<compile_context>
chip_gen: v7x
topology: tpu7x:2x2x1
jax: 0.10.0
libtpu: 0.0.40
codegen_flags: <defaults>
</compile_context>

<pallas_src>
import functools

import numpy as np
import jax
import jax.numpy as jnp
from jax import lax
from jax.experimental import pallas as pl
from jax.experimental.pallas import tpu as pltpu

_EPS_LN = 1e-6   # torchvision vit_b_16 uses LayerNorm(eps=1e-6)
_BF16 = jnp.bfloat16


# ---------------------------------------------------------------------------
# In-kernel helpers
# ---------------------------------------------------------------------------

def _bdot(a, b):
    """MXU matmul, bf16 operands, f32 accumulation."""
    return jnp.dot(a.astype(_BF16), b.astype(_BF16), preferred_element_type=jnp.float32)


def _bdot_general(a, b, dims):
    return lax.dot_general(a.astype(_BF16), b.astype(_BF16), dims,
                           preferred_element_type=jnp.float32)


def _ln(x, gb, eps):
    """LayerNorm over last dim. gb is (2, hidden): row 0 = gamma, row 1 = beta."""
    g = gb[0:1, :]
    b = gb[1:2, :]
    mu = jnp.mean(x, axis=-1, keepdims=True)
    xc = x - mu
    var = jnp.mean(xc * xc, axis=-1, keepdims=True)
    return xc * lax.rsqrt(var + eps) * g + b


# ---------------------------------------------------------------------------
# The single fused kernel
# ---------------------------------------------------------------------------

def _vit_seg_kernel(patches_ref, posb_ref, pw_ref,
                    ln1_ref, wqkv_ref, bqkv_ref, wo_ref, bo_ref,
                    ln2_ref, w1_ref, b1_ref, w2_ref, b2_ref,
                    lnf_ref, s_ref, w1a_ref, b1c_ref, w2c_ref, b2c_ref, kmat_ref,
                    o_ref, *, B, n, hidden, heads, depth, eps):
    dh = hidden // heads
    rows = B * n
    co = b1c_ref.shape[1]           # conv1 output channels (256)

    # ---- patch embedding (+ bias and positional embedding folded into posb) ----
    tok = _bdot(patches_ref[...], pw_ref[...])                       # (B*n, hidden) f32
    tok = (tok.reshape(B, n, hidden) + posb_ref[...]).reshape(rows, hidden)

    # ---- transformer encoder blocks (static unroll over depth) ----
    for d in range(depth):
        # --- attention: LN1 -> fused QKV -> per-head batched softmax attn -> out-proj ---
        h = _ln(tok, ln1_ref[d], eps)
        qkv = _bdot(h, wqkv_ref[d]) + bqkv_ref[d]                    # (rows, 3*hidden)
        wo_d = wo_ref[d]                                             # (hidden, hidden) bf16
        acc = jnp.zeros((rows, hidden), jnp.float32)
        for hi in range(heads):                                      # static unroll
            qh = qkv[:, hi * dh:(hi + 1) * dh].reshape(B, n, dh)     # q pre-scaled
            kh = qkv[:, hidden + hi * dh: hidden + (hi + 1) * dh].reshape(B, n, dh)
            vh = qkv[:, 2 * hidden + hi * dh: 2 * hidden + (hi + 1) * dh].reshape(B, n, dh)
            # scores: one batched (over B) MXU op per head
            s = _bdot_general(qh, kh, (((2,), (2,)), ((0,), (0,))))  # (B, n, n)
            s = s - jnp.max(s, axis=-1, keepdims=True)
            p = jnp.exp(s)
            p = p * pl.reciprocal(jnp.sum(p, axis=-1, keepdims=True), approx=True)
            ctx = _bdot_general(p, vh, (((2,), (1,)), ((0,), (0,)))) # (B, n, dh)
            # per-head slice of the output projection == concat(heads) @ wo
            acc = acc + _bdot(ctx.reshape(rows, dh), wo_d[hi * dh:(hi + 1) * dh, :])
        tok = tok + acc + bo_ref[d]

        # --- MLP: LN2 -> W1 -> GELU -> W2 -> +residual ---
        h2 = _ln(tok, ln2_ref[d], eps)
        m = _bdot(h2, w1_ref[d]) + b1_ref[d]
        # TODO(synk): tanh-approx GELU; PyTorch nn.GELU defaults to exact erf (tiny diff).
        m = jax.nn.gelu(m)
        tok = tok + _bdot(m, w2_ref[d]) + b2_ref[d]

    # ---- final LayerNorm (fused epilogue) ----
    tok = _ln(tok, lnf_ref[...], eps)

    # ---- segmentation head + bilinear upsample, per batch element ----
    # feat[b, c, i, j] == tok[b*n + i*gw + j, c]; the 3x3 conv (pad=1) is expressed as
    #   y1 = relu( sum_k S_k @ (t @ W1_all)[:, k*co:(k+1)*co] + b1 )
    # with S_k the (n, n) 0/1 selection matrix of conv tap k (BN already folded into W1_all).
    for b in range(B):
        t_b = tok[b * n:(b + 1) * n, :]                              # (n, hidden)
        v = _bdot(t_b, w1a_ref[...])                                 # (n, 9*co)
        y1 = jnp.zeros((n, co), jnp.float32)
        for k in range(9):                                           # static unroll
            y1 = y1 + _bdot(s_ref[k], v[:, k * co:(k + 1) * co])     # (n, n) @ (n, co)
        y1 = jnp.maximum(y1 + b1c_ref[...], 0.0)                     # (n, co)
        # 1x1 conv in A @ B^T form -> result already (nc, n), no transpose needed
        y2t = _bdot_general(w2c_ref[...], y1, (((1,), (1,)), ((), ())))   # (nc, n)
        # bilinear upsample (Kronecker matrix); conv2 bias commutes (rows of kmat sum to 1)
        o_ref[b] = _bdot(y2t, kmat_ref[...]) + b2c_ref[...]          # (nc, H*W) lane-dense


# ---------------------------------------------------------------------------
# Raw (torch-like) parameter init, deterministic & synthetic
# ---------------------------------------------------------------------------

def init_raw_params(key, *, in_ch=3, img=32, patch=8, hidden=64, depth=2, heads=4,
                    mlp_dim=128, num_classes=5):
    n = (img // patch) ** 2
    ks = jax.random.split(key, 8 + depth)

    def nrm(k, shape, scale=0.02):
        return scale * jax.random.normal(k, shape, jnp.float32)

    raw = dict(patch=patch, hidden=hidden, heads=heads, num_classes=num_classes)
    raw["patch_w"] = nrm(ks[0], (in_ch * patch * patch, hidden))
    raw["patch_b"] = jnp.zeros((hidden,), jnp.float32)
    raw["pos_emb"] = nrm(ks[1], (1, n, hidden))

    blocks = []
    for d in range(depth):
        subk = jax.random.split(ks[2 + d], 6)
        blocks.append(dict(
            ln1_g=jnp.ones((hidden,), jnp.float32), ln1_b=jnp.zeros((hidden,), jnp.float32),
            wq=nrm(subk[0], (hidden, hidden)), bq=jnp.zeros((hidden,), jnp.float32),
            wk=nrm(subk[1], (hidden, hidden)), bk=jnp.zeros((hidden,), jnp.float32),
            wv=nrm(subk[2], (hidden, hidden)), bv=jnp.zeros((hidden,), jnp.float32),
            wo=nrm(subk[3], (hidden, hidden)), bo=jnp.zeros((hidden,), jnp.float32),
            ln2_g=jnp.ones((hidden,), jnp.float32), ln2_b=jnp.zeros((hidden,), jnp.float32),
            w1=nrm(subk[4], (hidden, mlp_dim)), b1=jnp.zeros((mlp_dim,), jnp.float32),
            w2=nrm(subk[5], (mlp_dim, hidden)), b2=jnp.zeros((hidden,), jnp.float32),
        ))
    raw["blocks"] = blocks
    raw["ln_f_g"] = jnp.ones((hidden,), jnp.float32)
    raw["ln_f_b"] = jnp.zeros((hidden,), jnp.float32)

    i = 2 + depth
    # Segmentation head: Conv2d(hidden, 256, 3, pad=1) + BatchNorm2d(256) + Conv2d(256, nc, 1)
    raw["conv1_w"] = nrm(ks[i], (256, hidden, 3, 3))
    raw["conv1_b"] = jnp.zeros((256,), jnp.float32)
    raw["bn_g"] = jnp.ones((256,), jnp.float32)
    raw["bn_b"] = jnp.zeros((256,), jnp.float32)
    raw["bn_mean"] = jnp.zeros((256,), jnp.float32)
    raw["bn_var"] = jnp.ones((256,), jnp.float32)
    raw["conv2_w"] = nrm(ks[i + 1], (num_classes, 256, 1, 1))
    raw["conv2_b"] = jnp.zeros((num_classes,), jnp.float32)
    return raw


# ---------------------------------------------------------------------------
# One-time packing: weight fusion, BN fold, bf16 casts, resize / selection matrices
# ---------------------------------------------------------------------------

def _bilinear_matrix(dst, src):
    """Row-stochastic (dst, src) matrix: 1-D bilinear resize, align_corners=True."""
    if src == 1:
        return jnp.ones((dst, 1), jnp.float32)
    pos = jnp.arange(dst, dtype=jnp.float32) * (src - 1) / (dst - 1)
    lo = jnp.clip(jnp.floor(pos), 0, src - 2).astype(jnp.int32)
    frac = pos - lo.astype(jnp.float32)
    return ((1.0 - frac)[:, None] * jax.nn.one_hot(lo, src, dtype=jnp.float32)
            + frac[:, None] * jax.nn.one_hot(lo + 1, src, dtype=jnp.float32))


def pack_params(raw, *, img):
    p = raw["patch"]
    hidden = raw["hidden"]
    heads = raw["heads"]
    nc = raw["num_classes"]
    gh = gw = img // p
    n = gh * gw
    dh = hidden // heads
    scale = 1.0 / (dh ** 0.5)

    packed = dict(patch=p, hidden=hidden, heads=heads, num_classes=nc,
                  depth=len(raw["blocks"]), img=img)
    packed["patch_w"] = raw["patch_w"].astype(_BF16)
    packed["posb"] = raw["pos_emb"][0] + raw["patch_b"][None, :]           # (n, hidden)

    ln1, wqkv, bqkv, wo, bo, ln2, w1, b1, w2, b2 = ([] for _ in range(10))
    for blk in raw["blocks"]:
        ln1.append(jnp.stack([blk["ln1_g"], blk["ln1_b"]]))
        # fold the 1/sqrt(dh) softmax scale into the Q columns / bias
        wqkv.append(jnp.concatenate([blk["wq"] * scale, blk["wk"], blk["wv"]], axis=1))
        bqkv.append(jnp.concatenate([blk["bq"] * scale, blk["bk"], blk["bv"]])[None, :])
        wo.append(blk["wo"])
        bo.append(blk["bo"][None, :])
        ln2.append(jnp.stack([blk["ln2_g"], blk["ln2_b"]]))
        w1.append(blk["w1"]); b1.append(blk["b1"][None, :])
        w2.append(blk["w2"]); b2.append(blk["b2"][None, :])
    packed["ln1"] = jnp.stack(ln1)                                         # (D, 2, hidden)
    packed["wqkv"] = jnp.stack(wqkv).astype(_BF16)                         # (D, hidden, 3h)
    packed["bqkv"] = jnp.stack(bqkv)                                       # (D, 1, 3h)
    packed["wo"] = jnp.stack(wo).astype(_BF16)                             # (D, hidden, hidden)
    packed["bo"] = jnp.stack(bo)                                           # (D, 1, hidden)
    packed["ln2"] = jnp.stack(ln2)
    packed["w1"] = jnp.stack(w1).astype(_BF16)                             # (D, hidden, mlp)
    packed["b1"] = jnp.stack(b1)
    packed["w2"] = jnp.stack(w2).astype(_BF16)                             # (D, mlp, hidden)
    packed["b2"] = jnp.stack(b2)
    packed["lnf"] = jnp.stack([raw["ln_f_g"], raw["ln_f_b"]])              # (2, hidden)

    # --- seg head: eval-mode BatchNorm folded into conv1 ---
    co = raw["conv1_w"].shape[0]
    bn_scale = raw["bn_g"] / jnp.sqrt(raw["bn_var"] + 1e-5)
    bn_shift = raw["bn_b"] - raw["bn_mean"] * bn_scale
    wfold = raw["conv1_w"] * bn_scale[:, None, None, None]                 # (co, hidden, 3, 3)
    # W1_all[c, (di*3+dj)*co + o] = wfold[o, c, di, dj]
    packed["w1a"] = wfold.transpose(1, 2, 3, 0).reshape(hidden, 9 * co).astype(_BF16)
    packed["b1c"] = (raw["conv1_b"] * bn_scale + bn_shift)[None, :]        # (1, co)
    packed["w2c"] = raw["conv2_w"].reshape(nc, co).astype(_BF16)           # (nc, co)
    packed["b2c"] = raw["conv2_b"][:, None]                                # (nc, 1)

    # --- 3x3-tap selection matrices (zero padding): S[k, p, q] ---
    S = np.zeros((9, n, n), np.float32)
    for di in range(3):
        for dj in range(3):
            k = di * 3 + dj
            for i in range(gh):
                for j in range(gw):
                    si, sj = i + di - 1, j + dj - 1
                    if 0 <= si < gh and 0 <= sj < gw:
                        S[k, i * gw + j, si * gw + sj] = 1.0
    packed["smat"] = jnp.asarray(S, dtype=_BF16)                           # (9, n, n)

    # --- bilinear upsample (align_corners=True) as one Kronecker matrix (n, H*W) ---
    Wh = _bilinear_matrix(img, gh)
    Ww = _bilinear_matrix(img, gw)
    packed["kmat"] = jnp.einsum('ia,jb->abij', Wh, Ww).reshape(n, img * img).astype(_BF16)
    return packed


# ---------------------------------------------------------------------------
# Forward pass: one pallas_call
# ---------------------------------------------------------------------------

def vit_segmentation_forward(params, x):
    B, Cin, H, W = x.shape
    p = params["patch"]
    hidden = params["hidden"]
    heads = params["heads"]
    nc = params["num_classes"]
    depth = params["depth"]
    assert H == W == params["img"], "packed resize matrix was built for a different size"
    gh, gw = H // p, W // p
    n = gh * gw
    cpp = Cin * p * p
    HW = H * W

    # patch extraction (Conv2d kernel=stride=patch), batch folded into rows
    patches = (x.reshape(B, Cin, gh, p, gw, p)
                .transpose(0, 2, 4, 1, 3, 5)
                .reshape(B * n, cpp)).astype(jnp.float32)
    # TODO(synk): torchvision vit_b_16's class token is omitted so the token count N stays a
    # perfect square, matching this module's `H = W = int(N ** 0.5)` reshape of patch tokens.

    args = (patches, params["posb"], params["patch_w"],
            params["ln1"], params["wqkv"], params["bqkv"], params["wo"], params["bo"],
            params["ln2"], params["w1"], params["b1"], params["w2"], params["b2"],
            params["lnf"], params["smat"], params["w1a"], params["b1c"],
            params["w2c"], params["b2c"], params["kmat"])

    def _spec(a):
        nd = a.ndim
        return pl.BlockSpec(a.shape, lambda i, _nd=nd: (0,) * _nd)   # full-extent block

    out = pl.pallas_call(
        functools.partial(_vit_seg_kernel, B=B, n=n, hidden=hidden, heads=heads,
                          depth=depth, eps=_EPS_LN),
        out_shape=jax.ShapeDtypeStruct((B, nc, HW), jnp.float32),
        grid=(1,),                                       # single fused launch
        in_specs=[_spec(a) for a in args],
        out_specs=pl.BlockSpec((B, nc, HW), lambda i: (0, 0, 0)),
        compiler_params=pltpu.CompilerParams(dimension_semantics=("arbitrary",)),
    )(*args)

    return out.reshape(B, nc, H, W)


# ---------------------------------------------------------------------------
# Main
# ---------------------------------------------------------------------------

if __name__ == "__main__":
    key = jax.random.PRNGKey(0)
    pkey, xkey = jax.random.split(key)
    raw = init_raw_params(pkey, in_ch=3, img=32, patch=8, hidden=64, depth=2,
                          heads=4, mlp_dim=128, num_classes=5)
    params = pack_params(raw, img=32)
    x = jax.random.normal(xkey, (2, 3, 32, 32), jnp.float32)   # NCHW, like PyTorch
    out = vit_segmentation_forward(params, x)
    out = jax.block_until_ready(out)
    assert out.shape == (2, 5, 32, 32), out.shape
    assert bool(jnp.all(jnp.isfinite(out)))
    print("KERNEL_OK")
</pallas_src>

<mosaic_0001>
module attributes {stable_mosaic.version = 11 : i64} {
  func.func @_vit_seg_kernel(%arg0: i32, %arg1: memref<32x192xf32, #tpu.memory_space<vmem>>, %arg2: memref<16x64xf32, #tpu.memory_space<vmem>>, %arg3: memref<192x64xbf16, #tpu.memory_space<vmem>>, %arg4: memref<2x2x64xf32, #tpu.memory_space<vmem>>, %arg5: memref<2x64x192xbf16, #tpu.memory_space<vmem>>, %arg6: memref<2x1x192xf32, #tpu.memory_space<vmem>>, %arg7: memref<2x64x64xbf16, #tpu.memory_space<vmem>>, %arg8: memref<2x1x64xf32, #tpu.memory_space<vmem>>, %arg9: memref<2x2x64xf32, #tpu.memory_space<vmem>>, %arg10: memref<2x64x128xbf16, #tpu.memory_space<vmem>>, %arg11: memref<2x1x128xf32, #tpu.memory_space<vmem>>, %arg12: memref<2x128x64xbf16, #tpu.memory_space<vmem>>, %arg13: memref<2x1x64xf32, #tpu.memory_space<vmem>>, %arg14: memref<2x64xf32, #tpu.memory_space<vmem>>, %arg15: memref<9x16x16xbf16, #tpu.memory_space<vmem>>, %arg16: memref<64x2304xbf16, #tpu.memory_space<vmem>>, %arg17: memref<1x256xf32, #tpu.memory_space<vmem>>, %arg18: memref<5x256xbf16, #tpu.memory_space<vmem>>, %arg19: memref<5x1xf32, #tpu.memory_space<vmem>>, %arg20: memref<16x1024xbf16, #tpu.memory_space<vmem>>, %arg21: memref<2x5x1024xf32, #tpu.memory_space<vmem>>) attributes {dimension_semantics = [#tpu.dimension_semantics<arbitrary>], iteration_bounds = array<i64: 1>, scalar_prefetch = 0 : i64, scratch_operands = 0 : i64, tpu.core_type = #tpu.core_type<tc>, window_params = [{pipeline_mode = #tpu.pipeline_mode<synchronous>, transform_indices = @transform_0, window_bounds = array<i64: 32, 192>}, {pipeline_mode = #tpu.pipeline_mode<synchronous>, transform_indices = @transform_1, window_bounds = array<i64: 16, 64>}, {pipeline_mode = #tpu.pipeline_mode<synchronous>, transform_indices = @transform_2, window_bounds = array<i64: 192, 64>}, {pipeline_mode = #tpu.pipeline_mode<synchronous>, transform_indices = @transform_3, window_bounds = array<i64: 2, 2, 64>}, {pipeline_mode = #tpu.pipeline_mode<synchronous>, transform_indices = @transform_4, window_bounds = array<i64: 2, 64, 192>}, {pipeline_mode = #tpu.pipeline_mode<synchronous>, transform_indices = @transform_5, window_bounds = array<i64: 2, 1, 192>}, {pipeline_mode = #tpu.pipeline_mode<synchronous>, transform_indices = @transform_6, window_bounds = array<i64: 2, 64, 64>}, {pipeline_mode = #tpu.pipeline_mode<synchronous>, transform_indices = @transform_7, window_bounds = array<i64: 2, 1, 64>}, {pipeline_mode = #tpu.pipeline_mode<synchronous>, transform_indices = @transform_8, window_bounds = array<i64: 2, 2, 64>}, {pipeline_mode = #tpu.pipeline_mode<synchronous>, transform_indices = @transform_9, window_bounds = array<i64: 2, 64, 128>}, {pipeline_mode = #tpu.pipeline_mode<synchronous>, transform_indices = @transform_10, window_bounds = array<i64: 2, 1, 128>}, {pipeline_mode = #tpu.pipeline_mode<synchronous>, transform_indices = @transform_11, window_bounds = array<i64: 2, 128, 64>}, {pipeline_mode = #tpu.pipeline_mode<synchronous>, transform_indices = @transform_12, window_bounds = array<i64: 2, 1, 64>}, {pipeline_mode = #tpu.pipeline_mode<synchronous>, transform_indices = @transform_13, window_bounds = array<i64: 2, 64>}, {pipeline_mode = #tpu.pipeline_mode<synchronous>, transform_indices = @transform_14, window_bounds = array<i64: 9, 16, 16>}, {pipeline_mode = #tpu.pipeline_mode<synchronous>, transform_indices = @transform_15, window_bounds = array<i64: 64, 2304>}, {pipeline_mode = #tpu.pipeline_mode<synchronous>, transform_indices = @transform_16, window_bounds = array<i64: 1, 256>}, {pipeline_mode = #tpu.pipeline_mode<synchronous>, transform_indices = @transform_17, window_bounds = array<i64: 5, 256>}, {pipeline_mode = #tpu.pipeline_mode<synchronous>, transform_indices = @transform_18, window_bounds = array<i64: 5, 1>}, {pipeline_mode = #tpu.pipeline_mode<synchronous>, transform_indices = @transform_19, window_bounds = array<i64: 16, 1024>}, {pipeline_mode = #tpu.pipeline_mode<synchronous>, transform_indices = @transform_20, window_bounds = array<i64: 2, 5, 1024>}]} {
    %c0 = arith.constant 0 : index
    %c0_0 = arith.constant 0 : index
    %0 = vector.load %arg1[%c0, %c0_0] : memref<32x192xf32, #tpu.memory_space<vmem>>, vector<32x192xf32>
    %c0_1 = arith.constant 0 : index
    %c0_2 = arith.constant 0 : index
    %1 = vector.load %arg3[%c0_1, %c0_2] : memref<192x64xbf16, #tpu.memory_space<vmem>>, vector<192x64xbf16>
    %2 = arith.truncf %0 : vector<32x192xf32> to vector<32x192xbf16>
    %cst = arith.constant dense<0.000000e+00> : vector<32x64xf32>
    %3 = tpu.matmul %2, %1, %cst {dimension_numbers = #tpu.dot_dimension_numbers<[1], [0], [0], [1], [0, 0, 1, 1], [], []>} : vector<32x192xbf16>, vector<192x64xbf16>, vector<32x64xf32> -> vector<32x64xf32>
    %4 = vector.shape_cast %3 : vector<32x64xf32> to vector<2x16x64xf32>
    %c0_3 = arith.constant 0 : index
    %c0_4 = arith.constant 0 : index
    %5 = vector.load %arg2[%c0_3, %c0_4] : memref<16x64xf32, #tpu.memory_space<vmem>>, vector<16x64xf32>
    %6 = vector.shape_cast %5 : vector<16x64xf32> to vector<1x16x64xf32>
    %7 = vector.broadcast %6 : vector<1x16x64xf32> to vector<2x16x64xf32>
    %8 = arith.addf %4, %7 : vector<2x16x64xf32>
    %9 = vector.shape_cast %8 : vector<2x16x64xf32> to vector<32x64xf32>
    %c0_5 = arith.constant 0 : index
    %c0_6 = arith.constant 0 : index
    %c0_7 = arith.constant 0 : index
    %10 = vector.load %arg4[%c0_5, %c0_6, %c0_7] : memref<2x2x64xf32, #tpu.memory_space<vmem>>, vector<1x2x64xf32>
    %11 = vector.shape_cast %10 : vector<1x2x64xf32> to vector<2x64xf32>
    %12 = vector.extract_strided_slice %11 {offsets = [0, 0], sizes = [1, 64], strides = [1, 1]} : vector<2x64xf32> to vector<1x64xf32>
    %13 = vector.extract_strided_slice %11 {offsets = [1, 0], sizes = [1, 64], strides = [1, 1]} : vector<2x64xf32> to vector<1x64xf32>
    %cst_8 = arith.constant dense<0.000000e+00> : vector<32xf32>
    %14 = vector.multi_reduction <add>, %9, %cst_8 [1] : vector<32x64xf32> to vector<32xf32>
    %15 = vector.shape_cast %14 : vector<32xf32> to vector<32x1xf32>
    %cst_9 = arith.constant 6.400000e+01 : f32
    %16 = vector.broadcast %cst_9 : f32 to vector<32x1xf32>
    %17 = arith.divf %15, %16 : vector<32x1xf32>
    %18 = vector.broadcast %17 : vector<32x1xf32> to vector<32x64xf32>
    %19 = arith.subf %9, %18 : vector<32x64xf32>
    %20 = arith.mulf %19, %19 : vector<32x64xf32>
    %cst_10 = arith.constant dense<0.000000e+00> : vector<32xf32>
    %21 = vector.multi_reduction <add>, %20, %cst_10 [1] : vector<32x64xf32> to vector<32xf32>
    %22 = vector.shape_cast %21 : vector<32xf32> to vector<32x1xf32>
    %cst_11 = arith.constant 6.400000e+01 : f32
    %23 = vector.broadcast %cst_11 : f32 to vector<32x1xf32>
    %24 = arith.divf %22, %23 : vector<32x1xf32>
    %cst_12 = arith.constant 9.99999997E-7 : f32
    %25 = vector.broadcast %cst_12 : f32 to vector<32x1xf32>
    %26 = arith.addf %24, %25 : vector<32x1xf32>
    %27 = math.rsqrt %26 : vector<32x1xf32>
    %28 = vector.broadcast %27 : vector<32x1xf32> to vector<32x64xf32>
    %29 = arith.mulf %19, %28 : vector<32x64xf32>
    %30 = vector.broadcast %12 : vector<1x64xf32> to vector<32x64xf32>
    %31 = arith.mulf %29, %30 : vector<32x64xf32>
    %32 = vector.broadcast %13 : vector<1x64xf32> to vector<32x64xf32>
    %33 = arith.addf %31, %32 : vector<32x64xf32>
    %c0_13 = arith.constant 0 : index
    %c0_14 = arith.constant 0 : index
    %c0_15 = arith.constant 0 : index
    %34 = vector.load %arg5[%c0_13, %c0_14, %c0_15] : memref<2x64x192xbf16, #tpu.memory_space<vmem>>, vector<1x64x192xbf16>
    %35 = vector.shape_cast %34 : vector<1x64x192xbf16> to vector<64x192xbf16>
    %36 = arith.truncf %33 : vector<32x64xf32> to vector<32x64xbf16>
    %cst_16 = arith.constant dense<0.000000e+00> : vector<32x192xf32>
    %37 = tpu.matmul %36, %35, %cst_16 {dimension_numbers = #tpu.dot_dimension_numbers<[1], [0], [0], [1], [0, 0, 1, 1], [], []>} : vector<32x64xbf16>, vector<64x192xbf16>, vector<32x192xf32> -> vector<32x192xf32>
    %c0_17 = arith.constant 0 : index
    %c0_18 = arith.constant 0 : index
    %c0_19 = arith.constant 0 : index
    %38 = vector.load %arg6[%c0_17, %c0_18, %c0_19] : memref<2x1x192xf32, #tpu.memory_space<vmem>>, vector<1x1x192xf32>
    %39 = vector.shape_cast %38 : vector<1x1x192xf32> to vector<1x192xf32>
    %40 = vector.broadcast %39 : vector<1x192xf32> to vector<32x192xf32>
    %41 = arith.addf %37, %40 : vector<32x192xf32>
    %c0_20 = arith.constant 0 : index
    %c0_21 = arith.constant 0 : index
    %c0_22 = arith.constant 0 : index
    %42 = vector.load %arg7[%c0_20, %c0_21, %c0_22] : memref<2x64x64xbf16, #tpu.memory_space<vmem>>, vector<1x64x64xbf16>
    %43 = vector.shape_cast %42 : vector<1x64x64xbf16> to vector<64x64xbf16>
    %cst_23 = arith.constant 0.000000e+00 : f32
    %44 = vector.broadcast %cst_23 : f32 to vector<32x64xf32>
    %45 = vector.extract_strided_slice %41 {offsets = [0, 0], sizes = [32, 16], strides = [1, 1]} : vector<32x192xf32> to vector<32x16xf32>
    %46 = vector.shape_cast %45 : vector<32x16xf32> to vector<2x16x16xf32>
    %47 = vector.extract_strided_slice %41 {offsets = [0, 64], sizes = [32, 16], strides = [1, 1]} : vector<32x192xf32> to vector<32x16xf32>
    %48 = vector.shape_cast %47 : vector<32x16xf32> to vector<2x16x16xf32>
    %49 = vector.extract_strided_slice %41 {offsets = [0, 128], sizes = [32, 16], strides = [1, 1]} : vector<32x192xf32> to vector<32x16xf32>
    %50 = vector.shape_cast %49 : vector<32x16xf32> to vector<2x16x16xf32>
    %51 = arith.truncf %46 : vector<2x16x16xf32> to vector<2x16x16xbf16>
    %52 = arith.truncf %48 : vector<2x16x16xf32> to vector<2x16x16xbf16>
    %cst_24 = arith.constant dense<0.000000e+00> : vector<2x16x16xf32>
    %53 = tpu.matmul %51, %52, %cst_24 {dimension_numbers = #tpu.dot_dimension_numbers<[2], [2], [1], [1], [0, 0, 0, 1, 1, 1], [0], [0]>} : vector<2x16x16xbf16>, vector<2x16x16xbf16>, vector<2x16x16xf32> -> vector<2x16x16xf32>
    %cst_25 = arith.constant dense<0xFF800000> : vector<2x16xf32>
    %54 = vector.multi_reduction <maximumf>, %53, %cst_25 [2] : vector<2x16x16xf32> to vector<2x16xf32>
    %55 = vector.shape_cast %54 : vector<2x16xf32> to vector<2x16x1xf32>
    %56 = vector.broadcast %55 : vector<2x16x1xf32> to vector<2x16x16xf32>
    %57 = arith.subf %53, %56 : vector<2x16x16xf32>
    %58 = math.exp %57 : vector<2x16x16xf32>
    %cst_26 = arith.constant dense<0.000000e+00> : vector<2x16xf32>
    %59 = vector.multi_reduction <add>, %58, %cst_26 [2] : vector<2x16x16xf32> to vector<2x16xf32>
    %60 = vector.shape_cast %59 : vector<2x16xf32> to vector<2x16x1xf32>
    %61 = tpu.reciprocal %60 {approx = true} : vector<2x16x1xf32> -> vector<2x16x1xf32>
    %62 = vector.broadcast %61 : vector<2x16x1xf32> to vector<2x16x16xf32>
    %63 = arith.mulf %58, %62 : vector<2x16x16xf32>
    %64 = arith.truncf %63 : vector<2x16x16xf32> to vector<2x16x16xbf16>
    %65 = arith.truncf %50 : vector<2x16x16xf32> to vector<2x16x16xbf16>
    %cst_27 = arith.constant dense<0.000000e+00> : vector<2x16x16xf32>
    %66 = tpu.matmul %64, %65, %cst_27 {dimension_numbers = #tpu.dot_dimension_numbers<[2], [1], [1], [2], [0, 0, 0, 1, 1, 2], [0], [0]>} : vector<2x16x16xbf16>, vector<2x16x16xbf16>, vector<2x16x16xf32> -> vector<2x16x16xf32>
    %67 = vector.shape_cast %66 : vector<2x16x16xf32> to vector<32x16xf32>
    %68 = vector.extract_strided_slice %43 {offsets = [0, 0], sizes = [16, 64], strides = [1, 1]} : vector<64x64xbf16> to vector<16x64xbf16>
    %69 = arith.truncf %67 : vector<32x16xf32> to vector<32x16xbf16>
    %cst_28 = arith.constant dense<0.000000e+00> : vector<32x64xf32>
    %70 = tpu.matmul %69, %68, %cst_28 {dimension_numbers = #tpu.dot_dimension_numbers<[1], [0], [0], [1], [0, 0, 1, 1], [], []>} : vector<32x16xbf16>, vector<16x64xbf16>, vector<32x64xf32> -> vector<32x64xf32>
    %71 = arith.addf %44, %70 : vector<32x64xf32>
    %72 = vector.extract_strided_slice %41 {offsets = [0, 16], sizes = [32, 16], strides = [1, 1]} : vector<32x192xf32> to vector<32x16xf32>
    %73 = vector.shape_cast %72 : vector<32x16xf32> to vector<2x16x16xf32>
    %74 = vector.extract_strided_slice %41 {offsets = [0, 80], sizes = [32, 16], strides = [1, 1]} : vector<32x192xf32> to vector<32x16xf32>
    %75 = vector.shape_cast %74 : vector<32x16xf32> to vector<2x16x16xf32>
    %76 = vector.extract_strided_slice %41 {offsets = [0, 144], sizes = [32, 16], strides = [1, 1]} : vector<32x192xf32> to vector<32x16xf32>
    %77 = vector.shape_cast %76 : vector<32x16xf32> to vector<2x16x16xf32>
    %78 = arith.truncf %73 : vector<2x16x16xf32> to vector<2x16x16xbf16>
    %79 = arith.truncf %75 : vector<2x16x16xf32> to vector<2x16x16xbf16>
    %cst_29 = arith.constant dense<0.000000e+00> : vector<2x16x16xf32>
    %80 = tpu.matmul %78, %79, %cst_29 {dimension_numbers = #tpu.dot_dimension_numbers<[2], [2], [1], [1], [0, 0, 0, 1, 1, 1], [0], [0]>} : vector<2x16x16xbf16>, vector<2x16x16xbf16>, vector<2x16x16xf32> -> vector<2x16x16xf32>
    %cst_30 = arith.constant dense<0xFF800000> : vector<2x16xf32>
    %81 = vector.multi_reduction <maximumf>, %80, %cst_30 [2] : vector<2x16x16xf32> to vector<2x16xf32>
    %82 = vector.shape_cast %81 : vector<2x16xf32> to vector<2x16x1xf32>
    %83 = vector.broadcast %82 : vector<2x16x1xf32> to vector<2x16x16xf32>
    %84 = arith.subf %80, %83 : vector<2x16x16xf32>
    %85 = math.exp %84 : vector<2x16x16xf32>
    %cst_31 = arith.constant dense<0.000000e+00> : vector<2x16xf32>
    %86 = vector.multi_reduction <add>, %85, %cst_31 [2] : vector<2x16x16xf32> to vector<2x16xf32>
    %87 = vector.shape_cast %86 : vector<2x16xf32> to vector<2x16x1xf32>
    %88 = tpu.reciprocal %87 {approx = true} : vector<2x16x1xf32> -> vector<2x16x1xf32>
    %89 = vector.broadcast %88 : vector<2x16x1xf32> to vector<2x16x16xf32>
    %90 = arith.mulf %85, %89 : vector<2x16x16xf32>
    %91 = arith.truncf %90 : vector<2x16x16xf32> to vector<2x16x16xbf16>
    %92 = arith.truncf %77 : vector<2x16x16xf32> to vector<2x16x16xbf16>
    %cst_32 = arith.constant dense<0.000000e+00> : vector<2x16x16xf32>
    %93 = tpu.matmul %91, %92, %cst_32 {dimension_numbers = #tpu.dot_dimension_numbers<[2], [1], [1], [2], [0, 0, 0, 1, 1, 2], [0], [0]>} : vector<2x16x16xbf16>, vector<2x16x16xbf16>, vector<2x16x16xf32> -> vector<2x16x16xf32>
    %94 = vector.shape_cast %93 : vector<2x16x16xf32> to vector<32x16xf32>
    %95 = vector.extract_strided_slice %43 {offsets = [16, 0], sizes = [16, 64], strides = [1, 1]} : vector<64x64xbf16> to vector<16x64xbf16>
    %96 = arith.truncf %94 : vector<32x16xf32> to vector<32x16xbf16>
    %cst_33 = arith.constant dense<0.000000e+00> : vector<32x64xf32>
    %97 = tpu.matmul %96, %95, %cst_33 {dimension_numbers = #tpu.dot_dimension_numbers<[1], [0], [0], [1], [0, 0, 1, 1], [], []>} : vector<32x16xbf16>, vector<16x64xbf16>, vector<32x64xf32> -> vector<32x64xf32>
    %98 = arith.addf %71, %97 : vector<32x64xf32>
    %99 = vector.extract_strided_slice %41 {offsets = [0, 32], sizes = [32, 16], strides = [1, 1]} : vector<32x192xf32> to vector<32x16xf32>
    %100 = vector.shape_cast %99 : vector<32x16xf32> to vector<2x16x16xf32>
    %101 = vector.extract_strided_slice %41 {offsets = [0, 96], sizes = [32, 16], strides = [1, 1]} : vector<32x192xf32> to vector<32x16xf32>
    %102 = vector.shape_cast %101 : vector<32x16xf32> to vector<2x16x16xf32>
    %103 = vector.extract_strided_slice %41 {offsets = [0, 160], sizes = [32, 16], strides = [1, 1]} : vector<32x192xf32> to vector<32x16xf32>
    %104 = vector.shape_cast %103 : vector<32x16xf32> to vector<2x16x16xf32>
    %105 = arith.truncf %100 : vector<2x16x16xf32> to vector<2x16x16xbf16>
    %106 = arith.truncf %102 : vector<2x16x16xf32> to vector<2x16x16xbf16>
    %cst_34 = arith.constant dense<0.000000e+00> : vector<2x16x16xf32>
    %107 = tpu.matmul %105, %106, %cst_34 {dimension_numbers = #tpu.dot_dimension_numbers<[2], [2], [1], [1], [0, 0, 0, 1, 1, 1], [0], [0]>} : vector<2x16x16xbf16>, vector<2x16x16xbf16>, vector<2x16x16xf32> -> vector<2x16x16xf32>
    %cst_35 = arith.constant dense<0xFF800000> : vector<2x16xf32>
    %108 = vector.multi_reduction <maximumf>, %107, %cst_35 [2] : vector<2x16x16xf32> to vector<2x16xf32>
    %109 = vector.shape_cast %108 : vector<2x16xf32> to vector<2x16x1xf32>
    %110 = vector.broadcast %109 : vector<2x16x1xf32> to vector<2x16x16xf32>
    %111 = arith.subf %107, %110 : vector<2x16x16xf32>
    %112 = math.exp %111 : vector<2x16x16xf32>
    %cst_36 = arith.constant dense<0.000000e+00> : vector<2x16xf32>
    %113 = vector.multi_reduction <add>, %112, %cst_36 [2] : vector<2x16x16xf32> to vector<2x16xf32>
    %114 = vector.shape_cast %113 : vector<2x16xf32> to vector<2x16x1xf32>
    %115 = tpu.reciprocal %114 {approx = true} : vector<2x16x1xf32> -> vector<2x16x1xf32>
    %116 = vector.broadcast %115 : vector<2x16x1xf32> to vector<2x16x16xf32>
    %117 = arith.mulf %112, %116 : vector<2x16x16xf32>
    %118 = arith.truncf %117 : vector<2x16x16xf32> to vector<2x16x16xbf16>
    %119 = arith.truncf %104 : vector<2x16x16xf32> to vector<2x16x16xbf16>
    %cst_37 = arith.constant dense<0.000000e+00> : vector<2x16x16xf32>
    %120 = tpu.matmul %118, %119, %cst_37 {dimension_numbers = #tpu.dot_dimension_numbers<[2], [1], [1], [2], [0, 0, 0, 1, 1, 2], [0], [0]>} : vector<2x16x16xbf16>, vector<2x16x16xbf16>, vector<2x16x16xf32> -> vector<2x16x16xf32>
    %121 = vector.shape_cast %120 : vector<2x16x16xf32> to vector<32x16xf32>
    %122 = vector.extract_strided_slice %43 {offsets = [32, 0], sizes = [16, 64], strides = [1, 1]} : vector<64x64xbf16> to vector<16x64xbf16>
    %123 = arith.truncf %121 : vector<32x16xf32> to vector<32x16xbf16>
    %cst_38 = arith.constant dense<0.000000e+00> : vector<32x64xf32>
    %124 = tpu.matmul %123, %122, %cst_38 {dimension_numbers = #tpu.dot_dimension_numbers<[1], [0], [0], [1], [0, 0, 1, 1], [], []>} : vector<32x16xbf16>, vector<16x64xbf16>, vector<32x64xf32> -> vector<32x64xf32>
    %125 = arith.addf %98, %124 : vector<32x64xf32>
    %126 = vector.extract_strided_slice %41 {offsets = [0, 48], sizes = [32, 16], strides = [1, 1]} : vector<32x192xf32> to vector<32x16xf32>
    %127 = vector.shape_cast %126 : vector<32x16xf32> to vector<2x16x16xf32>
    %128 = vector.extract_strided_slice %41 {offsets = [0, 112], sizes = [32, 16], strides = [1, 1]} : vector<32x192xf32> to vector<32x16xf32>
    %129 = vector.shape_cast %128 : vector<32x16xf32> to vector<2x16x16xf32>
    %130 = vector.extract_strided_slice %41 {offsets = [0, 176], sizes = [32, 16], strides = [1, 1]} : vector<32x192xf32> to vector<32x16xf32>
    %131 = vector.shape_cast %130 : vector<32x16xf32> to vector<2x16x16xf32>
    %132 = arith.truncf %127 : vector<2x16x16xf32> to vector<2x16x16xbf16>
    %133 = arith.truncf %129 : vector<2x16x16xf32> to vector<2x16x16xbf16>
    %cst_39 = arith.constant dense<0.000000e+00> : vector<2x16x16xf32>
    %134 = tpu.matmul %132, %133, %cst_39 {dimension_numbers = #tpu.dot_dimension_numbers<[2], [2], [1], [1], [0, 0, 0, 1, 1, 1], [0], [0]>} : vector<2x16x16xbf16>, vector<2x16x16xbf16>, vector<2x16x16xf32> -> vector<2x16x16xf32>
    %cst_40 = arith.constant dense<0xFF800000> : vector<2x16xf32>
    %135 = vector.multi_reduction <maximumf>, %134, %cst_40 [2] : vector<2x16x16xf32> to vector<2x16xf32>
    %136 = vector.shape_cast %135 : vector<2x16xf32> to vector<2x16x1xf32>
    %137 = vector.broadcast %136 : vector<2x16x1xf32> to vector<2x16x16xf32>
    %138 = arith.subf %134, %137 : vector<2x16x16xf32>
    %139 = math.exp %138 : vector<2x16x16xf32>
    %cst_41 = arith.constant dense<0.000000e+00> : vector<2x16xf32>
    %140 = vector.multi_reduction <add>, %139, %cst_41 [2] : vector<2x16x16xf32> to vector<2x16xf32>
    %141 = vector.shape_cast %140 : vector<2x16xf32> to vector<2x16x1xf32>
    %142 = tpu.reciprocal %141 {approx = true} : vector<2x16x1xf32> -> vector<2x16x1xf32>
    %143 = vector.broadcast %142 : vector<2x16x1xf32> to vector<2x16x16xf32>
    %144 = arith.mulf %139, %143 : vector<2x16x16xf32>
    %145 = arith.truncf %144 : vector<2x16x16xf32> to vector<2x16x16xbf16>
    %146 = arith.truncf %131 : vector<2x16x16xf32> to vector<2x16x16xbf16>
    %cst_42 = arith.constant dense<0.000000e+00> : vector<2x16x16xf32>
    %147 = tpu.matmul %145, %146, %cst_42 {dimension_numbers = #tpu.dot_dimension_numbers<[2], [1], [1], [2], [0, 0, 0, 1, 1, 2], [0], [0]>} : vector<2x16x16xbf16>, vector<2x16x16xbf16>, vector<2x16x16xf32> -> vector<2x16x16xf32>
    %148 = vector.shape_cast %147 : vector<2x16x16xf32> to vector<32x16xf32>
    %149 = vector.extract_strided_slice %43 {offsets = [48, 0], sizes = [16, 64], strides = [1, 1]} : vector<64x64xbf16> to vector<16x64xbf16>
    %150 = arith.truncf %148 : vector<32x16xf32> to vector<32x16xbf16>
    %cst_43 = arith.constant dense<0.000000e+00> : vector<32x64xf32>
    %151 = tpu.matmul %150, %149, %cst_43 {dimension_numbers = #tpu.dot_dimension_numbers<[1], [0], [0], [1], [0, 0, 1, 1], [], []>} : vector<32x16xbf16>, vector<16x64xbf16>, vector<32x64xf32> -> vector<32x64xf32>
    %152 = arith.addf %125, %151 : vector<32x64xf32>
    %153 = arith.addf %9, %152 : vector<32x64xf32>
    %c0_44 = arith.constant 0 : index
    %c0_45 = arith.constant 0 : index
    %c0_46 = arith.constant 0 : index
    %154 = vector.load %arg8[%c0_44, %c0_45, %c0_46] : memref<2x1x64xf32, #tpu.memory_space<vmem>>, vector<1x1x64xf32>
    %155 = vector.shape_cast %154 : vector<1x1x64xf32> to vector<1x64xf32>
    %156 = vector.broadcast %155 : vector<1x64xf32> to vector<32x64xf32>
    %157 = arith.addf %153, %156 : vector<32x64xf32>
    %c0_47 = arith.constant 0 : index
    %c0_48 = arith.constant 0 : index
    %c0_49 = arith.constant 0 : index
    %158 = vector.load %arg9[%c0_47, %c0_48, %c0_49] : memref<2x2x64xf32, #tpu.memory_space<vmem>>, vector<1x2x64xf32>
    %159 = vector.shape_cast %158 : vector<1x2x64xf32> to vector<2x64xf32>
    %160 = vector.extract_strided_slice %159 {offsets = [0, 0], sizes = [1, 64], strides = [1, 1]} : vector<2x64xf32> to vector<1x64xf32>
    %161 = vector.extract_strided_slice %159 {offsets = [1, 0], sizes = [1, 64], strides = [1, 1]} : vector<2x64xf32> to vector<1x64xf32>
    %cst_50 = arith.constant dense<0.000000e+00> : vector<32xf32>
    %162 = vector.multi_reduction <add>, %157, %cst_50 [1] : vector<32x64xf32> to vector<32xf32>
    %163 = vector.shape_cast %162 : vector<32xf32> to vector<32x1xf32>
    %cst_51 = arith.constant 6.400000e+01 : f32
    %164 = vector.broadcast %cst_51 : f32 to vector<32x1xf32>
    %165 = arith.divf %163, %164 : vector<32x1xf32>
    %166 = vector.broadcast %165 : vector<32x1xf32> to vector<32x64xf32>
    %167 = arith.subf %157, %166 : vector<32x64xf32>
    %168 = arith.mulf %167, %167 : vector<32x64xf32>
    %cst_52 = arith.constant dense<0.000000e+00> : vector<32xf32>
    %169 = vector.multi_reduction <add>, %168, %cst_52 [1] : vector<32x64xf32> to vector<32xf32>
    %170 = vector.shape_cast %169 : vector<32xf32> to vector<32x1xf32>
    %cst_53 = arith.constant 6.400000e+01 : f32
    %171 = vector.broadcast %cst_53 : f32 to vector<32x1xf32>
    %172 = arith.divf %170, %171 : vector<32x1xf32>
    %cst_54 = arith.constant 9.99999997E-7 : f32
    %173 = vector.broadcast %cst_54 : f32 to vector<32x1xf32>
    %174 = arith.addf %172, %173 : vector<32x1xf32>
    %175 = math.rsqrt %174 : vector<32x1xf32>
    %176 = vector.broadcast %175 : vector<32x1xf32> to vector<32x64xf32>
    %177 = arith.mulf %167, %176 : vector<32x64xf32>
    %178 = vector.broadcast %160 : vector<1x64xf32> to vector<32x64xf32>
    %179 = arith.mulf %177, %178 : vector<32x64xf32>
    %180 = vector.broadcast %161 : vector<1x64xf32> to vector<32x64xf32>
    %181 = arith.addf %179, %180 : vector<32x64xf32>
    %c0_55 = arith.constant 0 : index
    %c0_56 = arith.constant 0 : index
    %c0_57 = arith.constant 0 : index
    %182 = vector.load %arg10[%c0_55, %c0_56, %c0_57] : memref<2x64x128xbf16, #tpu.memory_space<vmem>>, vector<1x64x128xbf16>
    %183 = vector.shape_cast %182 : vector<1x64x128xbf16> to vector<64x128xbf16>
    %184 = arith.truncf %181 : vector<32x64xf32> to vector<32x64xbf16>
    %cst_58 = arith.constant dense<0.000000e+00> : vector<32x128xf32>
    %185 = tpu.matmul %184, %183, %cst_58 {dimension_numbers = #tpu.dot_dimension_numbers<[1], [0], [0], [1], [0, 0, 1, 1], [], []>} : vector<32x64xbf16>, vector<64x128xbf16>, vector<32x128xf32> -> vector<32x128xf32>
    %c0_59 = arith.constant 0 : index
    %c0_60 = arith.constant 0 : index
    %c0_61 = arith.constant 0 : index
    %186 = vector.load %arg11[%c0_59, %c0_60, %c0_61] : memref<2x1x128xf32, #tpu.memory_space<vmem>>, vector<1x1x128xf32>
    %187 = vector.shape_cast %186 : vector<1x1x128xf32> to vector<1x128xf32>
    %188 = vector.broadcast %187 : vector<1x128xf32> to vector<32x128xf32>
    %189 = arith.addf %185, %188 : vector<32x128xf32>
    %190 = arith.mulf %189, %189 : vector<32x128xf32>
    %191 = arith.mulf %189, %190 : vector<32x128xf32>
    %cst_62 = arith.constant 4.471500e-02 : f32
    %192 = vector.broadcast %cst_62 : f32 to vector<32x128xf32>
    %193 = arith.mulf %192, %191 : vector<32x128xf32>
    %194 = arith.addf %189, %193 : vector<32x128xf32>
    %cst_63 = arith.constant 0.797884583 : f32
    %195 = vector.broadcast %cst_63 : f32 to vector<32x128xf32>
    %196 = arith.mulf %195, %194 : vector<32x128xf32>
    %197 = math.tanh %196 : vector<32x128xf32>
    %cst_64 = arith.constant 1.000000e+00 : f32
    %198 = vector.broadcast %cst_64 : f32 to vector<32x128xf32>
    %199 = arith.addf %198, %197 : vector<32x128xf32>
    %cst_65 = arith.constant 5.000000e-01 : f32
    %200 = vector.broadcast %cst_65 : f32 to vector<32x128xf32>
    %201 = arith.mulf %200, %199 : vector<32x128xf32>
    %202 = arith.mulf %189, %201 : vector<32x128xf32>
    %c0_66 = arith.constant 0 : index
    %c0_67 = arith.constant 0 : index
    %c0_68 = arith.constant 0 : index
    %203 = vector.load %arg12[%c0_66, %c0_67, %c0_68] : memref<2x128x64xbf16, #tpu.memory_space<vmem>>, vector<1x128x64xbf16>
    %204 = vector.shape_cast %203 : vector<1x128x64xbf16> to vector<128x64xbf16>
    %205 = arith.truncf %202 : vector<32x128xf32> to vector<32x128xbf16>
    %cst_69 = arith.constant dense<0.000000e+00> : vector<32x64xf32>
    %206 = tpu.matmul %205, %204, %cst_69 {dimension_numbers = #tpu.dot_dimension_numbers<[1], [0], [0], [1], [0, 0, 1, 1], [], []>} : vector<32x128xbf16>, vector<128x64xbf16>, vector<32x64xf32> -> vector<32x64xf32>
    %207 = arith.addf %157, %206 : vector<32x64xf32>
    %c0_70 = arith.constant 0 : index
    %c0_71 = arith.constant 0 : index
    %c0_72 = arith.constant 0 : index
    %208 = vector.load %arg13[%c0_70, %c0_71, %c0_72] : memref<2x1x64xf32, #tpu.memory_space<vmem>>, vector<1x1x64xf32>
    %209 = vector.shape_cast %208 : vector<1x1x64xf32> to vector<1x64xf32>
    %210 = vector.broadcast %209 : vector<1x64xf32> to vector<32x64xf32>
    %211 = arith.addf %207, %210 : vector<32x64xf32>
    %c1 = arith.constant 1 : index
    %c0_73 = arith.constant 0 : index
    %c0_74 = arith.constant 0 : index
    %212 = vector.load %arg4[%c1, %c0_73, %c0_74] : memref<2x2x64xf32, #tpu.memory_space<vmem>>, vector<1x2x64xf32>
    %213 = vector.shape_cast %212 : vector<1x2x64xf32> to vector<2x64xf32>
    %214 = vector.extract_strided_slice %213 {offsets = [0, 0], sizes = [1, 64], strides = [1, 1]} : vector<2x64xf32> to vector<1x64xf32>
    %215 = vector.extract_strided_slice %213 {offsets = [1, 0], sizes = [1, 64], strides = [1, 1]} : vector<2x64xf32> to vector<1x64xf32>
    %cst_75 = arith.constant dense<0.000000e+00> : vector<32xf32>
    %216 = vector.multi_reduction <add>, %211, %cst_75 [1] : vector<32x64xf32> to vector<32xf32>
    %217 = vector.shape_cast %216 : vector<32xf32> to vector<32x1xf32>
    %cst_76 = arith.constant 6.400000e+01 : f32
    %218 = vector.broadcast %cst_76 : f32 to vector<32x1xf32>
    %219 = arith.divf %217, %218 : vector<32x1xf32>
    %220 = vector.broadcast %219 : vector<32x1xf32> to vector<32x64xf32>
    %221 = arith.subf %211, %220 : vector<32x64xf32>
    %222 = arith.mulf %221, %221 : vector<32x64xf32>
    %cst_77 = arith.constant dense<0.000000e+00> : vector<32xf32>
    %223 = vector.multi_reduction <add>, %222, %cst_77 [1] : vector<32x64xf32> to vector<32xf32>
    %224 = vector.shape_cast %223 : vector<32xf32> to vector<32x1xf32>
    %cst_78 = arith.constant 6.400000e+01 : f32
    %225 = vector.broadcast %cst_78 : f32 to vector<32x1xf32>
    %226 = arith.divf %224, %225 : vector<32x1xf32>
    %cst_79 = arith.constant 9.99999997E-7 : f32
    %227 = vector.broadcast %cst_79 : f32 to vector<32x1xf32>
    %228 = arith.addf %226, %227 : vector<32x1xf32>
    %229 = math.rsqrt %228 : vector<32x1xf32>
    %230 = vector.broadcast %229 : vector<32x1xf32> to vector<32x64xf32>
    %231 = arith.mulf %221, %230 : vector<32x64xf32>
    %232 = vector.broadcast %214 : vector<1x64xf32> to vector<32x64xf32>
    %233 = arith.mulf %231, %232 : vector<32x64xf32>
    %234 = vector.broadcast %215 : vector<1x64xf32> to vector<32x64xf32>
    %235 = arith.addf %233, %234 : vector<32x64xf32>
    %c1_80 = arith.constant 1 : index
    %c0_81 = arith.constant 0 : index
    %c0_82 = arith.constant 0 : index
    %236 = vector.load %arg5[%c1_80, %c0_81, %c0_82] : memref<2x64x192xbf16, #tpu.memory_space<vmem>>, vector<1x64x192xbf16>
    %237 = vector.shape_cast %236 : vector<1x64x192xbf16> to vector<64x192xbf16>
    %238 = arith.truncf %235 : vector<32x64xf32> to vector<32x64xbf16>
    %cst_83 = arith.constant dense<0.000000e+00> : vector<32x192xf32>
    %239 = tpu.matmul %238, %237, %cst_83 {dimension_numbers = #tpu.dot_dimension_numbers<[1], [0], [0], [1], [0, 0, 1, 1], [], []>} : vector<32x64xbf16>, vector<64x192xbf16>, vector<32x192xf32> -> vector<32x192xf32>
    %c1_84 = arith.constant 1 : index
    %c0_85 = arith.constant 0 : index
    %c0_86 = arith.constant 0 : index
    %240 = vector.load %arg6[%c1_84, %c0_85, %c0_86] : memref<2x1x192xf32, #tpu.memory_space<vmem>>, vector<1x1x192xf32>
    %241 = vector.shape_cast %240 : vector<1x1x192xf32> to vector<1x192xf32>
    %242 = vector.broadcast %241 : vector<1x192xf32> to vector<32x192xf32>
    %243 = arith.addf %239, %242 : vector<32x192xf32>
    %c1_87 = arith.constant 1 : index
    %c0_88 = arith.constant 0 : index
    %c0_89 = arith.constant 0 : index
    %244 = vector.load %arg7[%c1_87, %c0_88, %c0_89] : memref<2x64x64xbf16, #tpu.memory_space<vmem>>, vector<1x64x64xbf16>
    %245 = vector.shape_cast %244 : vector<1x64x64xbf16> to vector<64x64xbf16>
    %cst_90 = arith.constant 0.000000e+00 : f32
    %246 = vector.broadcast %cst_90 : f32 to vector<32x64xf32>
    %247 = vector.extract_strided_slice %243 {offsets = [0, 0], sizes = [32, 16], strides = [1, 1]} : vector<32x192xf32> to vector<32x16xf32>
    %248 = vector.shape_cast %247 : vector<32x16xf32> to vector<2x16x16xf32>
    %249 = vector.extract_strided_slice %243 {offsets = [0, 64], sizes = [32, 16], strides = [1, 1]} : vector<32x192xf32> to vector<32x16xf32>
    %250 = vector.shape_cast %249 : vector<32x16xf32> to vector<2x16x16xf32>
    %251 = vector.extract_strided_slice %243 {offsets = [0, 128], sizes = [32, 16], strides = [1, 1]} : vector<32x192xf32> to vector<32x16xf32>
    %252 = vector.shape_cast %251 : vector<32x16xf32> to vector<2x16x16xf32>
    %253 = arith.truncf %248 : vector<2x16x16xf32> to vector<2x16x16xbf16>
    %254 = arith.truncf %250 : vector<2x16x16xf32> to vector<2x16x16xbf16>
    %cst_91 = arith.constant dense<0.000000e+00> : vector<2x16x16xf32>
    %255 = tpu.matmul %253, %254, %cst_91 {dimension_numbers = #tpu.dot_dimension_numbers<[2], [2], [1], [1], [0, 0, 0, 1, 1, 1], [0], [0]>} : vector<2x16x16xbf16>, vector<2x16x16xbf16>, vector<2x16x16xf32> -> vector<2x16x16xf32>
    %cst_92 = arith.constant dense<0xFF800000> : vector<2x16xf32>
    %256 = vector.multi_reduction <maximumf>, %255, %cst_92 [2] : vector<2x16x16xf32> to vector<2x16xf32>
    %257 = vector.shape_cast %256 : vector<2x16xf32> to vector<2x16x1xf32>
    %258 = vector.broadcast %257 : vector<2x16x1xf32> to vector<2x16x16xf32>
    %259 = arith.subf %255, %258 : vector<2x16x16xf32>
    %260 = math.exp %259 : vector<2x16x16xf32>
    %cst_93 = arith.constant dense<0.000000e+00> : vector<2x16xf32>
    %261 = vector.multi_reduction <add>, %260, %cst_93 [2] : vector<2x16x16xf32> to vector<2x16xf32>
    %262 = vector.shape_cast %261 : vector<2x16xf32> to vector<2x16x1xf32>
    %263 = tpu.reciprocal %262 {approx = true} : vector<2x16x1xf32> -> vector<2x16x1xf32>
    %264 = vector.broadcast %263 : vector<2x16x1xf32> to vector<2x16x16xf32>
    %265 = arith.mulf %260, %264 : vector<2x16x16xf32>
    %266 = arith.truncf %265 : vector<2x16x16xf32> to vector<2x16x16xbf16>
    %267 = arith.truncf %252 : vector<2x16x16xf32> to vector<2x16x16xbf16>
    %cst_94 = arith.constant dense<0.000000e+00> : vector<2x16x16xf32>
    %268 = tpu.matmul %266, %267, %cst_94 {dimension_numbers = #tpu.dot_dimension_numbers<[2], [1], [1], [2], [0, 0, 0, 1, 1, 2], [0], [0]>} : vector<2x16x16xbf16>, vector<2x16x16xbf16>, vector<2x16x16xf32> -> vector<2x16x16xf32>
    %269 = vector.shape_cast %268 : vector<2x16x16xf32> to vector<32x16xf32>
    %270 = vector.extract_strided_slice %245 {offsets = [0, 0], sizes = [16, 64], strides = [1, 1]} : vector<64x64xbf16> to vector<16x64xbf16>
    %271 = arith.truncf %269 : vector<32x16xf32> to vector<32x16xbf16>
    %cst_95 = arith.constant dense<0.000000e+00> : vector<32x64xf32>
    %272 = tpu.matmul %271, %270, %cst_95 {dimension_numbers = #tpu.dot_dimension_numbers<[1], [0], [0], [1], [0, 0, 1, 1], [], []>} : vector<32x16xbf16>, vector<16x64xbf16>, vector<32x64xf32> -> vector<32x64xf32>
    %273 = arith.addf %246, %272 : vector<32x64xf32>
    %274 = vector.extract_strided_slice %243 {offsets = [0, 16], sizes = [32, 16], strides = [1, 1]} : vector<32x192xf32> to vector<32x16xf32>
    %275 = vector.shape_cast %274 : vector<32x16xf32> to vector<2x16x16xf32>
    %276 = vector.extract_strided_slice %243 {offsets = [0, 80], sizes = [32, 16], strides = [1, 1]} : vector<32x192xf32> to vector<32x16xf32>
    %277 = vector.shape_cast %276 : vector<32x16xf32> to vector<2x16x16xf32>
    %278 = vector.extract_strided_slice %243 {offsets = [0, 144], sizes = [32, 16], strides = [1, 1]} : vector<32x192xf32> to vector<32x16xf32>
    %279 = vector.shape_cast %278 : vector<32x16xf32> to vector<2x16x16xf32>
    %280 = arith.truncf %275 : vector<2x16x16xf32> to vector<2x16x16xbf16>
    %281 = arith.truncf %277 : vector<2x16x16xf32> to vector<2x16x16xbf16>
    %cst_96 = arith.constant dense<0.000000e+00> : vector<2x16x16xf32>
    %282 = tpu.matmul %280, %281, %cst_96 {dimension_numbers = #tpu.dot_dimension_numbers<[2], [2], [1], [1], [0, 0, 0, 1, 1, 1], [0], [0]>} : vector<2x16x16xbf16>, vector<2x16x16xbf16>, vector<2x16x16xf32> -> vector<2x16x16xf32>
    %cst_97 = arith.constant dense<0xFF800000> : vector<2x16xf32>
    %283 = vector.multi_reduction <maximumf>, %282, %cst_97 [2] : vector<2x16x16xf32> to vector<2x16xf32>
    %284 = vector.shape_cast %283 : vector<2x16xf32> to vector<2x16x1xf32>
    %285 = vector.broadcast %284 : vector<2x16x1xf32> to vector<2x16x16xf32>
    %286 = arith.subf %282, %285 : vector<2x16x16xf32>
    %287 = math.exp %286 : vector<2x16x16xf32>
    %cst_98 = arith.constant dense<0.000000e+00> : vector<2x16xf32>
    %288 = vector.multi_reduction <add>, %287, %cst_98 [2] : vector<2x16x16xf32> to vector<2x16xf32>
    %289 = vector.shape_cast %288 : vector<2x16xf32> to vector<2x16x1xf32>
    %290 = tpu.reciprocal %289 {approx = true} : vector<2x16x1xf32> -> vector<2x16x1xf32>
    %291 = vector.broadcast %290 : vector<2x16x1xf32> to vector<2x16x16xf32>
    %292 = arith.mulf %287, %291 : vector<2x16x16xf32>
    %293 = arith.truncf %292 : vector<2x16x16xf32> to vector<2x16x16xbf16>
    %294 = arith.truncf %279 : vector<2x16x16xf32> to vector<2x16x16xbf16>
    %cst_99 = arith.constant dense<0.000000e+00> : vector<2x16x16xf32>
    %295 = tpu.matmul %293, %294, %cst_99 {dimension_numbers = #tpu.dot_dimension_numbers<[2], [1], [1], [2], [0, 0, 0, 1, 1, 2], [0], [0]>} : vector<2x16x16xbf16>, vector<2x16x16xbf16>, vector<2x16x16xf32> -> vector<2x16x16xf32>
    %296 = vector.shape_cast %295 : vector<2x16x16xf32> to vector<32x16xf32>
    %297 = vector.extract_strided_slice %245 {offsets = [16, 0], sizes = [16, 64], strides = [1, 1]} : vector<64x64xbf16> to vector<16x64xbf16>
    %298 = arith.truncf %296 : vector<32x16xf32> to vector<32x16xbf16>
    %cst_100 = arith.constant dense<0.000000e+00> : vector<32x64xf32>
    %299 = tpu.matmul %298, %297, %cst_100 {dimension_numbers = #tpu.dot_dimension_numbers<[1], [0], [0], [1], [0, 0, 1, 1], [], []>} : vector<32x16xbf16>, vector<16x64xbf16>, vector<32x64xf32> -> vector<32x64xf32>
    %300 = arith.addf %273, %299 : vector<32x64xf32>
    %301 = vector.extract_strided_slice %243 {offsets = [0, 32], sizes = [32, 16], strides = [1, 1]} : vector<32x192xf32> to vector<32x16xf32>
    %302 = vector.shape_cast %301 : vector<32x16xf32> to vector<2x16x16xf32>
    %303 = vector.extract_strided_slice %243 {offsets = [0, 96], sizes = [32, 16], strides = [1, 1]} : vector<32x192xf32> to vector<32x16xf32>
    %304 = vector.shape_cast %303 : vector<32x16xf32> to vector<2x16x16xf32>
    %305 = vector.extract_strided_slice %243 {offsets = [0, 160], sizes = [32, 16], strides = [1, 1]} : vector<32x192xf32> to vector<32x16xf32>
    %306 = vector.shape_cast %305 : vector<32x16xf32> to vector<2x16x16xf32>
    %307 = arith.truncf %302 : vector<2x16x16xf32> to vector<2x16x16xbf16>
    %308 = arith.truncf %304 : vector<2x16x16xf32> to vector<2x16x16xbf16>
    %cst_101 = arith.constant dense<0.000000e+00> : vector<2x16x16xf32>
    %309 = tpu.matmul %307, %308, %cst_101 {dimension_numbers = #tpu.dot_dimension_numbers<[2], [2], [1], [1], [0, 0, 0, 1, 1, 1], [0], [0]>} : vector<2x16x16xbf16>, vector<2x16x16xbf16>, vector<2x16x16xf32> -> vector<2x16x16xf32>
    %cst_102 = arith.constant dense<0xFF800000> : vector<2x16xf32>
    %310 = vector.multi_reduction <maximumf>, %309, %cst_102 [2] : vector<2x16x16xf32> to vector<2x16xf32>
    %311 = vector.shape_cast %310 : vector<2x16xf32> to vector<2x16x1xf32>
    %312 = vector.broadcast %311 : vector<2x16x1xf32> to vector<2x16x16xf32>
    %313 = arith.subf %309, %312 : vector<2x16x16xf32>
    %314 = math.exp %313 : vector<2x16x16xf32>
    %cst_103 = arith.constant dense<0.000000e+00> : vector<2x16xf32>
    %315 = vector.multi_reduction <add>, %314, %cst_103 [2] : vector<2x16x16xf32> to vector<2x16xf32>
    %316 = vector.shape_cast %315 : vector<2x16xf32> to vector<2x16x1xf32>
    %317 = tpu.reciprocal %316 {approx = true} : vector<2x16x1xf32> -> vector<2x16x1xf32>
    %318 = vector.broadcast %317 : vector<2x16x1xf32> to vector<2x16x16xf32>
    %319 = arith.mulf %314, %318 : vector<2x16x16xf32>
    %320 = arith.truncf %319 : vector<2x16x16xf32> to vector<2x16x16xbf16>
    %321 = arith.truncf %306 : vector<2x16x16xf32> to vector<2x16x16xbf16>
    %cst_104 = arith.constant dense<0.000000e+00> : vector<2x16x16xf32>
    %322 = tpu.matmul %320, %321, %cst_104 {dimension_numbers = #tpu.dot_dimension_numbers<[2], [1], [1], [2], [0, 0, 0, 1, 1, 2], [0], [0]>} : vector<2x16x16xbf16>, vector<2x16x16xbf16>, vector<2x16x16xf32> -> vector<2x16x16xf32>
    %323 = vector.shape_cast %322 : vector<2x16x16xf32> to vector<32x16xf32>
    %324 = vector.extract_strided_slice %245 {offsets = [32, 0], sizes = [16, 64], strides = [1, 1]} : vector<64x64xbf16> to vector<16x64xbf16>
    %325 = arith.truncf %323 : vector<32x16xf32> to vector<32x16xbf16>
    %cst_105 = arith.constant dense<0.000000e+00> : vector<32x64xf32>
    %326 = tpu.matmul %325, %324, %cst_105 {dimension_numbers = #tpu.dot_dimension_numbers<[1], [0], [0], [1], [0, 0, 1, 1], [], []>} : vector<32x16xbf16>, vector<16x64xbf16>, vector<32x64xf32> -> vector<32x64xf32>
    %327 = arith.addf %300, %326 : vector<32x64xf32>
    %328 = vector.extract_strided_slice %243 {offsets = [0, 48], sizes = [32, 16], strides = [1, 1]} : vector<32x192xf32> to vector<32x16xf32>
    %329 = vector.shape_cast %328 : vector<32x16xf32> to vector<2x16x16xf32>
    %330 = vector.extract_strided_slice %243 {offsets = [0, 112], sizes = [32, 16], strides = [1, 1]} : vector<32x192xf32> to vector<32x16xf32>
    %331 = vector.shape_cast %330 : vector<32x16xf32> to vector<2x16x16xf32>
    %332 = vector.extract_strided_slice %243 {offsets = [0, 176], sizes = [32, 16], strides = [1, 1]} : vector<32x192xf32> to vector<32x16xf32>
    %333 = vector.shape_cast %332 : vector<32x16xf32> to vector<2x16x16xf32>
    %334 = arith.truncf %329 : vector<2x16x16xf32> to vector<2x16x16xbf16>
    %335 = arith.truncf %331 : vector<2x16x16xf32> to vector<2x16x16xbf16>
    %cst_106 = arith.constant dense<0.000000e+00> : vector<2x16x16xf32>
    %336 = tpu.matmul %334, %335, %cst_106 {dimension_numbers = #tpu.dot_dimension_numbers<[2], [2], [1], [1], [0, 0, 0, 1, 1, 1], [0], [0]>} : vector<2x16x16xbf16>, vector<2x16x16xbf16>, vector<2x16x16xf32> -> vector<2x16x16xf32>
    %cst_107 = arith.constant dense<0xFF800000> : vector<2x16xf32>
    %337 = vector.multi_reduction <maximumf>, %336, %cst_107 [2] : vector<2x16x16xf32> to vector<2x16xf32>
    %338 = vector.shape_cast %337 : vector<2x16xf32> to vector<2x16x1xf32>
    %339 = vector.broadcast %338 : vector<2x16x1xf32> to vector<2x16x16xf32>
    %340 = arith.subf %336, %339 : vector<2x16x16xf32>
    %341 = math.exp %340 : vector<2x16x16xf32>
    %cst_108 = arith.constant dense<0.000000e+00> : vector<2x16xf32>
    %342 = vector.multi_reduction <add>, %341, %cst_108 [2] : vector<2x16x16xf32> to vector<2x16xf32>
    %343 = vector.shape_cast %342 : vector<2x16xf32> to vector<2x16x1xf32>
    %344 = tpu.reciprocal %343 {approx = true} : vector<2x16x1xf32> -> vector<2x16x1xf32>
    %345 = vector.broadcast %344 : vector<2x16x1xf32> to vector<2x16x16xf32>
    %346 = arith.mulf %341, %345 : vector<2x16x16xf32>
    %347 = arith.truncf %346 : vector<2x16x16xf32> to vector<2x16x16xbf16>
    %348 = arith.truncf %333 : vector<2x16x16xf32> to vector<2x16x16xbf16>
    %cst_109 = arith.constant dense<0.000000e+00> : vector<2x16x16xf32>
    %349 = tpu.matmul %347, %348, %cst_109 {dimension_numbers = #tpu.dot_dimension_numbers<[2], [1], [1], [2], [0, 0, 0, 1, 1, 2], [0], [0]>} : vector<2x16x16xbf16>, vector<2x16x16xbf16>, vector<2x16x16xf32> -> vector<2x16x16xf32>
    %350 = vector.shape_cast %349 : vector<2x16x16xf32> to vector<32x16xf32>
    %351 = vector.extract_strided_slice %245 {offsets = [48, 0], sizes = [16, 64], strides = [1, 1]} : vector<64x64xbf16> to vector<16x64xbf16>
    %352 = arith.truncf %350 : vector<32x16xf32> to vector<32x16xbf16>
    %cst_110 = arith.constant dense<0.000000e+00> : vector<32x64xf32>
    %353 = tpu.matmul %352, %351, %cst_110 {dimension_numbers = #tpu.dot_dimension_numbers<[1], [0], [0], [1], [0, 0, 1, 1], [], []>} : vector<32x16xbf16>, vector<16x64xbf16>, vector<32x64xf32> -> vector<32x64xf32>
    %354 = arith.addf %327, %353 : vector<32x64xf32>
    %355 = arith.addf %211, %354 : vector<32x64xf32>
    %c1_111 = arith.constant 1 : index
    %c0_112 = arith.constant 0 : index
    %c0_113 = arith.constant 0 : index
    %356 = vector.load %arg8[%c1_111, %c0_112, %c0_113] : memref<2x1x64xf32, #tpu.memory_space<vmem>>, vector<1x1x64xf32>
    %357 = vector.shape_cast %356 : vector<1x1x64xf32> to vector<1x64xf32>
    %358 = vector.broadcast %357 : vector<1x64xf32> to vector<32x64xf32>
    %359 = arith.addf %355, %358 : vector<32x64xf32>
    %c1_114 = arith.constant 1 : index
    %c0_115 = arith.constant 0 : index
    %c0_116 = arith.constant 0 : index
    %360 = vector.load %arg9[%c1_114, %c0_115, %c0_116] : memref<2x2x64xf32, #tpu.memory_space<vmem>>, vector<1x2x64xf32>
    %361 = vector.shape_cast %360 : vector<1x2x64xf32> to vector<2x64xf32>
    %362 = vector.extract_strided_slice %361 {offsets = [0, 0], sizes = [1, 64], strides = [1, 1]} : vector<2x64xf32> to vector<1x64xf32>
    %363 = vector.extract_strided_slice %361 {offsets = [1, 0], sizes = [1, 64], strides = [1, 1]} : vector<2x64xf32> to vector<1x64xf32>
    %cst_117 = arith.constant dense<0.000000e+00> : vector<32xf32>
    %364 = vector.multi_reduction <add>, %359, %cst_117 [1] : vector<32x64xf32> to vector<32xf32>
    %365 = vector.shape_cast %364 : vector<32xf32> to vector<32x1xf32>
    %cst_118 = arith.constant 6.400000e+01 : f32
    %366 = vector.broadcast %cst_118 : f32 to vector<32x1xf32>
    %367 = arith.divf %365, %366 : vector<32x1xf32>
    %368 = vector.broadcast %367 : vector<32x1xf32> to vector<32x64xf32>
    %369 = arith.subf %359, %368 : vector<32x64xf32>
    %370 = arith.mulf %369, %369 : vector<32x64xf32>
    %cst_119 = arith.constant dense<0.000000e+00> : vector<32xf32>
    %371 = vector.multi_reduction <add>, %370, %cst_119 [1] : vector<32x64xf32> to vector<32xf32>
    %372 = vector.shape_cast %371 : vector<32xf32> to vector<32x1xf32>
    %cst_120 = arith.constant 6.400000e+01 : f32
    %373 = vector.broadcast %cst_120 : f32 to vector<32x1xf32>
    %374 = arith.divf %372, %373 : vector<32x1xf32>
    %cst_121 = arith.constant 9.99999997E-7 : f32
    %375 = vector.broadcast %cst_121 : f32 to vector<32x1xf32>
    %376 = arith.addf %374, %375 : vector<32x1xf32>
    %377 = math.rsqrt %376 : vector<32x1xf32>
    %378 = vector.broadcast %377 : vector<32x1xf32> to vector<32x64xf32>
    %379 = arith.mulf %369, %378 : vector<32x64xf32>
    %380 = vector.broadcast %362 : vector<1x64xf32> to vector<32x64xf32>
    %381 = arith.mulf %379, %380 : vector<32x64xf32>
    %382 = vector.broadcast %363 : vector<1x64xf32> to vector<32x64xf32>
    %383 = arith.addf %381, %382 : vector<32x64xf32>
    %c1_122 = arith.constant 1 : index
    %c0_123 = arith.constant 0 : index
    %c0_124 = arith.constant 0 : index
    %384 = vector.load %arg10[%c1_122, %c0_123, %c0_124] : memref<2x64x128xbf16, #tpu.memory_space<vmem>>, vector<1x64x128xbf16>
    %385 = vector.shape_cast %384 : vector<1x64x128xbf16> to vector<64x128xbf16>
    %386 = arith.truncf %383 : vector<32x64xf32> to vector<32x64xbf16>
    %cst_125 = arith.constant dense<0.000000e+00> : vector<32x128xf32>
    %387 = tpu.matmul %386, %385, %cst_125 {dimension_numbers = #tpu.dot_dimension_numbers<[1], [0], [0], [1], [0, 0, 1, 1], [], []>} : vector<32x64xbf16>, vector<64x128xbf16>, vector<32x128xf32> -> vector<32x128xf32>
    %c1_126 = arith.constant 1 : index
    %c0_127 = arith.constant 0 : index
    %c0_128 = arith.constant 0 : index
    %388 = vector.load %arg11[%c1_126, %c0_127, %c0_128] : memref<2x1x128xf32, #tpu.memory_space<vmem>>, vector<1x1x128xf32>
    %389 = vector.shape_cast %388 : vector<1x1x128xf32> to vector<1x128xf32>
    %390 = vector.broadcast %389 : vector<1x128xf32> to vector<32x128xf32>
    %391 = arith.addf %387, %390 : vector<32x128xf32>
    %392 = arith.mulf %391, %391 : vector<32x128xf32>
    %393 = arith.mulf %391, %392 : vector<32x128xf32>
    %cst_129 = arith.constant 4.471500e-02 : f32
    %394 = vector.broadcast %cst_129 : f32 to vector<32x128xf32>
    %395 = arith.mulf %394, %393 : vector<32x128xf32>
    %396 = arith.addf %391, %395 : vector<32x128xf32>
    %cst_130 = arith.constant 0.797884583 : f32
    %397 = vector.broadcast %cst_130 : f32 to vector<32x128xf32>
    %398 = arith.mulf %397, %396 : vector<32x128xf32>
    %399 = math.tanh %398 : vector<32x128xf32>
    %cst_131 = arith.constant 1.000000e+00 : f32
    %400 = vector.broadcast %cst_131 : f32 to vector<32x128xf32>
    %401 = arith.addf %400, %399 : vector<32x128xf32>
    %cst_132 = arith.constant 5.000000e-01 : f32
    %402 = vector.broadcast %cst_132 : f32 to vector<32x128xf32>
    %403 = arith.mulf %402, %401 : vector<32x128xf32>
    %404 = arith.mulf %391, %403 : vector<32x128xf32>
    %c1_133 = arith.constant 1 : index
    %c0_134 = arith.constant 0 : index
    %c0_135 = arith.constant 0 : index
    %405 = vector.load %arg12[%c1_133, %c0_134, %c0_135] : memref<2x128x64xbf16, #tpu.memory_space<vmem>>, vector<1x128x64xbf16>
    %406 = vector.shape_cast %405 : vector<1x128x64xbf16> to vector<128x64xbf16>
    %407 = arith.truncf %404 : vector<32x128xf32> to vector<32x128xbf16>
    %cst_136 = arith.constant dense<0.000000e+00> : vector<32x64xf32>
    %408 = tpu.matmul %407, %406, %cst_136 {dimension_numbers = #tpu.dot_dimension_numbers<[1], [0], [0], [1], [0, 0, 1, 1], [], []>} : vector<32x128xbf16>, vector<128x64xbf16>, vector<32x64xf32> -> vector<32x64xf32>
    %409 = arith.addf %359, %408 : vector<32x64xf32>
    %c1_137 = arith.constant 1 : index
    %c0_138 = arith.constant 0 : index
    %c0_139 = arith.constant 0 : index
    %410 = vector.load %arg13[%c1_137, %c0_138, %c0_139] : memref<2x1x64xf32, #tpu.memory_space<vmem>>, vector<1x1x64xf32>
    %411 = vector.shape_cast %410 : vector<1x1x64xf32> to vector<1x64xf32>
    %412 = vector.broadcast %411 : vector<1x64xf32> to vector<32x64xf32>
    %413 = arith.addf %409, %412 : vector<32x64xf32>
    %c0_140 = arith.constant 0 : index
    %c0_141 = arith.constant 0 : index
    %414 = vector.load %arg14[%c0_140, %c0_141] : memref<2x64xf32, #tpu.memory_space<vmem>>, vector<2x64xf32>
    %415 = vector.extract_strided_slice %414 {offsets = [0, 0], sizes = [1, 64], strides = [1, 1]} : vector<2x64xf32> to vector<1x64xf32>
    %416 = vector.extract_strided_slice %414 {offsets = [1, 0], sizes = [1, 64], strides = [1, 1]} : vector<2x64xf32> to vector<1x64xf32>
    %cst_142 = arith.constant dense<0.000000e+00> : vector<32xf32>
    %417 = vector.multi_reduction <add>, %413, %cst_142 [1] : vector<32x64xf32> to vector<32xf32>
    %418 = vector.shape_cast %417 : vector<32xf32> to vector<32x1xf32>
    %cst_143 = arith.constant 6.400000e+01 : f32
    %419 = vector.broadcast %cst_143 : f32 to vector<32x1xf32>
    %420 = arith.divf %418, %419 : vector<32x1xf32>
    %421 = vector.broadcast %420 : vector<32x1xf32> to vector<32x64xf32>
    %422 = arith.subf %413, %421 : vector<32x64xf32>
    %423 = arith.mulf %422, %422 : vector<32x64xf32>
    %cst_144 = arith.constant dense<0.000000e+00> : vector<32xf32>
    %424 = vector.multi_reduction <add>, %423, %cst_144 [1] : vector<32x64xf32> to vector<32xf32>
    %425 = vector.shape_cast %424 : vector<32xf32> to vector<32x1xf32>
    %cst_145 = arith.constant 6.400000e+01 : f32
    %426 = vector.broadcast %cst_145 : f32 to vector<32x1xf32>
    %427 = arith.divf %425, %426 : vector<32x1xf32>
    %cst_146 = arith.constant 9.99999997E-7 : f32
    %428 = vector.broadcast %cst_146 : f32 to vector<32x1xf32>
    %429 = arith.addf %427, %428 : vector<32x1xf32>
    %430 = math.rsqrt %429 : vector<32x1xf32>
    %431 = vector.broadcast %430 : vector<32x1xf32> to vector<32x64xf32>
    %432 = arith.mulf %422, %431 : vector<32x64xf32>
    %433 = vector.broadcast %415 : vector<1x64xf32> to vector<32x64xf32>
    %434 = arith.mulf %432, %433 : vector<32x64xf32>
    %435 = vector.broadcast %416 : vector<1x64xf32> to vector<32x64xf32>
    %436 = arith.addf %434, %435 : vector<32x64xf32>
    %437 = vector.extract_strided_slice %436 {offsets = [0, 0], sizes = [16, 64], strides = [1, 1]} : vector<32x64xf32> to vector<16x64xf32>
    %c0_147 = arith.constant 0 : index
    %c0_148 = arith.constant 0 : index
    %438 = vector.load %arg16[%c0_147, %c0_148] : memref<64x2304xbf16, #tpu.memory_space<vmem>>, vector<64x2304xbf16>
    %439 = arith.truncf %437 : vector<16x64xf32> to vector<16x64xbf16>
    %cst_149 = arith.constant dense<0.000000e+00> : vector<16x2304xf32>
    %440 = tpu.matmul %439, %438, %cst_149 {dimension_numbers = #tpu.dot_dimension_numbers<[1], [0], [0], [1], [0, 0, 1, 1], [], []>} : vector<16x64xbf16>, vector<64x2304xbf16>, vector<16x2304xf32> -> vector<16x2304xf32>
    %cst_150 = arith.constant 0.000000e+00 : f32
    %441 = vector.broadcast %cst_150 : f32 to vector<16x256xf32>
    %c0_151 = arith.constant 0 : index
    %c0_152 = arith.constant 0 : index
    %c0_153 = arith.constant 0 : index
    %442 = vector.load %arg15[%c0_151, %c0_152, %c0_153] : memref<9x16x16xbf16, #tpu.memory_space<vmem>>, vector<1x16x16xbf16>
    %443 = vector.shape_cast %442 : vector<1x16x16xbf16> to vector<16x16xbf16>
    %444 = vector.extract_strided_slice %440 {offsets = [0, 0], sizes = [16, 256], strides = [1, 1]} : vector<16x2304xf32> to vector<16x256xf32>
    %445 = arith.truncf %444 : vector<16x256xf32> to vector<16x256xbf16>
    %cst_154 = arith.constant dense<0.000000e+00> : vector<16x256xf32>
    %446 = tpu.matmul %443, %445, %cst_154 {dimension_numbers = #tpu.dot_dimension_numbers<[1], [0], [0], [1], [0, 0, 1, 1], [], []>} : vector<16x16xbf16>, vector<16x256xbf16>, vector<16x256xf32> -> vector<16x256xf32>
    %447 = arith.addf %441, %446 : vector<16x256xf32>
    %c1_155 = arith.constant 1 : index
    %c0_156 = arith.constant 0 : index
    %c0_157 = arith.constant 0 : index
    %448 = vector.load %arg15[%c1_155, %c0_156, %c0_157] : memref<9x16x16xbf16, #tpu.memory_space<vmem>>, vector<1x16x16xbf16>
    %449 = vector.shape_cast %448 : vector<1x16x16xbf16> to vector<16x16xbf16>
    %450 = vector.extract_strided_slice %440 {offsets = [0, 256], sizes = [16, 256], strides = [1, 1]} : vector<16x2304xf32> to vector<16x256xf32>
    %451 = arith.truncf %450 : vector<16x256xf32> to vector<16x256xbf16>
    %cst_158 = arith.constant dense<0.000000e+00> : vector<16x256xf32>
    %452 = tpu.matmul %449, %451, %cst_158 {dimension_numbers = #tpu.dot_dimension_numbers<[1], [0], [0], [1], [0, 0, 1, 1], [], []>} : vector<16x16xbf16>, vector<16x256xbf16>, vector<16x256xf32> -> vector<16x256xf32>
    %453 = arith.addf %447, %452 : vector<16x256xf32>
    %c2 = arith.constant 2 : index
    %c0_159 = arith.constant 0 : index
    %c0_160 = arith.constant 0 : index
    %454 = vector.load %arg15[%c2, %c0_159, %c0_160] : memref<9x16x16xbf16, #tpu.memory_space<vmem>>, vector<1x16x16xbf16>
    %455 = vector.shape_cast %454 : vector<1x16x16xbf16> to vector<16x16xbf16>
    %456 = vector.extract_strided_slice %440 {offsets = [0, 512], sizes = [16, 256], strides = [1, 1]} : vector<16x2304xf32> to vector<16x256xf32>
    %457 = arith.truncf %456 : vector<16x256xf32> to vector<16x256xbf16>
    %cst_161 = arith.constant dense<0.000000e+00> : vector<16x256xf32>
    %458 = tpu.matmul %455, %457, %cst_161 {dimension_numbers = #tpu.dot_dimension_numbers<[1], [0], [0], [1], [0, 0, 1, 1], [], []>} : vector<16x16xbf16>, vector<16x256xbf16>, vector<16x256xf32> -> vector<16x256xf32>
    %459 = arith.addf %453, %458 : vector<16x256xf32>
    %c3 = arith.constant 3 : index
    %c0_162 = arith.constant 0 : index
    %c0_163 = arith.constant 0 : index
    %460 = vector.load %arg15[%c3, %c0_162, %c0_163] : memref<9x16x16xbf16, #tpu.memory_space<vmem>>, vector<1x16x16xbf16>
    %461 = vector.shape_cast %460 : vector<1x16x16xbf16> to vector<16x16xbf16>
    %462 = vector.extract_strided_slice %440 {offsets = [0, 768], sizes = [16, 256], strides = [1, 1]} : vector<16x2304xf32> to vector<16x256xf32>
    %463 = arith.truncf %462 : vector<16x256xf32> to vector<16x256xbf16>
    %cst_164 = arith.constant dense<0.000000e+00> : vector<16x256xf32>
    %464 = tpu.matmul %461, %463, %cst_164 {dimension_numbers = #tpu.dot_dimension_numbers<[1], [0], [0], [1], [0, 0, 1, 1], [], []>} : vector<16x16xbf16>, vector<16x256xbf16>, vector<16x256xf32> -> vector<16x256xf32>
    %465 = arith.addf %459, %464 : vector<16x256xf32>
    %c4 = arith.constant 4 : index
    %c0_165 = arith.constant 0 : index
    %c0_166 = arith.constant 0 : index
    %466 = vector.load %arg15[%c4, %c0_165, %c0_166] : memref<9x16x16xbf16, #tpu.memory_space<vmem>>, vector<1x16x16xbf16>
    %467 = vector.shape_cast %466 : vector<1x16x16xbf16> to vector<16x16xbf16>
    %468 = vector.extract_strided_slice %440 {offsets = [0, 1024], sizes = [16, 256], strides = [1, 1]} : vector<16x2304xf32> to vector<16x256xf32>
    %469 = arith.truncf %468 : vector<16x256xf32> to vector<16x256xbf16>
    %cst_167 = arith.constant dense<0.000000e+00> : vector<16x256xf32>
    %470 = tpu.matmul %467, %469, %cst_167 {dimension_numbers = #tpu.dot_dimension_numbers<[1], [0], [0], [1], [0, 0, 1, 1], [], []>} : vector<16x16xbf16>, vector<16x256xbf16>, vector<16x256xf32> -> vector<16x256xf32>
    %471 = arith.addf %465, %470 : vector<16x256xf32>
    %c5 = arith.constant 5 : index
    %c0_168 = arith.constant 0 : index
    %c0_169 = arith.constant 0 : index
    %472 = vector.load %arg15[%c5, %c0_168, %c0_169] : memref<9x16x16xbf16, #tpu.memory_space<vmem>>, vector<1x16x16xbf16>
    %473 = vector.shape_cast %472 : vector<1x16x16xbf16> to vector<16x16xbf16>
    %474 = vector.extract_strided_slice %440 {offsets = [0, 1280], sizes = [16, 256], strides = [1, 1]} : vector<16x2304xf32> to vector<16x256xf32>
    %475 = arith.truncf %474 : vector<16x256xf32> to vector<16x256xbf16>
    %cst_170 = arith.constant dense<0.000000e+00> : vector<16x256xf32>
    %476 = tpu.matmul %473, %475, %cst_170 {dimension_numbers = #tpu.dot_dimension_numbers<[1], [0], [0], [1], [0, 0, 1, 1], [], []>} : vector<16x16xbf16>, vector<16x256xbf16>, vector<16x256xf32> -> vector<16x256xf32>
    %477 = arith.addf %471, %476 : vector<16x256xf32>
    %c6 = arith.constant 6 : index
    %c0_171 = arith.constant 0 : index
    %c0_172 = arith.constant 0 : index
    %478 = vector.load %arg15[%c6, %c0_171, %c0_172] : memref<9x16x16xbf16, #tpu.memory_space<vmem>>, vector<1x16x16xbf16>
    %479 = vector.shape_cast %478 : vector<1x16x16xbf16> to vector<16x16xbf16>
    %480 = vector.extract_strided_slice %440 {offsets = [0, 1536], sizes = [16, 256], strides = [1, 1]} : vector<16x2304xf32> to vector<16x256xf32>
    %481 = arith.truncf %480 : vector<16x256xf32> to vector<16x256xbf16>
    %cst_173 = arith.constant dense<0.000000e+00> : vector<16x256xf32>
    %482 = tpu.matmul %479, %481, %cst_173 {dimension_numbers = #tpu.dot_dimension_numbers<[1], [0], [0], [1], [0, 0, 1, 1], [], []>} : vector<16x16xbf16>, vector<16x256xbf16>, vector<16x256xf32> -> vector<16x256xf32>
    %483 = arith.addf %477, %482 : vector<16x256xf32>
    %c7 = arith.constant 7 : index
    %c0_174 = arith.constant 0 : index
    %c0_175 = arith.constant 0 : index
    %484 = vector.load %arg15[%c7, %c0_174, %c0_175] : memref<9x16x16xbf16, #tpu.memory_space<vmem>>, vector<1x16x16xbf16>
    %485 = vector.shape_cast %484 : vector<1x16x16xbf16> to vector<16x16xbf16>
    %486 = vector.extract_strided_slice %440 {offsets = [0, 1792], sizes = [16, 256], strides = [1, 1]} : vector<16x2304xf32> to vector<16x256xf32>
    %487 = arith.truncf %486 : vector<16x256xf32> to vector<16x256xbf16>
    %cst_176 = arith.constant dense<0.000000e+00> : vector<16x256xf32>
    %488 = tpu.matmul %485, %487, %cst_176 {dimension_numbers = #tpu.dot_dimension_numbers<[1], [0], [0], [1], [0, 0, 1, 1], [], []>} : vector<16x16xbf16>, vector<16x256xbf16>, vector<16x256xf32> -> vector<16x256xf32>
    %489 = arith.addf %483, %488 : vector<16x256xf32>
    %c8 = arith.constant 8 : index
    %c0_177 = arith.constant 0 : index
    %c0_178 = arith.constant 0 : index
    %490 = vector.load %arg15[%c8, %c0_177, %c0_178] : memref<9x16x16xbf16, #tpu.memory_space<vmem>>, vector<1x16x16xbf16>
    %491 = vector.shape_cast %490 : vector<1x16x16xbf16> to vector<16x16xbf16>
    %492 = vector.extract_strided_slice %440 {offsets = [0, 2048], sizes = [16, 256], strides = [1, 1]} : vector<16x2304xf32> to vector<16x256xf32>
    %493 = arith.truncf %492 : vector<16x256xf32> to vector<16x256xbf16>
    %cst_179 = arith.constant dense<0.000000e+00> : vector<16x256xf32>
    %494 = tpu.matmul %491, %493, %cst_179 {dimension_numbers = #tpu.dot_dimension_numbers<[1], [0], [0], [1], [0, 0, 1, 1], [], []>} : vector<16x16xbf16>, vector<16x256xbf16>, vector<16x256xf32> -> vector<16x256xf32>
    %495 = arith.addf %489, %494 : vector<16x256xf32>
    %c0_180 = arith.constant 0 : index
    %c0_181 = arith.constant 0 : index
    %496 = vector.load %arg17[%c0_180, %c0_181] : memref<1x256xf32, #tpu.memory_space<vmem>>, vector<1x256xf32>
    %497 = vector.broadcast %496 : vector<1x256xf32> to vector<16x256xf32>
    %498 = arith.addf %495, %497 : vector<16x256xf32>
    %cst_182 = arith.constant 0.000000e+00 : f32
    %499 = vector.broadcast %cst_182 : f32 to vector<16x256xf32>
    %500 = arith.maximumf %498, %499 : vector<16x256xf32>
    %c0_183 = arith.constant 0 : index
    %c0_184 = arith.constant 0 : index
    %501 = vector.load %arg18[%c0_183, %c0_184] : memref<5x256xbf16, #tpu.memory_space<vmem>>, vector<5x256xbf16>
    %502 = arith.truncf %500 : vector<16x256xf32> to vector<16x256xbf16>
    %cst_185 = arith.constant dense<0.000000e+00> : vector<5x16xf32>
    %503 = tpu.matmul %501, %502, %cst_185 {dimension_numbers = #tpu.dot_dimension_numbers<[1], [1], [0], [0], [0, 0, 1, 0], [], []>} : vector<5x256xbf16>, vector<16x256xbf16>, vector<5x16xf32> -> vector<5x16xf32>
    %c0_186 = arith.constant 0 : index
    %c0_187 = arith.constant 0 : index
    %504 = vector.load %arg20[%c0_186, %c0_187] : memref<16x1024xbf16, #tpu.memory_space<vmem>>, vector<16x1024xbf16>
    %505 = arith.truncf %503 : vector<5x16xf32> to vector<5x16xbf16>
    %cst_188 = arith.constant dense<0.000000e+00> : vector<5x1024xf32>
    %506 = tpu.matmul %505, %504, %cst_188 {dimension_numbers = #tpu.dot_dimension_numbers<[1], [0], [0], [1], [0, 0, 1, 1], [], []>} : vector<5x16xbf16>, vector<16x1024xbf16>, vector<5x1024xf32> -> vector<5x1024xf32>
    %c0_189 = arith.constant 0 : index
    %c0_190 = arith.constant 0 : index
    %507 = vector.load %arg19[%c0_189, %c0_190] : memref<5x1xf32, #tpu.memory_space<vmem>>, vector<5x1xf32>
    %508 = vector.broadcast %507 : vector<5x1xf32> to vector<5x1024xf32>
    %509 = arith.addf %506, %508 : vector<5x1024xf32>
    %c0_191 = arith.constant 0 : index
    %c0_192 = arith.constant 0 : index
    %c0_193 = arith.constant 0 : index
    %510 = vector.load %arg21[%c0_191, %c0_192, %c0_193] : memref<2x5x1024xf32, #tpu.memory_space<vmem>>, vector<1x5x1024xf32>
    %511 = vector.shape_cast %510 : vector<1x5x1024xf32> to vector<5x1024xf32>
    %512 = vector.shape_cast %509 : vector<5x1024xf32> to vector<1x5x1024xf32>
    tpu.vector_store %arg21[%c0_191, %c0_192, %c0_193], %512 {strides = array<i32>} : memref<2x5x1024xf32, #tpu.memory_space<vmem>>, vector<1x5x1024xf32>,
    %513 = vector.extract_strided_slice %436 {offsets = [16, 0], sizes = [16, 64], strides = [1, 1]} : vector<32x64xf32> to vector<16x64xf32>
    %c0_194 = arith.constant 0 : index
    %c0_195 = arith.constant 0 : index
    %514 = vector.load %arg16[%c0_194, %c0_195] : memref<64x2304xbf16, #tpu.memory_space<vmem>>, vector<64x2304xbf16>
    %515 = arith.truncf %513 : vector<16x64xf32> to vector<16x64xbf16>
    %cst_196 = arith.constant dense<0.000000e+00> : vector<16x2304xf32>
    %516 = tpu.matmul %515, %514, %cst_196 {dimension_numbers = #tpu.dot_dimension_numbers<[1], [0], [0], [1], [0, 0, 1, 1], [], []>} : vector<16x64xbf16>, vector<64x2304xbf16>, vector<16x2304xf32> -> vector<16x2304xf32>
    %cst_197 = arith.constant 0.000000e+00 : f32
    %517 = vector.broadcast %cst_197 : f32 to vector<16x256xf32>
    %c0_198 = arith.constant 0 : index
    %c0_199 = arith.constant 0 : index
    %c0_200 = arith.constant 0 : index
    %518 = vector.load %arg15[%c0_198, %c0_199, %c0_200] : memref<9x16x16xbf16, #tpu.memory_space<vmem>>, vector<1x16x16xbf16>
    %519 = vector.shape_cast %518 : vector<1x16x16xbf16> to vector<16x16xbf16>
    %520 = vector.extract_strided_slice %516 {offsets = [0, 0], sizes = [16, 256], strides = [1, 1]} : vector<16x2304xf32> to vector<16x256xf32>
    %521 = arith.truncf %520 : vector<16x256xf32> to vector<16x256xbf16>
    %cst_201 = arith.constant dense<0.000000e+00> : vector<16x256xf32>
    %522 = tpu.matmul %519, %521, %cst_201 {dimension_numbers = #tpu.dot_dimension_numbers<[1], [0], [0], [1], [0, 0, 1, 1], [], []>} : vector<16x16xbf16>, vector<16x256xbf16>, vector<16x256xf32> -> vector<16x256xf32>
    %523 = arith.addf %517, %522 : vector<16x256xf32>
    %c1_202 = arith.constant 1 : index
    %c0_203 = arith.constant 0 : index
    %c0_204 = arith.constant 0 : index
    %524 = vector.load %arg15[%c1_202, %c0_203, %c0_204] : memref<9x16x16xbf16, #tpu.memory_space<vmem>>, vector<1x16x16xbf16>
    %525 = vector.shape_cast %524 : vector<1x16x16xbf16> to vector<16x16xbf16>
    %526 = vector.extract_strided_slice %516 {offsets = [0, 256], sizes = [16, 256], strides = [1, 1]} : vector<16x2304xf32> to vector<16x256xf32>
    %527 = arith.truncf %526 : vector<16x256xf32> to vector<16x256xbf16>
    %cst_205 = arith.constant dense<0.000000e+00> : vector<16x256xf32>
    %528 = tpu.matmul %525, %527, %cst_205 {dimension_numbers = #tpu.dot_dimension_numbers<[1], [0], [0], [1], [0, 0, 1, 1], [], []>} : vector<16x16xbf16>, vector<16x256xbf16>, vector<16x256xf32> -> vector<16x256xf32>
    %529 = arith.addf %523, %528 : vector<16x256xf32>
    %c2_206 = arith.constant 2 : index
    %c0_207 = arith.constant 0 : index
    %c0_208 = arith.constant 0 : index
    %530 = vector.load %arg15[%c2_206, %c0_207, %c0_208] : memref<9x16x16xbf16, #tpu.memory_space<vmem>>, vector<1x16x16xbf16>
    %531 = vector.shape_cast %530 : vector<1x16x16xbf16> to vector<16x16xbf16>
    %532 = vector.extract_strided_slice %516 {offsets = [0, 512], sizes = [16, 256], strides = [1, 1]} : vector<16x2304xf32> to vector<16x256xf32>
    %533 = arith.truncf %532 : vector<16x256xf32> to vector<16x256xbf16>
    %cst_209 = arith.constant dense<0.000000e+00> : vector<16x256xf32>
    %534 = tpu.matmul %531, %533, %cst_209 {dimension_numbers = #tpu.dot_dimension_numbers<[1], [0], [0], [1], [0, 0, 1, 1], [], []>} : vector<16x16xbf16>, vector<16x256xbf16>, vector<16x256xf32> -> vector<16x256xf32>
    %535 = arith.addf %529, %534 : vector<16x256xf32>
    %c3_210 = arith.constant 3 : index
    %c0_211 = arith.constant 0 : index
    %c0_212 = arith.constant 0 : index
    %536 = vector.load %arg15[%c3_210, %c0_211, %c0_212] : memref<9x16x16xbf16, #tpu.memory_space<vmem>>, vector<1x16x16xbf16>
    %537 = vector.shape_cast %536 : vector<1x16x16xbf16> to vector<16x16xbf16>
    %538 = vector.extract_strided_slice %516 {offsets = [0, 768], sizes = [16, 256], strides = [1, 1]} : vector<16x2304xf32> to vector<16x256xf32>
    %539 = arith.truncf %538 : vector<16x256xf32> to vector<16x256xbf16>
    %cst_213 = arith.constant dense<0.000000e+00> : vector<16x256xf32>
    %540 = tpu.matmul %537, %539, %cst_213 {dimension_numbers = #tpu.dot_dimension_numbers<[1], [0], [0], [1], [0, 0, 1, 1], [], []>} : vector<16x16xbf16>, vector<16x256xbf16>, vector<16x256xf32> -> vector<16x256xf32>
    %541 = arith.addf %535, %540 : vector<16x256xf32>
    %c4_214 = arith.constant 4 : index
    %c0_215 = arith.constant 0 : index
    %c0_216 = arith.constant 0 : index
    %542 = vector.load %arg15[%c4_214, %c0_215, %c0_216] : memref<9x16x16xbf16, #tpu.memory_space<vmem>>, vector<1x16x16xbf16>
    %543 = vector.shape_cast %542 : vector<1x16x16xbf16> to vector<16x16xbf16>
    %544 = vector.extract_strided_slice %516 {offsets = [0, 1024], sizes = [16, 256], strides = [1, 1]} : vector<16x2304xf32> to vector<16x256xf32>
    %545 = arith.truncf %544 : vector<16x256xf32> to vector<16x256xbf16>
    %cst_217 = arith.constant dense<0.000000e+00> : vector<16x256xf32>
    %546 = tpu.matmul %543, %545, %cst_217 {dimension_numbers = #tpu.dot_dimension_numbers<[1], [0], [0], [1], [0, 0, 1, 1], [], []>} : vector<16x16xbf16>, vector<16x256xbf16>, vector<16x256xf32> -> vector<16x256xf32>
    %547 = arith.addf %541, %546 : vector<16x256xf32>
    %c5_218 = arith.constant 5 : index
    %c0_219 = arith.constant 0 : index
    %c0_220 = arith.constant 0 : index
    %548 = vector.load %arg15[%c5_218, %c0_219, %c0_220] : memref<9x16x16xbf16, #tpu.memory_space<vmem>>, vector<1x16x16xbf16>
    %549 = vector.shape_cast %548 : vector<1x16x16xbf16> to vector<16x16xbf16>
    %550 = vector.extract_strided_slice %516 {offsets = [0, 1280], sizes = [16, 256], strides = [1, 1]} : vector<16x2304xf32> to vector<16x256xf32>
    %551 = arith.truncf %550 : vector<16x256xf32> to vector<16x256xbf16>
    %cst_221 = arith.constant dense<0.000000e+00> : vector<16x256xf32>
    %552 = tpu.matmul %549, %551, %cst_221 {dimension_numbers = #tpu.dot_dimension_numbers<[1], [0], [0], [1], [0, 0, 1, 1], [], []>} : vector<16x16xbf16>, vector<16x256xbf16>, vector<16x256xf32> -> vector<16x256xf32>
    %553 = arith.addf %547, %552 : vector<16x256xf32>
    %c6_222 = arith.constant 6 : index
    %c0_223 = arith.constant 0 : index
    %c0_224 = arith.constant 0 : index
    %554 = vector.load %arg15[%c6_222, %c0_223, %c0_224] : memref<9x16x16xbf16, #tpu.memory_space<vmem>>, vector<1x16x16xbf16>
    %555 = vector.shape_cast %554 : vector<1x16x16xbf16> to vector<16x16xbf16>
    %556 = vector.extract_strided_slice %516 {offsets = [0, 1536], sizes = [16, 256], strides = [1, 1]} : vector<16x2304xf32> to vector<16x256xf32>
    %557 = arith.truncf %556 : vector<16x256xf32> to vector<16x256xbf16>
    %cst_225 = arith.constant dense<0.000000e+00> : vector<16x256xf32>
    %558 = tpu.matmul %555, %557, %cst_225 {dimension_numbers = #tpu.dot_dimension_numbers<[1], [0], [0], [1], [0, 0, 1, 1], [], []>} : vector<16x16xbf16>, vector<16x256xbf16>, vector<16x256xf32> -> vector<16x256xf32>
    %559 = arith.addf %553, %558 : vector<16x256xf32>
    %c7_226 = arith.constant 7 : index
    %c0_227 = arith.constant 0 : index
    %c0_228 = arith.constant 0 : index
    %560 = vector.load %arg15[%c7_226, %c0_227, %c0_228] : memref<9x16x16xbf16, #tpu.memory_space<vmem>>, vector<1x16x16xbf16>
    %561 = vector.shape_cast %560 : vector<1x16x16xbf16> to vector<16x16xbf16>
    %562 = vector.extract_strided_slice %516 {offsets = [0, 1792], sizes = [16, 256], strides = [1, 1]} : vector<16x2304xf32> to vector<16x256xf32>
    %563 = arith.truncf %562 : vector<16x256xf32> to vector<16x256xbf16>
    %cst_229 = arith.constant dense<0.000000e+00> : vector<16x256xf32>
    %564 = tpu.matmul %561, %563, %cst_229 {dimension_numbers = #tpu.dot_dimension_numbers<[1], [0], [0], [1], [0, 0, 1, 1], [], []>} : vector<16x16xbf16>, vector<16x256xbf16>, vector<16x256xf32> -> vector<16x256xf32>
    %565 = arith.addf %559, %564 : vector<16x256xf32>
    %c8_230 = arith.constant 8 : index
    %c0_231 = arith.constant 0 : index
    %c0_232 = arith.constant 0 : index
    %566 = vector.load %arg15[%c8_230, %c0_231, %c0_232] : memref<9x16x16xbf16, #tpu.memory_space<vmem>>, vector<1x16x16xbf16>
    %567 = vector.shape_cast %566 : vector<1x16x16xbf16> to vector<16x16xbf16>
    %568 = vector.extract_strided_slice %516 {offsets = [0, 2048], sizes = [16, 256], strides = [1, 1]} : vector<16x2304xf32> to vector<16x256xf32>
    %569 = arith.truncf %568 : vector<16x256xf32> to vector<16x256xbf16>
    %cst_233 = arith.constant dense<0.000000e+00> : vector<16x256xf32>
    %570 = tpu.matmul %567, %569, %cst_233 {dimension_numbers = #tpu.dot_dimension_numbers<[1], [0], [0], [1], [0, 0, 1, 1], [], []>} : vector<16x16xbf16>, vector<16x256xbf16>, vector<16x256xf32> -> vector<16x256xf32>
    %571 = arith.addf %565, %570 : vector<16x256xf32>
    %c0_234 = arith.constant 0 : index
    %c0_235 = arith.constant 0 : index
    %572 = vector.load %arg17[%c0_234, %c0_235] : memref<1x256xf32, #tpu.memory_space<vmem>>, vector<1x256xf32>
    %573 = vector.broadcast %572 : vector<1x256xf32> to vector<16x256xf32>
    %574 = arith.addf %571, %573 : vector<16x256xf32>
    %cst_236 = arith.constant 0.000000e+00 : f32
    %575 = vector.broadcast %cst_236 : f32 to vector<16x256xf32>
    %576 = arith.maximumf %574, %575 : vector<16x256xf32>
    %c0_237 = arith.constant 0 : index
    %c0_238 = arith.constant 0 : index
    %577 = vector.load %arg18[%c0_237, %c0_238] : memref<5x256xbf16, #tpu.memory_space<vmem>>, vector<5x256xbf16>
    %578 = arith.truncf %576 : vector<16x256xf32> to vector<16x256xbf16>
    %cst_239 = arith.constant dense<0.000000e+00> : vector<5x16xf32>
    %579 = tpu.matmul %577, %578, %cst_239 {dimension_numbers = #tpu.dot_dimension_numbers<[1], [1], [0], [0], [0, 0, 1, 0], [], []>} : vector<5x256xbf16>, vector<16x256xbf16>, vector<5x16xf32> -> vector<5x16xf32>
    %c0_240 = arith.constant 0 : index
    %c0_241 = arith.constant 0 : index
    %580 = vector.load %arg20[%c0_240, %c0_241] : memref<16x1024xbf16, #tpu.memory_space<vmem>>, vector<16x1024xbf16>
    %581 = arith.truncf %579 : vector<5x16xf32> to vector<5x16xbf16>
    %cst_242 = arith.constant dense<0.000000e+00> : vector<5x1024xf32>
    %582 = tpu.matmul %581, %580, %cst_242 {dimension_numbers = #tpu.dot_dimension_numbers<[1], [0], [0], [1], [0, 0, 1, 1], [], []>} : vector<5x16xbf16>, vector<16x1024xbf16>, vector<5x1024xf32> -> vector<5x1024xf32>
    %c0_243 = arith.constant 0 : index
    %c0_244 = arith.constant 0 : index
    %583 = vector.load %arg19[%c0_243, %c0_244] : memref<5x1xf32, #tpu.memory_space<vmem>>, vector<5x1xf32>
    %584 = vector.broadcast %583 : vector<5x1xf32> to vector<5x1024xf32>
    %585 = arith.addf %582, %584 : vector<5x1024xf32>
    %c1_245 = arith.constant 1 : index
    %c0_246 = arith.constant 0 : index
    %c0_247 = arith.constant 0 : index
    %586 = vector.load %arg21[%c1_245, %c0_246, %c0_247] : memref<2x5x1024xf32, #tpu.memory_space<vmem>>, vector<1x5x1024xf32>
    %587 = vector.shape_cast %586 : vector<1x5x1024xf32> to vector<5x1024xf32>
    %588 = vector.shape_cast %585 : vector<5x1024xf32> to vector<1x5x1024xf32>
    tpu.vector_store %arg21[%c1_245, %c0_246, %c0_247], %588 {strides = array<i32>} : memref<2x5x1024xf32, #tpu.memory_space<vmem>>, vector<1x5x1024xf32>,
    return
  }
  func.func @transform_0(%arg0: i32) -> (i32, i32) {
    %c0_i32 = arith.constant 0 : i32
    %c0_i32_0 = arith.constant 0 : i32
    %c0_i32_1 = arith.constant 0 : i32
    return %c0_i32, %c0_i32_0 : i32, i32
  }
  func.func @transform_1(%arg0: i32) -> (i32, i32) {
    %c0_i32 = arith.constant 0 : i32
    %c0_i32_0 = arith.constant 0 : i32
    %c0_i32_1 = arith.constant 0 : i32
    return %c0_i32, %c0_i32_0 : i32, i32
  }
  func.func @transform_2(%arg0: i32) -> (i32, i32) {
    %c0_i32 = arith.constant 0 : i32
    %c0_i32_0 = arith.constant 0 : i32
    %c0_i32_1 = arith.constant 0 : i32
    return %c0_i32, %c0_i32_0 : i32, i32
  }
  func.func @transform_3(%arg0: i32) -> (i32, i32, i32) {
    %c0_i32 = arith.constant 0 : i32
    %c0_i32_0 = arith.constant 0 : i32
    %c0_i32_1 = arith.constant 0 : i32
    %c0_i32_2 = arith.constant 0 : i32
    return %c0_i32, %c0_i32_0, %c0_i32_1 : i32, i32, i32
  }
  func.func @transform_4(%arg0: i32) -> (i32, i32, i32) {
    %c0_i32 = arith.constant 0 : i32
    %c0_i32_0 = arith.constant 0 : i32
    %c0_i32_1 = arith.constant 0 : i32
    %c0_i32_2 = arith.constant 0 : i32
    return %c0_i32, %c0_i32_0, %c0_i32_1 : i32, i32, i32
  }
  func.func @transform_5(%arg0: i32) -> (i32, i32, i32) {
    %c0_i32 = arith.constant 0 : i32
    %c0_i32_0 = arith.constant 0 : i32
    %c0_i32_1 = arith.constant 0 : i32
    %c0_i32_2 = arith.constant 0 : i32
    return %c0_i32, %c0_i32_0, %c0_i32_1 : i32, i32, i32
  }
  func.func @transform_6(%arg0: i32) -> (i32, i32, i32) {
    %c0_i32 = arith.constant 0 : i32
    %c0_i32_0 = arith.constant 0 : i32
    %c0_i32_1 = arith.constant 0 : i32
    %c0_i32_2 = arith.constant 0 : i32
    return %c0_i32, %c0_i32_0, %c0_i32_1 : i32, i32, i32
  }
  func.func @transform_7(%arg0: i32) -> (i32, i32, i32) {
    %c0_i32 = arith.constant 0 : i32
    %c0_i32_0 = arith.constant 0 : i32
    %c0_i32_1 = arith.constant 0 : i32
    %c0_i32_2 = arith.constant 0 : i32
    return %c0_i32, %c0_i32_0, %c0_i32_1 : i32, i32, i32
  }
  func.func @transform_8(%arg0: i32) -> (i32, i32, i32) {
    %c0_i32 = arith.constant 0 : i32
    %c0_i32_0 = arith.constant 0 : i32
    %c0_i32_1 = arith.constant 0 : i32
    %c0_i32_2 = arith.constant 0 : i32
    return %c0_i32, %c0_i32_0, %c0_i32_1 : i32, i32, i32
  }
  func.func @transform_9(%arg0: i32) -> (i32, i32, i32) {
    %c0_i32 = arith.constant 0 : i32
    %c0_i32_0 = arith.constant 0 : i32
    %c0_i32_1 = arith.constant 0 : i32
    %c0_i32_2 = arith.constant 0 : i32
    return %c0_i32, %c0_i32_0, %c0_i32_1 : i32, i32, i32
  }
  func.func @transform_10(%arg0: i32) -> (i32, i32, i32) {
    %c0_i32 = arith.constant 0 : i32
    %c0_i32_0 = arith.constant 0 : i32
    %c0_i32_1 = arith.constant 0 : i32
    %c0_i32_2 = arith.constant 0 : i32
    return %c0_i32, %c0_i32_0, %c0_i32_1 : i32, i32, i32
  }
  func.func @transform_11(%arg0: i32) -> (i32, i32, i32) {
    %c0_i32 = arith.constant 0 : i32
    %c0_i32_0 = arith.constant 0 : i32
    %c0_i32_1 = arith.constant 0 : i32
    %c0_i32_2 = arith.constant 0 : i32
    return %c0_i32, %c0_i32_0, %c0_i32_1 : i32, i32, i32
  }
  func.func @transform_12(%arg0: i32) -> (i32, i32, i32) {
    %c0_i32 = arith.constant 0 : i32
    %c0_i32_0 = arith.constant 0 : i32
    %c0_i32_1 = arith.constant 0 : i32
    %c0_i32_2 = arith.constant 0 : i32
    return %c0_i32, %c0_i32_0, %c0_i32_1 : i32, i32, i32
  }
  func.func @transform_13(%arg0: i32) -> (i32, i32) {
    %c0_i32 = arith.constant 0 : i32
    %c0_i32_0 = arith.constant 0 : i32
    %c0_i32_1 = arith.constant 0 : i32
    return %c0_i32, %c0_i32_0 : i32, i32
  }
  func.func @transform_14(%arg0: i32) -> (i32, i32, i32) {
    %c0_i32 = arith.constant 0 : i32
    %c0_i32_0 = arith.constant 0 : i32
    %c0_i32_1 = arith.constant 0 : i32
    %c0_i32_2 = arith.constant 0 : i32
    return %c0_i32, %c0_i32_0, %c0_i32_1 : i32, i32, i32
  }
  func.func @transform_15(%arg0: i32) -> (i32, i32) {
    %c0_i32 = arith.constant 0 : i32
    %c0_i32_0 = arith.constant 0 : i32
    %c0_i32_1 = arith.constant 0 : i32
    return %c0_i32, %c0_i32_0 : i32, i32
  }
  func.func @transform_16(%arg0: i32) -> (i32, i32) {
    %c0_i32 = arith.constant 0 : i32
    %c0_i32_0 = arith.constant 0 : i32
    %c0_i32_1 = arith.constant 0 : i32
    return %c0_i32, %c0_i32_0 : i32, i32
  }
  func.func @transform_17(%arg0: i32) -> (i32, i32) {
    %c0_i32 = arith.constant 0 : i32
    %c0_i32_0 = arith.constant 0 : i32
    %c0_i32_1 = arith.constant 0 : i32
    return %c0_i32, %c0_i32_0 : i32, i32
  }
  func.func @transform_18(%arg0: i32) -> (i32, i32) {
    %c0_i32 = arith.constant 0 : i32
    %c0_i32_0 = arith.constant 0 : i32
    %c0_i32_1 = arith.constant 0 : i32
    return %c0_i32, %c0_i32_0 : i32, i32
  }
  func.func @transform_19(%arg0: i32) -> (i32, i32) {
    %c0_i32 = arith.constant 0 : i32
    %c0_i32_0 = arith.constant 0 : i32
    %c0_i32_1 = arith.constant 0 : i32
    return %c0_i32, %c0_i32_0 : i32, i32
  }
  func.func @transform_20(%arg0: i32) -> (i32, i32, i32) {
    %c0_i32 = arith.constant 0 : i32
    %c0_i32_0 = arith.constant 0 : i32
    %c0_i32_1 = arith.constant 0 : i32
    %c0_i32_2 = arith.constant 0 : i32
    return %c0_i32, %c0_i32_0, %c0_i32_1 : i32, i32, i32
  }
}

</mosaic_0001>

<llo_original>
// kernel: tpu_custom_call.1
$region0: #{tpu_custom_call.1}
  #allocation0 [shape = 'u32[]', space=smem, size = 0x4, offset = 0x4, fixed_abs, tag = 'smem constant byte address 0x4 - core index']
  #allocation1 [shape = 'u32[144,128]{1,0:T(1,128)}', space=vmem, size = 0x12000, scoped, tag = 'internal scratch']
  %s0 = inlined_call_operand.vmem [shape: f32[32,192], index: 0, kind: input, shape index: {}]
  %s1 = inlined_call_operand.hbm [shape: f32[16,64], index: 1, kind: input, shape index: {}]
  %s2 = inlined_call_operand.vmem [shape: bf16[192,64], index: 2, kind: input, shape index: {}]
  %s3 = inlined_call_operand.vmem [shape: f32[2,2,64], index: 3, kind: input, shape index: {}]
  %s4 = inlined_call_operand.vmem [shape: bf16[2,64,192], index: 4, kind: input, shape index: {}]
  %s5 = inlined_call_operand.hbm [shape: f32[2,1,192], index: 5, kind: input, shape index: {}]
  %s6 = inlined_call_operand.hbm [shape: bf16[2,64,64], index: 6, kind: input, shape index: {}]
  %s7 = inlined_call_operand.vmem [shape: f32[2,1,64], index: 7, kind: input, shape index: {}]
  %s8 = inlined_call_operand.hbm [shape: f32[2,2,64], index: 8, kind: input, shape index: {}]
  %s9 = inlined_call_operand.hbm [shape: bf16[2,64,128], index: 9, kind: input, shape index: {}]
  %s10 = inlined_call_operand.hbm [shape: f32[2,1,128], index: 10, kind: input, shape index: {}]
  %s11 = inlined_call_operand.vmem [shape: bf16[2,128,64], index: 11, kind: input, shape index: {}]
  %s12 = inlined_call_operand.hbm [shape: f32[2,1,64], index: 12, kind: input, shape index: {}]
  %s13 = inlined_call_operand.hbm [shape: f32[2,64], index: 13, kind: input, shape index: {}]
  %s14 = inlined_call_operand.vmem [shape: bf16[9,16,16], index: 14, kind: input, shape index: {}]
  %s15 = inlined_call_operand.hbm [shape: bf16[64,2304], index: 15, kind: input, shape index: {}]
  %s16 = inlined_call_operand.vmem [shape: f32[1,256], index: 16, kind: input, shape index: {}]
  %s17 = inlined_call_operand.vmem [shape: bf16[5,256], index: 17, kind: input, shape index: {}]
  %s18 = inlined_call_operand.vmem [shape: f32[5,1], index: 18, kind: input, shape index: {}]
  %s19 = inlined_call_operand.vmem [shape: bf16[16,1024], index: 19, kind: input, shape index: {}]
  %s20 = inlined_call_operand.vmem [shape: f32[2,5,1024], index: 20, kind: output, shape index: {}]
  %s21 = sld [smem:[#allocation0]]
  $region126: #{tpu_custom_call.1} parent=0
    _
  %s23 = ssub.s32 1, %s21
  %s24 = scalar_select 0, %s23, %s21
  $region1: #{tpu_custom_call.1} parent=0
    #allocation2 [shape = 'u8[8192]{0}', space=vmem, size = 0x2000, scoped, tag = 'input window, operand 1, single buffered']
    #allocation3 [shape = 's32[1]{0}', space=sflag, size = 0x4, scoped, tag = 'scoped memory for tpu_custom_call.1']
    #allocation4 [shape = 'u8[2048]{0}', space=vmem, size = 0x800, scoped, tag = 'input window, operand 5, single buffered']
    #allocation5 [shape = 's32[1]{0}', space=sflag, size = 0x4, scoped, tag = 'scoped memory for tpu_custom_call.1']
    #allocation6 [shape = 'u8[32768]{0}', space=vmem, size = 0x8000, scoped, tag = 'input window, operand 6, single buffered']
    #allocation7 [shape = 'u8[2048]{0}', space=vmem, size = 0x800, scoped, tag = 'input window, operand 8, single buffered']
    #allocation8 [shape = 's32[1]{0}', space=sflag, size = 0x4, scoped, tag = 'scoped memory for tpu_custom_call.1']
    #allocation9 [shape = 'u8[32768]{0}', space=vmem, size = 0x8000, scoped, tag = 'input window, operand 9, single buffered']
    #allocation10 [shape = 'u8[1024]{0}', space=vmem, size = 0x400, scoped, tag = 'input window, operand 10, single buffered']
    #allocation11 [shape = 's32[1]{0}', space=sflag, size = 0x4, scoped, tag = 'scoped memory for tpu_custom_call.1']
    #allocation12 [shape = 'u8[1024]{0}', space=vmem, size = 0x400, scoped, tag = 'input window, operand 12, single buffered']
    #allocation13 [shape = 'u8[1024]{0}', space=vmem, size = 0x400, scoped, tag = 'input window, operand 13, single buffered']
    #allocation14 [shape = 's32[1]{0}', space=sflag, size = 0x4, scoped, tag = 'scoped memory for tpu_custom_call.1']
    #allocation15 [shape = 'u8[294912]{0}', space=vmem, size = 0x48000, scoped, tag = 'input window, operand 15, single buffered']
    %25 = vsyncpa [#allocation3], 0
    %26 = vsyncpa [#allocation5], 0
    %27 = vsyncpa [#allocation8], 0
    %28 = vsyncpa [#allocation11], 0
    %29 = vsyncpa [#allocation14], 0
    // Predicated region
    $region2: #{tpu_custom_call.1} parent=1 // pred_check
      _
    $region3: #{tpu_custom_call.1} parent=1 // pred_check_branch
      %31 = sbr.rel (0) target = $region5
    $region4: #{tpu_custom_call.1} parent=1 // pred_region
      _
    $region5: #{tpu_custom_call.1} parent=1 // pred_fallthru
      _
    // Predicated region
    $region6: #{tpu_custom_call.1} parent=1 // pred_check
      _
    $region7: #{tpu_custom_call.1} parent=1 // pred_check_branch
      %33 = sbr.rel (0) target = $region9
    $region8: #{tpu_custom_call.1} parent=1 // pred_region
      %s35 = ssub.s32 256, 256
      %36 = vsyncadd [#allocation3], %s35
      %s37 = sshll.u32 [#allocation2], 4
      %s38 = int_to_ptr.vmem [resolvable:$true] %s37
      %43 = dma.hbm_to_vmem [thread:$0]  %s1, 256, %s38, [#allocation3], 128, 128, 8
    $region9: #{tpu_custom_call.1} parent=1 // pred_fallthru
      _
    // Predicated region
    $region10: #{tpu_custom_call.1} parent=1 // pred_check
      _
    $region11: #{tpu_custom_call.1} parent=1 // pred_check_branch
      %45 = sbr.rel (0) target = $region13
    $region12: #{tpu_custom_call.1} parent=1 // pred_region
      _
    $region13: #{tpu_custom_call.1} parent=1 // pred_fallthru
      _
    // Predicated region
    $region14: #{tpu_custom_call.1} parent=1 // pred_check
      _
    $region15: #{tpu_custom_call.1} parent=1 // pred_check_branch
      %47 = sbr.rel (0) target = $region17
    $region16: #{tpu_custom_call.1} parent=1 // pred_region
      _
    $region17: #{tpu_custom_call.1} parent=1 // pred_fallthru
      _
    // Predicated region
    $region18: #{tpu_custom_call.1} parent=1 // pred_check
      _
    $region19: #{tpu_custom_call.1} parent=1 // pred_check_branch
      %49 = sbr.rel (0) target = $region21
    $region20: #{tpu_custom_call.1} parent=1 // pred_region
      _
    $region21: #{tpu_custom_call.1} parent=1 // pred_fallthru
      _
    // Predicated region
    $region22: #{tpu_custom_call.1} parent=1 // pred_check
      _
    $region23: #{tpu_custom_call.1} parent=1 // pred_check_branch
      %51 = sbr.rel (0) target = $region25
    $region24: #{tpu_custom_call.1} parent=1 // pred_region
      %s53 = ssub.s32 64, 64
      %54 = vsyncadd [#allocation5], %s53
      %s55 = sshll.u32 [#allocation4], 4
      %s56 = int_to_ptr.vmem [resolvable:$true] %s55
      %61 = dma.hbm_to_vmem [thread:$0]  %s5, 64, %s56, [#allocation5], 32, 32, 2
    $region25: #{tpu_custom_call.1} parent=1 // pred_fallthru
      _
    // Predicated region
    $region26: #{tpu_custom_call.1} parent=1 // pred_check
      _
    $region27: #{tpu_custom_call.1} parent=1 // pred_check_branch
      %63 = sbr.rel (0) target = $region29
    $region28: #{tpu_custom_call.1} parent=1 // pred_region
      %s65 = ssub.s32 1024, 1024
      %66 = vsyncadd [#allocation5], %s65
      %s67 = sshll.u32 [#allocation6], 4
      %s68 = int_to_ptr.vmem [resolvable:$true] %s67
      %73 = dma.hbm_to_vmem [thread:$0]  %s6, 1024, %s68, [#allocation5], 64, 64, 4
    $region29: #{tpu_custom_call.1} parent=1 // pred_fallthru
      _
    // Predicated region
    $region30: #{tpu_custom_call.1} parent=1 // pred_check
      _
    $region31: #{tpu_custom_call.1} parent=1 // pred_check_branch
      %75 = sbr.rel (0) target = $region33
    $region32: #{tpu_custom_call.1} parent=1 // pred_region
      _
    $region33: #{tpu_custom_call.1} parent=1 // pred_fallthru
      _
    // Predicated region
    $region34: #{tpu_custom_call.1} parent=1 // pred_check
      _
    $region35: #{tpu_custom_call.1} parent=1 // pred_check_branch
      %77 = sbr.rel (0) target = $region37
    $region36: #{tpu_custom_call.1} parent=1 // pred_region
      %s79 = ssub.s32 64, 64
      %80 = vsyncadd [#allocation8], %s79
      %s81 = sshll.u32 [#allocation7], 4
      %s82 = int_to_ptr.vmem [resolvable:$true] %s81
      %87 = dma.hbm_to_vmem [thread:$0]  %s8, 64, %s82, [#allocation8], 32, 32, 2
    $region37: #{tpu_custom_call.1} parent=1 // pred_fallthru
      _
    // Predicated region
    $region38: #{tpu_custom_call.1} parent=1 // pred_check
      _
    $region39: #{tpu_custom_call.1} parent=1 // pred_check_branch
      %89 = sbr.rel (0) target = $region41
    $region40: #{tpu_custom_call.1} parent=1 // pred_region
      %s91 = ssub.s32 1024, 1024
      %92 = vsyncadd [#allocation8], %s91
      %s93 = sshll.u32 [#allocation9], 4
      %s94 = int_to_ptr.vmem [resolvable:$true] %s93
      %99 = dma.hbm_to_vmem [thread:$0]  %s9, 1024, %s94, [#allocation8], 64, 64, 4
    $region41: #{tpu_custom_call.1} parent=1 // pred_fallthru
      _
    // Predicated region
    $region42: #{tpu_custom_call.1} parent=1 // pred_check
      _
    $region43: #{tpu_custom_call.1} parent=1 // pred_check_branch
      %101 = sbr.rel (0) target = $region45
    $region44: #{tpu_custom_call.1} parent=1 // pred_region
      %s103 = ssub.s32 32, 32
      %104 = vsyncadd [#allocation11], %s103
      %s105 = sshll.u32 [#allocation10], 4
      %s106 = int_to_ptr.vmem [resolvable:$true] %s105
      %111 = dma.hbm_to_vmem [thread:$0]  %s10, 32, %s106, [#allocation11], 16, 16, 1
    $region45: #{tpu_custom_call.1} parent=1 // pred_fallthru
      _
    // Predicated region
    $region46: #{tpu_custom_call.1} parent=1 // pred_check
      _
    $region47: #{tpu_custom_call.1} parent=1 // pred_check_branch
      %113 = sbr.rel (0) target = $region49
    $region48: #{tpu_custom_call.1} parent=1 // pred_region
      _
    $region49: #{tpu_custom_call.1} parent=1 // pred_fallthru
      _
    // Predicated region
    $region50: #{tpu_custom_call.1} parent=1 // pred_check
      _
    $region51: #{tpu_custom_call.1} parent=1 // pred_check_branch
      %115 = sbr.rel (0) target = $region53
    $region52: #{tpu_custom_call.1} parent=1 // pred_region
      %s117 = ssub.s32 32, 32
      %118 = vsyncadd [#allocation11], %s117
      %s119 = sshll.u32 [#allocation12], 4
      %s120 = int_to_ptr.vmem [resolvable:$true] %s119
      %125 = dma.hbm_to_vmem [thread:$0]  %s12, 32, %s120, [#allocation11], 16, 16, 1
    $region53: #{tpu_custom_call.1} parent=1 // pred_fallthru
      _
    // Predicated region
    $region54: #{tpu_custom_call.1} parent=1 // pred_check
      _
    $region55: #{tpu_custom_call.1} parent=1 // pred_check_branch
      %127 = sbr.rel (0) target = $region57
    $region56: #{tpu_custom_call.1} parent=1 // pred_region
      %s129 = ssub.s32 32, 32
      %130 = vsyncadd [#allocation14], %s129
      %s132 = sshll.u32 [#allocation13], 4
      %s133 = int_to_ptr.vmem [resolvable:$true] %s132
      %135 = dma.hbm_to_vmem [thread:$0]  %s13, 32, %s133, [#allocation14]
    $region57: #{tpu_custom_call.1} parent=1 // pred_fallthru
      _
    // Predicated region
    $region58: #{tpu_custom_call.1} parent=1 // pred_check
      _
    $region59: #{tpu_custom_call.1} parent=1 // pred_check_branch
      %137 = sbr.rel (0) target = $region61
    $region60: #{tpu_custom_call.1} parent=1 // pred_region
      _
    $region61: #{tpu_custom_call.1} parent=1 // pred_fallthru
      _
    // Predicated region
    $region62: #{tpu_custom_call.1} parent=1 // pred_check
      _
    $region63: #{tpu_custom_call.1} parent=1 // pred_check_branch
      %139 = sbr.rel (0) target = $region65
    $region64: #{tpu_custom_call.1} parent=1 // pred_region
      %s141 = ssub.s32 9216, 9216
      %142 = vsyncadd [#allocation14], %s141
      %s143 = sshll.u32 [#allocation15], 4
      %s144 = int_to_ptr.vmem [resolvable:$true] %s143
      %149 = dma.hbm_to_vmem [thread:$0]  %s15, 9216, %s144, [#allocation14], 1152, 1152, 72
    $region65: #{tpu_custom_call.1} parent=1 // pred_fallthru
      _
    // Predicated region
    $region66: #{tpu_custom_call.1} parent=1 // pred_check
      _
    $region67: #{tpu_custom_call.1} parent=1 // pred_check_branch
      %151 = sbr.rel (0) target = $region69
    $region68: #{tpu_custom_call.1} parent=1 // pred_region
      _
    $region69: #{tpu_custom_call.1} parent=1 // pred_fallthru
      _
    // Predicated region
    $region70: #{tpu_custom_call.1} parent=1 // pred_check
      _
    $region71: #{tpu_custom_call.1} parent=1 // pred_check_branch
      %153 = sbr.rel (0) target = $region73
    $region72: #{tpu_custom_call.1} parent=1 // pred_region
      _
    $region73: #{tpu_custom_call.1} parent=1 // pred_fallthru
      _
    // Predicated region
    $region74: #{tpu_custom_call.1} parent=1 // pred_check
      _
    $region75: #{tpu_custom_call.1} parent=1 // pred_check_branch
      %155 = sbr.rel (0) target = $region77
    $region76: #{tpu_custom_call.1} parent=1 // pred_region
      _
    $region77: #{tpu_custom_call.1} parent=1 // pred_fallthru
      _
    // Predicated region
    $region78: #{tpu_custom_call.1} parent=1 // pred_check
      _
    $region79: #{tpu_custom_call.1} parent=1 // pred_check_branch
      %157 = sbr.rel (0) target = $region81
    $region80: #{tpu_custom_call.1} parent=1 // pred_region
      _
    $region81: #{tpu_custom_call.1} parent=1 // pred_fallthru
      _
    // Predicated region
    $region82: #{tpu_custom_call.1} parent=1 // pred_check
      _
    $region83: #{tpu_custom_call.1} parent=1 // pred_check_branch
      %159 = sbr.rel (0) target = $region85
    $region84: #{tpu_custom_call.1} parent=1 // pred_region
      %160 = dma.done [#allocation3], 256
    $region85: #{tpu_custom_call.1} parent=1 // pred_fallthru
      _
    // Predicated region
    $region86: #{tpu_custom_call.1} parent=1 // pred_check
      _
    $region87: #{tpu_custom_call.1} parent=1 // pred_check_branch
      %162 = sbr.rel (0) target = $region89
    $region88: #{tpu_custom_call.1} parent=1 // pred_region
      %163 = dma.done [#allocation5], 64
    $region89: #{tpu_custom_call.1} parent=1 // pred_fallthru
      _
    // Predicated region
    $region90: #{tpu_custom_call.1} parent=1 // pred_check
      _
    $region91: #{tpu_custom_call.1} parent=1 // pred_check_branch
      %165 = sbr.rel (0) target = $region93
    $region92: #{tpu_custom_call.1} parent=1 // pred_region
      %166 = dma.done [#allocation5], 1024
    $region93: #{tpu_custom_call.1} parent=1 // pred_fallthru
      _
    // Predicated region
    $region94: #{tpu_custom_call.1} parent=1 // pred_check
      _
    $region95: #{tpu_custom_call.1} parent=1 // pred_check_branch
      %168 = sbr.rel (0) target = $region97
    $region96: #{tpu_custom_call.1} parent=1 // pred_region
      %169 = dma.done [#allocation8], 64
    $region97: #{tpu_custom_call.1} parent=1 // pred_fallthru
      _
    // Predicated region
    $region98: #{tpu_custom_call.1} parent=1 // pred_check
      _
    $region99: #{tpu_custom_call.1} parent=1 // pred_check_branch
      %171 = sbr.rel (0) target = $region101
    $region100: #{tpu_custom_call.1} parent=1 // pred_region
      %172 = dma.done [#allocation8], 1024
    $region101: #{tpu_custom_call.1} parent=1 // pred_fallthru
      _
    // Predicated region
    $region102: #{tpu_custom_call.1} parent=1 // pred_check
      _
    $region103: #{tpu_custom_call.1} parent=1 // pred_check_branch
      %174 = sbr.rel (0) target = $region105
    $region104: #{tpu_custom_call.1} parent=1 // pred_region
      %175 = dma.done [#allocation11], 32
    $region105: #{tpu_custom_call.1} parent=1 // pred_fallthru
      _
    // Predicated region
    $region106: #{tpu_custom_call.1} parent=1 // pred_check
      _
    $region107: #{tpu_custom_call.1} parent=1 // pred_check_branch
      %177 = sbr.rel (0) target = $region109
    $region108: #{tpu_custom_call.1} parent=1 // pred_region
      %178 = dma.done [#allocation11], 32
    $region109: #{tpu_custom_call.1} parent=1 // pred_fallthru
      _
    // Predicated region
    $region110: #{tpu_custom_call.1} parent=1 // pred_check
      _
    $region111: #{tpu_custom_call.1} parent=1 // pred_check_branch
      %180 = sbr.rel (0) target = $region113
    $region112: #{tpu_custom_call.1} parent=1 // pred_region
      %181 = dma.done [#allocation14], 32
    $region113: #{tpu_custom_call.1} parent=1 // pred_fallthru
      _
    // Predicated region
    $region114: #{tpu_custom_call.1} parent=1 // pred_check
      _
    $region115: #{tpu_custom_call.1} parent=1 // pred_check_branch
      %183 = sbr.rel (0) target = $region117
    $region116: #{tpu_custom_call.1} parent=1 // pred_region
      %184 = dma.done [#allocation14], 9216
    $region117: #{tpu_custom_call.1} parent=1 // pred_fallthru
      _
    %v186 = vld [vmem:[%s0] sm:$0xff]
    %v187 = vld [vmem:[%s0 + $0x8] sm:$0xff]
    %v188 = vld [vmem:[%s0 + $0x10] sm:$0xff]
    %v189 = vld [vmem:[%s0 + $0x18] sm:$0xff]
    %v190 = vld [vmem:[%s0 + $0x20] sm:$0xff]
    %v191 = vld [vmem:[%s0 + $0x28] sm:$0xff]
    %v192 = vld [vmem:[%s0 + $0x30] sm:$0xff]
    %v193 = vld [vmem:[%s0 + $0x38] sm:$0xff]
    %v194 = vld [vmem:[%s2] sm:$0xf]
    %v195 = vld [vmem:[%s2 + $0x4] sm:$0xf]
    %v196 = vld [vmem:[%s2 + $0x8] sm:$0xf]
    %v197 = vld [vmem:[%s2 + $0xc] sm:$0xf]
    %v198 = vld [vmem:[%s2 + $0x10] sm:$0xf]
    %v199 = vld [vmem:[%s2 + $0x14] sm:$0xf]
    %v200 = vld [vmem:[%s2 + $0x18] sm:$0xf]
    %v201 = vld [vmem:[%s2 + $0x1c] sm:$0xf]
    %v202 = vld [vmem:[%s2 + $0x20] sm:$0xf]
    %v203 = vld [vmem:[%s2 + $0x24] sm:$0xf]
    %v204 = vld [vmem:[%s2 + $0x28] sm:$0xf]
    %v205 = vld [vmem:[%s2 + $0x2c] sm:$0xf]
    %v206 = vld [vmem:[%s2 + $0x30] sm:$0xf]
    %v207 = vld [vmem:[%s2 + $0x34] sm:$0xf]
    %v208 = vld [vmem:[%s2 + $0x38] sm:$0xf]
    %v209 = vld [vmem:[%s2 + $0x3c] sm:$0xf]
    %v210 = vld [vmem:[%s2 + $0x40] sm:$0xf]
    %v211 = vld [vmem:[%s2 + $0x44] sm:$0xf]
    %v212 = vld [vmem:[%s2 + $0x48] sm:$0xf]
    %v213 = vld [vmem:[%s2 + $0x4c] sm:$0xf]
    %v214 = vld [vmem:[%s2 + $0x50] sm:$0xf]
    %v215 = vld [vmem:[%s2 + $0x54] sm:$0xf]
    %v216 = vld [vmem:[%s2 + $0x58] sm:$0xf]
    %v217 = vld [vmem:[%s2 + $0x5c] sm:$0xf]
    %v218 = vpack.c.bf16 %v188, %v186
    %v219 = vpack.c.bf16 %v189, %v187
    %v220 = vpack.c.bf16 %v192, %v190
    %v221 = vpack.c.bf16 %v193, %v191
    %v246 = vunpack.c.l.b16 %v194
    %v247 = vunpack.c.l.b16 %v195
    %v248 = vunpack.c.l.b16 %v196
    %v249 = vunpack.c.l.b16 %v197
    %v250 = vunpack.c.l.b16 %v198
    %v251 = vunpack.c.l.b16 %v199
    %v252 = vunpack.c.l.b16 %v200
    %v253 = vunpack.c.l.b16 %v201
    %v254 = vunpack.c.l.b16 %v202
    %v255 = vunpack.c.l.b16 %v203
    %v256 = vunpack.c.l.b16 %v204
    %v257 = vunpack.c.l.b16 %v205
    %v258 = vunpack.c.l.b16 %v206
    %v259 = vunpack.c.l.b16 %v207
    %v260 = vunpack.c.l.b16 %v208
    %v261 = vunpack.c.l.b16 %v209
    %v262 = vunpack.c.l.b16 %v210
    %v263 = vunpack.c.l.b16 %v211
    %v264 = vunpack.c.l.b16 %v212
    %v265 = vunpack.c.l.b16 %v213
    %v266 = vunpack.c.l.b16 %v214
    %v267 = vunpack.c.l.b16 %v215
    %v268 = vunpack.c.l.b16 %v216
    %v269 = vunpack.c.l.b16 %v217
    %v270 = vpack.c.b16 %v247, %v246
    %v271 = vpack.c.b16 %v249, %v248
    %v272 = vpack.c.b16 %v251, %v250
    %v273 = vpack.c.b16 %v253, %v252
    %v274 = vpack.c.b16 %v255, %v254
    %v275 = vpack.c.b16 %v257, %v256
    %v276 = vpack.c.b16 %v259, %v258
    %v277 = vpack.c.b16 %v261, %v260
    %v278 = vpack.c.b16 %v263, %v262
    %v279 = vpack.c.b16 %v265, %v264
    %v280 = vpack.c.b16 %v267, %v266
    %v281 = vpack.c.b16 %v269, %v268
    %vm294 = vcmask 523264
    %v296 = vsel %vm294, %v219, 0
    %v299 = vsel %vm294, %v221, 0
    %301 = vmatprep.subr.bf16.mxu0 0
    %302 = vmatpush1.bf16.msra.mxu0 %v270
    %303 = vmatprep.subr.bf16.mxu0 0
    %304 = vmatpush1.bf16.msra.mxu0 %v271
    %305 = vmatprep.subr.bf16.mxu0 0
    %306 = vmatpush1.bf16.msra.mxu0 %v272
    %307 = vmatprep.subr.bf16.mxu0 0
    %308 = vmatpush1.bf16.msra.mxu0 %v273
    %309 = vmatprep.subr.bf16.mxu0 0
    %310 = vmatpush1.bf16.msra.mxu0 %v274
    %311 = vmatprep.subr.bf16.mxu0 0
    %312 = vmatpush1.bf16.msra.mxu0 %v275
    %313 = vmatprep.subr.bf16.mxu0 0
    %314 = vmatpush1.bf16.msra.mxu0 %v276
    %315 = vmatprep.subr.bf16.mxu0 0
    %316 = vmatpush1.bf16.msra.mxu0 %v277
    %317 = vmatprep.subr.bf16.mxu0 0
    %318 = vmatpush1.bf16.msra.mxu0 %v278
    %319 = vmatprep.subr.bf16.mxu0 0
    %320 = vmatpush1.bf16.msra.mxu0 %v279
    %321 = vmatprep.subr.bf16.mxu0 0
    %322 = vmatpush1.bf16.msra.mxu0 %v280
    %323 = vmatprep.subr.bf16.mxu0 0
    %324 = vmatpush1.bf16.msra.mxu0 %v281
    %325 = vmatprep.subr.bf16.mxu0 0
    %326 = vmatpush1.bf16.msra.mxu0 0
    %327 = vmatprep.subr.bf16.mxu0 0
    %328 = vmatpush1.bf16.msra.mxu0 0
    %329 = vmatprep.subr.bf16.mxu0 0
    %330 = vmatpush1.bf16.msra.mxu0 0
    %331 = vmatprep.subr.bf16.mxu0 0
    %332 = vmatpush1.bf16.msra.mxu0 0
    %333 = vmatprep.mubr.bf16.mxu0 %v296
    %334 = vmatmul.mubr.bf16.gmra.mrb[0].mxu0 %v218
    %v335 = vpop.f32.mrb[0].mxu0
    %v336 = vadd.f32 0.0, %v335
    %v337 = vpop.f32.mrb[0].mxu0
    %v338 = vpop.f32.mrb[0].mxu0
    %v339 = vadd.f32 0.0, %v338
    %v340 = vpop.f32.mrb[0].mxu0
    %341 = vmatprep.mubr.bf16.mxu0 %v299
    %342 = vmatmul.mubr.bf16.gmra.mrb[0].mxu0 %v220
    %v343 = vpop.f32.mrb[0].mxu0
    %v344 = vadd.f32 0.0, %v343
    %v345 = vpop.f32.mrb[0].mxu0
    %v346 = vpop.f32.mrb[0].mxu0
    %v347 = vadd.f32 0.0, %v346
    %v348 = vpop.f32.mrb[0].mxu0
    %349 = vdwg.mxu0
    %v350 = vld [vmem:[#allocation2] sm:$0xff]
    %v351 = vld [vmem:[#allocation2 + $0x8] sm:$0xff]
    %v352 = vadd.f32 %v336, %v350
    %v353 = vadd.f32 %v339, %v351
    %v354 = vadd.f32 %v344, %v350
    %v355 = vadd.f32 %v347, %v351
    %v356 = vld [vmem:[%s3] sm:$0x3]
    %v357 = vsel %vm294, %v352, 0.0
    %358 = vadd.xlane.f32.xlu0 %v357
    %v359 = vpop.xlane.xlu0 %358
    %v360 = vsel %vm294, %v353, 0.0
    %361 = vadd.xlane.f32.xlu0 %v360
    %v362 = vpop.xlane.xlu0 %361
    %v363 = vsel %vm294, %v354, 0.0
    %364 = vadd.xlane.f32.xlu0 %v363
    %v365 = vpop.xlane.xlu0 %364
    %v366 = vsel %vm294, %v355, 0.0
    %367 = vadd.xlane.f32.xlu0 %v366
    %v368 = vpop.xlane.xlu0 %367
    %v369 = vrcp.pop 64.0
    %v370 = vmul.f32 %v359, %v369
    %v371 = vmul.f32 %v362, %v369
    %v372 = vmul.f32 %v365, %v369
    %v373 = vmul.f32 %v368, %v369
    %v374 = vsub.f32 %v352, %v370
    %v375 = vsub.f32 %v353, %v371
    %v376 = vsub.f32 %v354, %v372
    %v377 = vsub.f32 %v355, %v373
    %v378 = vmul.f32 %v374, %v374
    %v379 = vmul.f32 %v375, %v375
    %v380 = vmul.f32 %v376, %v376
    %v381 = vmul.f32 %v377, %v377
    %v382 = vsel %vm294, %v378, 0.0
    %383 = vadd.xlane.f32.xlu0 %v382
    %v384 = vpop.xlane.xlu0 %383
    %v385 = vsel %vm294, %v379, 0.0
    %386 = vadd.xlane.f32.xlu0 %v385
    %v387 = vpop.xlane.xlu0 %386
    %v388 = vsel %vm294, %v380, 0.0
    %389 = vadd.xlane.f32.xlu0 %v388
    %v390 = vpop.xlane.xlu0 %389
    %v391 = vsel %vm294, %v381, 0.0
    %392 = vadd.xlane.f32.xlu0 %v391
    %v393 = vpop.xlane.xlu0 %392
    %v394 = vmul.f32 %v384, %v369
    %v395 = vmul.f32 %v387, %v369
    %v396 = vmul.f32 %v390, %v369
    %v397 = vmul.f32 %v393, %v369
    %v398 = vadd.f32 %v394, 1e-06
    %v399 = vadd.f32 %v395, 1e-06
    %v400 = vadd.f32 %v396, 1e-06
    %v401 = vadd.f32 %v397, 1e-06
    %v402 = vrsqrt.pop %v398
    %v403 = vrsqrt.pop %v399
    %v404 = vrsqrt.pop %v400
    %v405 = vrsqrt.pop %v401
    %v406 = vmul.f32 %v374, %v402
    %v407 = vmul.f32 %v375, %v403
    %v408 = vmul.f32 %v376, %v404
    %v409 = vmul.f32 %v377, %v405
    %v410 = vlaneseq
    %v411 = vshrl.u32 %v410, 7
    %v412 = vsub.s32 0, %v411
    %v413 = vrot.slane %v356, %v412
    %v414 = vmul.f32 %v406, %v413
    %v415 = vmul.f32 %v407, %v413
    %v416 = vmul.f32 %v408, %v413
    %v417 = vmul.f32 %v409, %v413
    %v418 = vlaneseq
    %v419 = vshrl.u32 %v418, 7
    %v420 = vsub.s32 1, %v419
    %v421 = vrot.slane %v356, %v420
    %v422 = vadd.f32 %v414, %v421
    %v423 = vadd.f32 %v415, %v421
    %v424 = vadd.f32 %v416, %v421
    %v425 = vadd.f32 %v417, %v421
    %v426 = vld [vmem:[%s4] sm:$0xff]
    %v427 = vld [vmem:[%s4 + $0x8] sm:$0xff]
    %v428 = vld [vmem:[%s4 + $0x10] sm:$0xff]
    %v429 = vld [vmem:[%s4 + $0x18] sm:$0xff]
    %v430 = vld [vmem:[%s4 + $0x20] sm:$0xff]
    %v431 = vld [vmem:[%s4 + $0x28] sm:$0xff]
    %v432 = vld [vmem:[%s4 + $0x30] sm:$0xff]
    %v433 = vld [vmem:[%s4 + $0x38] sm:$0xff]
    %v434 = vpack.c.bf16 %v423, %v422
    %v435 = vpack.c.bf16 %v425, %v424
    %v436 = vld [vmem:[#allocation4] sm:$0x3]
    %v438 = vlaneseq
    %v439 = vshrl.u32 %v438, 7
    %v440 = vsub.s32 0, %v439
    %v441 = vrot.slane %v436, %v440
    %v442 = vlaneseq
    %v443 = vshrl.u32 %v442, 7
    %v444 = vsub.s32 1, %v443
    %v445 = vrot.slane %v436, %v444
    %v456 = vunpack.c.l.b16 %v426
    %v457 = vunpack.c.h.b16 %v426
    %v458 = vunpack.c.l.b16 %v427
    %v459 = vunpack.c.h.b16 %v427
    %v460 = vunpack.c.l.b16 %v428
    %v461 = vunpack.c.h.b16 %v428
    %v462 = vunpack.c.l.b16 %v429
    %v463 = vunpack.c.h.b16 %v429
    %v464 = vunpack.c.l.b16 %v430
    %v465 = vunpack.c.h.b16 %v430
    %v466 = vunpack.c.l.b16 %v431
    %v467 = vunpack.c.h.b16 %v431
    %v468 = vunpack.c.l.b16 %v432
    %v469 = vunpack.c.h.b16 %v432
    %v470 = vunpack.c.l.b16 %v433
    %v471 = vunpack.c.h.b16 %v433
    %v472 = vpack.c.b16 %v458, %v456
    %v473 = vpack.c.b16 %v459, %v457
    %v474 = vpack.c.b16 %v462, %v460
    %v475 = vpack.c.b16 %v463, %v461
    %v476 = vpack.c.b16 %v466, %v464
    %v477 = vpack.c.b16 %v467, %v465
    %v478 = vpack.c.b16 %v470, %v468
    %v479 = vpack.c.b16 %v471, %v469
    %v489 = vsel %vm294, %v434, 0
    %v492 = vsel %vm294, %v435, 0
    %494 = vmatprep.subr.bf16.mxu0 %v473
    %495 = vmatpush1.bf16.msra.mxu0 %v472
    %496 = vmatprep.subr.bf16.mxu0 %v475
    %497 = vmatpush1.bf16.msra.mxu0 %v474
    %498 = vmatprep.subr.bf16.mxu0 %v477
    %499 = vmatpush1.bf16.msra.mxu0 %v476
    %500 = vmatprep.subr.bf16.mxu0 %v479
    %501 = vmatpush1.bf16.msra.mxu0 %v478
    %502 = vmatprep.subr.bf16.mxu0 0
    %503 = vmatpush1.bf16.msra.mxu0 0
    %504 = vmatprep.subr.bf16.mxu0 0
    %505 = vmatpush1.bf16.msra.mxu0 0
    %506 = vmatprep.subr.bf16.mxu0 0
    %507 = vmatpush1.bf16.msra.mxu0 0
    %508 = vmatprep.subr.bf16.mxu0 0
    %509 = vmatpush1.bf16.msra.mxu0 0
    %510 = vmatprep.subr.bf16.mxu0 0
    %511 = vmatpush1.bf16.msra.mxu0 0
    %512 = vmatprep.subr.bf16.mxu0 0
    %513 = vmatpush1.bf16.msra.mxu0 0
    %514 = vmatprep.subr.bf16.mxu0 0
    %515 = vmatpush1.bf16.msra.mxu0 0
    %516 = vmatprep.subr.bf16.mxu0 0
    %517 = vmatpush1.bf16.msra.mxu0 0
    %518 = vmatprep.subr.bf16.mxu0 0
    %519 = vmatpush1.bf16.msra.mxu0 0
    %520 = vmatprep.subr.bf16.mxu0 0
    %521 = vmatpush1.bf16.msra.mxu0 0
    %522 = vmatprep.subr.bf16.mxu0 0
    %523 = vmatpush1.bf16.msra.mxu0 0
    %524 = vmatprep.subr.bf16.mxu0 0
    %525 = vmatpush1.bf16.msra.mxu0 0
    %526 = vmatprep.mubr.bf16.mxu0 0
    %527 = vmatmul.mubr.bf16.gmra.mrb[0].mxu0 %v489
    %v528 = vpop.f32.mrb[0].mxu0
    %v529 = vadd.f32 %v441, %v528
    %v530 = vpop.f32.mrb[0].mxu0
    %v531 = vadd.f32 %v445, %v530
    %v532 = vpop.f32.mrb[0].mxu0
    %v533 = vadd.f32 %v441, %v532
    %v534 = vpop.f32.mrb[0].mxu0
    %v535 = vadd.f32 %v445, %v534
    %536 = vmatprep.mubr.bf16.mxu0 0
    %537 = vmatmul.mubr.bf16.gmra.mrb[0].mxu0 %v492
    %v538 = vpop.f32.mrb[0].mxu0
    %v539 = vadd.f32 %v441, %v538
    %v540 = vpop.f32.mrb[0].mxu0
    %v541 = vadd.f32 %v445, %v540
    %v542 = vpop.f32.mrb[0].mxu0
    %v543 = vadd.f32 %v441, %v542
    %v544 = vpop.f32.mrb[0].mxu0
    %v545 = vadd.f32 %v445, %v544
    %546 = vdwg.mxu0
    %v547 = vld [vmem:[#allocation6] sm:$0xf]
    %v548 = vld [vmem:[#allocation6 + $0x4] sm:$0xf]
    %v549 = vld [vmem:[#allocation6 + $0x8] sm:$0xf]
    %v550 = vld [vmem:[#allocation6 + $0xc] sm:$0xf]
    %v551 = vld [vmem:[#allocation6 + $0x10] sm:$0xf]
    %v552 = vld [vmem:[#allocation6 + $0x14] sm:$0xf]
    %v553 = vld [vmem:[#allocation6 + $0x18] sm:$0xf]
    %v554 = vld [vmem:[#allocation6 + $0x1c] sm:$0xf]
    %v555 = vpack.c.bf16 %v533, %v529
    %v556 = vpack.c.bf16 %v543, %v539
    %558 = vrot.lane.b32.xlu0 %v555, 64
    %v559 = vpop.permute.xlu0 %558
    %vm560 = vcmask 130048
    %v562 = vsel %vm560, %v555, 0
    %v565 = vsel %vm560, %v559, 0
    %567 = vmatprep.subr.bf16.mxu0 0
    %568 = vmatpush1.bf16.xpose.msra.mxu0 %v565
    %569 = vmatprep.subr.bf16.mxu0 0
    %570 = vmatpush1.bf16.xpose.msra.mxu0 0
    %571 = vmatprep.subr.bf16.mxu0 0
    %572 = vmatpush1.bf16.xpose.msra.mxu0 0
    %573 = vmatprep.subr.bf16.mxu0 0
    %574 = vmatpush1.bf16.xpose.msra.mxu0 0
    %575 = vmatprep.subr.bf16.mxu0 0
    %576 = vmatpush1.bf16.xpose.msra.mxu0 0
    %577 = vmatprep.subr.bf16.mxu0 0
    %578 = vmatpush1.bf16.xpose.msra.mxu0 0
    %579 = vmatprep.subr.bf16.mxu0 0
    %580 = vmatpush1.bf16.xpose.msra.mxu0 0
    %581 = vmatprep.subr.bf16.mxu0 0
    %582 = vmatpush1.bf16.xpose.msra.mxu0 0
    %583 = vmatprep.subr.bf16.mxu0 0
    %584 = vmatpush1.bf16.xpose.msra.mxu0 0
    %585 = vmatprep.subr.bf16.mxu0 0
    %586 = vmatpush1.bf16.xpose.msra.mxu0 0
    %587 = vmatprep.subr.bf16.mxu0 0
    %588 = vmatpush1.bf16.xpose.msra.mxu0 0
    %589 = vmatprep.subr.bf16.mxu0 0
    %590 = vmatpush1.bf16.xpose.msra.mxu0 0
    %591 = vmatprep.subr.bf16.mxu0 0
    %592 = vmatpush1.bf16.xpose.msra.mxu0 0
    %593 = vmatprep.subr.bf16.mxu0 0
    %594 = vmatpush1.bf16.xpose.msra.mxu0 0
    %595 = vmatprep.subr.bf16.mxu0 0
    %596 = vmatpush1.bf16.xpose.msra.mxu0 0
    %597 = vmatprep.subr.bf16.mxu0 0
    %598 = vmatpush1.bf16.xpose.msra.mxu0 0
    %599 = vmatprep.mubr.bf16.mxu0 0
    %600 = vmatmul.mubr.bf16.gmra.mrb[0].mxu0 %v562
    %v601 = vpop.f32.mrb[0].mxu0
    %v602 = vadd.f32 0.0, %v601
    %v603 = vpop.f32.mrb[0].mxu0
    %v604 = vpop.f32.mrb[0].mxu0
    %v605 = vadd.f32 0.0, %v604
    %v606 = vpop.f32.mrb[0].mxu0
    %607 = vdwg.mxu0
    %609 = vrot.lane.b32.xlu0 %v556, 64
    %v610 = vpop.permute.xlu0 %609
    %v612 = vsel %vm560, %v556, 0
    %v615 = vsel %vm560, %v610, 0
    %617 = vmatprep.subr.bf16.mxu0 0
    %618 = vmatpush1.bf16.xpose.msra.mxu0 %v615
    %619 = vmatprep.subr.bf16.mxu0 0
    %620 = vmatpush1.bf16.xpose.msra.mxu0 0
    %621 = vmatprep.subr.bf16.mxu0 0
    %622 = vmatpush1.bf16.xpose.msra.mxu0 0
    %623 = vmatprep.subr.bf16.mxu0 0
    %624 = vmatpush1.bf16.xpose.msra.mxu0 0
    %625 = vmatprep.subr.bf16.mxu0 0
    %626 = vmatpush1.bf16.xpose.msra.mxu0 0
    %627 = vmatprep.subr.bf16.mxu0 0
    %628 = vmatpush1.bf16.xpose.msra.mxu0 0
    %629 = vmatprep.subr.bf16.mxu0 0
    %630 = vmatpush1.bf16.xpose.msra.mxu0 0
    %631 = vmatprep.subr.bf16.mxu0 0
    %632 = vmatpush1.bf16.xpose.msra.mxu0 0
    %633 = vmatprep.subr.bf16.mxu0 0
    %634 = vmatpush1.bf16.xpose.msra.mxu0 0
    %635 = vmatprep.subr.bf16.mxu0 0
    %636 = vmatpush1.bf16.xpose.msra.mxu0 0
    %637 = vmatprep.subr.bf16.mxu0 0
    %638 = vmatpush1.bf16.xpose.msra.mxu0 0
    %639 = vmatprep.subr.bf16.mxu0 0
    %640 = vmatpush1.bf16.xpose.msra.mxu0 0
    %641 = vmatprep.subr.bf16.mxu0 0
    %642 = vmatpush1.bf16.xpose.msra.mxu0 0
    %643 = vmatprep.subr.bf16.mxu0 0
    %644 = vmatpush1.bf16.xpose.msra.mxu0 0
    %645 = vmatprep.subr.bf16.mxu0 0
    %646 = vmatpush1.bf16.xpose.msra.mxu0 0
    %647 = vmatprep.subr.bf16.mxu0 0
    %648 = vmatpush1.bf16.xpose.msra.mxu0 0
    %649 = vmatprep.mubr.bf16.mxu0 0
    %650 = vmatmul.mubr.bf16.gmra.mrb[0].mxu0 %v612
    %v651 = vpop.f32.mrb[0].mxu0
    %v652 = vadd.f32 0.0, %v651
    %v653 = vpop.f32.mrb[0].mxu0
    %v654 = vpop.f32.mrb[0].mxu0
    %v655 = vadd.f32 0.0, %v654
    %v656 = vpop.f32.mrb[0].mxu0
    %657 = vdwg.mxu0
    %v658 = vsel %vm560, %v602, -inf
    %659 = vmax.xlane.f32.xlu0 %v658
    %v660 = vpop.xlane.xlu0 %659
    %v661 = vsel %vm560, %v605, -inf
    %662 = vmax.xlane.f32.xlu0 %v661
    %v663 = vpop.xlane.xlu0 %662
    %v664 = vsel %vm560, %v652, -inf
    %665 = vmax.xlane.f32.xlu0 %v664
    %v666 = vpop.xlane.xlu0 %665
    %v667 = vsel %vm560, %v655, -inf
    %668 = vmax.xlane.f32.xlu0 %v667
    %v669 = vpop.xlane.xlu0 %668
    %v670 = vsub.f32 %v602, %v660
    %v671 = vsub.f32 %v605, %v663
    %v672 = vsub.f32 %v652, %v666
    %v673 = vsub.f32 %v655, %v669
    %v674 = vmul.f32 %v670, 1.442695
    %v675 = vpow.pop %v674
    %v676 = vmul.f32 %v671, 1.442695
    %v677 = vpow.pop %v676
    %v678 = vmul.f32 %v672, 1.442695
    %v679 = vpow.pop %v678
    %v680 = vmul.f32 %v673, 1.442695
    %v681 = vpow.pop %v680
    %v682 = vsel %vm560, %v675, 0.0
    %683 = vadd.xlane.f32.xlu0 %v682
    %v684 = vpop.xlane.xlu0 %683
    %v685 = vsel %vm560, %v677, 0.0
    %686 = vadd.xlane.f32.xlu0 %v685
    %v687 = vpop.xlane.xlu0 %686
    %v688 = vsel %vm560, %v679, 0.0
    %689 = vadd.xlane.f32.xlu0 %v688
    %v690 = vpop.xlane.xlu0 %689
    %v691 = vsel %vm560, %v681, 0.0
    %692 = vadd.xlane.f32.xlu0 %v691
    %v693 = vpop.xlane.xlu0 %692
    %v694 = vrcp.pop %v684
    %v695 = vrcp.pop %v687
    %v696 = vrcp.pop %v690
    %v697 = vrcp.pop %v693
    %v698 = vmul.f32 %v675, %v694
    %v699 = vmul.f32 %v677, %v695
    %v700 = vmul.f32 %v679, %v696
    %v701 = vmul.f32 %v681, %v697
    %v702 = vpack.c.bf16 %v699, %v698
    %v703 = vpack.c.bf16 %v701, %v700
    %v704 = vpack.c.bf16 %v535, %v531
    %v705 = vpack.c.bf16 %v545, %v541
    %v707 = vsel %vm560, %v702, 0
    %709 = vmatprep.subr.bf16.mxu0 0
    %710 = vmatpush1.bf16.msra.mxu0 %v704
    %711 = vmatprep.subr.bf16.mxu0 0
    %712 = vmatpush1.bf16.msra.mxu0 0
    %713 = vmatprep.subr.bf16.mxu0 0
    %714 = vmatpush1.bf16.msra.mxu0 0
    %715 = vmatprep.subr.bf16.mxu0 0
    %716 = vmatpush1.bf16.msra.mxu0 0
    %717 = vmatprep.subr.bf16.mxu0 0
    %718 = vmatpush1.bf16.msra.mxu0 0
    %719 = vmatprep.subr.bf16.mxu0 0
    %720 = vmatpush1.bf16.msra.mxu0 0
    %721 = vmatprep.subr.bf16.mxu0 0
    %722 = vmatpush1.bf16.msra.mxu0 0
    %723 = vmatprep.subr.bf16.mxu0 0
    %724 = vmatpush1.bf16.msra.mxu0 0
    %725 = vmatprep.subr.bf16.mxu0 0
    %726 = vmatpush1.bf16.msra.mxu0 0
    %727 = vmatprep.subr.bf16.mxu0 0
    %728 = vmatpush1.bf16.msra.mxu0 0
    %729 = vmatprep.subr.bf16.mxu0 0
    %730 = vmatpush1.bf16.msra.mxu0 0
    %731 = vmatprep.subr.bf16.mxu0 0
    %732 = vmatpush1.bf16.msra.mxu0 0
    %733 = vmatprep.subr.bf16.mxu0 0
    %734 = vmatpush1.bf16.msra.mxu0 0
    %735 = vmatprep.subr.bf16.mxu0 0
    %736 = vmatpush1.bf16.msra.mxu0 0
    %737 = vmatprep.subr.bf16.mxu0 0
    %738 = vmatpush1.bf16.msra.mxu0 0
    %739 = vmatprep.subr.bf16.mxu0 0
    %740 = vmatpush1.bf16.msra.mxu0 0
    %741 = vmatprep.mubr.bf16.mxu0 0
    %742 = vmatmul.mubr.bf16.gmra.mrb[0].mxu0 %v707
    %v743 = vpop.f32.mrb[0].mxu0
    %v744 = vadd.f32 0.0, %v743
    %v745 = vpop.f32.mrb[0].mxu0
    %v746 = vpop.f32.mrb[0].mxu0
    %v747 = vadd.f32 0.0, %v746
    %v748 = vpop.f32.mrb[0].mxu0
    %749 = vdwg.mxu0
    %v751 = vsel %vm560, %v703, 0
    %753 = vmatprep.subr.bf16.mxu0 0
    %754 = vmatpush1.bf16.msra.mxu0 %v705
    %755 = vmatprep.subr.bf16.mxu0 0
    %756 = vmatpush1.bf16.msra.mxu0 0
    %757 = vmatprep.subr.bf16.mxu0 0
    %758 = vmatpush1.bf16.msra.mxu0 0
    %759 = vmatprep.subr.bf16.mxu0 0
    %760 = vmatpush1.bf16.msra.mxu0 0
    %761 = vmatprep.subr.bf16.mxu0 0
    %762 = vmatpush1.bf16.msra.mxu0 0
    %763 = vmatprep.subr.bf16.mxu0 0
    %764 = vmatpush1.bf16.msra.mxu0 0
    %765 = vmatprep.subr.bf16.mxu0 0
    %766 = vmatpush1.bf16.msra.mxu0 0
    %767 = vmatprep.subr.bf16.mxu0 0
    %768 = vmatpush1.bf16.msra.mxu0 0
    %769 = vmatprep.subr.bf16.mxu0 0
    %770 = vmatpush1.bf16.msra.mxu0 0
    %771 = vmatprep.subr.bf16.mxu0 0
    %772 = vmatpush1.bf16.msra.mxu0 0
    %773 = vmatprep.subr.bf16.mxu0 0
    %774 = vmatpush1.bf16.msra.mxu0 0
    %775 = vmatprep.subr.bf16.mxu0 0
    %776 = vmatpush1.bf16.msra.mxu0 0
    %777 = vmatprep.subr.bf16.mxu0 0
    %778 = vmatpush1.bf16.msra.mxu0 0
    %779 = vmatprep.subr.bf16.mxu0 0
    %780 = vmatpush1.bf16.msra.mxu0 0
    %781 = vmatprep.subr.bf16.mxu0 0
    %782 = vmatpush1.bf16.msra.mxu0 0
    %783 = vmatprep.subr.bf16.mxu0 0
    %784 = vmatpush1.bf16.msra.mxu0 0
    %785 = vmatprep.mubr.bf16.mxu0 0
    %786 = vmatmul.mubr.bf16.gmra.mrb[0].mxu0 %v751
    %v787 = vpop.f32.mrb[0].mxu0
    %v788 = vadd.f32 0.0, %v787
    %v789 = vpop.f32.mrb[0].mxu0
    %v790 = vpop.f32.mrb[0].mxu0
    %v791 = vadd.f32 0.0, %v790
    %v792 = vpop.f32.mrb[0].mxu0
    %793 = vdwg.mxu0
    %v794 = vpack.c.bf16 %v747, %v744
    %v795 = vpack.c.bf16 %v791, %v788
    %796 = vrot.lane.b32.xlu0 %v555, 112
    %v797 = vpop.permute.xlu0 %796
    %798 = vrot.lane.b32.xlu0 %v555, 48
    %v799 = vpop.permute.xlu0 %798
    %v801 = vsel %vm560, %v797, 0
    %v804 = vsel %vm560, %v799, 0
    %806 = vmatprep.subr.bf16.mxu0 0
    %807 = vmatpush1.bf16.xpose.msra.mxu0 %v804
    %808 = vmatprep.subr.bf16.mxu0 0
    %809 = vmatpush1.bf16.xpose.msra.mxu0 0
    %810 = vmatprep.subr.bf16.mxu0 0
    %811 = vmatpush1.bf16.xpose.msra.mxu0 0
    %812 = vmatprep.subr.bf16.mxu0 0
    %813 = vmatpush1.bf16.xpose.msra.mxu0 0
    %814 = vmatprep.subr.bf16.mxu0 0
    %815 = vmatpush1.bf16.xpose.msra.mxu0 0
    %816 = vmatprep.subr.bf16.mxu0 0
    %817 = vmatpush1.bf16.xpose.msra.mxu0 0
    %818 = vmatprep.subr.bf16.mxu0 0
    %819 = vmatpush1.bf16.xpose.msra.mxu0 0
    %820 = vmatprep.subr.bf16.mxu0 0
    %821 = vmatpush1.bf16.xpose.msra.mxu0 0
    %822 = vmatprep.subr.bf16.mxu0 0
    %823 = vmatpush1.bf16.xpose.msra.mxu0 0
    %824 = vmatprep.subr.bf16.mxu0 0
    %825 = vmatpush1.bf16.xpose.msra.mxu0 0
    %826 = vmatprep.subr.bf16.mxu0 0
    %827 = vmatpush1.bf16.xpose.msra.mxu0 0
    %828 = vmatprep.subr.bf16.mxu0 0
    %829 = vmatpush1.bf16.xpose.msra.mxu0 0
    %830 = vmatprep.subr.bf16.mxu0 0
    %831 = vmatpush1.bf16.xpose.msra.mxu0 0
    %832 = vmatprep.subr.bf16.mxu0 0
    %833 = vmatpush1.bf16.xpose.msra.mxu0 0
    %834 = vmatprep.subr.bf16.mxu0 0
    %835 = vmatpush1.bf16.xpose.msra.mxu0 0
    %836 = vmatprep.subr.bf16.mxu0 0
    %837 = vmatpush1.bf16.xpose.msra.mxu0 0
    %838 = vmatprep.mubr.bf16.mxu0 0
    %839 = vmatmul.mubr.bf16.gmra.mrb[0].mxu0 %v801
    %v840 = vpop.f32.mrb[0].mxu0
    %v841 = vadd.f32 0.0, %v840
    %v842 = vpop.f32.mrb[0].mxu0
    %v843 = vpop.f32.mrb[0].mxu0
    %v844 = vadd.f32 0.0, %v843
    %v845 = vpop.f32.mrb[0].mxu0
    %846 = vdwg.mxu0
    %847 = vrot.lane.b32.xlu0 %v556, 112
    %v848 = vpop.permute.xlu0 %847
    %849 = vrot.lane.b32.xlu0 %v556, 48
    %v850 = vpop.permute.xlu0 %849
    %v852 = vsel %vm560, %v848, 0
    %v855 = vsel %vm560, %v850, 0
    %857 = vmatprep.subr.bf16.mxu0 0
    %858 = vmatpush1.bf16.xpose.msra.mxu0 %v855
    %859 = vmatprep.subr.bf16.mxu0 0
    %860 = vmatpush1.bf16.xpose.msra.mxu0 0
    %861 = vmatprep.subr.bf16.mxu0 0
    %862 = vmatpush1.bf16.xpose.msra.mxu0 0
    %863 = vmatprep.subr.bf16.mxu0 0
    %864 = vmatpush1.bf16.xpose.msra.mxu0 0
    %865 = vmatprep.subr.bf16.mxu0 0
    %866 = vmatpush1.bf16.xpose.msra.mxu0 0
    %867 = vmatprep.subr.bf16.mxu0 0
    %868 = vmatpush1.bf16.xpose.msra.mxu0 0
    %869 = vmatprep.subr.bf16.mxu0 0
    %870 = vmatpush1.bf16.xpose.msra.mxu0 0
    %871 = vmatprep.subr.bf16.mxu0 0
    %872 = vmatpush1.bf16.xpose.msra.mxu0 0
    %873 = vmatprep.subr.bf16.mxu0 0
    %874 = vmatpush1.bf16.xpose.msra.mxu0 0
    %875 = vmatprep.subr.bf16.mxu0 0
    %876 = vmatpush1.bf16.xpose.msra.mxu0 0
    %877 = vmatprep.subr.bf16.mxu0 0
    %878 = vmatpush1.bf16.xpose.msra.mxu0 0
    %879 = vmatprep.subr.bf16.mxu0 0
    %880 = vmatpush1.bf16.xpose.msra.mxu0 0
    %881 = vmatprep.subr.bf16.mxu0 0
    %882 = vmatpush1.bf16.xpose.msra.mxu0 0
    %883 = vmatprep.subr.bf16.mxu0 0
    %884 = vmatpush1.bf16.xpose.msra.mxu0 0
    %885 = vmatprep.subr.bf16.mxu0 0
    %886 = vmatpush1.bf16.xpose.msra.mxu0 0
    %887 = vmatprep.subr.bf16.mxu0 0
    %888 = vmatpush1.bf16.xpose.msra.mxu0 0
    %889 = vmatprep.mubr.bf16.mxu0 0
    %890 = vmatmul.mubr.bf16.gmra.mrb[0].mxu0 %v852
    %v891 = vpop.f32.mrb[0].mxu0
    %v892 = vadd.f32 0.0, %v891
    %v893 = vpop.f32.mrb[0].mxu0
    %v894 = vpop.f32.mrb[0].mxu0
    %v895 = vadd.f32 0.0, %v894
    %v896 = vpop.f32.mrb[0].mxu0
    %897 = vdwg.mxu0
    %v898 = vsel %vm560, %v841, -inf
    %899 = vmax.xlane.f32.xlu0 %v898
    %v900 = vpop.xlane.xlu0 %899
    %v901 = vsel %vm560, %v844, -inf
    %902 = vmax.xlane.f32.xlu0 %v901
    %v903 = vpop.xlane.xlu0 %902
    %v904 = vsel %vm560, %v892, -inf
    %905 = vmax.xlane.f32.xlu0 %v904
    %v906 = vpop.xlane.xlu0 %905
    %v907 = vsel %vm560, %v895, -inf
    %908 = vmax.xlane.f32.xlu0 %v907
    %v909 = vpop.xlane.xlu0 %908
    %v910 = vsub.f32 %v841, %v900
    %v911 = vsub.f32 %v844, %v903
    %v912 = vsub.f32 %v892, %v906
    %v913 = vsub.f32 %v895, %v909
    %v914 = vmul.f32 %v910, 1.442695
    %v915 = vpow.pop %v914
    %v916 = vmul.f32 %v911, 1.442695
    %v917 = vpow.pop %v916
    %v918 = vmul.f32 %v912, 1.442695
    %v919 = vpow.pop %v918
    %v920 = vmul.f32 %v913, 1.442695
    %v921 = vpow.pop %v920
    %v922 = vsel %vm560, %v915, 0.0
    %923 = vadd.xlane.f32.xlu0 %v922
    %v924 = vpop.xlane.xlu0 %923
    %v925 = vsel %vm560, %v917, 0.0
    %926 = vadd.xlane.f32.xlu0 %v925
    %v927 = vpop.xlane.xlu0 %926
    %v928 = vsel %vm560, %v919, 0.0
    %929 = vadd.xlane.f32.xlu0 %v928
    %v930 = vpop.xlane.xlu0 %929
    %v931 = vsel %vm560, %v921, 0.0
    %932 = vadd.xlane.f32.xlu0 %v931
    %v933 = vpop.xlane.xlu0 %932
    %v934 = vrcp.pop %v924
    %v935 = vrcp.pop %v927
    %v936 = vrcp.pop %v930
    %v937 = vrcp.pop %v933
    %v938 = vmul.f32 %v915, %v934
    %v939 = vmul.f32 %v917, %v935
    %v940 = vmul.f32 %v919, %v936
    %v941 = vmul.f32 %v921, %v937
    %v942 = vpack.c.bf16 %v939, %v938
    %v943 = vpack.c.bf16 %v941, %v940
    %945 = vrot.lane.b32.xlu0 %v704, 112
    %v946 = vpop.permute.xlu0 %945
    %v949 = vsel %vm560, %v942, 0
    %951 = vmatprep.subr.bf16.mxu0 0
    %952 = vmatpush1.bf16.msra.mxu0 %v946
    %953 = vmatprep.subr.bf16.mxu0 0
    %954 = vmatpush1.bf16.msra.mxu0 0
    %955 = vmatprep.subr.bf16.mxu0 0
    %956 = vmatpush1.bf16.msra.mxu0 0
    %957 = vmatprep.subr.bf16.mxu0 0
    %958 = vmatpush1.bf16.msra.mxu0 0
    %959 = vmatprep.subr.bf16.mxu0 0
    %960 = vmatpush1.bf16.msra.mxu0 0
    %961 = vmatprep.subr.bf16.mxu0 0
    %962 = vmatpush1.bf16.msra.mxu0 0
    %963 = vmatprep.subr.bf16.mxu0 0
    %964 = vmatpush1.bf16.msra.mxu0 0
    %965 = vmatprep.subr.bf16.mxu0 0
    %966 = vmatpush1.bf16.msra.mxu0 0
    %967 = vmatprep.subr.bf16.mxu0 0
    %968 = vmatpush1.bf16.msra.mxu0 0
    %969 = vmatprep.subr.bf16.mxu0 0
    %970 = vmatpush1.bf16.msra.mxu0 0
    %971 = vmatprep.subr.bf16.mxu0 0
    %972 = vmatpush1.bf16.msra.mxu0 0
    %973 = vmatprep.subr.bf16.mxu0 0
    %974 = vmatpush1.bf16.msra.mxu0 0
    %975 = vmatprep.subr.bf16.mxu0 0
    %976 = vmatpush1.bf16.msra.mxu0 0
    %977 = vmatprep.subr.bf16.mxu0 0
    %978 = vmatpush1.bf16.msra.mxu0 0
    %979 = vmatprep.subr.bf16.mxu0 0
    %980 = vmatpush1.bf16.msra.mxu0 0
    %981 = vmatprep.subr.bf16.mxu0 0
    %982 = vmatpush1.bf16.msra.mxu0 0
    %983 = vmatprep.mubr.bf16.mxu0 0
    %984 = vmatmul.mubr.bf16.gmra.mrb[0].mxu0 %v949
    %v985 = vpop.f32.mrb[0].mxu0
    %v986 = vadd.f32 0.0, %v985
    %v987 = vpop.f32.mrb[0].mxu0
    %v988 = vpop.f32.mrb[0].mxu0
    %v989 = vadd.f32 0.0, %v988
    %v990 = vpop.f32.mrb[0].mxu0
    %991 = vdwg.mxu0
    %993 = vrot.lane.b32.xlu0 %v705, 112
    %v994 = vpop.permute.xlu0 %993
    %v997 = vsel %vm560, %v943, 0
    %999 = vmatprep.subr.bf16.mxu0 0
    %1000 = vmatpush1.bf16.msra.mxu0 %v994
    %1001 = vmatprep.subr.bf16.mxu0 0
    %1002 = vmatpush1.bf16.msra.mxu0 0
    %1003 = vmatprep.subr.bf16.mxu0 0
    %1004 = vmatpush1.bf16.msra.mxu0 0
    %1005 = vmatprep.subr.bf16.mxu0 0
    %1006 = vmatpush1.bf16.msra.mxu0 0
    %1007 = vmatprep.subr.bf16.mxu0 0
    %1008 = vmatpush1.bf16.msra.mxu0 0
    %1009 = vmatprep.subr.bf16.mxu0 0
    %1010 = vmatpush1.bf16.msra.mxu0 0
    %1011 = vmatprep.subr.bf16.mxu0 0
    %1012 = vmatpush1.bf16.msra.mxu0 0
    %1013 = vmatprep.subr.bf16.mxu0 0
    %1014 = vmatpush1.bf16.msra.mxu0 0
    %1015 = vmatprep.subr.bf16.mxu0 0
    %1016 = vmatpush1.bf16.msra.mxu0 0
    %1017 = vmatprep.subr.bf16.mxu0 0
    %1018 = vmatpush1.bf16.msra.mxu0 0
    %1019 = vmatprep.subr.bf16.mxu0 0
    %1020 = vmatpush1.bf16.msra.mxu0 0
    %1021 = vmatprep.subr.bf16.mxu0 0
    %1022 = vmatpush1.bf16.msra.mxu0 0
    %1023 = vmatprep.subr.bf16.mxu0 0
    %1024 = vmatpush1.bf16.msra.mxu0 0
    %1025 = vmatprep.subr.bf16.mxu0 0
    %1026 = vmatpush1.bf16.msra.mxu0 0
    %1027 = vmatprep.subr.bf16.mxu0 0
    %1028 = vmatpush1.bf16.msra.mxu0 0
    %1029 = vmatprep.subr.bf16.mxu0 0
    %1030 = vmatpush1.bf16.msra.mxu0 0
    %1031 = vmatprep.mubr.bf16.mxu0 0
    %1032 = vmatmul.mubr.bf16.gmra.mrb[0].mxu0 %v997
    %v1033 = vpop.f32.mrb[0].mxu0
    %v1034 = vadd.f32 0.0, %v1033
    %v1035 = vpop.f32.mrb[0].mxu0
    %v1036 = vpop.f32.mrb[0].mxu0
    %v1037 = vadd.f32 0.0, %v1036
    %v1038 = vpop.f32.mrb[0].mxu0
    %1039 = vdwg.mxu0
    %v1040 = vpack.c.bf16 %v989, %v986
    %v1041 = vpack.c.bf16 %v1037, %v1034
    %v1044 = vunpack.c.l.b16 %v549
    %v1045 = vunpack.c.l.b16 %v550
    %v1046 = vpack.c.b16 %v1045, %v1044
    %v1049 = vsel %vm560, %v1040, 0
    %v1052 = vsel %vm560, %v1041, 0
    %1054 = vmatprep.subr.bf16.mxu0 0
    %1055 = vmatpush1.bf16.msra.mxu0 %v1046
    %1056 = vmatprep.subr.bf16.mxu0 0
    %1057 = vmatpush1.bf16.msra.mxu0 0
    %1058 = vmatprep.subr.bf16.mxu0 0
    %1059 = vmatpush1.bf16.msra.mxu0 0
    %1060 = vmatprep.subr.bf16.mxu0 0
    %1061 = vmatpush1.bf16.msra.mxu0 0
    %1062 = vmatprep.subr.bf16.mxu0 0
    %1063 = vmatpush1.bf16.msra.mxu0 0
    %1064 = vmatprep.subr.bf16.mxu0 0
    %1065 = vmatpush1.bf16.msra.mxu0 0
    %1066 = vmatprep.subr.bf16.mxu0 0
    %1067 = vmatpush1.bf16.msra.mxu0 0
    %1068 = vmatprep.subr.bf16.mxu0 0
    %1069 = vmatpush1.bf16.msra.mxu0 0
    %1070 = vmatprep.subr.bf16.mxu0 0
    %1071 = vmatpush1.bf16.msra.mxu0 0
    %1072 = vmatprep.subr.bf16.mxu0 0
    %1073 = vmatpush1.bf16.msra.mxu0 0
    %1074 = vmatprep.subr.bf16.mxu0 0
    %1075 = vmatpush1.bf16.msra.mxu0 0
    %1076 = vmatprep.subr.bf16.mxu0 0
    %1077 = vmatpush1.bf16.msra.mxu0 0
    %1078 = vmatprep.subr.bf16.mxu0 0
    %1079 = vmatpush1.bf16.msra.mxu0 0
    %1080 = vmatprep.subr.bf16.mxu0 0
    %1081 = vmatpush1.bf16.msra.mxu0 0
    %1082 = vmatprep.subr.bf16.mxu0 0
    %1083 = vmatpush1.bf16.msra.mxu0 0
    %1084 = vmatprep.subr.bf16.mxu0 0
    %1085 = vmatpush1.bf16.msra.mxu0 0
    %1086 = vmatprep.mubr.bf16.mxu0 0
    %1087 = vmatmul.mubr.bf16.gmra.mrb[0].mxu0 %v1049
    %v1088 = vpop.f32.mrb[0].mxu0
    %v1089 = vadd.f32 0.0, %v1088
    %v1090 = vpop.f32.mrb[0].mxu0
    %v1091 = vpop.f32.mrb[0].mxu0
    %v1092 = vadd.f32 0.0, %v1091
    %v1093 = vpop.f32.mrb[0].mxu0
    %1094 = vmatprep.mubr.bf16.mxu0 0
    %1095 = vmatmul.mubr.bf16.gmra.mrb[0].mxu0 %v1052
    %v1096 = vpop.f32.mrb[0].mxu0
    %v1097 = vadd.f32 0.0, %v1096
    %v1098 = vpop.f32.mrb[0].mxu0
    %v1099 = vpop.f32.mrb[0].mxu0
    %v1100 = vadd.f32 0.0, %v1099
    %v1101 = vpop.f32.mrb[0].mxu0
    %1102 = vdwg.mxu0
    %v1105 = vunpack.c.l.b16 %v547
    %v1106 = vunpack.c.l.b16 %v548
    %v1107 = vpack.c.b16 %v1106, %v1105
    %v1110 = vsel %vm560, %v794, 0
    %v1113 = vsel %vm560, %v795, 0
    %1115 = vmatprep.subr.bf16.mxu0 0
    %1116 = vmatpush1.bf16.msra.mxu0 %v1107
    %1117 = vmatprep.subr.bf16.mxu0 0
    %1118 = vmatpush1.bf16.msra.mxu0 0
    %1119 = vmatprep.subr.bf16.mxu0 0
    %1120 = vmatpush1.bf16.msra.mxu0 0
    %1121 = vmatprep.subr.bf16.mxu0 0
    %1122 = vmatpush1.bf16.msra.mxu0 0
    %1123 = vmatprep.subr.bf16.mxu0 0
    %1124 = vmatpush1.bf16.msra.mxu0 0
    %1125 = vmatprep.subr.bf16.mxu0 0
    %1126 = vmatpush1.bf16.msra.mxu0 0
    %1127 = vmatprep.subr.bf16.mxu0 0
    %1128 = vmatpush1.bf16.msra.mxu0 0
    %1129 = vmatprep.subr.bf16.mxu0 0
    %1130 = vmatpush1.bf16.msra.mxu0 0
    %1131 = vmatprep.subr.bf16.mxu0 0
    %1132 = vmatpush1.bf16.msra.mxu0 0
    %1133 = vmatprep.subr.bf16.mxu0 0
    %1134 = vmatpush1.bf16.msra.mxu0 0
    %1135 = vmatprep.subr.bf16.mxu0 0
    %1136 = vmatpush1.bf16.msra.mxu0 0
    %1137 = vmatprep.subr.bf16.mxu0 0
    %1138 = vmatpush1.bf16.msra.mxu0 0
    %1139 = vmatprep.subr.bf16.mxu0 0
    %1140 = vmatpush1.bf16.msra.mxu0 0
    %1141 = vmatprep.subr.bf16.mxu0 0
    %1142 = vmatpush1.bf16.msra.mxu0 0
    %1143 = vmatprep.subr.bf16.mxu0 0
    %1144 = vmatpush1.bf16.msra.mxu0 0
    %1145 = vmatprep.subr.bf16.mxu0 0
    %1146 = vmatpush1.bf16.msra.mxu0 0
    %1147 = vmatprep.mubr.bf16.mxu0 0
    %1148 = vmatmul.mubr.bf16.gmra.mrb[0].mxu0 %v1110
    %v1149 = vpop.f32.mrb[0].mxu0
    %v1150 = vadd.f32 %v1089, %v1149
    %v1151 = vpop.f32.mrb[0].mxu0
    %v1152 = vpop.f32.mrb[0].mxu0
    %v1153 = vadd.f32 %v1092, %v1152
    %v1154 = vpop.f32.mrb[0].mxu0
    %1155 = vmatprep.mubr.bf16.mxu0 0
    %1156 = vmatmul.mubr.bf16.gmra.mrb[0].mxu0 %v1113
    %v1157 = vpop.f32.mrb[0].mxu0
    %v1158 = vadd.f32 %v1097, %v1157
    %v1159 = vpop.f32.mrb[0].mxu0
    %v1160 = vpop.f32.mrb[0].mxu0
    %v1161 = vadd.f32 %v1100, %v1160
    %v1162 = vpop.f32.mrb[0].mxu0
    %1163 = vdwg.mxu0
    %1164 = vrot.lane.b32.xlu0 %v555, 96
    %v1165 = vpop.permute.xlu0 %1164
    %1166 = vrot.lane.b32.xlu0 %v555, 32
    %v1167 = vpop.permute.xlu0 %1166
    %v1169 = vsel %vm560, %v1165, 0
    %v1172 = vsel %vm560, %v1167, 0
    %1174 = vmatprep.subr.bf16.mxu0 0
    %1175 = vmatpush1.bf16.xpose.msra.mxu0 %v1172
    %1176 = vmatprep.subr.bf16.mxu0 0
    %1177 = vmatpush1.bf16.xpose.msra.mxu0 0
    %1178 = vmatprep.subr.bf16.mxu0 0
    %1179 = vmatpush1.bf16.xpose.msra.mxu0 0
    %1180 = vmatprep.subr.bf16.mxu0 0
    %1181 = vmatpush1.bf16.xpose.msra.mxu0 0
    %1182 = vmatprep.subr.bf16.mxu0 0
    %1183 = vmatpush1.bf16.xpose.msra.mxu0 0
    %1184 = vmatprep.subr.bf16.mxu0 0
    %1185 = vmatpush1.bf16.xpose.msra.mxu0 0
    %1186 = vmatprep.subr.bf16.mxu0 0
    %1187 = vmatpush1.bf16.xpose.msra.mxu0 0
    %1188 = vmatprep.subr.bf16.mxu0 0
    %1189 = vmatpush1.bf16.xpose.msra.mxu0 0
    %1190 = vmatprep.subr.bf16.mxu0 0
    %1191 = vmatpush1.bf16.xpose.msra.mxu0 0
    %1192 = vmatprep.subr.bf16.mxu0 0
    %1193 = vmatpush1.bf16.xpose.msra.mxu0 0
    %1194 = vmatprep.subr.bf16.mxu0 0
    %1195 = vmatpush1.bf16.xpose.msra.mxu0 0
    %1196 = vmatprep.subr.bf16.mxu0 0
    %1197 = vmatpush1.bf16.xpose.msra.mxu0 0
    %1198 = vmatprep.subr.bf16.mxu0 0
    %1199 = vmatpush1.bf16.xpose.msra.mxu0 0
    %1200 = vmatprep.subr.bf16.mxu0 0
    %1201 = vmatpush1.bf16.xpose.msra.mxu0 0
    %1202 = vmatprep.subr.bf16.mxu0 0
    %1203 = vmatpush1.bf16.xpose.msra.mxu0 0
    %1204 = vmatprep.subr.bf16.mxu0 0
    %1205 = vmatpush1.bf16.xpose.msra.mxu0 0
    %1206 = vmatprep.mubr.bf16.mxu0 0
    %1207 = vmatmul.mubr.bf16.gmra.mrb[0].mxu0 %v1169
    %v1208 = vpop.f32.mrb[0].mxu0
    %v1209 = vadd.f32 0.0, %v1208
    %v1210 = vpop.f32.mrb[0].mxu0
    %v1211 = vpop.f32.mrb[0].mxu0
    %v1212 = vadd.f32 0.0, %v1211
    %v1213 = vpop.f32.mrb[0].mxu0
    %1214 = vdwg.mxu0
    %1215 = vrot.lane.b32.xlu0 %v556, 96
    %v1216 = vpop.permute.xlu0 %1215
    %1217 = vrot.lane.b32.xlu0 %v556, 32
    %v1218 = vpop.permute.xlu0 %1217
    %v1220 = vsel %vm560, %v1216, 0
    %v1223 = vsel %vm560, %v1218, 0
    %1225 = vmatprep.subr.bf16.mxu0 0
    %1226 = vmatpush1.bf16.xpose.msra.mxu0 %v1223
    %1227 = vmatprep.subr.bf16.mxu0 0
    %1228 = vmatpush1.bf16.xpose.msra.mxu0 0
    %1229 = vmatprep.subr.bf16.mxu0 0
    %1230 = vmatpush1.bf16.xpose.msra.mxu0 0
    %1231 = vmatprep.subr.bf16.mxu0 0
    %1232 = vmatpush1.bf16.xpose.msra.mxu0 0
    %1233 = vmatprep.subr.bf16.mxu0 0
    %1234 = vmatpush1.bf16.xpose.msra.mxu0 0
    %1235 = vmatprep.subr.bf16.mxu0 0
    %1236 = vmatpush1.bf16.xpose.msra.mxu0 0
    %1237 = vmatprep.subr.bf16.mxu0 0
    %1238 = vmatpush1.bf16.xpose.msra.mxu0 0
    %1239 = vmatprep.subr.bf16.mxu0 0
    %1240 = vmatpush1.bf16.xpose.msra.mxu0 0
    %1241 = vmatprep.subr.bf16.mxu0 0
    %1242 = vmatpush1.bf16.xpose.msra.mxu0 0
    %1243 = vmatprep.subr.bf16.mxu0 0
    %1244 = vmatpush1.bf16.xpose.msra.mxu0 0
    %1245 = vmatprep.subr.bf16.mxu0 0
    %1246 = vmatpush1.bf16.xpose.msra.mxu0 0
    %1247 = vmatprep.subr.bf16.mxu0 0
    %1248 = vmatpush1.bf16.xpose.msra.mxu0 0
    %1249 = vmatprep.subr.bf16.mxu0 0
    %1250 = vmatpush1.bf16.xpose.msra.mxu0 0
    %1251 = vmatprep.subr.bf16.mxu0 0
    %1252 = vmatpush1.bf16.xpose.msra.mxu0 0
    %1253 = vmatprep.subr.bf16.mxu0 0
    %1254 = vmatpush1.bf16.xpose.msra.mxu0 0
    %1255 = vmatprep.subr.bf16.mxu0 0
    %1256 = vmatpush1.bf16.xpose.msra.mxu0 0
    %1257 = vmatprep.mubr.bf16.mxu0 0
    %1258 = vmatmul.mubr.bf16.gmra.mrb[0].mxu0 %v1220
    %v1259 = vpop.f32.mrb[0].mxu0
    %v1260 = vadd.f32 0.0, %v1259
    %v1261 = vpop.f32.mrb[0].mxu0
    %v1262 = vpop.f32.mrb[0].mxu0
    %v1263 = vadd.f32 0.0, %v1262
    %v1264 = vpop.f32.mrb[0].mxu0
    %1265 = vdwg.mxu0
    %v1266 = vsel %vm560, %v1209, -inf
    %1267 = vmax.xlane.f32.xlu0 %v1266
    %v1268 = vpop.xlane.xlu0 %1267
    %v1269 = vsel %vm560, %v1212, -inf
    %1270 = vmax.xlane.f32.xlu0 %v1269
    %v1271 = vpop.xlane.xlu0 %1270
    %v1272 = vsel %vm560, %v1260, -inf
    %1273 = vmax.xlane.f32.xlu0 %v1272
    %v1274 = vpop.xlane.xlu0 %1273
    %v1275 = vsel %vm560, %v1263, -inf
    %1276 = vmax.xlane.f32.xlu0 %v1275
    %v1277 = vpop.xlane.xlu0 %1276
    %v1278 = vsub.f32 %v1209, %v1268
    %v1279 = vsub.f32 %v1212, %v1271
    %v1280 = vsub.f32 %v1260, %v1274
    %v1281 = vsub.f32 %v1263, %v1277
    %v1282 = vmul.f32 %v1278, 1.442695
    %v1283 = vpow.pop %v1282
    %v1284 = vmul.f32 %v1279, 1.442695
    %v1285 = vpow.pop %v1284
    %v1286 = vmul.f32 %v1280, 1.442695
    %v1287 = vpow.pop %v1286
    %v1288 = vmul.f32 %v1281, 1.442695
    %v1289 = vpow.pop %v1288
    %v1290 = vsel %vm560, %v1283, 0.0
    %1291 = vadd.xlane.f32.xlu0 %v1290
    %v1292 = vpop.xlane.xlu0 %1291
    %v1293 = vsel %vm560, %v1285, 0.0
    %1294 = vadd.xlane.f32.xlu0 %v1293
    %v1295 = vpop.xlane.xlu0 %1294
    %v1296 = vsel %vm560, %v1287, 0.0
    %1297 = vadd.xlane.f32.xlu0 %v1296
    %v1298 = vpop.xlane.xlu0 %1297
    %v1299 = vsel %vm560, %v1289, 0.0
    %1300 = vadd.xlane.f32.xlu0 %v1299
    %v1301 = vpop.xlane.xlu0 %1300
    %v1302 = vrcp.pop %v1292
    %v1303 = vrcp.pop %v1295
    %v1304 = vrcp.pop %v1298
    %v1305 = vrcp.pop %v1301
    %v1306 = vmul.f32 %v1283, %v1302
    %v1307 = vmul.f32 %v1285, %v1303
    %v1308 = vmul.f32 %v1287, %v1304
    %v1309 = vmul.f32 %v1289, %v1305
    %v1310 = vpack.c.bf16 %v1307, %v1306
    %v1311 = vpack.c.bf16 %v1309, %v1308
    %1312 = vrot.lane.b32.xlu0 %v704, 96
    %v1313 = vpop.permute.xlu0 %1312
    %v1316 = vsel %vm560, %v1310, 0
    %1318 = vmatprep.subr.bf16.mxu0 0
    %1319 = vmatpush1.bf16.msra.mxu0 %v1313
    %1320 = vmatprep.subr.bf16.mxu0 0
    %1321 = vmatpush1.bf16.msra.mxu0 0
    %1322 = vmatprep.subr.bf16.mxu0 0
    %1323 = vmatpush1.bf16.msra.mxu0 0
    %1324 = vmatprep.subr.bf16.mxu0 0
    %1325 = vmatpush1.bf16.msra.mxu0 0
    %1326 = vmatprep.subr.bf16.mxu0 0
    %1327 = vmatpush1.bf16.msra.mxu0 0
    %1328 = vmatprep.subr.bf16.mxu0 0
    %1329 = vmatpush1.bf16.msra.mxu0 0
    %1330 = vmatprep.subr.bf16.mxu0 0
    %1331 = vmatpush1.bf16.msra.mxu0 0
    %1332 = vmatprep.subr.bf16.mxu0 0
    %1333 = vmatpush1.bf16.msra.mxu0 0
    %1334 = vmatprep.subr.bf16.mxu0 0
    %1335 = vmatpush1.bf16.msra.mxu0 0
    %1336 = vmatprep.subr.bf16.mxu0 0
    %1337 = vmatpush1.bf16.msra.mxu0 0
    %1338 = vmatprep.subr.bf16.mxu0 0
    %1339 = vmatpush1.bf16.msra.mxu0 0
    %1340 = vmatprep.subr.bf16.mxu0 0
    %1341 = vmatpush1.bf16.msra.mxu0 0
    %1342 = vmatprep.subr.bf16.mxu0 0
    %1343 = vmatpush1.bf16.msra.mxu0 0
    %1344 = vmatprep.subr.bf16.mxu0 0
    %1345 = vmatpush1.bf16.msra.mxu0 0
    %1346 = vmatprep.subr.bf16.mxu0 0
    %1347 = vmatpush1.bf16.msra.mxu0 0
    %1348 = vmatprep.subr.bf16.mxu0 0
    %1349 = vmatpush1.bf16.msra.mxu0 0
    %1350 = vmatprep.mubr.bf16.mxu0 0
    %1351 = vmatmul.mubr.bf16.gmra.mrb[0].mxu0 %v1316
    %v1352 = vpop.f32.mrb[0].mxu0
    %v1353 = vadd.f32 0.0, %v1352
    %v1354 = vpop.f32.mrb[0].mxu0
    %v1355 = vpop.f32.mrb[0].mxu0
    %v1356 = vadd.f32 0.0, %v1355
    %v1357 = vpop.f32.mrb[0].mxu0
    %1358 = vdwg.mxu0
    %1359 = vrot.lane.b32.xlu0 %v705, 96
    %v1360 = vpop.permute.xlu0 %1359
    %v1363 = vsel %vm560, %v1311, 0
    %1365 = vmatprep.subr.bf16.mxu0 0
    %1366 = vmatpush1.bf16.msra.mxu0 %v1360
    %1367 = vmatprep.subr.bf16.mxu0 0
    %1368 = vmatpush1.bf16.msra.mxu0 0
    %1369 = vmatprep.subr.bf16.mxu0 0
    %1370 = vmatpush1.bf16.msra.mxu0 0
    %1371 = vmatprep.subr.bf16.mxu0 0
    %1372 = vmatpush1.bf16.msra.mxu0 0
    %1373 = vmatprep.subr.bf16.mxu0 0
    %1374 = vmatpush1.bf16.msra.mxu0 0
    %1375 = vmatprep.subr.bf16.mxu0 0
    %1376 = vmatpush1.bf16.msra.mxu0 0
    %1377 = vmatprep.subr.bf16.mxu0 0
    %1378 = vmatpush1.bf16.msra.mxu0 0
    %1379 = vmatprep.subr.bf16.mxu0 0
    %1380 = vmatpush1.bf16.msra.mxu0 0
    %1381 = vmatprep.subr.bf16.mxu0 0
    %1382 = vmatpush1.bf16.msra.mxu0 0
    %1383 = vmatprep.subr.bf16.mxu0 0
    %1384 = vmatpush1.bf16.msra.mxu0 0
    %1385 = vmatprep.subr.bf16.mxu0 0
    %1386 = vmatpush1.bf16.msra.mxu0 0
    %1387 = vmatprep.subr.bf16.mxu0 0
    %1388 = vmatpush1.bf16.msra.mxu0 0
    %1389 = vmatprep.subr.bf16.mxu0 0
    %1390 = vmatpush1.bf16.msra.mxu0 0
    %1391 = vmatprep.subr.bf16.mxu0 0
    %1392 = vmatpush1.bf16.msra.mxu0 0
    %1393 = vmatprep.subr.bf16.mxu0 0
    %1394 = vmatpush1.bf16.msra.mxu0 0
    %1395 = vmatprep.subr.bf16.mxu0 0
    %1396 = vmatpush1.bf16.msra.mxu0 0
    %1397 = vmatprep.mubr.bf16.mxu0 0
    %1398 = vmatmul.mubr.bf16.gmra.mrb[0].mxu0 %v1363
    %v1399 = vpop.f32.mrb[0].mxu0
    %v1400 = vadd.f32 0.0, %v1399
    %v1401 = vpop.f32.mrb[0].mxu0
    %v1402 = vpop.f32.mrb[0].mxu0
    %v1403 = vadd.f32 0.0, %v1402
    %v1404 = vpop.f32.mrb[0].mxu0
    %1405 = vdwg.mxu0
    %v1406 = vpack.c.bf16 %v1356, %v1353
    %v1407 = vpack.c.bf16 %v1403, %v1400
    %v1410 = vunpack.c.l.b16 %v551
    %v1411 = vunpack.c.l.b16 %v552
    %v1412 = vpack.c.b16 %v1411, %v1410
    %v1415 = vsel %vm560, %v1406, 0
    %v1418 = vsel %vm560, %v1407, 0
    %1420 = vmatprep.subr.bf16.mxu0 0
    %1421 = vmatpush1.bf16.msra.mxu0 %v1412
    %1422 = vmatprep.subr.bf16.mxu0 0
    %1423 = vmatpush1.bf16.msra.mxu0 0
    %1424 = vmatprep.subr.bf16.mxu0 0
    %1425 = vmatpush1.bf16.msra.mxu0 0
    %1426 = vmatprep.subr.bf16.mxu0 0
    %1427 = vmatpush1.bf16.msra.mxu0 0
    %1428 = vmatprep.subr.bf16.mxu0 0
    %1429 = vmatpush1.bf16.msra.mxu0 0
    %1430 = vmatprep.subr.bf16.mxu0 0
    %1431 = vmatpush1.bf16.msra.mxu0 0
    %1432 = vmatprep.subr.bf16.mxu0 0
    %1433 = vmatpush1.bf16.msra.mxu0 0
    %1434 = vmatprep.subr.bf16.mxu0 0
    %1435 = vmatpush1.bf16.msra.mxu0 0
    %1436 = vmatprep.subr.bf16.mxu0 0
    %1437 = vmatpush1.bf16.msra.mxu0 0
    %1438 = vmatprep.subr.bf16.mxu0 0
    %1439 = vmatpush1.bf16.msra.mxu0 0
    %1440 = vmatprep.subr.bf16.mxu0 0
    %1441 = vmatpush1.bf16.msra.mxu0 0
    %1442 = vmatprep.subr.bf16.mxu0 0
    %1443 = vmatpush1.bf16.msra.mxu0 0
    %1444 = vmatprep.subr.bf16.mxu0 0
    %1445 = vmatpush1.bf16.msra.mxu0 0
    %1446 = vmatprep.subr.bf16.mxu0 0
    %1447 = vmatpush1.bf16.msra.mxu0 0
    %1448 = vmatprep.subr.bf16.mxu0 0
    %1449 = vmatpush1.bf16.msra.mxu0 0
    %1450 = vmatprep.subr.bf16.mxu0 0
    %1451 = vmatpush1.bf16.msra.mxu0 0
    %1452 = vmatprep.mubr.bf16.mxu0 0
    %1453 = vmatmul.mubr.bf16.gmra.mrb[0].mxu0 %v1415
    %v1454 = vpop.f32.mrb[0].mxu0
    %v1455 = vadd.f32 0.0, %v1454
    %v1456 = vpop.f32.mrb[0].mxu0
    %v1457 = vpop.f32.mrb[0].mxu0
    %v1458 = vadd.f32 0.0, %v1457
    %v1459 = vpop.f32.mrb[0].mxu0
    %1460 = vmatprep.mubr.bf16.mxu0 0
    %1461 = vmatmul.mubr.bf16.gmra.mrb[0].mxu0 %v1418
    %v1462 = vpop.f32.mrb[0].mxu0
    %v1463 = vadd.f32 0.0, %v1462
    %v1464 = vpop.f32.mrb[0].mxu0
    %v1465 = vpop.f32.mrb[0].mxu0
    %v1466 = vadd.f32 0.0, %v1465
    %v1467 = vpop.f32.mrb[0].mxu0
    %1468 = vdwg.mxu0
    %v1469 = vadd.f32 %v1150, %v1455
    %v1470 = vadd.f32 %v1153, %v1458
    %v1471 = vadd.f32 %v1158, %v1463
    %v1472 = vadd.f32 %v1161, %v1466
    %1473 = vrot.lane.b32.xlu0 %v555, 80
    %v1474 = vpop.permute.xlu0 %1473
    %1475 = vrot.lane.b32.xlu0 %v555, 16
    %v1476 = vpop.permute.xlu0 %1475
    %v1478 = vsel %vm560, %v1474, 0
    %v1481 = vsel %vm560, %v1476, 0
    %1483 = vmatprep.subr.bf16.mxu0 0
    %1484 = vmatpush1.bf16.xpose.msra.mxu0 %v1481
    %1485 = vmatprep.subr.bf16.mxu0 0
    %1486 = vmatpush1.bf16.xpose.msra.mxu0 0
    %1487 = vmatprep.subr.bf16.mxu0 0
    %1488 = vmatpush1.bf16.xpose.msra.mxu0 0
    %1489 = vmatprep.subr.bf16.mxu0 0
    %1490 = vmatpush1.bf16.xpose.msra.mxu0 0
    %1491 = vmatprep.subr.bf16.mxu0 0
    %1492 = vmatpush1.bf16.xpose.msra.mxu0 0
    %1493 = vmatprep.subr.bf16.mxu0 0
    %1494 = vmatpush1.bf16.xpose.msra.mxu0 0
    %1495 = vmatprep.subr.bf16.mxu0 0
    %1496 = vmatpush1.bf16.xpose.msra.mxu0 0
    %1497 = vmatprep.subr.bf16.mxu0 0
    %1498 = vmatpush1.bf16.xpose.msra.mxu0 0
    %1499 = vmatprep.subr.bf16.mxu0 0
    %1500 = vmatpush1.bf16.xpose.msra.mxu0 0
    %1501 = vmatprep.subr.bf16.mxu0 0
    %1502 = vmatpush1.bf16.xpose.msra.mxu0 0
    %1503 = vmatprep.subr.bf16.mxu0 0
    %1504 = vmatpush1.bf16.xpose.msra.mxu0 0
    %1505 = vmatprep.subr.bf16.mxu0 0
    %1506 = vmatpush1.bf16.xpose.msra.mxu0 0
    %1507 = vmatprep.subr.bf16.mxu0 0
    %1508 = vmatpush1.bf16.xpose.msra.mxu0 0
    %1509 = vmatprep.subr.bf16.mxu0 0
    %1510 = vmatpush1.bf16.xpose.msra.mxu0 0
    %1511 = vmatprep.subr.bf16.mxu0 0
    %1512 = vmatpush1.bf16.xpose.msra.mxu0 0
    %1513 = vmatprep.subr.bf16.mxu0 0
    %1514 = vmatpush1.bf16.xpose.msra.mxu0 0
    %1515 = vmatprep.mubr.bf16.mxu0 0
    %1516 = vmatmul.mubr.bf16.gmra.mrb[0].mxu0 %v1478
    %v1517 = vpop.f32.mrb[0].mxu0
    %v1518 = vadd.f32 0.0, %v1517
    %v1519 = vpop.f32.mrb[0].mxu0
    %v1520 = vpop.f32.mrb[0].mxu0
    %v1521 = vadd.f32 0.0, %v1520
    %v1522 = vpop.f32.mrb[0].mxu0
    %1523 = vdwg.mxu0
    %1524 = vrot.lane.b32.xlu0 %v556, 80
    %v1525 = vpop.permute.xlu0 %1524
    %1526 = vrot.lane.b32.xlu0 %v556, 16
    %v1527 = vpop.permute.xlu0 %1526
    %v1529 = vsel %vm560, %v1525, 0
    %v1532 = vsel %vm560, %v1527, 0
    %1534 = vmatprep.subr.bf16.mxu0 0
    %1535 = vmatpush1.bf16.xpose.msra.mxu0 %v1532
    %1536 = vmatprep.subr.bf16.mxu0 0
    %1537 = vmatpush1.bf16.xpose.msra.mxu0 0
    %1538 = vmatprep.subr.bf16.mxu0 0
    %1539 = vmatpush1.bf16.xpose.msra.mxu0 0
    %1540 = vmatprep.subr.bf16.mxu0 0
    %1541 = vmatpush1.bf16.xpose.msra.mxu0 0
    %1542 = vmatprep.subr.bf16.mxu0 0
    %1543 = vmatpush1.bf16.xpose.msra.mxu0 0
    %1544 = vmatprep.subr.bf16.mxu0 0
    %1545 = vmatpush1.bf16.xpose.msra.mxu0 0
    %1546 = vmatprep.subr.bf16.mxu0 0
    %1547 = vmatpush1.bf16.xpose.msra.mxu0 0
    %1548 = vmatprep.subr.bf16.mxu0 0
    %1549 = vmatpush1.bf16.xpose.msra.mxu0 0
    %1550 = vmatprep.subr.bf16.mxu0 0
    %1551 = vmatpush1.bf16.xpose.msra.mxu0 0
    %1552 = vmatprep.subr.bf16.mxu0 0
    %1553 = vmatpush1.bf16.xpose.msra.mxu0 0
    %1554 = vmatprep.subr.bf16.mxu0 0
    %1555 = vmatpush1.bf16.xpose.msra.mxu0 0
    %1556 = vmatprep.subr.bf16.mxu0 0
    %1557 = vmatpush1.bf16.xpose.msra.mxu0 0
    %1558 = vmatprep.subr.bf16.mxu0 0
    %1559 = vmatpush1.bf16.xpose.msra.mxu0 0
    %1560 = vmatprep.subr.bf16.mxu0 0
    %1561 = vmatpush1.bf16.xpose.msra.mxu0 0
    %1562 = vmatprep.subr.bf16.mxu0 0
    %1563 = vmatpush1.bf16.xpose.msra.mxu0 0
    %1564 = vmatprep.subr.bf16.mxu0 0
    %1565 = vmatpush1.bf16.xpose.msra.mxu0 0
    %1566 = vmatprep.mubr.bf16.mxu0 0
    %1567 = vmatmul.mubr.bf16.gmra.mrb[0].mxu0 %v1529
    %v1568 = vpop.f32.mrb[0].mxu0
    %v1569 = vadd.f32 0.0, %v1568
    %v1570 = vpop.f32.mrb[0].mxu0
    %v1571 = vpop.f32.mrb[0].mxu0
    %v1572 = vadd.f32 0.0, %v1571
    %v1573 = vpop.f32.mrb[0].mxu0
    %1574 = vdwg.mxu0
    %v1575 = vsel %vm560, %v1518, -inf
    %1576 = vmax.xlane.f32.xlu0 %v1575
    %v1577 = vpop.xlane.xlu0 %1576
    %v1578 = vsel %vm560, %v1521, -inf
    %1579 = vmax.xlane.f32.xlu0 %v1578
    %v1580 = vpop.xlane.xlu0 %1579
    %v1581 = vsel %vm560, %v1569, -inf
    %1582 = vmax.xlane.f32.xlu0 %v1581
    %v1583 = vpop.xlane.xlu0 %1582
    %v1584 = vsel %vm560, %v1572, -inf
    %1585 = vmax.xlane.f32.xlu0 %v1584
    %v1586 = vpop.xlane.xlu0 %1585
    %v1587 = vsub.f32 %v1518, %v1577
    %v1588 = vsub.f32 %v1521, %v1580
    %v1589 = vsub.f32 %v1569, %v1583
    %v1590 = vsub.f32 %v1572, %v1586
    %v1591 = vmul.f32 %v1587, 1.442695
    %v1592 = vpow.pop %v1591
    %v1593 = vmul.f32 %v1588, 1.442695
    %v1594 = vpow.pop %v1593
    %v1595 = vmul.f32 %v1589, 1.442695
    %v1596 = vpow.pop %v1595
    %v1597 = vmul.f32 %v1590, 1.442695
    %v1598 = vpow.pop %v1597
    %v1599 = vsel %vm560, %v1592, 0.0
    %1600 = vadd.xlane.f32.xlu0 %v1599
    %v1601 = vpop.xlane.xlu0 %1600
    %v1602 = vsel %vm560, %v1594, 0.0
    %1603 = vadd.xlane.f32.xlu0 %v1602
    %v1604 = vpop.xlane.xlu0 %1603
    %v1605 = vsel %vm560, %v1596, 0.0
    %1606 = vadd.xlane.f32.xlu0 %v1605
    %v1607 = vpop.xlane.xlu0 %1606
    %v1608 = vsel %vm560, %v1598, 0.0
    %1609 = vadd.xlane.f32.xlu0 %v1608
    %v1610 = vpop.xlane.xlu0 %1609
    %v1611 = vrcp.pop %v1601
    %v1612 = vrcp.pop %v1604
    %v1613 = vrcp.pop %v1607
    %v1614 = vrcp.pop %v1610
    %v1615 = vmul.f32 %v1592, %v1611
    %v1616 = vmul.f32 %v1594, %v1612
    %v1617 = vmul.f32 %v1596, %v1613
    %v1618 = vmul.f32 %v1598, %v1614
    %v1619 = vpack.c.bf16 %v1616, %v1615
    %v1620 = vpack.c.bf16 %v1618, %v1617
    %1621 = vrot.lane.b32.xlu0 %v704, 80
    %v1622 = vpop.permute.xlu0 %1621
    %v1625 = vsel %vm560, %v1619, 0
    %1627 = vmatprep.subr.bf16.mxu0 0
    %1628 = vmatpush1.bf16.msra.mxu0 %v1622
    %1629 = vmatprep.subr.bf16.mxu0 0
    %1630 = vmatpush1.bf16.msra.mxu0 0
    %1631 = vmatprep.subr.bf16.mxu0 0
    %1632 = vmatpush1.bf16.msra.mxu0 0
    %1633 = vmatprep.subr.bf16.mxu0 0
    %1634 = vmatpush1.bf16.msra.mxu0 0
    %1635 = vmatprep.subr.bf16.mxu0 0
    %1636 = vmatpush1.bf16.msra.mxu0 0
    %1637 = vmatprep.subr.bf16.mxu0 0
    %1638 = vmatpush1.bf16.msra.mxu0 0
    %1639 = vmatprep.subr.bf16.mxu0 0
    %1640 = vmatpush1.bf16.msra.mxu0 0
    %1641 = vmatprep.subr.bf16.mxu0 0
    %1642 = vmatpush1.bf16.msra.mxu0 0
    %1643 = vmatprep.subr.bf16.mxu0 0
    %1644 = vmatpush1.bf16.msra.mxu0 0
    %1645 = vmatprep.subr.bf16.mxu0 0
    %1646 = vmatpush1.bf16.msra.mxu0 0
    %1647 = vmatprep.subr.bf16.mxu0 0
    %1648 = vmatpush1.bf16.msra.mxu0 0
    %1649 = vmatprep.subr.bf16.mxu0 0
    %1650 = vmatpush1.bf16.msra.mxu0 0
    %1651 = vmatprep.subr.bf16.mxu0 0
    %1652 = vmatpush1.bf16.msra.mxu0 0
    %1653 = vmatprep.subr.bf16.mxu0 0
    %1654 = vmatpush1.bf16.msra.mxu0 0
    %1655 = vmatprep.subr.bf16.mxu0 0
    %1656 = vmatpush1.bf16.msra.mxu0 0
    %1657 = vmatprep.subr.bf16.mxu0 0
    %1658 = vmatpush1.bf16.msra.mxu0 0
    %1659 = vmatprep.mubr.bf16.mxu0 0
    %1660 = vmatmul.mubr.bf16.gmra.mrb[0].mxu0 %v1625
    %v1661 = vpop.f32.mrb[0].mxu0
    %v1662 = vadd.f32 0.0, %v1661
    %v1663 = vpop.f32.mrb[0].mxu0
    %v1664 = vpop.f32.mrb[0].mxu0
    %v1665 = vadd.f32 0.0, %v1664
    %v1666 = vpop.f32.mrb[0].mxu0
    %1667 = vdwg.mxu0
    %1668 = vrot.lane.b32.xlu0 %v705, 80
    %v1669 = vpop.permute.xlu0 %1668
    %v1672 = vsel %vm560, %v1620, 0
    %1674 = vmatprep.subr.bf16.mxu0 0
    %1675 = vmatpush1.bf16.msra.mxu0 %v1669
    %1676 = vmatprep.subr.bf16.mxu0 0
    %1677 = vmatpush1.bf16.msra.mxu0 0
    %1678 = vmatprep.subr.bf16.mxu0 0
    %1679 = vmatpush1.bf16.msra.mxu0 0
    %1680 = vmatprep.subr.bf16.mxu0 0
    %1681 = vmatpush1.bf16.msra.mxu0 0
    %1682 = vmatprep.subr.bf16.mxu0 0
    %1683 = vmatpush1.bf16.msra.mxu0 0
    %1684 = vmatprep.subr.bf16.mxu0 0
    %1685 = vmatpush1.bf16.msra.mxu0 0
    %1686 = vmatprep.subr.bf16.mxu0 0
    %1687 = vmatpush1.bf16.msra.mxu0 0
    %1688 = vmatprep.subr.bf16.mxu0 0
    %1689 = vmatpush1.bf16.msra.mxu0 0
    %1690 = vmatprep.subr.bf16.mxu0 0
    %1691 = vmatpush1.bf16.msra.mxu0 0
    %1692 = vmatprep.subr.bf16.mxu0 0
    %1693 = vmatpush1.bf16.msra.mxu0 0
    %1694 = vmatprep.subr.bf16.mxu0 0
    %1695 = vmatpush1.bf16.msra.mxu0 0
    %1696 = vmatprep.subr.bf16.mxu0 0
    %1697 = vmatpush1.bf16.msra.mxu0 0
    %1698 = vmatprep.subr.bf16.mxu0 0
    %1699 = vmatpush1.bf16.msra.mxu0 0
    %1700 = vmatprep.subr.bf16.mxu0 0
    %1701 = vmatpush1.bf16.msra.mxu0 0
    %1702 = vmatprep.subr.bf16.mxu0 0
    %1703 = vmatpush1.bf16.msra.mxu0 0
    %1704 = vmatprep.subr.bf16.mxu0 0
    %1705 = vmatpush1.bf16.msra.mxu0 0
    %1706 = vmatprep.mubr.bf16.mxu0 0
    %1707 = vmatmul.mubr.bf16.gmra.mrb[0].mxu0 %v1672
    %v1708 = vpop.f32.mrb[0].mxu0
    %v1709 = vadd.f32 0.0, %v1708
    %v1710 = vpop.f32.mrb[0].mxu0
    %v1711 = vpop.f32.mrb[0].mxu0
    %v1712 = vadd.f32 0.0, %v1711
    %v1713 = vpop.f32.mrb[0].mxu0
    %1714 = vdwg.mxu0
    %v1715 = vpack.c.bf16 %v1665, %v1662
    %v1716 = vpack.c.bf16 %v1712, %v1709
    %v1719 = vunpack.c.l.b16 %v553
    %v1720 = vunpack.c.l.b16 %v554
    %v1721 = vpack.c.b16 %v1720, %v1719
    %v1724 = vsel %vm560, %v1715, 0
    %v1727 = vsel %vm560, %v1716, 0
    %1729 = vmatprep.subr.bf16.mxu0 0
    %1730 = vmatpush1.bf16.msra.mxu0 %v1721
    %1731 = vmatprep.subr.bf16.mxu0 0
    %1732 = vmatpush1.bf16.msra.mxu0 0
    %1733 = vmatprep.subr.bf16.mxu0 0
    %1734 = vmatpush1.bf16.msra.mxu0 0
    %1735 = vmatprep.subr.bf16.mxu0 0
    %1736 = vmatpush1.bf16.msra.mxu0 0
    %1737 = vmatprep.subr.bf16.mxu0 0
    %1738 = vmatpush1.bf16.msra.mxu0 0
    %1739 = vmatprep.subr.bf16.mxu0 0
    %1740 = vmatpush1.bf16.msra.mxu0 0
    %1741 = vmatprep.subr.bf16.mxu0 0
    %1742 = vmatpush1.bf16.msra.mxu0 0
    %1743 = vmatprep.subr.bf16.mxu0 0
    %1744 = vmatpush1.bf16.msra.mxu0 0
    %1745 = vmatprep.subr.bf16.mxu0 0
    %1746 = vmatpush1.bf16.msra.mxu0 0
    %1747 = vmatprep.subr.bf16.mxu0 0
    %1748 = vmatpush1.bf16.msra.mxu0 0
    %1749 = vmatprep.subr.bf16.mxu0 0
    %1750 = vmatpush1.bf16.msra.mxu0 0
    %1751 = vmatprep.subr.bf16.mxu0 0
    %1752 = vmatpush1.bf16.msra.mxu0 0
    %1753 = vmatprep.subr.bf16.mxu0 0
    %1754 = vmatpush1.bf16.msra.mxu0 0
    %1755 = vmatprep.subr.bf16.mxu0 0
    %1756 = vmatpush1.bf16.msra.mxu0 0
    %1757 = vmatprep.subr.bf16.mxu0 0
    %1758 = vmatpush1.bf16.msra.mxu0 0
    %1759 = vmatprep.subr.bf16.mxu0 0
    %1760 = vmatpush1.bf16.msra.mxu0 0
    %1761 = vmatprep.mubr.bf16.mxu0 0
    %1762 = vmatmul.mubr.bf16.gmra.mrb[0].mxu0 %v1724
    %v1763 = vpop.f32.mrb[0].mxu0
    %v1764 = vadd.f32 0.0, %v1763
    %v1765 = vpop.f32.mrb[0].mxu0
    %v1766 = vpop.f32.mrb[0].mxu0
    %v1767 = vadd.f32 0.0, %v1766
    %v1768 = vpop.f32.mrb[0].mxu0
    %1769 = vmatprep.mubr.bf16.mxu0 0
    %1770 = vmatmul.mubr.bf16.gmra.mrb[0].mxu0 %v1727
    %v1771 = vpop.f32.mrb[0].mxu0
    %v1772 = vadd.f32 0.0, %v1771
    %v1773 = vpop.f32.mrb[0].mxu0
    %v1774 = vpop.f32.mrb[0].mxu0
    %v1775 = vadd.f32 0.0, %v1774
    %v1776 = vpop.f32.mrb[0].mxu0
    %1777 = vdwg.mxu0
    %v1778 = vadd.f32 %v1469, %v1764
    %v1779 = vadd.f32 %v1470, %v1767
    %v1780 = vadd.f32 %v1471, %v1772
    %v1781 = vadd.f32 %v1472, %v1775
    %v1782 = vadd.f32 %v352, %v1778
    %v1783 = vadd.f32 %v353, %v1779
    %v1784 = vadd.f32 %v354, %v1780
    %v1785 = vadd.f32 %v355, %v1781
    %v1786 = vld [vmem:[%s7] sm:$0x1]
    %v1788 = vlaneseq
    %v1789 = vshrl.u32 %v1788, 7
    %v1790 = vsub.s32 0, %v1789
    %v1791 = vrot.slane %v1786, %v1790
    %v1793 = vadd.f32 %v1782, %v1791
    %v1794 = vadd.f32 %v1783, %v1791
    %v1795 = vadd.f32 %v1784, %v1791
    %v1796 = vadd.f32 %v1785, %v1791
    %v1797 = vld [vmem:[#allocation7] sm:$0x3]
    %v1798 = vsel %vm294, %v1793, 0.0
    %1799 = vadd.xlane.f32.xlu0 %v1798
    %v1800 = vpop.xlane.xlu0 %1799
    %v1801 = vsel %vm294, %v1794, 0.0
    %1802 = vadd.xlane.f32.xlu0 %v1801
    %v1803 = vpop.xlane.xlu0 %1802
    %v1804 = vsel %vm294, %v1795, 0.0
    %1805 = vadd.xlane.f32.xlu0 %v1804
    %v1806 = vpop.xlane.xlu0 %1805
    %v1807 = vsel %vm294, %v1796, 0.0
    %1808 = vadd.xlane.f32.xlu0 %v1807
    %v1809 = vpop.xlane.xlu0 %1808
    %v1810 = vmul.f32 %v1800, %v369
    %v1811 = vmul.f32 %v1803, %v369
    %v1812 = vmul.f32 %v1806, %v369
    %v1813 = vmul.f32 %v1809, %v369
    %v1814 = vsub.f32 %v1793, %v1810
    %v1815 = vsub.f32 %v1794, %v1811
    %v1816 = vsub.f32 %v1795, %v1812
    %v1817 = vsub.f32 %v1796, %v1813
    %v1818 = vmul.f32 %v1814, %v1814
    %v1819 = vmul.f32 %v1815, %v1815
    %v1820 = vmul.f32 %v1816, %v1816
    %v1821 = vmul.f32 %v1817, %v1817
    %v1822 = vsel %vm294, %v1818, 0.0
    %1823 = vadd.xlane.f32.xlu0 %v1822
    %v1824 = vpop.xlane.xlu0 %1823
    %v1825 = vsel %vm294, %v1819, 0.0
    %1826 = vadd.xlane.f32.xlu0 %v1825
    %v1827 = vpop.xlane.xlu0 %1826
    %v1828 = vsel %vm294, %v1820, 0.0
    %1829 = vadd.xlane.f32.xlu0 %v1828
    %v1830 = vpop.xlane.xlu0 %1829
    %v1831 = vsel %vm294, %v1821, 0.0
    %1832 = vadd.xlane.f32.xlu0 %v1831
    %v1833 = vpop.xlane.xlu0 %1832
    %v1834 = vmul.f32 %v1824, %v369
    %v1835 = vmul.f32 %v1827, %v369
    %v1836 = vmul.f32 %v1830, %v369
    %v1837 = vmul.f32 %v1833, %v369
    %v1838 = vadd.f32 %v1834, 1e-06
    %v1839 = vadd.f32 %v1835, 1e-06
    %v1840 = vadd.f32 %v1836, 1e-06
    %v1841 = vadd.f32 %v1837, 1e-06
    %v1842 = vrsqrt.pop %v1838
    %v1843 = vrsqrt.pop %v1839
    %v1844 = vrsqrt.pop %v1840
    %v1845 = vrsqrt.pop %v1841
    %v1846 = vmul.f32 %v1814, %v1842
    %v1847 = vmul.f32 %v1815, %v1843
    %v1848 = vmul.f32 %v1816, %v1844
    %v1849 = vmul.f32 %v1817, %v1845
    %v1850 = vlaneseq
    %v1851 = vshrl.u32 %v1850, 7
    %v1852 = vsub.s32 0, %v1851
    %v1853 = vrot.slane %v1797, %v1852
    %v1854 = vmul.f32 %v1846, %v1853
    %v1855 = vmul.f32 %v1847, %v1853
    %v1856 = vmul.f32 %v1848, %v1853
    %v1857 = vmul.f32 %v1849, %v1853
    %v1858 = vlaneseq
    %v1859 = vshrl.u32 %v1858, 7
    %v1860 = vsub.s32 1, %v1859
    %v1861 = vrot.slane %v1797, %v1860
    %v1862 = vadd.f32 %v1854, %v1861
    %v1863 = vadd.f32 %v1855, %v1861
    %v1864 = vadd.f32 %v1856, %v1861
    %v1865 = vadd.f32 %v1857, %v1861
    %v1866 = vld [vmem:[#allocation9] sm:$0xf]
    %v1867 = vld [vmem:[#allocation9 + $0x4] sm:$0xf]
    %v1868 = vld [vmem:[#allocation9 + $0x8] sm:$0xf]
    %v1869 = vld [vmem:[#allocation9 + $0xc] sm:$0xf]
    %v1870 = vld [vmem:[#allocation9 + $0x10] sm:$0xf]
    %v1871 = vld [vmem:[#allocation9 + $0x14] sm:$0xf]
    %v1872 = vld [vmem:[#allocation9 + $0x18] sm:$0xf]
    %v1873 = vld [vmem:[#allocation9 + $0x1c] sm:$0xf]
    %v1874 = vpack.c.bf16 %v1863, %v1862
    %v1875 = vpack.c.bf16 %v1865, %v1864
    %v1876 = vld [vmem:[#allocation10] sm:$0x1]
    %v1878 = vlaneseq
    %v1879 = vshrl.u32 %v1878, 7
    %v1880 = vsub.s32 0, %v1879
    %v1881 = vrot.slane %v1876, %v1880
    %v1891 = vunpack.c.l.b16 %v1866
    %v1892 = vunpack.c.l.b16 %v1867
    %v1893 = vunpack.c.l.b16 %v1868
    %v1894 = vunpack.c.l.b16 %v1869
    %v1895 = vunpack.c.l.b16 %v1870
    %v1896 = vunpack.c.l.b16 %v1871
    %v1897 = vunpack.c.l.b16 %v1872
    %v1898 = vunpack.c.l.b16 %v1873
    %v1899 = vpack.c.b16 %v1892, %v1891
    %v1900 = vpack.c.b16 %v1894, %v1893
    %v1901 = vpack.c.b16 %v1896, %v1895
    %v1902 = vpack.c.b16 %v1898, %v1897
    %v1908 = vsel %vm294, %v1874, 0
    %v1911 = vsel %vm294, %v1875, 0
    %1913 = vmatprep.subr.bf16.mxu0 0
    %1914 = vmatpush1.bf16.msra.mxu0 %v1899
    %1915 = vmatprep.subr.bf16.mxu0 0
    %1916 = vmatpush1.bf16.msra.mxu0 %v1900
    %1917 = vmatprep.subr.bf16.mxu0 0
    %1918 = vmatpush1.bf16.msra.mxu0 %v1901
    %1919 = vmatprep.subr.bf16.mxu0 0
    %1920 = vmatpush1.bf16.msra.mxu0 %v1902
    %1921 = vmatprep.subr.bf16.mxu0 0
    %1922 = vmatpush1.bf16.msra.mxu0 0
    %1923 = vmatprep.subr.bf16.mxu0 0
    %1924 = vmatpush1.bf16.msra.mxu0 0
    %1925 = vmatprep.subr.bf16.mxu0 0
    %1926 = vmatpush1.bf16.msra.mxu0 0
    %1927 = vmatprep.subr.bf16.mxu0 0
    %1928 = vmatpush1.bf16.msra.mxu0 0
    %1929 = vmatprep.subr.bf16.mxu0 0
    %1930 = vmatpush1.bf16.msra.mxu0 0
    %1931 = vmatprep.subr.bf16.mxu0 0
    %1932 = vmatpush1.bf16.msra.mxu0 0
    %1933 = vmatprep.subr.bf16.mxu0 0
    %1934 = vmatpush1.bf16.msra.mxu0 0
    %1935 = vmatprep.subr.bf16.mxu0 0
    %1936 = vmatpush1.bf16.msra.mxu0 0
    %1937 = vmatprep.subr.bf16.mxu0 0
    %1938 = vmatpush1.bf16.msra.mxu0 0
    %1939 = vmatprep.subr.bf16.mxu0 0
    %1940 = vmatpush1.bf16.msra.mxu0 0
    %1941 = vmatprep.subr.bf16.mxu0 0
    %1942 = vmatpush1.bf16.msra.mxu0 0
    %1943 = vmatprep.subr.bf16.mxu0 0
    %1944 = vmatpush1.bf16.msra.mxu0 0
    %1945 = vmatprep.mubr.bf16.mxu0 0
    %1946 = vmatmul.mubr.bf16.gmra.mrb[0].mxu0 %v1908
    %v1947 = vpop.f32.mrb[0].mxu0
    %v1948 = vadd.f32 %v1881, %v1947
    %v1949 = vpop.f32.mrb[0].mxu0
    %v1950 = vpop.f32.mrb[0].mxu0
    %v1951 = vadd.f32 %v1881, %v1950
    %v1952 = vpop.f32.mrb[0].mxu0
    %1953 = vmatprep.mubr.bf16.mxu0 0
    %1954 = vmatmul.mubr.bf16.gmra.mrb[0].mxu0 %v1911
    %v1955 = vpop.f32.mrb[0].mxu0
    %v1956 = vadd.f32 %v1881, %v1955
    %v1957 = vpop.f32.mrb[0].mxu0
    %v1958 = vpop.f32.mrb[0].mxu0
    %v1959 = vadd.f32 %v1881, %v1958
    %v1960 = vpop.f32.mrb[0].mxu0
    %1961 = vdwg.mxu0
    %v1962 = vmul.f32 %v1948, %v1948
    %v1963 = vmul.f32 %v1951, %v1951
    %v1964 = vmul.f32 %v1956, %v1956
    %v1965 = vmul.f32 %v1959, %v1959
    %v1966 = vmul.f32 %v1948, %v1962
    %v1967 = vmul.f32 %v1951, %v1963
    %v1968 = vmul.f32 %v1956, %v1964
    %v1969 = vmul.f32 %v1959, %v1965
    %v1970 = vmul.f32 %v1966, 0.044715
    %v1971 = vmul.f32 %v1967, 0.044715
    %v1972 = vmul.f32 %v1968, 0.044715
    %v1973 = vmul.f32 %v1969, 0.044715
    %v1974 = vadd.f32 %v1948, %v1970
    %v1975 = vadd.f32 %v1951, %v1971
    %v1976 = vadd.f32 %v1956, %v1972
    %v1977 = vadd.f32 %v1959, %v1973
    %v1978 = vmul.f32 %v1974, 0.7978846
    %v1979 = vmul.f32 %v1975, 0.7978846
    %v1980 = vmul.f32 %v1976, 0.7978846
    %v1981 = vmul.f32 %v1977, 0.7978846
    %v1982 = vtanh.pop %v1978
    %v1983 = vtanh.pop %v1979
    %v1984 = vtanh.pop %v1980
    %v1985 = vtanh.pop %v1981
    %v1986 = vadd.f32 %v1982, 1.0
    %v1987 = vadd.f32 %v1983, 1.0
    %v1988 = vadd.f32 %v1984, 1.0
    %v1989 = vadd.f32 %v1985, 1.0
    %v1990 = vmul.f32 %v1986, 0.5
    %v1991 = vmul.f32 %v1987, 0.5
    %v1992 = vmul.f32 %v1988, 0.5
    %v1993 = vmul.f32 %v1989, 0.5
    %v1994 = vmul.f32 %v1948, %v1990
    %v1995 = vmul.f32 %v1951, %v1991
    %v1996 = vmul.f32 %v1956, %v1992
    %v1997 = vmul.f32 %v1959, %v1993
    %v1998 = vld [vmem:[%s11] sm:$0xf]
    %v1999 = vld [vmem:[%s11 + $0x4] sm:$0xf]
    %v2000 = vld [vmem:[%s11 + $0x8] sm:$0xf]
    %v2001 = vld [vmem:[%s11 + $0xc] sm:$0xf]
    %v2002 = vld [vmem:[%s11 + $0x10] sm:$0xf]
    %v2003 = vld [vmem:[%s11 + $0x14] sm:$0xf]
    %v2004 = vld [vmem:[%s11 + $0x18] sm:$0xf]
    %v2005 = vld [vmem:[%s11 + $0x1c] sm:$0xf]
    %v2006 = vld [vmem:[%s11 + $0x20] sm:$0xf]
    %v2007 = vld [vmem:[%s11 + $0x24] sm:$0xf]
    %v2008 = vld [vmem:[%s11 + $0x28] sm:$0xf]
    %v2009 = vld [vmem:[%s11 + $0x2c] sm:$0xf]
    %v2010 = vld [vmem:[%s11 + $0x30] sm:$0xf]
    %v2011 = vld [vmem:[%s11 + $0x34] sm:$0xf]
    %v2012 = vld [vmem:[%s11 + $0x38] sm:$0xf]
    %v2013 = vld [vmem:[%s11 + $0x3c] sm:$0xf]
    %v2014 = vpack.c.bf16 %v1995, %v1994
    %v2015 = vpack.c.bf16 %v1997, %v1996
    %v2032 = vunpack.c.l.b16 %v1998
    %v2033 = vunpack.c.l.b16 %v1999
    %v2034 = vunpack.c.l.b16 %v2000
    %v2035 = vunpack.c.l.b16 %v2001
    %v2036 = vunpack.c.l.b16 %v2002
    %v2037 = vunpack.c.l.b16 %v2003
    %v2038 = vunpack.c.l.b16 %v2004
    %v2039 = vunpack.c.l.b16 %v2005
    %v2040 = vunpack.c.l.b16 %v2006
    %v2041 = vunpack.c.l.b16 %v2007
    %v2042 = vunpack.c.l.b16 %v2008
    %v2043 = vunpack.c.l.b16 %v2009
    %v2044 = vunpack.c.l.b16 %v2010
    %v2045 = vunpack.c.l.b16 %v2011
    %v2046 = vunpack.c.l.b16 %v2012
    %v2047 = vunpack.c.l.b16 %v2013
    %v2048 = vpack.c.b16 %v2033, %v2032
    %v2049 = vpack.c.b16 %v2035, %v2034
    %v2050 = vpack.c.b16 %v2037, %v2036
    %v2051 = vpack.c.b16 %v2039, %v2038
    %v2052 = vpack.c.b16 %v2041, %v2040
    %v2053 = vpack.c.b16 %v2043, %v2042
    %v2054 = vpack.c.b16 %v2045, %v2044
    %v2055 = vpack.c.b16 %v2047, %v2046
    %2064 = vmatprep.subr.bf16.mxu0 0
    %2065 = vmatpush1.bf16.msra.mxu0 %v2048
    %2066 = vmatprep.subr.bf16.mxu0 0
    %2067 = vmatpush1.bf16.msra.mxu0 %v2049
    %2068 = vmatprep.subr.bf16.mxu0 0
    %2069 = vmatpush1.bf16.msra.mxu0 %v2050
    %2070 = vmatprep.subr.bf16.mxu0 0
    %2071 = vmatpush1.bf16.msra.mxu0 %v2051
    %2072 = vmatprep.subr.bf16.mxu0 0
    %2073 = vmatpush1.bf16.msra.mxu0 %v2052
    %2074 = vmatprep.subr.bf16.mxu0 0
    %2075 = vmatpush1.bf16.msra.mxu0 %v2053
    %2076 = vmatprep.subr.bf16.mxu0 0
    %2077 = vmatpush1.bf16.msra.mxu0 %v2054
    %2078 = vmatprep.subr.bf16.mxu0 0
    %2079 = vmatpush1.bf16.msra.mxu0 %v2055
    %2080 = vmatprep.subr.bf16.mxu0 0
    %2081 = vmatpush1.bf16.msra.mxu0 0
    %2082 = vmatprep.subr.bf16.mxu0 0
    %2083 = vmatpush1.bf16.msra.mxu0 0
    %2084 = vmatprep.subr.bf16.mxu0 0
    %2085 = vmatpush1.bf16.msra.mxu0 0
    %2086 = vmatprep.subr.bf16.mxu0 0
    %2087 = vmatpush1.bf16.msra.mxu0 0
    %2088 = vmatprep.subr.bf16.mxu0 0
    %2089 = vmatpush1.bf16.msra.mxu0 0
    %2090 = vmatprep.subr.bf16.mxu0 0
    %2091 = vmatpush1.bf16.msra.mxu0 0
    %2092 = vmatprep.subr.bf16.mxu0 0
    %2093 = vmatpush1.bf16.msra.mxu0 0
    %2094 = vmatprep.subr.bf16.mxu0 0
    %2095 = vmatpush1.bf16.msra.mxu0 0
    %2096 = vmatprep.mubr.bf16.mxu0 0
    %2097 = vmatmul.mubr.bf16.gmra.mrb[0].mxu0 %v2014
    %v2098 = vpop.f32.mrb[0].mxu0
    %v2099 = vadd.f32 0.0, %v2098
    %v2100 = vpop.f32.mrb[0].mxu0
    %v2101 = vpop.f32.mrb[0].mxu0
    %v2102 = vadd.f32 0.0, %v2101
    %v2103 = vpop.f32.mrb[0].mxu0
    %2104 = vmatprep.mubr.bf16.mxu0 0
    %2105 = vmatmul.mubr.bf16.gmra.mrb[0].mxu0 %v2015
    %v2106 = vpop.f32.mrb[0].mxu0
    %v2107 = vadd.f32 0.0, %v2106
    %v2108 = vpop.f32.mrb[0].mxu0
    %v2109 = vpop.f32.mrb[0].mxu0
    %v2110 = vadd.f32 0.0, %v2109
    %v2111 = vpop.f32.mrb[0].mxu0
    %2112 = vdwg.mxu0
    %v2113 = vadd.f32 %v1793, %v2099
    %v2114 = vadd.f32 %v1794, %v2102
    %v2115 = vadd.f32 %v1795, %v2107
    %v2116 = vadd.f32 %v1796, %v2110
    %v2117 = vld [vmem:[#allocation12] sm:$0x1]
    %v2119 = vlaneseq
    %v2120 = vshrl.u32 %v2119, 7
    %v2121 = vsub.s32 0, %v2120
    %v2122 = vrot.slane %v2117, %v2121
    %v2124 = vadd.f32 %v2113, %v2122
    %v2125 = vadd.f32 %v2114, %v2122
    %v2126 = vadd.f32 %v2115, %v2122
    %v2127 = vadd.f32 %v2116, %v2122
    %s2128 = scalar_lea.vmem %s3, 2
    %v2129 = vld [vmem:[%s2128] sm:$0x3]
    %v2130 = vsel %vm294, %v2124, 0.0
    %2131 = vadd.xlane.f32.xlu0 %v2130
    %v2132 = vpop.xlane.xlu0 %2131
    %v2133 = vsel %vm294, %v2125, 0.0
    %2134 = vadd.xlane.f32.xlu0 %v2133
    %v2135 = vpop.xlane.xlu0 %2134
    %v2136 = vsel %vm294, %v2126, 0.0
    %2137 = vadd.xlane.f32.xlu0 %v2136
    %v2138 = vpop.xlane.xlu0 %2137
    %v2139 = vsel %vm294, %v2127, 0.0
    %2140 = vadd.xlane.f32.xlu0 %v2139
    %v2141 = vpop.xlane.xlu0 %2140
    %v2142 = vmul.f32 %v2132, %v369
    %v2143 = vmul.f32 %v2135, %v369
    %v2144 = vmul.f32 %v2138, %v369
    %v2145 = vmul.f32 %v2141, %v369
    %v2146 = vsub.f32 %v2124, %v2142
    %v2147 = vsub.f32 %v2125, %v2143
    %v2148 = vsub.f32 %v2126, %v2144
    %v2149 = vsub.f32 %v2127, %v2145
    %v2150 = vmul.f32 %v2146, %v2146
    %v2151 = vmul.f32 %v2147, %v2147
    %v2152 = vmul.f32 %v2148, %v2148
    %v2153 = vmul.f32 %v2149, %v2149
    %v2154 = vsel %vm294, %v2150, 0.0
    %2155 = vadd.xlane.f32.xlu0 %v2154
    %v2156 = vpop.xlane.xlu0 %2155
    %v2157 = vsel %vm294, %v2151, 0.0
    %2158 = vadd.xlane.f32.xlu0 %v2157
    %v2159 = vpop.xlane.xlu0 %2158
    %v2160 = vsel %vm294, %v2152, 0.0
    %2161 = vadd.xlane.f32.xlu0 %v2160
    %v2162 = vpop.xlane.xlu0 %2161
    %v2163 = vsel %vm294, %v2153, 0.0
    %2164 = vadd.xlane.f32.xlu0 %v2163
    %v2165 = vpop.xlane.xlu0 %2164
    %v2166 = vmul.f32 %v2156, %v369
    %v2167 = vmul.f32 %v2159, %v369
    %v2168 = vmul.f32 %v2162, %v369
    %v2169 = vmul.f32 %v2165, %v369
    %v2170 = vadd.f32 %v2166, 1e-06
    %v2171 = vadd.f32 %v2167, 1e-06
    %v2172 = vadd.f32 %v2168, 1e-06
    %v2173 = vadd.f32 %v2169, 1e-06
    %v2174 = vrsqrt.pop %v2170
    %v2175 = vrsqrt.pop %v2171
    %v2176 = vrsqrt.pop %v2172
    %v2177 = vrsqrt.pop %v2173
    %v2178 = vmul.f32 %v2146, %v2174
    %v2179 = vmul.f32 %v2147, %v2175
    %v2180 = vmul.f32 %v2148, %v2176
    %v2181 = vmul.f32 %v2149, %v2177
    %v2182 = vlaneseq
    %v2183 = vshrl.u32 %v2182, 7
    %v2184 = vsub.s32 0, %v2183
    %v2185 = vrot.slane %v2129, %v2184
    %v2186 = vmul.f32 %v2178, %v2185
    %v2187 = vmul.f32 %v2179, %v2185
    %v2188 = vmul.f32 %v2180, %v2185
    %v2189 = vmul.f32 %v2181, %v2185
    %v2190 = vlaneseq
    %v2191 = vshrl.u32 %v2190, 7
    %v2192 = vsub.s32 1, %v2191
    %v2193 = vrot.slane %v2129, %v2192
    %v2194 = vadd.f32 %v2186, %v2193
    %v2195 = vadd.f32 %v2187, %v2193
    %v2196 = vadd.f32 %v2188, %v2193
    %v2197 = vadd.f32 %v2189, %v2193
    %s2198 = scalar_lea.vmem %s4, 64
    %v2199 = vld [vmem:[%s2198] sm:$0xff]
    %v2200 = vld [vmem:[%s2198 + $0x8] sm:$0xff]
    %v2201 = vld [vmem:[%s2198 + $0x10] sm:$0xff]
    %v2202 = vld [vmem:[%s2198 + $0x18] sm:$0xff]
    %v2203 = vld [vmem:[%s2198 + $0x20] sm:$0xff]
    %v2204 = vld [vmem:[%s2198 + $0x28] sm:$0xff]
    %v2205 = vld [vmem:[%s2198 + $0x30] sm:$0xff]
    %v2206 = vld [vmem:[%s2198 + $0x38] sm:$0xff]
    %v2207 = vpack.c.bf16 %v2195, %v2194
    %v2208 = vpack.c.bf16 %v2197, %v2196
    %s2209 = scalar_lea.vmem [#allocation4], 2
    %v2210 = vld [vmem:[%s2209] sm:$0x3]
    %v2212 = vlaneseq
    %v2213 = vshrl.u32 %v2212, 7
    %v2214 = vsub.s32 0, %v2213
    %v2215 = vrot.slane %v2210, %v2214
    %v2216 = vlaneseq
    %v2217 = vshrl.u32 %v2216, 7
    %v2218 = vsub.s32 1, %v2217
    %v2219 = vrot.slane %v2210, %v2218
    %v2230 = vunpack.c.l.b16 %v2199
    %v2231 = vunpack.c.h.b16 %v2199
    %v2232 = vunpack.c.l.b16 %v2200
    %v2233 = vunpack.c.h.b16 %v2200
    %v2234 = vunpack.c.l.b16 %v2201
    %v2235 = vunpack.c.h.b16 %v2201
    %v2236 = vunpack.c.l.b16 %v2202
    %v2237 = vunpack.c.h.b16 %v2202
    %v2238 = vunpack.c.l.b16 %v2203
    %v2239 = vunpack.c.h.b16 %v2203
    %v2240 = vunpack.c.l.b16 %v2204
    %v2241 = vunpack.c.h.b16 %v2204
    %v2242 = vunpack.c.l.b16 %v2205
    %v2243 = vunpack.c.h.b16 %v2205
    %v2244 = vunpack.c.l.b16 %v2206
    %v2245 = vunpack.c.h.b16 %v2206
    %v2246 = vpack.c.b16 %v2232, %v2230
    %v2247 = vpack.c.b16 %v2233, %v2231
    %v2248 = vpack.c.b16 %v2236, %v2234
    %v2249 = vpack.c.b16 %v2237, %v2235
    %v2250 = vpack.c.b16 %v2240, %v2238
    %v2251 = vpack.c.b16 %v2241, %v2239
    %v2252 = vpack.c.b16 %v2244, %v2242
    %v2253 = vpack.c.b16 %v2245, %v2243
    %v2263 = vsel %vm294, %v2207, 0
    %v2266 = vsel %vm294, %v2208, 0
    %2268 = vmatprep.subr.bf16.mxu0 %v2247
    %2269 = vmatpush1.bf16.msra.mxu0 %v2246
    %2270 = vmatprep.subr.bf16.mxu0 %v2249
    %2271 = vmatpush1.bf16.msra.mxu0 %v2248
    %2272 = vmatprep.subr.bf16.mxu0 %v2251
    %2273 = vmatpush1.bf16.msra.mxu0 %v2250
    %2274 = vmatprep.subr.bf16.mxu0 %v2253
    %2275 = vmatpush1.bf16.msra.mxu0 %v2252
    %2276 = vmatprep.subr.bf16.mxu0 0
    %2277 = vmatpush1.bf16.msra.mxu0 0
    %2278 = vmatprep.subr.bf16.mxu0 0
    %2279 = vmatpush1.bf16.msra.mxu0 0
    %2280 = vmatprep.subr.bf16.mxu0 0
    %2281 = vmatpush1.bf16.msra.mxu0 0
    %2282 = vmatprep.subr.bf16.mxu0 0
    %2283 = vmatpush1.bf16.msra.mxu0 0
    %2284 = vmatprep.subr.bf16.mxu0 0
    %2285 = vmatpush1.bf16.msra.mxu0 0
    %2286 = vmatprep.subr.bf16.mxu0 0
    %2287 = vmatpush1.bf16.msra.mxu0 0
    %2288 = vmatprep.subr.bf16.mxu0 0
    %2289 = vmatpush1.bf16.msra.mxu0 0
    %2290 = vmatprep.subr.bf16.mxu0 0
    %2291 = vmatpush1.bf16.msra.mxu0 0
    %2292 = vmatprep.subr.bf16.mxu0 0
    %2293 = vmatpush1.bf16.msra.mxu0 0
    %2294 = vmatprep.subr.bf16.mxu0 0
    %2295 = vmatpush1.bf16.msra.mxu0 0
    %2296 = vmatprep.subr.bf16.mxu0 0
    %2297 = vmatpush1.bf16.msra.mxu0 0
    %2298 = vmatprep.subr.bf16.mxu0 0
    %2299 = vmatpush1.bf16.msra.mxu0 0
    %2300 = vmatprep.mubr.bf16.mxu0 0
    %2301 = vmatmul.mubr.bf16.gmra.mrb[0].mxu0 %v2263
    %v2302 = vpop.f32.mrb[0].mxu0
    %v2303 = vadd.f32 %v2215, %v2302
    %v2304 = vpop.f32.mrb[0].mxu0
    %v2305 = vadd.f32 %v2219, %v2304
    %v2306 = vpop.f32.mrb[0].mxu0
    %v2307 = vadd.f32 %v2215, %v2306
    %v2308 = vpop.f32.mrb[0].mxu0
    %v2309 = vadd.f32 %v2219, %v2308
    %2310 = vmatprep.mubr.bf16.mxu0 0
    %2311 = vmatmul.mubr.bf16.gmra.mrb[0].mxu0 %v2266
    %v2312 = vpop.f32.mrb[0].mxu0
    %v2313 = vadd.f32 %v2215, %v2312
    %v2314 = vpop.f32.mrb[0].mxu0
    %v2315 = vadd.f32 %v2219, %v2314
    %v2316 = vpop.f32.mrb[0].mxu0
    %v2317 = vadd.f32 %v2215, %v2316
    %v2318 = vpop.f32.mrb[0].mxu0
    %v2319 = vadd.f32 %v2219, %v2318
    %2320 = vdwg.mxu0
    %s2321 = scalar_lea.vmem [#allocation6], 32
    %v2322 = vld [vmem:[%s2321] sm:$0xf]
    %v2323 = vld [vmem:[%s2321 + $0x4] sm:$0xf]
    %v2324 = vld [vmem:[%s2321 + $0x8] sm:$0xf]
    %v2325 = vld [vmem:[%s2321 + $0xc] sm:$0xf]
    %v2326 = vld [vmem:[%s2321 + $0x10] sm:$0xf]
    %v2327 = vld [vmem:[%s2321 + $0x14] sm:$0xf]
    %v2328 = vld [vmem:[%s2321 + $0x18] sm:$0xf]
    %v2329 = vld [vmem:[%s2321 + $0x1c] sm:$0xf]
    %v2330 = vpack.c.bf16 %v2307, %v2303
    %v2331 = vpack.c.bf16 %v2317, %v2313
    %2333 = vrot.lane.b32.xlu0 %v2330, 64
    %v2334 = vpop.permute.xlu0 %2333
    %v2336 = vsel %vm560, %v2330, 0
    %v2339 = vsel %vm560, %v2334, 0
    %2341 = vmatprep.subr.bf16.mxu0 0
    %2342 = vmatpush1.bf16.xpose.msra.mxu0 %v2339
    %2343 = vmatprep.subr.bf16.mxu0 0
    %2344 = vmatpush1.bf16.xpose.msra.mxu0 0
    %2345 = vmatprep.subr.bf16.mxu0 0
    %2346 = vmatpush1.bf16.xpose.msra.mxu0 0
    %2347 = vmatprep.subr.bf16.mxu0 0
    %2348 = vmatpush1.bf16.xpose.msra.mxu0 0
    %2349 = vmatprep.subr.bf16.mxu0 0
    %2350 = vmatpush1.bf16.xpose.msra.mxu0 0
    %2351 = vmatprep.subr.bf16.mxu0 0
    %2352 = vmatpush1.bf16.xpose.msra.mxu0 0
    %2353 = vmatprep.subr.bf16.mxu0 0
    %2354 = vmatpush1.bf16.xpose.msra.mxu0 0
    %2355 = vmatprep.subr.bf16.mxu0 0
    %2356 = vmatpush1.bf16.xpose.msra.mxu0 0
    %2357 = vmatprep.subr.bf16.mxu0 0
    %2358 = vmatpush1.bf16.xpose.msra.mxu0 0
    %2359 = vmatprep.subr.bf16.mxu0 0
    %2360 = vmatpush1.bf16.xpose.msra.mxu0 0
    %2361 = vmatprep.subr.bf16.mxu0 0
    %2362 = vmatpush1.bf16.xpose.msra.mxu0 0
    %2363 = vmatprep.subr.bf16.mxu0 0
    %2364 = vmatpush1.bf16.xpose.msra.mxu0 0
    %2365 = vmatprep.subr.bf16.mxu0 0
    %2366 = vmatpush1.bf16.xpose.msra.mxu0 0
    %2367 = vmatprep.subr.bf16.mxu0 0
    %2368 = vmatpush1.bf16.xpose.msra.mxu0 0
    %2369 = vmatprep.subr.bf16.mxu0 0
    %2370 = vmatpush1.bf16.xpose.msra.mxu0 0
    %2371 = vmatprep.subr.bf16.mxu0 0
    %2372 = vmatpush1.bf16.xpose.msra.mxu0 0
    %2373 = vmatprep.mubr.bf16.mxu0 0
    %2374 = vmatmul.mubr.bf16.gmra.mrb[0].mxu0 %v2336
    %v2375 = vpop.f32.mrb[0].mxu0
    %v2376 = vadd.f32 0.0, %v2375
    %v2377 = vpop.f32.mrb[0].mxu0
    %v2378 = vpop.f32.mrb[0].mxu0
    %v2379 = vadd.f32 0.0, %v2378
    %v2380 = vpop.f32.mrb[0].mxu0
    %2381 = vdwg.mxu0
    %2383 = vrot.lane.b32.xlu0 %v2331, 64
    %v2384 = vpop.permute.xlu0 %2383
    %v2386 = vsel %vm560, %v2331, 0
    %v2389 = vsel %vm560, %v2384, 0
    %2391 = vmatprep.subr.bf16.mxu0 0
    %2392 = vmatpush1.bf16.xpose.msra.mxu0 %v2389
    %2393 = vmatprep.subr.bf16.mxu0 0
    %2394 = vmatpush1.bf16.xpose.msra.mxu0 0
    %2395 = vmatprep.subr.bf16.mxu0 0
    %2396 = vmatpush1.bf16.xpose.msra.mxu0 0
    %2397 = vmatprep.subr.bf16.mxu0 0
    %2398 = vmatpush1.bf16.xpose.msra.mxu0 0
    %2399 = vmatprep.subr.bf16.mxu0 0
    %2400 = vmatpush1.bf16.xpose.msra.mxu0 0
    %2401 = vmatprep.subr.bf16.mxu0 0
    %2402 = vmatpush1.bf16.xpose.msra.mxu0 0
    %2403 = vmatprep.subr.bf16.mxu0 0
    %2404 = vmatpush1.bf16.xpose.msra.mxu0 0
    %2405 = vmatprep.subr.bf16.mxu0 0
    %2406 = vmatpush1.bf16.xpose.msra.mxu0 0
    %2407 = vmatprep.subr.bf16.mxu0 0
    %2408 = vmatpush1.bf16.xpose.msra.mxu0 0
    %2409 = vmatprep.subr.bf16.mxu0 0
    %2410 = vmatpush1.bf16.xpose.msra.mxu0 0
    %2411 = vmatprep.subr.bf16.mxu0 0
    %2412 = vmatpush1.bf16.xpose.msra.mxu0 0
    %2413 = vmatprep.subr.bf16.mxu0 0
    %2414 = vmatpush1.bf16.xpose.msra.mxu0 0
    %2415 = vmatprep.subr.bf16.mxu0 0
    %2416 = vmatpush1.bf16.xpose.msra.mxu0 0
    %2417 = vmatprep.subr.bf16.mxu0 0
    %2418 = vmatpush1.bf16.xpose.msra.mxu0 0
    %2419 = vmatprep.subr.bf16.mxu0 0
    %2420 = vmatpush1.bf16.xpose.msra.mxu0 0
    %2421 = vmatprep.subr.bf16.mxu0 0
    %2422 = vmatpush1.bf16.xpose.msra.mxu0 0
    %2423 = vmatprep.mubr.bf16.mxu0 0
    %2424 = vmatmul.mubr.bf16.gmra.mrb[0].mxu0 %v2386
    %v2425 = vpop.f32.mrb[0].mxu0
    %v2426 = vadd.f32 0.0, %v2425
    %v2427 = vpop.f32.mrb[0].mxu0
    %v2428 = vpop.f32.mrb[0].mxu0
    %v2429 = vadd.f32 0.0, %v2428
    %v2430 = vpop.f32.mrb[0].mxu0
    %2431 = vdwg.mxu0
    %v2432 = vsel %vm560, %v2376, -inf
    %2433 = vmax.xlane.f32.xlu0 %v2432
    %v2434 = vpop.xlane.xlu0 %2433
    %v2435 = vsel %vm560, %v2379, -inf
    %2436 = vmax.xlane.f32.xlu0 %v2435
    %v2437 = vpop.xlane.xlu0 %2436
    %v2438 = vsel %vm560, %v2426, -inf
    %2439 = vmax.xlane.f32.xlu0 %v2438
    %v2440 = vpop.xlane.xlu0 %2439
    %v2441 = vsel %vm560, %v2429, -inf
    %2442 = vmax.xlane.f32.xlu0 %v2441
    %v2443 = vpop.xlane.xlu0 %2442
    %v2444 = vsub.f32 %v2376, %v2434
    %v2445 = vsub.f32 %v2379, %v2437
    %v2446 = vsub.f32 %v2426, %v2440
    %v2447 = vsub.f32 %v2429, %v2443
    %v2448 = vmul.f32 %v2444, 1.442695
    %v2449 = vpow.pop %v2448
    %v2450 = vmul.f32 %v2445, 1.442695
    %v2451 = vpow.pop %v2450
    %v2452 = vmul.f32 %v2446, 1.442695
    %v2453 = vpow.pop %v2452
    %v2454 = vmul.f32 %v2447, 1.442695
    %v2455 = vpow.pop %v2454
    %v2456 = vsel %vm560, %v2449, 0.0
    %2457 = vadd.xlane.f32.xlu0 %v2456
    %v2458 = vpop.xlane.xlu0 %2457
    %v2459 = vsel %vm560, %v2451, 0.0
    %2460 = vadd.xlane.f32.xlu0 %v2459
    %v2461 = vpop.xlane.xlu0 %2460
    %v2462 = vsel %vm560, %v2453, 0.0
    %2463 = vadd.xlane.f32.xlu0 %v2462
    %v2464 = vpop.xlane.xlu0 %2463
    %v2465 = vsel %vm560, %v2455, 0.0
    %2466 = vadd.xlane.f32.xlu0 %v2465
    %v2467 = vpop.xlane.xlu0 %2466
    %v2468 = vrcp.pop %v2458
    %v2469 = vrcp.pop %v2461
    %v2470 = vrcp.pop %v2464
    %v2471 = vrcp.pop %v2467
    %v2472 = vmul.f32 %v2449, %v2468
    %v2473 = vmul.f32 %v2451, %v2469
    %v2474 = vmul.f32 %v2453, %v2470
    %v2475 = vmul.f32 %v2455, %v2471
    %v2476 = vpack.c.bf16 %v2473, %v2472
    %v2477 = vpack.c.bf16 %v2475, %v2474
    %v2478 = vpack.c.bf16 %v2309, %v2305
    %v2479 = vpack.c.bf16 %v2319, %v2315
    %v2481 = vsel %vm560, %v2476, 0
    %2483 = vmatprep.subr.bf16.mxu0 0
    %2484 = vmatpush1.bf16.msra.mxu0 %v2478
    %2485 = vmatprep.subr.bf16.mxu0 0
    %2486 = vmatpush1.bf16.msra.mxu0 0
    %2487 = vmatprep.subr.bf16.mxu0 0
    %2488 = vmatpush1.bf16.msra.mxu0 0
    %2489 = vmatprep.subr.bf16.mxu0 0
    %2490 = vmatpush1.bf16.msra.mxu0 0
    %2491 = vmatprep.subr.bf16.mxu0 0
    %2492 = vmatpush1.bf16.msra.mxu0 0
    %2493 = vmatprep.subr.bf16.mxu0 0
    %2494 = vmatpush1.bf16.msra.mxu0 0
    %2495 = vmatprep.subr.bf16.mxu0 0
    %2496 = vmatpush1.bf16.msra.mxu0 0
    %2497 = vmatprep.subr.bf16.mxu0 0
    %2498 = vmatpush1.bf16.msra.mxu0 0
    %2499 = vmatprep.subr.bf16.mxu0 0
    %2500 = vmatpush1.bf16.msra.mxu0 0
    %2501 = vmatprep.subr.bf16.mxu0 0
    %2502 = vmatpush1.bf16.msra.mxu0 0
    %2503 = vmatprep.subr.bf16.mxu0 0
    %2504 = vmatpush1.bf16.msra.mxu0 0
    %2505 = vmatprep.subr.bf16.mxu0 0
    %2506 = vmatpush1.bf16.msra.mxu0 0
    %2507 = vmatprep.subr.bf16.mxu0 0
    %2508 = vmatpush1.bf16.msra.mxu0 0
    %2509 = vmatprep.subr.bf16.mxu0 0
    %2510 = vmatpush1.bf16.msra.mxu0 0
    %2511 = vmatprep.subr.bf16.mxu0 0
    %2512 = vmatpush1.bf16.msra.mxu0 0
    %2513 = vmatprep.subr.bf16.mxu0 0
    %2514 = vmatpush1.bf16.msra.mxu0 0
    %2515 = vmatprep.mubr.bf16.mxu0 0
    %2516 = vmatmul.mubr.bf16.gmra.mrb[0].mxu0 %v2481
    %v2517 = vpop.f32.mrb[0].mxu0
    %v2518 = vadd.f32 0.0, %v2517
    %v2519 = vpop.f32.mrb[0].mxu0
    %v2520 = vpop.f32.mrb[0].mxu0
    %v2521 = vadd.f32 0.0, %v2520
    %v2522 = vpop.f32.mrb[0].mxu0
    %2523 = vdwg.mxu0
    %v2525 = vsel %vm560, %v2477, 0
    %2527 = vmatprep.subr.bf16.mxu0 0
    %2528 = vmatpush1.bf16.msra.mxu0 %v2479
    %2529 = vmatprep.subr.bf16.mxu0 0
    %2530 = vmatpush1.bf16.msra.mxu0 0
    %2531 = vmatprep.subr.bf16.mxu0 0
    %2532 = vmatpush1.bf16.msra.mxu0 0
    %2533 = vmatprep.subr.bf16.mxu0 0
    %2534 = vmatpush1.bf16.msra.mxu0 0
    %2535 = vmatprep.subr.bf16.mxu0 0
    %2536 = vmatpush1.bf16.msra.mxu0 0
    %2537 = vmatprep.subr.bf16.mxu0 0
    %2538 = vmatpush1.bf16.msra.mxu0 0
    %2539 = vmatprep.subr.bf16.mxu0 0
    %2540 = vmatpush1.bf16.msra.mxu0 0
    %2541 = vmatprep.subr.bf16.mxu0 0
    %2542 = vmatpush1.bf16.msra.mxu0 0
    %2543 = vmatprep.subr.bf16.mxu0 0
    %2544 = vmatpush1.bf16.msra.mxu0 0
    %2545 = vmatprep.subr.bf16.mxu0 0
    %2546 = vmatpush1.bf16.msra.mxu0 0
    %2547 = vmatprep.subr.bf16.mxu0 0
    %2548 = vmatpush1.bf16.msra.mxu0 0
    %2549 = vmatprep.subr.bf16.mxu0 0
    %2550 = vmatpush1.bf16.msra.mxu0 0
    %2551 = vmatprep.subr.bf16.mxu0 0
    %2552 = vmatpush1.bf16.msra.mxu0 0
    %2553 = vmatprep.subr.bf16.mxu0 0
    %2554 = vmatpush1.bf16.msra.mxu0 0
    %2555 = vmatprep.subr.bf16.mxu0 0
    %2556 = vmatpush1.bf16.msra.mxu0 0
    %2557 = vmatprep.subr.bf16.mxu0 0
    %2558 = vmatpush1.bf16.msra.mxu0 0
    %2559 = vmatprep.mubr.bf16.mxu0 0
    %2560 = vmatmul.mubr.bf16.gmra.mrb[0].mxu0 %v2525
    %v2561 = vpop.f32.mrb[0].mxu0
    %v2562 = vadd.f32 0.0, %v2561
    %v2563 = vpop.f32.mrb[0].mxu0
    %v2564 = vpop.f32.mrb[0].mxu0
    %v2565 = vadd.f32 0.0, %v2564
    %v2566 = vpop.f32.mrb[0].mxu0
    %2567 = vdwg.mxu0
    %v2568 = vpack.c.bf16 %v2521, %v2518
    %v2569 = vpack.c.bf16 %v2565, %v2562
    %2570 = vrot.lane.b32.xlu0 %v2330, 112
    %v2571 = vpop.permute.xlu0 %2570
    %2572 = vrot.lane.b32.xlu0 %v2330, 48
    %v2573 = vpop.permute.xlu0 %2572
    %v2575 = vsel %vm560, %v2571, 0
    %v2578 = vsel %vm560, %v2573, 0
    %2580 = vmatprep.subr.bf16.mxu0 0
    %2581 = vmatpush1.bf16.xpose.msra.mxu0 %v2578
    %2582 = vmatprep.subr.bf16.mxu0 0
    %2583 = vmatpush1.bf16.xpose.msra.mxu0 0
    %2584 = vmatprep.subr.bf16.mxu0 0
    %2585 = vmatpush1.bf16.xpose.msra.mxu0 0
    %2586 = vmatprep.subr.bf16.mxu0 0
    %2587 = vmatpush1.bf16.xpose.msra.mxu0 0
    %2588 = vmatprep.subr.bf16.mxu0 0
    %2589 = vmatpush1.bf16.xpose.msra.mxu0 0
    %2590 = vmatprep.subr.bf16.mxu0 0
    %2591 = vmatpush1.bf16.xpose.msra.mxu0 0
    %2592 = vmatprep.subr.bf16.mxu0 0
    %2593 = vmatpush1.bf16.xpose.msra.mxu0 0
    %2594 = vmatprep.subr.bf16.mxu0 0
    %2595 = vmatpush1.bf16.xpose.msra.mxu0 0
    %2596 = vmatprep.subr.bf16.mxu0 0
    %2597 = vmatpush1.bf16.xpose.msra.mxu0 0
    %2598 = vmatprep.subr.bf16.mxu0 0
    %2599 = vmatpush1.bf16.xpose.msra.mxu0 0
    %2600 = vmatprep.subr.bf16.mxu0 0
    %2601 = vmatpush1.bf16.xpose.msra.mxu0 0
    %2602 = vmatprep.subr.bf16.mxu0 0
    %2603 = vmatpush1.bf16.xpose.msra.mxu0 0
    %2604 = vmatprep.subr.bf16.mxu0 0
    %2605 = vmatpush1.bf16.xpose.msra.mxu0 0
    %2606 = vmatprep.subr.bf16.mxu0 0
    %2607 = vmatpush1.bf16.xpose.msra.mxu0 0
    %2608 = vmatprep.subr.bf16.mxu0 0
    %2609 = vmatpush1.bf16.xpose.msra.mxu0 0
    %2610 = vmatprep.subr.bf16.mxu0 0
    %2611 = vmatpush1.bf16.xpose.msra.mxu0 0
    %2612 = vmatprep.mubr.bf16.mxu0 0
    %2613 = vmatmul.mubr.bf16.gmra.mrb[0].mxu0 %v2575
    %v2614 = vpop.f32.mrb[0].mxu0
    %v2615 = vadd.f32 0.0, %v2614
    %v2616 = vpop.f32.mrb[0].mxu0
    %v2617 = vpop.f32.mrb[0].mxu0
    %v2618 = vadd.f32 0.0, %v2617
    %v2619 = vpop.f32.mrb[0].mxu0
    %2620 = vdwg.mxu0
    %2621 = vrot.lane.b32.xlu0 %v2331, 112
    %v2622 = vpop.permute.xlu0 %2621
    %2623 = vrot.lane.b32.xlu0 %v2331, 48
    %v2624 = vpop.permute.xlu0 %2623
    %v2626 = vsel %vm560, %v2622, 0
    %v2629 = vsel %vm560, %v2624, 0
    %2631 = vmatprep.subr.bf16.mxu0 0
    %2632 = vmatpush1.bf16.xpose.msra.mxu0 %v2629
    %2633 = vmatprep.subr.bf16.mxu0 0
    %2634 = vmatpush1.bf16.xpose.msra.mxu0 0
    %2635 = vmatprep.subr.bf16.mxu0 0
    %2636 = vmatpush1.bf16.xpose.msra.mxu0 0
    %2637 = vmatprep.subr.bf16.mxu0 0
    %2638 = vmatpush1.bf16.xpose.msra.mxu0 0
    %2639 = vmatprep.subr.bf16.mxu0 0
    %2640 = vmatpush1.bf16.xpose.msra.mxu0 0
    %2641 = vmatprep.subr.bf16.mxu0 0
    %2642 = vmatpush1.bf16.xpose.msra.mxu0 0
    %2643 = vmatprep.subr.bf16.mxu0 0
    %2644 = vmatpush1.bf16.xpose.msra.mxu0 0
    %2645 = vmatprep.subr.bf16.mxu0 0
    %2646 = vmatpush1.bf16.xpose.msra.mxu0 0
    %2647 = vmatprep.subr.bf16.mxu0 0
    %2648 = vmatpush1.bf16.xpose.msra.mxu0 0
    %2649 = vmatprep.subr.bf16.mxu0 0
    %2650 = vmatpush1.bf16.xpose.msra.mxu0 0
    %2651 = vmatprep.subr.bf16.mxu0 0
    %2652 = vmatpush1.bf16.xpose.msra.mxu0 0
    %2653 = vmatprep.subr.bf16.mxu0 0
    %2654 = vmatpush1.bf16.xpose.msra.mxu0 0
    %2655 = vmatprep.subr.bf16.mxu0 0
    %2656 = vmatpush1.bf16.xpose.msra.mxu0 0
    %2657 = vmatprep.subr.bf16.mxu0 0
    %2658 = vmatpush1.bf16.xpose.msra.mxu0 0
    %2659 = vmatprep.subr.bf16.mxu0 0
    %2660 = vmatpush1.bf16.xpose.msra.mxu0 0
    %2661 = vmatprep.subr.bf16.mxu0 0
    %2662 = vmatpush1.bf16.xpose.msra.mxu0 0
    %2663 = vmatprep.mubr.bf16.mxu0 0
    %2664 = vmatmul.mubr.bf16.gmra.mrb[0].mxu0 %v2626
    %v2665 = vpop.f32.mrb[0].mxu0
    %v2666 = vadd.f32 0.0, %v2665
    %v2667 = vpop.f32.mrb[0].mxu0
    %v2668 = vpop.f32.mrb[0].mxu0
    %v2669 = vadd.f32 0.0, %v2668
    %v2670 = vpop.f32.mrb[0].mxu0
    %2671 = vdwg.mxu0
    %v2672 = vsel %vm560, %v2615, -inf
    %2673 = vmax.xlane.f32.xlu0 %v2672
    %v2674 = vpop.xlane.xlu0 %2673
    %v2675 = vsel %vm560, %v2618, -inf
    %2676 = vmax.xlane.f32.xlu0 %v2675
    %v2677 = vpop.xlane.xlu0 %2676
    %v2678 = vsel %vm560, %v2666, -inf
    %2679 = vmax.xlane.f32.xlu0 %v2678
    %v2680 = vpop.xlane.xlu0 %2679
    %v2681 = vsel %vm560, %v2669, -inf
    %2682 = vmax.xlane.f32.xlu0 %v2681
    %v2683 = vpop.xlane.xlu0 %2682
    %v2684 = vsub.f32 %v2615, %v2674
    %v2685 = vsub.f32 %v2618, %v2677
    %v2686 = vsub.f32 %v2666, %v2680
    %v2687 = vsub.f32 %v2669, %v2683
    %v2688 = vmul.f32 %v2684, 1.442695
    %v2689 = vpow.pop %v2688
    %v2690 = vmul.f32 %v2685, 1.442695
    %v2691 = vpow.pop %v2690
    %v2692 = vmul.f32 %v2686, 1.442695
    %v2693 = vpow.pop %v2692
    %v2694 = vmul.f32 %v2687, 1.442695
    %v2695 = vpow.pop %v2694
    %v2696 = vsel %vm560, %v2689, 0.0
    %2697 = vadd.xlane.f32.xlu0 %v2696
    %v2698 = vpop.xlane.xlu0 %2697
    %v2699 = vsel %vm560, %v2691, 0.0
    %2700 = vadd.xlane.f32.xlu0 %v2699
    %v2701 = vpop.xlane.xlu0 %2700
    %v2702 = vsel %vm560, %v2693, 0.0
    %2703 = vadd.xlane.f32.xlu0 %v2702
    %v2704 = vpop.xlane.xlu0 %2703
    %v2705 = vsel %vm560, %v2695, 0.0
    %2706 = vadd.xlane.f32.xlu0 %v2705
    %v2707 = vpop.xlane.xlu0 %2706
    %v2708 = vrcp.pop %v2698
    %v2709 = vrcp.pop %v2701
    %v2710 = vrcp.pop %v2704
    %v2711 = vrcp.pop %v2707
    %v2712 = vmul.f32 %v2689, %v2708
    %v2713 = vmul.f32 %v2691, %v2709
    %v2714 = vmul.f32 %v2693, %v2710
    %v2715 = vmul.f32 %v2695, %v2711
    %v2716 = vpack.c.bf16 %v2713, %v2712
    %v2717 = vpack.c.bf16 %v2715, %v2714
    %2719 = vrot.lane.b32.xlu0 %v2478, 112
    %v2720 = vpop.permute.xlu0 %2719
    %v2723 = vsel %vm560, %v2716, 0
    %2725 = vmatprep.subr.bf16.mxu0 0
    %2726 = vmatpush1.bf16.msra.mxu0 %v2720
    %2727 = vmatprep.subr.bf16.mxu0 0
    %2728 = vmatpush1.bf16.msra.mxu0 0
    %2729 = vmatprep.subr.bf16.mxu0 0
    %2730 = vmatpush1.bf16.msra.mxu0 0
    %2731 = vmatprep.subr.bf16.mxu0 0
    %2732 = vmatpush1.bf16.msra.mxu0 0
    %2733 = vmatprep.subr.bf16.mxu0 0
    %2734 = vmatpush1.bf16.msra.mxu0 0
    %2735 = vmatprep.subr.bf16.mxu0 0
    %2736 = vmatpush1.bf16.msra.mxu0 0
    %2737 = vmatprep.subr.bf16.mxu0 0
    %2738 = vmatpush1.bf16.msra.mxu0 0
    %2739 = vmatprep.subr.bf16.mxu0 0
    %2740 = vmatpush1.bf16.msra.mxu0 0
    %2741 = vmatprep.subr.bf16.mxu0 0
    %2742 = vmatpush1.bf16.msra.mxu0 0
    %2743 = vmatprep.subr.bf16.mxu0 0
    %2744 = vmatpush1.bf16.msra.mxu0 0
    %2745 = vmatprep.subr.bf16.mxu0 0
    %2746 = vmatpush1.bf16.msra.mxu0 0
    %2747 = vmatprep.subr.bf16.mxu0 0
    %2748 = vmatpush1.bf16.msra.mxu0 0
    %2749 = vmatprep.subr.bf16.mxu0 0
    %2750 = vmatpush1.bf16.msra.mxu0 0
    %2751 = vmatprep.subr.bf16.mxu0 0
    %2752 = vmatpush1.bf16.msra.mxu0 0
    %2753 = vmatprep.subr.bf16.mxu0 0
    %2754 = vmatpush1.bf16.msra.mxu0 0
    %2755 = vmatprep.subr.bf16.mxu0 0
    %2756 = vmatpush1.bf16.msra.mxu0 0
    %2757 = vmatprep.mubr.bf16.mxu0 0
    %2758 = vmatmul.mubr.bf16.gmra.mrb[0].mxu0 %v2723
    %v2759 = vpop.f32.mrb[0].mxu0
    %v2760 = vadd.f32 0.0, %v2759
    %v2761 = vpop.f32.mrb[0].mxu0
    %v2762 = vpop.f32.mrb[0].mxu0
    %v2763 = vadd.f32 0.0, %v2762
    %v2764 = vpop.f32.mrb[0].mxu0
    %2765 = vdwg.mxu0
    %2767 = vrot.lane.b32.xlu0 %v2479, 112
    %v2768 = vpop.permute.xlu0 %2767
    %v2771 = vsel %vm560, %v2717, 0
    %2773 = vmatprep.subr.bf16.mxu0 0
    %2774 = vmatpush1.bf16.msra.mxu0 %v2768
    %2775 = vmatprep.subr.bf16.mxu0 0
    %2776 = vmatpush1.bf16.msra.mxu0 0
    %2777 = vmatprep.subr.bf16.mxu0 0
    %2778 = vmatpush1.bf16.msra.mxu0 0
    %2779 = vmatprep.subr.bf16.mxu0 0
    %2780 = vmatpush1.bf16.msra.mxu0 0
    %2781 = vmatprep.subr.bf16.mxu0 0
    %2782 = vmatpush1.bf16.msra.mxu0 0
    %2783 = vmatprep.subr.bf16.mxu0 0
    %2784 = vmatpush1.bf16.msra.mxu0 0
    %2785 = vmatprep.subr.bf16.mxu0 0
    %2786 = vmatpush1.bf16.msra.mxu0 0
    %2787 = vmatprep.subr.bf16.mxu0 0
    %2788 = vmatpush1.bf16.msra.mxu0 0
    %2789 = vmatprep.subr.bf16.mxu0 0
    %2790 = vmatpush1.bf16.msra.mxu0 0
    %2791 = vmatprep.subr.bf16.mxu0 0
    %2792 = vmatpush1.bf16.msra.mxu0 0
    %2793 = vmatprep.subr.bf16.mxu0 0
    %2794 = vmatpush1.bf16.msra.mxu0 0
    %2795 = vmatprep.subr.bf16.mxu0 0
    %2796 = vmatpush1.bf16.msra.mxu0 0
    %2797 = vmatprep.subr.bf16.mxu0 0
    %2798 = vmatpush1.bf16.msra.mxu0 0
    %2799 = vmatprep.subr.bf16.mxu0 0
    %2800 = vmatpush1.bf16.msra.mxu0 0
    %2801 = vmatprep.subr.bf16.mxu0 0
    %2802 = vmatpush1.bf16.msra.mxu0 0
    %2803 = vmatprep.subr.bf16.mxu0 0
    %2804 = vmatpush1.bf16.msra.mxu0 0
    %2805 = vmatprep.mubr.bf16.mxu0 0
    %2806 = vmatmul.mubr.bf16.gmra.mrb[0].mxu0 %v2771
    %v2807 = vpop.f32.mrb[0].mxu0
    %v2808 = vadd.f32 0.0, %v2807
    %v2809 = vpop.f32.mrb[0].mxu0
    %v2810 = vpop.f32.mrb[0].mxu0
    %v2811 = vadd.f32 0.0, %v2810
    %v2812 = vpop.f32.mrb[0].mxu0
    %2813 = vdwg.mxu0
    %v2814 = vpack.c.bf16 %v2763, %v2760
    %v2815 = vpack.c.bf16 %v2811, %v2808
    %v2818 = vunpack.c.l.b16 %v2324
    %v2819 = vunpack.c.l.b16 %v2325
    %v2820 = vpack.c.b16 %v2819, %v2818
    %v2823 = vsel %vm560, %v2814, 0
    %v2826 = vsel %vm560, %v2815, 0
    %2828 = vmatprep.subr.bf16.mxu0 0
    %2829 = vmatpush1.bf16.msra.mxu0 %v2820
    %2830 = vmatprep.subr.bf16.mxu0 0
    %2831 = vmatpush1.bf16.msra.mxu0 0
    %2832 = vmatprep.subr.bf16.mxu0 0
    %2833 = vmatpush1.bf16.msra.mxu0 0
    %2834 = vmatprep.subr.bf16.mxu0 0
    %2835 = vmatpush1.bf16.msra.mxu0 0
    %2836 = vmatprep.subr.bf16.mxu0 0
    %2837 = vmatpush1.bf16.msra.mxu0 0
    %2838 = vmatprep.subr.bf16.mxu0 0
    %2839 = vmatpush1.bf16.msra.mxu0 0
    %2840 = vmatprep.subr.bf16.mxu0 0
    %2841 = vmatpush1.bf16.msra.mxu0 0
    %2842 = vmatprep.subr.bf16.mxu0 0
    %2843 = vmatpush1.bf16.msra.mxu0 0
    %2844 = vmatprep.subr.bf16.mxu0 0
    %2845 = vmatpush1.bf16.msra.mxu0 0
    %2846 = vmatprep.subr.bf16.mxu0 0
    %2847 = vmatpush1.bf16.msra.mxu0 0
    %2848 = vmatprep.subr.bf16.mxu0 0
    %2849 = vmatpush1.bf16.msra.mxu0 0
    %2850 = vmatprep.subr.bf16.mxu0 0
    %2851 = vmatpush1.bf16.msra.mxu0 0
    %2852 = vmatprep.subr.bf16.mxu0 0
    %2853 = vmatpush1.bf16.msra.mxu0 0
    %2854 = vmatprep.subr.bf16.mxu0 0
    %2855 = vmatpush1.bf16.msra.mxu0 0
    %2856 = vmatprep.subr.bf16.mxu0 0
    %2857 = vmatpush1.bf16.msra.mxu0 0
    %2858 = vmatprep.subr.bf16.mxu0 0
    %2859 = vmatpush1.bf16.msra.mxu0 0
    %2860 = vmatprep.mubr.bf16.mxu0 0
    %2861 = vmatmul.mubr.bf16.gmra.mrb[0].mxu0 %v2823
    %v2862 = vpop.f32.mrb[0].mxu0
    %v2863 = vadd.f32 0.0, %v2862
    %v2864 = vpop.f32.mrb[0].mxu0
    %v2865 = vpop.f32.mrb[0].mxu0
    %v2866 = vadd.f32 0.0, %v2865
    %v2867 = vpop.f32.mrb[0].mxu0
    %2868 = vmatprep.mubr.bf16.mxu0 0
    %2869 = vmatmul.mubr.bf16.gmra.mrb[0].mxu0 %v2826
    %v2870 = vpop.f32.mrb[0].mxu0
    %v2871 = vadd.f32 0.0, %v2870
    %v2872 = vpop.f32.mrb[0].mxu0
    %v2873 = vpop.f32.mrb[0].mxu0
    %v2874 = vadd.f32 0.0, %v2873
    %v2875 = vpop.f32.mrb[0].mxu0
    %2876 = vdwg.mxu0
    %v2879 = vunpack.c.l.b16 %v2322
    %v2880 = vunpack.c.l.b16 %v2323
    %v2881 = vpack.c.b16 %v2880, %v2879
    %v2884 = vsel %vm560, %v2568, 0
    %v2887 = vsel %vm560, %v2569, 0
    %2889 = vmatprep.subr.bf16.mxu0 0
    %2890 = vmatpush1.bf16.msra.mxu0 %v2881
    %2891 = vmatprep.subr.bf16.mxu0 0
    %2892 = vmatpush1.bf16.msra.mxu0 0
    %2893 = vmatprep.subr.bf16.mxu0 0
    %2894 = vmatpush1.bf16.msra.mxu0 0
    %2895 = vmatprep.subr.bf16.mxu0 0
    %2896 = vmatpush1.bf16.msra.mxu0 0
    %2897 = vmatprep.subr.bf16.mxu0 0
    %2898 = vmatpush1.bf16.msra.mxu0 0
    %2899 = vmatprep.subr.bf16.mxu0 0
    %2900 = vmatpush1.bf16.msra.mxu0 0
    %2901 = vmatprep.subr.bf16.mxu0 0
    %2902 = vmatpush1.bf16.msra.mxu0 0
    %2903 = vmatprep.subr.bf16.mxu0 0
    %2904 = vmatpush1.bf16.msra.mxu0 0
    %2905 = vmatprep.subr.bf16.mxu0 0
    %2906 = vmatpush1.bf16.msra.mxu0 0
    %2907 = vmatprep.subr.bf16.mxu0 0
    %2908 = vmatpush1.bf16.msra.mxu0 0
    %2909 = vmatprep.subr.bf16.mxu0 0
    %2910 = vmatpush1.bf16.msra.mxu0 0
    %2911 = vmatprep.subr.bf16.mxu0 0
    %2912 = vmatpush1.bf16.msra.mxu0 0
    %2913 = vmatprep.subr.bf16.mxu0 0
    %2914 = vmatpush1.bf16.msra.mxu0 0
    %2915 = vmatprep.subr.bf16.mxu0 0
    %2916 = vmatpush1.bf16.msra.mxu0 0
    %2917 = vmatprep.subr.bf16.mxu0 0
    %2918 = vmatpush1.bf16.msra.mxu0 0
    %2919 = vmatprep.subr.bf16.mxu0 0
    %2920 = vmatpush1.bf16.msra.mxu0 0
    %2921 = vmatprep.mubr.bf16.mxu0 0
    %2922 = vmatmul.mubr.bf16.gmra.mrb[0].mxu0 %v2884
    %v2923 = vpop.f32.mrb[0].mxu0
    %v2924 = vadd.f32 %v2863, %v2923
    %v2925 = vpop.f32.mrb[0].mxu0
    %v2926 = vpop.f32.mrb[0].mxu0
    %v2927 = vadd.f32 %v2866, %v2926
    %v2928 = vpop.f32.mrb[0].mxu0
    %2929 = vmatprep.mubr.bf16.mxu0 0
    %2930 = vmatmul.mubr.bf16.gmra.mrb[0].mxu0 %v2887
    %v2931 = vpop.f32.mrb[0].mxu0
    %v2932 = vadd.f32 %v2871, %v2931
    %v2933 = vpop.f32.mrb[0].mxu0
    %v2934 = vpop.f32.mrb[0].mxu0
    %v2935 = vadd.f32 %v2874, %v2934
    %v2936 = vpop.f32.mrb[0].mxu0
    %2937 = vdwg.mxu0
    %2938 = vrot.lane.b32.xlu0 %v2330, 96
    %v2939 = vpop.permute.xlu0 %2938
    %2940 = vrot.lane.b32.xlu0 %v2330, 32
    %v2941 = vpop.permute.xlu0 %2940
    %v2943 = vsel %vm560, %v2939, 0
    %v2946 = vsel %vm560, %v2941, 0
    %2948 = vmatprep.subr.bf16.mxu0 0
    %2949 = vmatpush1.bf16.xpose.msra.mxu0 %v2946
    %2950 = vmatprep.subr.bf16.mxu0 0
    %2951 = vmatpush1.bf16.xpose.msra.mxu0 0
    %2952 = vmatprep.subr.bf16.mxu0 0
    %2953 = vmatpush1.bf16.xpose.msra.mxu0 0
    %2954 = vmatprep.subr.bf16.mxu0 0
    %2955 = vmatpush1.bf16.xpose.msra.mxu0 0
    %2956 = vmatprep.subr.bf16.mxu0 0
    %2957 = vmatpush1.bf16.xpose.msra.mxu0 0
    %2958 = vmatprep.subr.bf16.mxu0 0
    %2959 = vmatpush1.bf16.xpose.msra.mxu0 0
    %2960 = vmatprep.subr.bf16.mxu0 0
    %2961 = vmatpush1.bf16.xpose.msra.mxu0 0
    %2962 = vmatprep.subr.bf16.mxu0 0
    %2963 = vmatpush1.bf16.xpose.msra.mxu0 0
    %2964 = vmatprep.subr.bf16.mxu0 0
    %2965 = vmatpush1.bf16.xpose.msra.mxu0 0
    %2966 = vmatprep.subr.bf16.mxu0 0
    %2967 = vmatpush1.bf16.xpose.msra.mxu0 0
    %2968 = vmatprep.subr.bf16.mxu0 0
    %2969 = vmatpush1.bf16.xpose.msra.mxu0 0
    %2970 = vmatprep.subr.bf16.mxu0 0
    %2971 = vmatpush1.bf16.xpose.msra.mxu0 0
    %2972 = vmatprep.subr.bf16.mxu0 0
    %2973 = vmatpush1.bf16.xpose.msra.mxu0 0
    %2974 = vmatprep.subr.bf16.mxu0 0
    %2975 = vmatpush1.bf16.xpose.msra.mxu0 0
    %2976 = vmatprep.subr.bf16.mxu0 0
    %2977 = vmatpush1.bf16.xpose.msra.mxu0 0
    %2978 = vmatprep.subr.bf16.mxu0 0
    %2979 = vmatpush1.bf16.xpose.msra.mxu0 0
    %2980 = vmatprep.mubr.bf16.mxu0 0
    %2981 = vmatmul.mubr.bf16.gmra.mrb[0].mxu0 %v2943
    %v2982 = vpop.f32.mrb[0].mxu0
    %v2983 = vadd.f32 0.0, %v2982
    %v2984 = vpop.f32.mrb[0].mxu0
    %v2985 = vpop.f32.mrb[0].mxu0
    %v2986 = vadd.f32 0.0, %v2985
    %v2987 = vpop.f32.mrb[0].mxu0
    %2988 = vdwg.mxu0
    %2989 = vrot.lane.b32.xlu0 %v2331, 96
    %v2990 = vpop.permute.xlu0 %2989
    %2991 = vrot.lane.b32.xlu0 %v2331, 32
    %v2992 = vpop.permute.xlu0 %2991
    %v2994 = vsel %vm560, %v2990, 0
    %v2997 = vsel %vm560, %v2992, 0
    %2999 = vmatprep.subr.bf16.mxu0 0
    %3000 = vmatpush1.bf16.xpose.msra.mxu0 %v2997
    %3001 = vmatprep.subr.bf16.mxu0 0
    %3002 = vmatpush1.bf16.xpose.msra.mxu0 0
    %3003 = vmatprep.subr.bf16.mxu0 0
    %3004 = vmatpush1.bf16.xpose.msra.mxu0 0
    %3005 = vmatprep.subr.bf16.mxu0 0
    %3006 = vmatpush1.bf16.xpose.msra.mxu0 0
    %3007 = vmatprep.subr.bf16.mxu0 0
    %3008 = vmatpush1.bf16.xpose.msra.mxu0 0
    %3009 = vmatprep.subr.bf16.mxu0 0
    %3010 = vmatpush1.bf16.xpose.msra.mxu0 0
    %3011 = vmatprep.subr.bf16.mxu0 0
    %3012 = vmatpush1.bf16.xpose.msra.mxu0 0
    %3013 = vmatprep.subr.bf16.mxu0 0
    %3014 = vmatpush1.bf16.xpose.msra.mxu0 0
    %3015 = vmatprep.subr.bf16.mxu0 0
    %3016 = vmatpush1.bf16.xpose.msra.mxu0 0
    %3017 = vmatprep.subr.bf16.mxu0 0
    %3018 = vmatpush1.bf16.xpose.msra.mxu0 0
    %3019 = vmatprep.subr.bf16.mxu0 0
    %3020 = vmatpush1.bf16.xpose.msra.mxu0 0
    %3021 = vmatprep.subr.bf16.mxu0 0
    %3022 = vmatpush1.bf16.xpose.msra.mxu0 0
    %3023 = vmatprep.subr.bf16.mxu0 0
    %3024 = vmatpush1.bf16.xpose.msra.mxu0 0
    %3025 = vmatprep.subr.bf16.mxu0 0
    %3026 = vmatpush1.bf16.xpose.msra.mxu0 0
    %3027 = vmatprep.subr.bf16.mxu0 0
    %3028 = vmatpush1.bf16.xpose.msra.mxu0 0
    %3029 = vmatprep.subr.bf16.mxu0 0
    %3030 = vmatpush1.bf16.xpose.msra.mxu0 0
    %3031 = vmatprep.mubr.bf16.mxu0 0
    %3032 = vmatmul.mubr.bf16.gmra.mrb[0].mxu0 %v2994
    %v3033 = vpop.f32.mrb[0].mxu0
    %v3034 = vadd.f32 0.0, %v3033
    %v3035 = vpop.f32.mrb[0].mxu0
    %v3036 = vpop.f32.mrb[0].mxu0
    %v3037 = vadd.f32 0.0, %v3036
    %v3038 = vpop.f32.mrb[0].mxu0
    %3039 = vdwg.mxu0
    %v3040 = vsel %vm560, %v2983, -inf
    %3041 = vmax.xlane.f32.xlu0 %v3040
    %v3042 = vpop.xlane.xlu0 %3041
    %v3043 = vsel %vm560, %v2986, -inf
    %3044 = vmax.xlane.f32.xlu0 %v3043
    %v3045 = vpop.xlane.xlu0 %3044
    %v3046 = vsel %vm560, %v3034, -inf
    %3047 = vmax.xlane.f32.xlu0 %v3046
    %v3048 = vpop.xlane.xlu0 %3047
    %v3049 = vsel %vm560, %v3037, -inf
    %3050 = vmax.xlane.f32.xlu0 %v3049
    %v3051 = vpop.xlane.xlu0 %3050
    %v3052 = vsub.f32 %v2983, %v3042
    %v3053 = vsub.f32 %v2986, %v3045
    %v3054 = vsub.f32 %v3034, %v3048
    %v3055 = vsub.f32 %v3037, %v3051
    %v3056 = vmul.f32 %v3052, 1.442695
    %v3057 = vpow.pop %v3056
    %v3058 = vmul.f32 %v3053, 1.442695
    %v3059 = vpow.pop %v3058
    %v3060 = vmul.f32 %v3054, 1.442695
    %v3061 = vpow.pop %v3060
    %v3062 = vmul.f32 %v3055, 1.442695
    %v3063 = vpow.pop %v3062
    %v3064 = vsel %vm560, %v3057, 0.0
    %3065 = vadd.xlane.f32.xlu0 %v3064
    %v3066 = vpop.xlane.xlu0 %3065
    %v3067 = vsel %vm560, %v3059, 0.0
    %3068 = vadd.xlane.f32.xlu0 %v3067
    %v3069 = vpop.xlane.xlu0 %3068
    %v3070 = vsel %vm560, %v3061, 0.0
    %3071 = vadd.xlane.f32.xlu0 %v3070
    %v3072 = vpop.xlane.xlu0 %3071
    %v3073 = vsel %vm560, %v3063, 0.0
    %3074 = vadd.xlane.f32.xlu0 %v3073
    %v3075 = vpop.xlane.xlu0 %3074
    %v3076 = vrcp.pop %v3066
    %v3077 = vrcp.pop %v3069
    %v3078 = vrcp.pop %v3072
    %v3079 = vrcp.pop %v3075
    %v3080 = vmul.f32 %v3057, %v3076
    %v3081 = vmul.f32 %v3059, %v3077
    %v3082 = vmul.f32 %v3061, %v3078
    %v3083 = vmul.f32 %v3063, %v3079
    %v3084 = vpack.c.bf16 %v3081, %v3080
    %v3085 = vpack.c.bf16 %v3083, %v3082
    %3086 = vrot.lane.b32.xlu0 %v2478, 96
    %v3087 = vpop.permute.xlu0 %3086
    %v3090 = vsel %vm560, %v3084, 0
    %3092 = vmatprep.subr.bf16.mxu0 0
    %3093 = vmatpush1.bf16.msra.mxu0 %v3087
    %3094 = vmatprep.subr.bf16.mxu0 0
    %3095 = vmatpush1.bf16.msra.mxu0 0
    %3096 = vmatprep.subr.bf16.mxu0 0
    %3097 = vmatpush1.bf16.msra.mxu0 0
    %3098 = vmatprep.subr.bf16.mxu0 0
    %3099 = vmatpush1.bf16.msra.mxu0 0
    %3100 = vmatprep.subr.bf16.mxu0 0
    %3101 = vmatpush1.bf16.msra.mxu0 0
    %3102 = vmatprep.subr.bf16.mxu0 0
    %3103 = vmatpush1.bf16.msra.mxu0 0
    %3104 = vmatprep.subr.bf16.mxu0 0
    %3105 = vmatpush1.bf16.msra.mxu0 0
    %3106 = vmatprep.subr.bf16.mxu0 0
    %3107 = vmatpush1.bf16.msra.mxu0 0
    %3108 = vmatprep.subr.bf16.mxu0 0
    %3109 = vmatpush1.bf16.msra.mxu0 0
    %3110 = vmatprep.subr.bf16.mxu0 0
    %3111 = vmatpush1.bf16.msra.mxu0 0
    %3112 = vmatprep.subr.bf16.mxu0 0
    %3113 = vmatpush1.bf16.msra.mxu0 0
    %3114 = vmatprep.subr.bf16.mxu0 0
    %3115 = vmatpush1.bf16.msra.mxu0 0
    %3116 = vmatprep.subr.bf16.mxu0 0
    %3117 = vmatpush1.bf16.msra.mxu0 0
    %3118 = vmatprep.subr.bf16.mxu0 0
    %3119 = vmatpush1.bf16.msra.mxu0 0
    %3120 = vmatprep.subr.bf16.mxu0 0
    %3121 = vmatpush1.bf16.msra.mxu0 0
    %3122 = vmatprep.subr.bf16.mxu0 0
    %3123 = vmatpush1.bf16.msra.mxu0 0
    %3124 = vmatprep.mubr.bf16.mxu0 0
    %3125 = vmatmul.mubr.bf16.gmra.mrb[0].mxu0 %v3090
    %v3126 = vpop.f32.mrb[0].mxu0
    %v3127 = vadd.f32 0.0, %v3126
    %v3128 = vpop.f32.mrb[0].mxu0
    %v3129 = vpop.f32.mrb[0].mxu0
    %v3130 = vadd.f32 0.0, %v3129
    %v3131 = vpop.f32.mrb[0].mxu0
    %3132 = vdwg.mxu0
    %3133 = vrot.lane.b32.xlu0 %v2479, 96
    %v3134 = vpop.permute.xlu0 %3133
    %v3137 = vsel %vm560, %v3085, 0
    %3139 = vmatprep.subr.bf16.mxu0 0
    %3140 = vmatpush1.bf16.msra.mxu0 %v3134
    %3141 = vmatprep.subr.bf16.mxu0 0
    %3142 = vmatpush1.bf16.msra.mxu0 0
    %3143 = vmatprep.subr.bf16.mxu0 0
    %3144 = vmatpush1.bf16.msra.mxu0 0
    %3145 = vmatprep.subr.bf16.mxu0 0
    %3146 = vmatpush1.bf16.msra.mxu0 0
    %3147 = vmatprep.subr.bf16.mxu0 0
    %3148 = vmatpush1.bf16.msra.mxu0 0
    %3149 = vmatprep.subr.bf16.mxu0 0
    %3150 = vmatpush1.bf16.msra.mxu0 0
    %3151 = vmatprep.subr.bf16.mxu0 0
    %3152 = vmatpush1.bf16.msra.mxu0 0
    %3153 = vmatprep.subr.bf16.mxu0 0
    %3154 = vmatpush1.bf16.msra.mxu0 0
    %3155 = vmatprep.subr.bf16.mxu0 0
    %3156 = vmatpush1.bf16.msra.mxu0 0
    %3157 = vmatprep.subr.bf16.mxu0 0
    %3158 = vmatpush1.bf16.msra.mxu0 0
    %3159 = vmatprep.subr.bf16.mxu0 0
    %3160 = vmatpush1.bf16.msra.mxu0 0
    %3161 = vmatprep.subr.bf16.mxu0 0
    %3162 = vmatpush1.bf16.msra.mxu0 0
    %3163 = vmatprep.subr.bf16.mxu0 0
    %3164 = vmatpush1.bf16.msra.mxu0 0
    %3165 = vmatprep.subr.bf16.mxu0 0
    %3166 = vmatpush1.bf16.msra.mxu0 0
    %3167 = vmatprep.subr.bf16.mxu0 0
    %3168 = vmatpush1.bf16.msra.mxu0 0
    %3169 = vmatprep.subr.bf16.mxu0 0
    %3170 = vmatpush1.bf16.msra.mxu0 0
    %3171 = vmatprep.mubr.bf16.mxu0 0
    %3172 = vmatmul.mubr.bf16.gmra.mrb[0].mxu0 %v3137
    %v3173 = vpop.f32.mrb[0].mxu0
    %v3174 = vadd.f32 0.0, %v3173
    %v3175 = vpop.f32.mrb[0].mxu0
    %v3176 = vpop.f32.mrb[0].mxu0
    %v3177 = vadd.f32 0.0, %v3176
    %v3178 = vpop.f32.mrb[0].mxu0
    %3179 = vdwg.mxu0
    %v3180 = vpack.c.bf16 %v3130, %v3127
    %v3181 = vpack.c.bf16 %v3177, %v3174
    %v3184 = vunpack.c.l.b16 %v2326
    %v3185 = vunpack.c.l.b16 %v2327
    %v3186 = vpack.c.b16 %v3185, %v3184
    %v3189 = vsel %vm560, %v3180, 0
    %v3192 = vsel %vm560, %v3181, 0
    %3194 = vmatprep.subr.bf16.mxu0 0
    %3195 = vmatpush1.bf16.msra.mxu0 %v3186
    %3196 = vmatprep.subr.bf16.mxu0 0
    %3197 = vmatpush1.bf16.msra.mxu0 0
    %3198 = vmatprep.subr.bf16.mxu0 0
    %3199 = vmatpush1.bf16.msra.mxu0 0
    %3200 = vmatprep.subr.bf16.mxu0 0
    %3201 = vmatpush1.bf16.msra.mxu0 0
    %3202 = vmatprep.subr.bf16.mxu0 0
    %3203 = vmatpush1.bf16.msra.mxu0 0
    %3204 = vmatprep.subr.bf16.mxu0 0
    %3205 = vmatpush1.bf16.msra.mxu0 0
    %3206 = vmatprep.subr.bf16.mxu0 0
    %3207 = vmatpush1.bf16.msra.mxu0 0
    %3208 = vmatprep.subr.bf16.mxu0 0
    %3209 = vmatpush1.bf16.msra.mxu0 0
    %3210 = vmatprep.subr.bf16.mxu0 0
    %3211 = vmatpush1.bf16.msra.mxu0 0
    %3212 = vmatprep.subr.bf16.mxu0 0
    %3213 = vmatpush1.bf16.msra.mxu0 0
    %3214 = vmatprep.subr.bf16.mxu0 0
    %3215 = vmatpush1.bf16.msra.mxu0 0
    %3216 = vmatprep.subr.bf16.mxu0 0
    %3217 = vmatpush1.bf16.msra.mxu0 0
    %3218 = vmatprep.subr.bf16.mxu0 0
    %3219 = vmatpush1.bf16.msra.mxu0 0
    %3220 = vmatprep.subr.bf16.mxu0 0
    %3221 = vmatpush1.bf16.msra.mxu0 0
    %3222 = vmatprep.subr.bf16.mxu0 0
    %3223 = vmatpush1.bf16.msra.mxu0 0
    %3224 = vmatprep.subr.bf16.mxu0 0
    %3225 = vmatpush1.bf16.msra.mxu0 0
    %3226 = vmatprep.mubr.bf16.mxu0 0
    %3227 = vmatmul.mubr.bf16.gmra.mrb[0].mxu0 %v3189
    %v3228 = vpop.f32.mrb[0].mxu0
    %v3229 = vadd.f32 0.0, %v3228
    %v3230 = vpop.f32.mrb[0].mxu0
    %v3231 = vpop.f32.mrb[0].mxu0
    %v3232 = vadd.f32 0.0, %v3231
    %v3233 = vpop.f32.mrb[0].mxu0
    %3234 = vmatprep.mubr.bf16.mxu0 0
    %3235 = vmatmul.mubr.bf16.gmra.mrb[0].mxu0 %v3192
    %v3236 = vpop.f32.mrb[0].mxu0
    %v3237 = vadd.f32 0.0, %v3236
    %v3238 = vpop.f32.mrb[0].mxu0
    %v3239 = vpop.f32.mrb[0].mxu0
    %v3240 = vadd.f32 0.0, %v3239
    %v3241 = vpop.f32.mrb[0].mxu0
    %3242 = vdwg.mxu0
    %v3243 = vadd.f32 %v2924, %v3229
    %v3244 = vadd.f32 %v2927, %v3232
    %v3245 = vadd.f32 %v2932, %v3237
    %v3246 = vadd.f32 %v2935, %v3240
    %3247 = vrot.lane.b32.xlu0 %v2330, 80
    %v3248 = vpop.permute.xlu0 %3247
    %3249 = vrot.lane.b32.xlu0 %v2330, 16
    %v3250 = vpop.permute.xlu0 %3249
    %v3252 = vsel %vm560, %v3248, 0
    %v3255 = vsel %vm560, %v3250, 0
    %3257 = vmatprep.subr.bf16.mxu0 0
    %3258 = vmatpush1.bf16.xpose.msra.mxu0 %v3255
    %3259 = vmatprep.subr.bf16.mxu0 0
    %3260 = vmatpush1.bf16.xpose.msra.mxu0 0
    %3261 = vmatprep.subr.bf16.mxu0 0
    %3262 = vmatpush1.bf16.xpose.msra.mxu0 0
    %3263 = vmatprep.subr.bf16.mxu0 0
    %3264 = vmatpush1.bf16.xpose.msra.mxu0 0
    %3265 = vmatprep.subr.bf16.mxu0 0
    %3266 = vmatpush1.bf16.xpose.msra.mxu0 0
    %3267 = vmatprep.subr.bf16.mxu0 0
    %3268 = vmatpush1.bf16.xpose.msra.mxu0 0
    %3269 = vmatprep.subr.bf16.mxu0 0
    %3270 = vmatpush1.bf16.xpose.msra.mxu0 0
    %3271 = vmatprep.subr.bf16.mxu0 0
    %3272 = vmatpush1.bf16.xpose.msra.mxu0 0
    %3273 = vmatprep.subr.bf16.mxu0 0
    %3274 = vmatpush1.bf16.xpose.msra.mxu0 0
    %3275 = vmatprep.subr.bf16.mxu0 0
    %3276 = vmatpush1.bf16.xpose.msra.mxu0 0
    %3277 = vmatprep.subr.bf16.mxu0 0
    %3278 = vmatpush1.bf16.xpose.msra.mxu0 0
    %3279 = vmatprep.subr.bf16.mxu0 0
    %3280 = vmatpush1.bf16.xpose.msra.mxu0 0
    %3281 = vmatprep.subr.bf16.mxu0 0
    %3282 = vmatpush1.bf16.xpose.msra.mxu0 0
    %3283 = vmatprep.subr.bf16.mxu0 0
    %3284 = vmatpush1.bf16.xpose.msra.mxu0 0
    %3285 = vmatprep.subr.bf16.mxu0 0
    %3286 = vmatpush1.bf16.xpose.msra.mxu0 0
    %3287 = vmatprep.subr.bf16.mxu0 0
    %3288 = vmatpush1.bf16.xpose.msra.mxu0 0
    %3289 = vmatprep.mubr.bf16.mxu0 0
    %3290 = vmatmul.mubr.bf16.gmra.mrb[0].mxu0 %v3252
    %v3291 = vpop.f32.mrb[0].mxu0
    %v3292 = vadd.f32 0.0, %v3291
    %v3293 = vpop.f32.mrb[0].mxu0
    %v3294 = vpop.f32.mrb[0].mxu0
    %v3295 = vadd.f32 0.0, %v3294
    %v3296 = vpop.f32.mrb[0].mxu0
    %3297 = vdwg.mxu0
    %3298 = vrot.lane.b32.xlu0 %v2331, 80
    %v3299 = vpop.permute.xlu0 %3298
    %3300 = vrot.lane.b32.xlu0 %v2331, 16
    %v3301 = vpop.permute.xlu0 %3300
    %v3303 = vsel %vm560, %v3299, 0
    %v3306 = vsel %vm560, %v3301, 0
    %3308 = vmatprep.subr.bf16.mxu0 0
    %3309 = vmatpush1.bf16.xpose.msra.mxu0 %v3306
    %3310 = vmatprep.subr.bf16.mxu0 0
    %3311 = vmatpush1.bf16.xpose.msra.mxu0 0
    %3312 = vmatprep.subr.bf16.mxu0 0
    %3313 = vmatpush1.bf16.xpose.msra.mxu0 0
    %3314 = vmatprep.subr.bf16.mxu0 0
    %3315 = vmatpush1.bf16.xpose.msra.mxu0 0
    %3316 = vmatprep.subr.bf16.mxu0 0
    %3317 = vmatpush1.bf16.xpose.msra.mxu0 0
    %3318 = vmatprep.subr.bf16.mxu0 0
    %3319 = vmatpush1.bf16.xpose.msra.mxu0 0
    %3320 = vmatprep.subr.bf16.mxu0 0
    %3321 = vmatpush1.bf16.xpose.msra.mxu0 0
    %3322 = vmatprep.subr.bf16.mxu0 0
    %3323 = vmatpush1.bf16.xpose.msra.mxu0 0
    %3324 = vmatprep.subr.bf16.mxu0 0
    %3325 = vmatpush1.bf16.xpose.msra.mxu0 0
    %3326 = vmatprep.subr.bf16.mxu0 0
    %3327 = vmatpush1.bf16.xpose.msra.mxu0 0
    %3328 = vmatprep.subr.bf16.mxu0 0
    %3329 = vmatpush1.bf16.xpose.msra.mxu0 0
    %3330 = vmatprep.subr.bf16.mxu0 0
    %3331 = vmatpush1.bf16.xpose.msra.mxu0 0
    %3332 = vmatprep.subr.bf16.mxu0 0
    %3333 = vmatpush1.bf16.xpose.msra.mxu0 0
    %3334 = vmatprep.subr.bf16.mxu0 0
    %3335 = vmatpush1.bf16.xpose.msra.mxu0 0
    %3336 = vmatprep.subr.bf16.mxu0 0
    %3337 = vmatpush1.bf16.xpose.msra.mxu0 0
    %3338 = vmatprep.subr.bf16.mxu0 0
    %3339 = vmatpush1.bf16.xpose.msra.mxu0 0
    %3340 = vmatprep.mubr.bf16.mxu0 0
    %3341 = vmatmul.mubr.bf16.gmra.mrb[0].mxu0 %v3303
    %v3342 = vpop.f32.mrb[0].mxu0
    %v3343 = vadd.f32 0.0, %v3342
    %v3344 = vpop.f32.mrb[0].mxu0
    %v3345 = vpop.f32.mrb[0].mxu0
    %v3346 = vadd.f32 0.0, %v3345
    %v3347 = vpop.f32.mrb[0].mxu0
    %3348 = vdwg.mxu0
    %v3349 = vsel %vm560, %v3292, -inf
    %3350 = vmax.xlane.f32.xlu0 %v3349
    %v3351 = vpop.xlane.xlu0 %3350
    %v3352 = vsel %vm560, %v3295, -inf
    %3353 = vmax.xlane.f32.xlu0 %v3352
    %v3354 = vpop.xlane.xlu0 %3353
    %v3355 = vsel %vm560, %v3343, -inf
    %3356 = vmax.xlane.f32.xlu0 %v3355
    %v3357 = vpop.xlane.xlu0 %3356
    %v3358 = vsel %vm560, %v3346, -inf
    %3359 = vmax.xlane.f32.xlu0 %v3358
    %v3360 = vpop.xlane.xlu0 %3359
    %v3361 = vsub.f32 %v3292, %v3351
    %v3362 = vsub.f32 %v3295, %v3354
    %v3363 = vsub.f32 %v3343, %v3357
    %v3364 = vsub.f32 %v3346, %v3360
    %v3365 = vmul.f32 %v3361, 1.442695
    %v3366 = vpow.pop %v3365
    %v3367 = vmul.f32 %v3362, 1.442695
    %v3368 = vpow.pop %v3367
    %v3369 = vmul.f32 %v3363, 1.442695
    %v3370 = vpow.pop %v3369
    %v3371 = vmul.f32 %v3364, 1.442695
    %v3372 = vpow.pop %v3371
    %v3373 = vsel %vm560, %v3366, 0.0
    %3374 = vadd.xlane.f32.xlu0 %v3373
    %v3375 = vpop.xlane.xlu0 %3374
    %v3376 = vsel %vm560, %v3368, 0.0
    %3377 = vadd.xlane.f32.xlu0 %v3376
    %v3378 = vpop.xlane.xlu0 %3377
    %v3379 = vsel %vm560, %v3370, 0.0
    %3380 = vadd.xlane.f32.xlu0 %v3379
    %v3381 = vpop.xlane.xlu0 %3380
    %v3382 = vsel %vm560, %v3372, 0.0
    %3383 = vadd.xlane.f32.xlu0 %v3382
    %v3384 = vpop.xlane.xlu0 %3383
    %v3385 = vrcp.pop %v3375
    %v3386 = vrcp.pop %v3378
    %v3387 = vrcp.pop %v3381
    %v3388 = vrcp.pop %v3384
    %v3389 = vmul.f32 %v3366, %v3385
    %v3390 = vmul.f32 %v3368, %v3386
    %v3391 = vmul.f32 %v3370, %v3387
    %v3392 = vmul.f32 %v3372, %v3388
    %v3393 = vpack.c.bf16 %v3390, %v3389
    %v3394 = vpack.c.bf16 %v3392, %v3391
    %3395 = vrot.lane.b32.xlu0 %v2478, 80
    %v3396 = vpop.permute.xlu0 %3395
    %v3399 = vsel %vm560, %v3393, 0
    %3401 = vmatprep.subr.bf16.mxu0 0
    %3402 = vmatpush1.bf16.msra.mxu0 %v3396
    %3403 = vmatprep.subr.bf16.mxu0 0
    %3404 = vmatpush1.bf16.msra.mxu0 0
    %3405 = vmatprep.subr.bf16.mxu0 0
    %3406 = vmatpush1.bf16.msra.mxu0 0
    %3407 = vmatprep.subr.bf16.mxu0 0
    %3408 = vmatpush1.bf16.msra.mxu0 0
    %3409 = vmatprep.subr.bf16.mxu0 0
    %3410 = vmatpush1.bf16.msra.mxu0 0
    %3411 = vmatprep.subr.bf16.mxu0 0
    %3412 = vmatpush1.bf16.msra.mxu0 0
    %3413 = vmatprep.subr.bf16.mxu0 0
    %3414 = vmatpush1.bf16.msra.mxu0 0
    %3415 = vmatprep.subr.bf16.mxu0 0
    %3416 = vmatpush1.bf16.msra.mxu0 0
    %3417 = vmatprep.subr.bf16.mxu0 0
    %3418 = vmatpush1.bf16.msra.mxu0 0
    %3419 = vmatprep.subr.bf16.mxu0 0
    %3420 = vmatpush1.bf16.msra.mxu0 0
    %3421 = vmatprep.subr.bf16.mxu0 0
    %3422 = vmatpush1.bf16.msra.mxu0 0
    %3423 = vmatprep.subr.bf16.mxu0 0
    %3424 = vmatpush1.bf16.msra.mxu0 0
    %3425 = vmatprep.subr.bf16.mxu0 0
    %3426 = vmatpush1.bf16.msra.mxu0 0
    %3427 = vmatprep.subr.bf16.mxu0 0
    %3428 = vmatpush1.bf16.msra.mxu0 0
    %3429 = vmatprep.subr.bf16.mxu0 0
    %3430 = vmatpush1.bf16.msra.mxu0 0
    %3431 = vmatprep.subr.bf16.mxu0 0
    %3432 = vmatpush1.bf16.msra.mxu0 0
    %3433 = vmatprep.mubr.bf16.mxu0 0
    %3434 = vmatmul.mubr.bf16.gmra.mrb[0].mxu0 %v3399
    %v3435 = vpop.f32.mrb[0].mxu0
    %v3436 = vadd.f32 0.0, %v3435
    %v3437 = vpop.f32.mrb[0].mxu0
    %v3438 = vpop.f32.mrb[0].mxu0
    %v3439 = vadd.f32 0.0, %v3438
    %v3440 = vpop.f32.mrb[0].mxu0
    %3441 = vdwg.mxu0
    %3442 = vrot.lane.b32.xlu0 %v2479, 80
    %v3443 = vpop.permute.xlu0 %3442
    %v3446 = vsel %vm560, %v3394, 0
    %3448 = vmatprep.subr.bf16.mxu0 0
    %3449 = vmatpush1.bf16.msra.mxu0 %v3443
    %3450 = vmatprep.subr.bf16.mxu0 0
    %3451 = vmatpush1.bf16.msra.mxu0 0
    %3452 = vmatprep.subr.bf16.mxu0 0
    %3453 = vmatpush1.bf16.msra.mxu0 0
    %3454 = vmatprep.subr.bf16.mxu0 0
    %3455 = vmatpush1.bf16.msra.mxu0 0
    %3456 = vmatprep.subr.bf16.mxu0 0
    %3457 = vmatpush1.bf16.msra.mxu0 0
    %3458 = vmatprep.subr.bf16.mxu0 0
    %3459 = vmatpush1.bf16.msra.mxu0 0
    %3460 = vmatprep.subr.bf16.mxu0 0
    %3461 = vmatpush1.bf16.msra.mxu0 0
    %3462 = vmatprep.subr.bf16.mxu0 0
    %3463 = vmatpush1.bf16.msra.mxu0 0
    %3464 = vmatprep.subr.bf16.mxu0 0
    %3465 = vmatpush1.bf16.msra.mxu0 0
    %3466 = vmatprep.subr.bf16.mxu0 0
    %3467 = vmatpush1.bf16.msra.mxu0 0
    %3468 = vmatprep.subr.bf16.mxu0 0
    %3469 = vmatpush1.bf16.msra.mxu0 0
    %3470 = vmatprep.subr.bf16.mxu0 0
    %3471 = vmatpush1.bf16.msra.mxu0 0
    %3472 = vmatprep.subr.bf16.mxu0 0
    %3473 = vmatpush1.bf16.msra.mxu0 0
    %3474 = vmatprep.subr.bf16.mxu0 0
    %3475 = vmatpush1.bf16.msra.mxu0 0
    %3476 = vmatprep.subr.bf16.mxu0 0
    %3477 = vmatpush1.bf16.msra.mxu0 0
    %3478 = vmatprep.subr.bf16.mxu0 0
    %3479 = vmatpush1.bf16.msra.mxu0 0
    %3480 = vmatprep.mubr.bf16.mxu0 0
    %3481 = vmatmul.mubr.bf16.gmra.mrb[0].mxu0 %v3446
    %v3482 = vpop.f32.mrb[0].mxu0
    %v3483 = vadd.f32 0.0, %v3482
    %v3484 = vpop.f32.mrb[0].mxu0
    %v3485 = vpop.f32.mrb[0].mxu0
    %v3486 = vadd.f32 0.0, %v3485
    %v3487 = vpop.f32.mrb[0].mxu0
    %3488 = vdwg.mxu0
    %v3489 = vpack.c.bf16 %v3439, %v3436
    %v3490 = vpack.c.bf16 %v3486, %v3483
    %v3493 = vunpack.c.l.b16 %v2328
    %v3494 = vunpack.c.l.b16 %v2329
    %v3495 = vpack.c.b16 %v3494, %v3493
    %v3498 = vsel %vm560, %v3489, 0
    %v3501 = vsel %vm560, %v3490, 0
    %3503 = vmatprep.subr.bf16.mxu0 0
    %3504 = vmatpush1.bf16.msra.mxu0 %v3495
    %3505 = vmatprep.subr.bf16.mxu0 0
    %3506 = vmatpush1.bf16.msra.mxu0 0
    %3507 = vmatprep.subr.bf16.mxu0 0
    %3508 = vmatpush1.bf16.msra.mxu0 0
    %3509 = vmatprep.subr.bf16.mxu0 0
    %3510 = vmatpush1.bf16.msra.mxu0 0
    %3511 = vmatprep.subr.bf16.mxu0 0
    %3512 = vmatpush1.bf16.msra.mxu0 0
    %3513 = vmatprep.subr.bf16.mxu0 0
    %3514 = vmatpush1.bf16.msra.mxu0 0
    %3515 = vmatprep.subr.bf16.mxu0 0
    %3516 = vmatpush1.bf16.msra.mxu0 0
    %3517 = vmatprep.subr.bf16.mxu0 0
    %3518 = vmatpush1.bf16.msra.mxu0 0
    %3519 = vmatprep.subr.bf16.mxu0 0
    %3520 = vmatpush1.bf16.msra.mxu0 0
    %3521 = vmatprep.subr.bf16.mxu0 0
    %3522 = vmatpush1.bf16.msra.mxu0 0
    %3523 = vmatprep.subr.bf16.mxu0 0
    %3524 = vmatpush1.bf16.msra.mxu0 0
    %3525 = vmatprep.subr.bf16.mxu0 0
    %3526 = vmatpush1.bf16.msra.mxu0 0
    %3527 = vmatprep.subr.bf16.mxu0 0
    %3528 = vmatpush1.bf16.msra.mxu0 0
    %3529 = vmatprep.subr.bf16.mxu0 0
    %3530 = vmatpush1.bf16.msra.mxu0 0
    %3531 = vmatprep.subr.bf16.mxu0 0
    %3532 = vmatpush1.bf16.msra.mxu0 0
    %3533 = vmatprep.subr.bf16.mxu0 0
    %3534 = vmatpush1.bf16.msra.mxu0 0
    %3535 = vmatprep.mubr.bf16.mxu0 0
    %3536 = vmatmul.mubr.bf16.gmra.mrb[0].mxu0 %v3498
    %v3537 = vpop.f32.mrb[0].mxu0
    %v3538 = vadd.f32 0.0, %v3537
    %v3539 = vpop.f32.mrb[0].mxu0
    %v3540 = vpop.f32.mrb[0].mxu0
    %v3541 = vadd.f32 0.0, %v3540
    %v3542 = vpop.f32.mrb[0].mxu0
    %3543 = vmatprep.mubr.bf16.mxu0 0
    %3544 = vmatmul.mubr.bf16.gmra.mrb[0].mxu0 %v3501
    %v3545 = vpop.f32.mrb[0].mxu0
    %v3546 = vadd.f32 0.0, %v3545
    %v3547 = vpop.f32.mrb[0].mxu0
    %v3548 = vpop.f32.mrb[0].mxu0
    %v3549 = vadd.f32 0.0, %v3548
    %v3550 = vpop.f32.mrb[0].mxu0
    %3551 = vdwg.mxu0
    %v3552 = vadd.f32 %v3243, %v3538
    %v3553 = vadd.f32 %v3244, %v3541
    %v3554 = vadd.f32 %v3245, %v3546
    %v3555 = vadd.f32 %v3246, %v3549
    %v3556 = vadd.f32 %v2124, %v3552
    %v3557 = vadd.f32 %v2125, %v3553
    %v3558 = vadd.f32 %v2126, %v3554
    %v3559 = vadd.f32 %v2127, %v3555
    %s3560 = scalar_lea.vmem %s7, 1
    %v3561 = vld [vmem:[%s3560] sm:$0x1]
    %v3563 = vlaneseq
    %v3564 = vshrl.u32 %v3563, 7
    %v3565 = vsub.s32 0, %v3564
    %v3566 = vrot.slane %v3561, %v3565
    %v3568 = vadd.f32 %v3556, %v3566
    %v3569 = vadd.f32 %v3557, %v3566
    %v3570 = vadd.f32 %v3558, %v3566
    %v3571 = vadd.f32 %v3559, %v3566
    %s3572 = scalar_lea.vmem [#allocation7], 2
    %v3573 = vld [vmem:[%s3572] sm:$0x3]
    %v3574 = vsel %vm294, %v3568, 0.0
    %3575 = vadd.xlane.f32.xlu0 %v3574
    %v3576 = vpop.xlane.xlu0 %3575
    %v3577 = vsel %vm294, %v3569, 0.0
    %3578 = vadd.xlane.f32.xlu0 %v3577
    %v3579 = vpop.xlane.xlu0 %3578
    %v3580 = vsel %vm294, %v3570, 0.0
    %3581 = vadd.xlane.f32.xlu0 %v3580
    %v3582 = vpop.xlane.xlu0 %3581
    %v3583 = vsel %vm294, %v3571, 0.0
    %3584 = vadd.xlane.f32.xlu0 %v3583
    %v3585 = vpop.xlane.xlu0 %3584
    %v3586 = vmul.f32 %v3576, %v369
    %v3587 = vmul.f32 %v3579, %v369
    %v3588 = vmul.f32 %v3582, %v369
    %v3589 = vmul.f32 %v3585, %v369
    %v3590 = vsub.f32 %v3568, %v3586
    %v3591 = vsub.f32 %v3569, %v3587
    %v3592 = vsub.f32 %v3570, %v3588
    %v3593 = vsub.f32 %v3571, %v3589
    %v3594 = vmul.f32 %v3590, %v3590
    %v3595 = vmul.f32 %v3591, %v3591
    %v3596 = vmul.f32 %v3592, %v3592
    %v3597 = vmul.f32 %v3593, %v3593
    %v3598 = vsel %vm294, %v3594, 0.0
    %3599 = vadd.xlane.f32.xlu0 %v3598
    %v3600 = vpop.xlane.xlu0 %3599
    %v3601 = vsel %vm294, %v3595, 0.0
    %3602 = vadd.xlane.f32.xlu0 %v3601
    %v3603 = vpop.xlane.xlu0 %3602
    %v3604 = vsel %vm294, %v3596, 0.0
    %3605 = vadd.xlane.f32.xlu0 %v3604
    %v3606 = vpop.xlane.xlu0 %3605
    %v3607 = vsel %vm294, %v3597, 0.0
    %3608 = vadd.xlane.f32.xlu0 %v3607
    %v3609 = vpop.xlane.xlu0 %3608
    %v3610 = vmul.f32 %v3600, %v369
    %v3611 = vmul.f32 %v3603, %v369
    %v3612 = vmul.f32 %v3606, %v369
    %v3613 = vmul.f32 %v3609, %v369
    %v3614 = vadd.f32 %v3610, 1e-06
    %v3615 = vadd.f32 %v3611, 1e-06
    %v3616 = vadd.f32 %v3612, 1e-06
    %v3617 = vadd.f32 %v3613, 1e-06
    %v3618 = vrsqrt.pop %v3614
    %v3619 = vrsqrt.pop %v3615
    %v3620 = vrsqrt.pop %v3616
    %v3621 = vrsqrt.pop %v3617
    %v3622 = vmul.f32 %v3590, %v3618
    %v3623 = vmul.f32 %v3591, %v3619
    %v3624 = vmul.f32 %v3592, %v3620
    %v3625 = vmul.f32 %v3593, %v3621
    %v3626 = vlaneseq
    %v3627 = vshrl.u32 %v3626, 7
    %v3628 = vsub.s32 0, %v3627
    %v3629 = vrot.slane %v3573, %v3628
    %v3630 = vmul.f32 %v3622, %v3629
    %v3631 = vmul.f32 %v3623, %v3629
    %v3632 = vmul.f32 %v3624, %v3629
    %v3633 = vmul.f32 %v3625, %v3629
    %v3634 = vlaneseq
    %v3635 = vshrl.u32 %v3634, 7
    %v3636 = vsub.s32 1, %v3635
    %v3637 = vrot.slane %v3573, %v3636
    %v3638 = vadd.f32 %v3630, %v3637
    %v3639 = vadd.f32 %v3631, %v3637
    %v3640 = vadd.f32 %v3632, %v3637
    %v3641 = vadd.f32 %v3633, %v3637
    %s3642 = scalar_lea.vmem [#allocation9], 32
    %v3643 = vld [vmem:[%s3642] sm:$0xf]
    %v3644 = vld [vmem:[%s3642 + $0x4] sm:$0xf]
    %v3645 = vld [vmem:[%s3642 + $0x8] sm:$0xf]
    %v3646 = vld [vmem:[%s3642 + $0xc] sm:$0xf]
    %v3647 = vld [vmem:[%s3642 + $0x10] sm:$0xf]
    %v3648 = vld [vmem:[%s3642 + $0x14] sm:$0xf]
    %v3649 = vld [vmem:[%s3642 + $0x18] sm:$0xf]
    %v3650 = vld [vmem:[%s3642 + $0x1c] sm:$0xf]
    %v3651 = vpack.c.bf16 %v3639, %v3638
    %v3652 = vpack.c.bf16 %v3641, %v3640
    %s3653 = scalar_lea.vmem [#allocation10], 1
    %v3654 = vld [vmem:[%s3653] sm:$0x1]
    %v3656 = vlaneseq
    %v3657 = vshrl.u32 %v3656, 7
    %v3658 = vsub.s32 0, %v3657
    %v3659 = vrot.slane %v3654, %v3658
    %v3669 = vunpack.c.l.b16 %v3643
    %v3670 = vunpack.c.l.b16 %v3644
    %v3671 = vunpack.c.l.b16 %v3645
    %v3672 = vunpack.c.l.b16 %v3646
    %v3673 = vunpack.c.l.b16 %v3647
    %v3674 = vunpack.c.l.b16 %v3648
    %v3675 = vunpack.c.l.b16 %v3649
    %v3676 = vunpack.c.l.b16 %v3650
    %v3677 = vpack.c.b16 %v3670, %v3669
    %v3678 = vpack.c.b16 %v3672, %v3671
    %v3679 = vpack.c.b16 %v3674, %v3673
    %v3680 = vpack.c.b16 %v3676, %v3675
    %v3686 = vsel %vm294, %v3651, 0
    %v3689 = vsel %vm294, %v3652, 0
    %3691 = vmatprep.subr.bf16.mxu0 0
    %3692 = vmatpush1.bf16.msra.mxu0 %v3677
    %3693 = vmatprep.subr.bf16.mxu0 0
    %3694 = vmatpush1.bf16.msra.mxu0 %v3678
    %3695 = vmatprep.subr.bf16.mxu0 0
    %3696 = vmatpush1.bf16.msra.mxu0 %v3679
    %3697 = vmatprep.subr.bf16.mxu0 0
    %3698 = vmatpush1.bf16.msra.mxu0 %v3680
    %3699 = vmatprep.subr.bf16.mxu0 0
    %3700 = vmatpush1.bf16.msra.mxu0 0
    %3701 = vmatprep.subr.bf16.mxu0 0
    %3702 = vmatpush1.bf16.msra.mxu0 0
    %3703 = vmatprep.subr.bf16.mxu0 0
    %3704 = vmatpush1.bf16.msra.mxu0 0
    %3705 = vmatprep.subr.bf16.mxu0 0
    %3706 = vmatpush1.bf16.msra.mxu0 0
    %3707 = vmatprep.subr.bf16.mxu0 0
    %3708 = vmatpush1.bf16.msra.mxu0 0
    %3709 = vmatprep.subr.bf16.mxu0 0
    %3710 = vmatpush1.bf16.msra.mxu0 0
    %3711 = vmatprep.subr.bf16.mxu0 0
    %3712 = vmatpush1.bf16.msra.mxu0 0
    %3713 = vmatprep.subr.bf16.mxu0 0
    %3714 = vmatpush1.bf16.msra.mxu0 0
    %3715 = vmatprep.subr.bf16.mxu0 0
    %3716 = vmatpush1.bf16.msra.mxu0 0
    %3717 = vmatprep.subr.bf16.mxu0 0
    %3718 = vmatpush1.bf16.msra.mxu0 0
    %3719 = vmatprep.subr.bf16.mxu0 0
    %3720 = vmatpush1.bf16.msra.mxu0 0
    %3721 = vmatprep.subr.bf16.mxu0 0
    %3722 = vmatpush1.bf16.msra.mxu0 0
    %3723 = vmatprep.mubr.bf16.mxu0 0
    %3724 = vmatmul.mubr.bf16.gmra.mrb[0].mxu0 %v3686
    %v3725 = vpop.f32.mrb[0].mxu0
    %v3726 = vadd.f32 %v3659, %v3725
    %v3727 = vpop.f32.mrb[0].mxu0
    %v3728 = vpop.f32.mrb[0].mxu0
    %v3729 = vadd.f32 %v3659, %v3728
    %v3730 = vpop.f32.mrb[0].mxu0
    %3731 = vmatprep.mubr.bf16.mxu0 0
    %3732 = vmatmul.mubr.bf16.gmra.mrb[0].mxu0 %v3689
    %v3733 = vpop.f32.mrb[0].mxu0
    %v3734 = vadd.f32 %v3659, %v3733
    %v3735 = vpop.f32.mrb[0].mxu0
    %v3736 = vpop.f32.mrb[0].mxu0
    %v3737 = vadd.f32 %v3659, %v3736
    %v3738 = vpop.f32.mrb[0].mxu0
    %3739 = vdwg.mxu0
    %v3740 = vmul.f32 %v3726, %v3726
    %v3741 = vmul.f32 %v3729, %v3729
    %v3742 = vmul.f32 %v3734, %v3734
    %v3743 = vmul.f32 %v3737, %v3737
    %v3744 = vmul.f32 %v3726, %v3740
    %v3745 = vmul.f32 %v3729, %v3741
    %v3746 = vmul.f32 %v3734, %v3742
    %v3747 = vmul.f32 %v3737, %v3743
    %v3748 = vmul.f32 %v3744, 0.044715
    %v3749 = vmul.f32 %v3745, 0.044715
    %v3750 = vmul.f32 %v3746, 0.044715
    %v3751 = vmul.f32 %v3747, 0.044715
    %v3752 = vadd.f32 %v3726, %v3748
    %v3753 = vadd.f32 %v3729, %v3749
    %v3754 = vadd.f32 %v3734, %v3750
    %v3755 = vadd.f32 %v3737, %v3751
    %v3756 = vmul.f32 %v3752, 0.7978846
    %v3757 = vmul.f32 %v3753, 0.7978846
    %v3758 = vmul.f32 %v3754, 0.7978846
    %v3759 = vmul.f32 %v3755, 0.7978846
    %v3760 = vtanh.pop %v3756
    %v3761 = vtanh.pop %v3757
    %v3762 = vtanh.pop %v3758
    %v3763 = vtanh.pop %v3759
    %v3764 = vadd.f32 %v3760, 1.0
    %v3765 = vadd.f32 %v3761, 1.0
    %v3766 = vadd.f32 %v3762, 1.0
    %v3767 = vadd.f32 %v3763, 1.0
    %v3768 = vmul.f32 %v3764, 0.5
    %v3769 = vmul.f32 %v3765, 0.5
    %v3770 = vmul.f32 %v3766, 0.5
    %v3771 = vmul.f32 %v3767, 0.5
    %v3772 = vmul.f32 %v3726, %v3768
    %v3773 = vmul.f32 %v3729, %v3769
    %v3774 = vmul.f32 %v3734, %v3770
    %v3775 = vmul.f32 %v3737, %v3771
    %s3776 = scalar_lea.vmem %s11, 64
    %v3777 = vld [vmem:[%s3776] sm:$0xf]
    %v3778 = vld [vmem:[%s3776 + $0x4] sm:$0xf]
    %v3779 = vld [vmem:[%s3776 + $0x8] sm:$0xf]
    %v3780 = vld [vmem:[%s3776 + $0xc] sm:$0xf]
    %v3781 = vld [vmem:[%s3776 + $0x10] sm:$0xf]
    %v3782 = vld [vmem:[%s3776 + $0x14] sm:$0xf]
    %v3783 = vld [vmem:[%s3776 + $0x18] sm:$0xf]
    %v3784 = vld [vmem:[%s3776 + $0x1c] sm:$0xf]
    %v3785 = vld [vmem:[%s3776 + $0x20] sm:$0xf]
    %v3786 = vld [vmem:[%s3776 + $0x24] sm:$0xf]
    %v3787 = vld [vmem:[%s3776 + $0x28] sm:$0xf]
    %v3788 = vld [vmem:[%s3776 + $0x2c] sm:$0xf]
    %v3789 = vld [vmem:[%s3776 + $0x30] sm:$0xf]
    %v3790 = vld [vmem:[%s3776 + $0x34] sm:$0xf]
    %v3791 = vld [vmem:[%s3776 + $0x38] sm:$0xf]
    %v3792 = vld [vmem:[%s3776 + $0x3c] sm:$0xf]
    %v3793 = vpack.c.bf16 %v3773, %v3772
    %v3794 = vpack.c.bf16 %v3775, %v3774
    %v3811 = vunpack.c.l.b16 %v3777
    %v3812 = vunpack.c.l.b16 %v3778
    %v3813 = vunpack.c.l.b16 %v3779
    %v3814 = vunpack.c.l.b16 %v3780
    %v3815 = vunpack.c.l.b16 %v3781
    %v3816 = vunpack.c.l.b16 %v3782
    %v3817 = vunpack.c.l.b16 %v3783
    %v3818 = vunpack.c.l.b16 %v3784
    %v3819 = vunpack.c.l.b16 %v3785
    %v3820 = vunpack.c.l.b16 %v3786
    %v3821 = vunpack.c.l.b16 %v3787
    %v3822 = vunpack.c.l.b16 %v3788
    %v3823 = vunpack.c.l.b16 %v3789
    %v3824 = vunpack.c.l.b16 %v3790
    %v3825 = vunpack.c.l.b16 %v3791
    %v3826 = vunpack.c.l.b16 %v3792
    %v3827 = vpack.c.b16 %v3812, %v3811
    %v3828 = vpack.c.b16 %v3814, %v3813
    %v3829 = vpack.c.b16 %v3816, %v3815
    %v3830 = vpack.c.b16 %v3818, %v3817
    %v3831 = vpack.c.b16 %v3820, %v3819
    %v3832 = vpack.c.b16 %v3822, %v3821
    %v3833 = vpack.c.b16 %v3824, %v3823
    %v3834 = vpack.c.b16 %v3826, %v3825
    %3843 = vmatprep.subr.bf16.mxu0 0
    %3844 = vmatpush1.bf16.msra.mxu0 %v3827
    %3845 = vmatprep.subr.bf16.mxu0 0
    %3846 = vmatpush1.bf16.msra.mxu0 %v3828
    %3847 = vmatprep.subr.bf16.mxu0 0
    %3848 = vmatpush1.bf16.msra.mxu0 %v3829
    %3849 = vmatprep.subr.bf16.mxu0 0
    %3850 = vmatpush1.bf16.msra.mxu0 %v3830
    %3851 = vmatprep.subr.bf16.mxu0 0
    %3852 = vmatpush1.bf16.msra.mxu0 %v3831
    %3853 = vmatprep.subr.bf16.mxu0 0
    %3854 = vmatpush1.bf16.msra.mxu0 %v3832
    %3855 = vmatprep.subr.bf16.mxu0 0
    %3856 = vmatpush1.bf16.msra.mxu0 %v3833
    %3857 = vmatprep.subr.bf16.mxu0 0
    %3858 = vmatpush1.bf16.msra.mxu0 %v3834
    %3859 = vmatprep.subr.bf16.mxu0 0
    %3860 = vmatpush1.bf16.msra.mxu0 0
    %3861 = vmatprep.subr.bf16.mxu0 0
    %3862 = vmatpush1.bf16.msra.mxu0 0
    %3863 = vmatprep.subr.bf16.mxu0 0
    %3864 = vmatpush1.bf16.msra.mxu0 0
    %3865 = vmatprep.subr.bf16.mxu0 0
    %3866 = vmatpush1.bf16.msra.mxu0 0
    %3867 = vmatprep.subr.bf16.mxu0 0
    %3868 = vmatpush1.bf16.msra.mxu0 0
    %3869 = vmatprep.subr.bf16.mxu0 0
    %3870 = vmatpush1.bf16.msra.mxu0 0
    %3871 = vmatprep.subr.bf16.mxu0 0
    %3872 = vmatpush1.bf16.msra.mxu0 0
    %3873 = vmatprep.subr.bf16.mxu0 0
    %3874 = vmatpush1.bf16.msra.mxu0 0
    %3875 = vmatprep.mubr.bf16.mxu0 0
    %3876 = vmatmul.mubr.bf16.gmra.mrb[0].mxu0 %v3793
    %v3877 = vpop.f32.mrb[0].mxu0
    %v3878 = vadd.f32 0.0, %v3877
    %v3879 = vpop.f32.mrb[0].mxu0
    %v3880 = vpop.f32.mrb[0].mxu0
    %v3881 = vadd.f32 0.0, %v3880
    %v3882 = vpop.f32.mrb[0].mxu0
    %3883 = vmatprep.mubr.bf16.mxu0 0
    %3884 = vmatmul.mubr.bf16.gmra.mrb[0].mxu0 %v3794
    %v3885 = vpop.f32.mrb[0].mxu0
    %v3886 = vadd.f32 0.0, %v3885
    %v3887 = vpop.f32.mrb[0].mxu0
    %v3888 = vpop.f32.mrb[0].mxu0
    %v3889 = vadd.f32 0.0, %v3888
    %v3890 = vpop.f32.mrb[0].mxu0
    %3891 = vdwg.mxu0
    %v3892 = vadd.f32 %v3568, %v3878
    %v3893 = vadd.f32 %v3569, %v3881
    %v3894 = vadd.f32 %v3570, %v3886
    %v3895 = vadd.f32 %v3571, %v3889
    %s3896 = scalar_lea.vmem [#allocation12], 1
    %v3897 = vld [vmem:[%s3896] sm:$0x1]
    %v3899 = vlaneseq
    %v3900 = vshrl.u32 %v3899, 7
    %v3901 = vsub.s32 0, %v3900
    %v3902 = vrot.slane %v3897, %v3901
    %v3904 = vadd.f32 %v3892, %v3902
    %v3905 = vadd.f32 %v3893, %v3902
    %v3906 = vadd.f32 %v3894, %v3902
    %v3907 = vadd.f32 %v3895, %v3902
    %v3908 = vld [vmem:[#allocation13] sm:$0x3]
    %v3909 = vsel %vm294, %v3904, 0.0
    %3910 = vadd.xlane.f32.xlu0 %v3909
    %v3911 = vpop.xlane.xlu0 %3910
    %v3912 = vsel %vm294, %v3905, 0.0
    %3913 = vadd.xlane.f32.xlu0 %v3912
    %v3914 = vpop.xlane.xlu0 %3913
    %v3915 = vsel %vm294, %v3906, 0.0
    %3916 = vadd.xlane.f32.xlu0 %v3915
    %v3917 = vpop.xlane.xlu0 %3916
    %v3918 = vsel %vm294, %v3907, 0.0
    %3919 = vadd.xlane.f32.xlu0 %v3918
    %v3920 = vpop.xlane.xlu0 %3919
    %v3921 = vmul.f32 %v3911, %v369
    %v3922 = vmul.f32 %v3914, %v369
    %v3923 = vmul.f32 %v3917, %v369
    %v3924 = vmul.f32 %v3920, %v369
    %v3925 = vsub.f32 %v3904, %v3921
    %v3926 = vsub.f32 %v3905, %v3922
    %v3927 = vsub.f32 %v3906, %v3923
    %v3928 = vsub.f32 %v3907, %v3924
    %v3929 = vmul.f32 %v3925, %v3925
    %v3930 = vmul.f32 %v3926, %v3926
    %v3931 = vmul.f32 %v3927, %v3927
    %v3932 = vmul.f32 %v3928, %v3928
    %v3933 = vsel %vm294, %v3929, 0.0
    %3934 = vadd.xlane.f32.xlu0 %v3933
    %v3935 = vpop.xlane.xlu0 %3934
    %v3936 = vsel %vm294, %v3930, 0.0
    %3937 = vadd.xlane.f32.xlu0 %v3936
    %v3938 = vpop.xlane.xlu0 %3937
    %v3939 = vsel %vm294, %v3931, 0.0
    %3940 = vadd.xlane.f32.xlu0 %v3939
    %v3941 = vpop.xlane.xlu0 %3940
    %v3942 = vsel %vm294, %v3932, 0.0
    %3943 = vadd.xlane.f32.xlu0 %v3942
    %v3944 = vpop.xlane.xlu0 %3943
    %v3945 = vmul.f32 %v3935, %v369
    %v3946 = vmul.f32 %v3938, %v369
    %v3947 = vmul.f32 %v3941, %v369
    %v3948 = vmul.f32 %v3944, %v369
    %v3949 = vadd.f32 %v3945, 1e-06
    %v3950 = vadd.f32 %v3946, 1e-06
    %v3951 = vadd.f32 %v3947, 1e-06
    %v3952 = vadd.f32 %v3948, 1e-06
    %v3953 = vrsqrt.pop %v3949
    %v3954 = vrsqrt.pop %v3950
    %v3955 = vrsqrt.pop %v3951
    %v3956 = vrsqrt.pop %v3952
    %v3957 = vmul.f32 %v3925, %v3953
    %v3958 = vmul.f32 %v3926, %v3954
    %v3959 = vmul.f32 %v3927, %v3955
    %v3960 = vmul.f32 %v3928, %v3956
    %v3961 = vlaneseq
    %v3962 = vshrl.u32 %v3961, 7
    %v3963 = vsub.s32 0, %v3962
    %v3964 = vrot.slane %v3908, %v3963
    %v3965 = vmul.f32 %v3957, %v3964
    %v3966 = vmul.f32 %v3958, %v3964
    %v3967 = vmul.f32 %v3959, %v3964
    %v3968 = vmul.f32 %v3960, %v3964
    %v3969 = vlaneseq
    %v3970 = vshrl.u32 %v3969, 7
    %v3971 = vsub.s32 1, %v3970
    %v3972 = vrot.slane %v3908, %v3971
    %v3973 = vadd.f32 %v3965, %v3972
    %v3974 = vadd.f32 %v3966, %v3972
    %v3975 = vadd.f32 %v3967, %v3972
    %v3976 = vadd.f32 %v3968, %v3972
    %v3977 = vld [vmem:[#allocation15] sm:$0xff]
    %v3978 = vld [vmem:[#allocation15 + $0x8] sm:$0xff]
    %v3979 = vld [vmem:[#allocation15 + $0x10] sm:$0xff]
    %v3980 = vld [vmem:[#allocation15 + $0x18] sm:$0xff]
    %v3981 = vld [vmem:[#allocation15 + $0x20] sm:$0xff]
    %v3982 = vld [vmem:[#allocation15 + $0x28] sm:$0xff]
    %v3983 = vld [vmem:[#allocation15 + $0x30] sm:$0xff]
    %v3984 = vld [vmem:[#allocation15 + $0x38] sm:$0xff]
    %v3985 = vld [vmem:[#allocation15 + $0x40] sm:$0xff]
    %v3986 = vld [vmem:[#allocation15 + $0x48] sm:$0xff]
    %v3987 = vld [vmem:[#allocation15 + $0x50] sm:$0xff]
    %v3988 = vld [vmem:[#allocation15 + $0x58] sm:$0xff]
    %v3989 = vld [vmem:[#allocation15 + $0x60] sm:$0xff]
    %v3990 = vld [vmem:[#allocation15 + $0x68] sm:$0xff]
    %v3991 = vld [vmem:[#allocation15 + $0x70] sm:$0xff]
    %v3992 = vld [vmem:[#allocation15 + $0x78] sm:$0xff]
    %v3993 = vld [vmem:[#allocation15 + $0x80] sm:$0xff]
    %v3994 = vld [vmem:[#allocation15 + $0x88] sm:$0xff]
    %v3995 = vld [vmem:[#allocation15 + $0x90] sm:$0xff]
    %v3996 = vld [vmem:[#allocation15 + $0x98] sm:$0xff]
    %v3997 = vld [vmem:[#allocation15 + $0xa0] sm:$0xff]
    %v3998 = vld [vmem:[#allocation15 + $0xa8] sm:$0xff]
    %v3999 = vld [vmem:[#allocation15 + $0xb0] sm:$0xff]
    %v4000 = vld [vmem:[#allocation15 + $0xb8] sm:$0xff]
    %v4001 = vld [vmem:[#allocation15 + $0xc0] sm:$0xff]
    %v4002 = vld [vmem:[#allocation15 + $0xc8] sm:$0xff]
    %v4003 = vld [vmem:[#allocation15 + $0xd0] sm:$0xff]
    %v4004 = vld [vmem:[#allocation15 + $0xd8] sm:$0xff]
    %v4005 = vld [vmem:[#allocation15 + $0xe0] sm:$0xff]
    %v4006 = vld [vmem:[#allocation15 + $0xe8] sm:$0xff]
    %v4007 = vld [vmem:[#allocation15 + $0xf0] sm:$0xff]
    %v4008 = vld [vmem:[#allocation15 + $0xf8] sm:$0xff]
    %v4009 = vld [vmem:[#allocation15 + $0x100] sm:$0xff]
    %v4010 = vld [vmem:[#allocation15 + $0x108] sm:$0xff]
    %v4011 = vld [vmem:[#allocation15 + $0x110] sm:$0xff]
    %v4012 = vld [vmem:[#allocation15 + $0x118] sm:$0xff]
    %v4013 = vld [vmem:[#allocation15 + $0x120] sm:$0xff]
    %v4014 = vld [vmem:[#allocation15 + $0x128] sm:$0xff]
    %v4015 = vld [vmem:[#allocation15 + $0x130] sm:$0xff]
    %v4016 = vld [vmem:[#allocation15 + $0x138] sm:$0xff]
    %v4017 = vld [vmem:[#allocation15 + $0x140] sm:$0xff]
    %v4018 = vld [vmem:[#allocation15 + $0x148] sm:$0xff]
    %v4019 = vld [vmem:[#allocation15 + $0x150] sm:$0xff]
    %v4020 = vld [vmem:[#allocation15 + $0x158] sm:$0xff]
    %v4021 = vld [vmem:[#allocation15 + $0x160] sm:$0xff]
    %v4022 = vld [vmem:[#allocation15 + $0x168] sm:$0xff]
    %v4023 = vld [vmem:[#allocation15 + $0x170] sm:$0xff]
    %v4024 = vld [vmem:[#allocation15 + $0x178] sm:$0xff]
    %v4025 = vld [vmem:[#allocation15 + $0x180] sm:$0xff]
    %v4026 = vld [vmem:[#allocation15 + $0x188] sm:$0xff]
    %v4027 = vld [vmem:[#allocation15 + $0x190] sm:$0xff]
    %v4028 = vld [vmem:[#allocation15 + $0x198] sm:$0xff]
    %v4029 = vld [vmem:[#allocation15 + $0x1a0] sm:$0xff]
    %v4030 = vld [vmem:[#allocation15 + $0x1a8] sm:$0xff]
    %v4031 = vld [vmem:[#allocation15 + $0x1b0] sm:$0xff]
    %v4032 = vld [vmem:[#allocation15 + $0x1b8] sm:$0xff]
    %v4033 = vld [vmem:[#allocation15 + $0x1c0] sm:$0xff]
    %v4034 = vld [vmem:[#allocation15 + $0x1c8] sm:$0xff]
    %v4035 = vld [vmem:[#allocation15 + $0x1d0] sm:$0xff]
    %v4036 = vld [vmem:[#allocation15 + $0x1d8] sm:$0xff]
    %v4037 = vld [vmem:[#allocation15 + $0x1e0] sm:$0xff]
    %v4038 = vld [vmem:[#allocation15 + $0x1e8] sm:$0xff]
    %v4039 = vld [vmem:[#allocation15 + $0x1f0] sm:$0xff]
    %v4040 = vld [vmem:[#allocation15 + $0x1f8] sm:$0xff]
    %v4041 = vld [vmem:[#allocation15 + $0x200] sm:$0xff]
    %v4042 = vld [vmem:[#allocation15 + $0x208] sm:$0xff]
    %v4043 = vld [vmem:[#allocation15 + $0x210] sm:$0xff]
    %v4044 = vld [vmem:[#allocation15 + $0x218] sm:$0xff]
    %v4045 = vld [vmem:[#allocation15 + $0x220] sm:$0xff]
    %v4046 = vld [vmem:[#allocation15 + $0x228] sm:$0xff]
    %v4047 = vld [vmem:[#allocation15 + $0x230] sm:$0xff]
    %v4048 = vld [vmem:[#allocation15 + $0x238] sm:$0xff]
    %v4049 = vpack.c.bf16 %v3974, %v3973
    %v4122 = vunpack.c.l.b16 %v3977
    %v4123 = vunpack.c.h.b16 %v3977
    %v4124 = vunpack.c.l.b16 %v3978
    %v4125 = vunpack.c.h.b16 %v3978
    %v4126 = vunpack.c.l.b16 %v3979
    %v4127 = vunpack.c.h.b16 %v3979
    %v4128 = vunpack.c.l.b16 %v3980
    %v4129 = vunpack.c.h.b16 %v3980
    %v4130 = vunpack.c.l.b16 %v3981
    %v4131 = vunpack.c.h.b16 %v3981
    %v4132 = vunpack.c.l.b16 %v3982
    %v4133 = vunpack.c.h.b16 %v3982
    %v4134 = vunpack.c.l.b16 %v3983
    %v4135 = vunpack.c.h.b16 %v3983
    %v4136 = vunpack.c.l.b16 %v3984
    %v4137 = vunpack.c.h.b16 %v3984
    %v4138 = vunpack.c.l.b16 %v3985
    %v4139 = vunpack.c.h.b16 %v3985
    %v4140 = vunpack.c.l.b16 %v3986
    %v4141 = vunpack.c.h.b16 %v3986
    %v4142 = vunpack.c.l.b16 %v3987
    %v4143 = vunpack.c.h.b16 %v3987
    %v4144 = vunpack.c.l.b16 %v3988
    %v4145 = vunpack.c.h.b16 %v3988
    %v4146 = vunpack.c.l.b16 %v3989
    %v4147 = vunpack.c.h.b16 %v3989
    %v4148 = vunpack.c.l.b16 %v3990
    %v4149 = vunpack.c.h.b16 %v3990
    %v4150 = vunpack.c.l.b16 %v3991
    %v4151 = vunpack.c.h.b16 %v3991
    %v4152 = vunpack.c.l.b16 %v3992
    %v4153 = vunpack.c.h.b16 %v3992
    %v4154 = vunpack.c.l.b16 %v3993
    %v4155 = vunpack.c.h.b16 %v3993
    %v4156 = vunpack.c.l.b16 %v3994
    %v4157 = vunpack.c.h.b16 %v3994
    %v4158 = vunpack.c.l.b16 %v3995
    %v4159 = vunpack.c.h.b16 %v3995
    %v4160 = vunpack.c.l.b16 %v3996
    %v4161 = vunpack.c.h.b16 %v3996
    %v4162 = vunpack.c.l.b16 %v3997
    %v4163 = vunpack.c.h.b16 %v3997
    %v4164 = vunpack.c.l.b16 %v3998
    %v4165 = vunpack.c.h.b16 %v3998
    %v4166 = vunpack.c.l.b16 %v3999
    %v4167 = vunpack.c.h.b16 %v3999
    %v4168 = vunpack.c.l.b16 %v4000
    %v4169 = vunpack.c.h.b16 %v4000
    %v4170 = vunpack.c.l.b16 %v4001
    %v4171 = vunpack.c.h.b16 %v4001
    %v4172 = vunpack.c.l.b16 %v4002
    %v4173 = vunpack.c.h.b16 %v4002
    %v4174 = vunpack.c.l.b16 %v4003
    %v4175 = vunpack.c.h.b16 %v4003
    %v4176 = vunpack.c.l.b16 %v4004
    %v4177 = vunpack.c.h.b16 %v4004
    %v4178 = vunpack.c.l.b16 %v4005
    %v4179 = vunpack.c.h.b16 %v4005
    %v4180 = vunpack.c.l.b16 %v4006
    %v4181 = vunpack.c.h.b16 %v4006
    %v4182 = vunpack.c.l.b16 %v4007
    %v4183 = vunpack.c.h.b16 %v4007
    %v4184 = vunpack.c.l.b16 %v4008
    %v4185 = vunpack.c.h.b16 %v4008
    %v4186 = vunpack.c.l.b16 %v4009
    %v4187 = vunpack.c.h.b16 %v4009
    %v4188 = vunpack.c.l.b16 %v4010
    %v4189 = vunpack.c.h.b16 %v4010
    %v4190 = vunpack.c.l.b16 %v4011
    %v4191 = vunpack.c.h.b16 %v4011
    %v4192 = vunpack.c.l.b16 %v4012
    %v4193 = vunpack.c.h.b16 %v4012
    %v4194 = vunpack.c.l.b16 %v4013
    %v4195 = vunpack.c.h.b16 %v4013
    %v4196 = vunpack.c.l.b16 %v4014
    %v4197 = vunpack.c.h.b16 %v4014
    %v4198 = vunpack.c.l.b16 %v4015
    %v4199 = vunpack.c.h.b16 %v4015
    %v4200 = vunpack.c.l.b16 %v4016
    %v4201 = vunpack.c.h.b16 %v4016
    %v4202 = vunpack.c.l.b16 %v4017
    %v4203 = vunpack.c.h.b16 %v4017
    %v4204 = vunpack.c.l.b16 %v4018
    %v4205 = vunpack.c.h.b16 %v4018
    %v4206 = vunpack.c.l.b16 %v4019
    %v4207 = vunpack.c.h.b16 %v4019
    %v4208 = vunpack.c.l.b16 %v4020
    %v4209 = vunpack.c.h.b16 %v4020
    %v4210 = vunpack.c.l.b16 %v4021
    %v4211 = vunpack.c.h.b16 %v4021
    %v4212 = vunpack.c.l.b16 %v4022
    %v4213 = vunpack.c.h.b16 %v4022
    %v4214 = vunpack.c.l.b16 %v4023
    %v4215 = vunpack.c.h.b16 %v4023
    %v4216 = vunpack.c.l.b16 %v4024
    %v4217 = vunpack.c.h.b16 %v4024
    %v4218 = vunpack.c.l.b16 %v4025
    %v4219 = vunpack.c.h.b16 %v4025
    %v4220 = vunpack.c.l.b16 %v4026
    %v4221 = vunpack.c.h.b16 %v4026
    %v4222 = vunpack.c.l.b16 %v4027
    %v4223 = vunpack.c.h.b16 %v4027
    %v4224 = vunpack.c.l.b16 %v4028
    %v4225 = vunpack.c.h.b16 %v4028
    %v4226 = vunpack.c.l.b16 %v4029
    %v4227 = vunpack.c.h.b16 %v4029
    %v4228 = vunpack.c.l.b16 %v4030
    %v4229 = vunpack.c.h.b16 %v4030
    %v4230 = vunpack.c.l.b16 %v4031
    %v4231 = vunpack.c.h.b16 %v4031
    %v4232 = vunpack.c.l.b16 %v4032
    %v4233 = vunpack.c.h.b16 %v4032
    %v4234 = vunpack.c.l.b16 %v4033
    %v4235 = vunpack.c.h.b16 %v4033
    %v4236 = vunpack.c.l.b16 %v4034
    %v4237 = vunpack.c.h.b16 %v4034
    %v4238 = vunpack.c.l.b16 %v4035
    %v4239 = vunpack.c.h.b16 %v4035
    %v4240 = vunpack.c.l.b16 %v4036
    %v4241 = vunpack.c.h.b16 %v4036
    %v4242 = vunpack.c.l.b16 %v4037
    %v4243 = vunpack.c.h.b16 %v4037
    %v4244 = vunpack.c.l.b16 %v4038
    %v4245 = vunpack.c.h.b16 %v4038
    %v4246 = vunpack.c.l.b16 %v4039
    %v4247 = vunpack.c.h.b16 %v4039
    %v4248 = vunpack.c.l.b16 %v4040
    %v4249 = vunpack.c.h.b16 %v4040
    %v4250 = vunpack.c.l.b16 %v4041
    %v4251 = vunpack.c.h.b16 %v4041
    %v4252 = vunpack.c.l.b16 %v4042
    %v4253 = vunpack.c.h.b16 %v4042
    %v4254 = vunpack.c.l.b16 %v4043
    %v4255 = vunpack.c.h.b16 %v4043
    %v4256 = vunpack.c.l.b16 %v4044
    %v4257 = vunpack.c.h.b16 %v4044
    %v4258 = vunpack.c.l.b16 %v4045
    %v4259 = vunpack.c.h.b16 %v4045
    %v4260 = vunpack.c.l.b16 %v4046
    %v4261 = vunpack.c.h.b16 %v4046
    %v4262 = vunpack.c.l.b16 %v4047
    %v4263 = vunpack.c.h.b16 %v4047
    %v4264 = vunpack.c.l.b16 %v4048
    %v4265 = vunpack.c.h.b16 %v4048
    %v4266 = vpack.c.b16 %v4140, %v4122
    %v4267 = vpack.c.b16 %v4141, %v4123
    %v4268 = vpack.c.b16 %v4142, %v4124
    %v4269 = vpack.c.b16 %v4143, %v4125
    %v4270 = vpack.c.b16 %v4144, %v4126
    %v4271 = vpack.c.b16 %v4145, %v4127
    %v4272 = vpack.c.b16 %v4146, %v4128
    %v4273 = vpack.c.b16 %v4147, %v4129
    %v4274 = vpack.c.b16 %v4148, %v4130
    %v4275 = vpack.c.b16 %v4149, %v4131
    %v4276 = vpack.c.b16 %v4150, %v4132
    %v4277 = vpack.c.b16 %v4151, %v4133
    %v4278 = vpack.c.b16 %v4152, %v4134
    %v4279 = vpack.c.b16 %v4153, %v4135
    %v4280 = vpack.c.b16 %v4154, %v4136
    %v4281 = vpack.c.b16 %v4155, %v4137
    %v4282 = vpack.c.b16 %v4156, %v4138
    %v4283 = vpack.c.b16 %v4157, %v4139
    %v4284 = vpack.c.b16 %v4176, %v4158
    %v4285 = vpack.c.b16 %v4177, %v4159
    %v4286 = vpack.c.b16 %v4178, %v4160
    %v4287 = vpack.c.b16 %v4179, %v4161
    %v4288 = vpack.c.b16 %v4180, %v4162
    %v4289 = vpack.c.b16 %v4181, %v4163
    %v4290 = vpack.c.b16 %v4182, %v4164
    %v4291 = vpack.c.b16 %v4183, %v4165
    %v4292 = vpack.c.b16 %v4184, %v4166
    %v4293 = vpack.c.b16 %v4185, %v4167
    %v4294 = vpack.c.b16 %v4186, %v4168
    %v4295 = vpack.c.b16 %v4187, %v4169
    %v4296 = vpack.c.b16 %v4188, %v4170
    %v4297 = vpack.c.b16 %v4189, %v4171
    %v4298 = vpack.c.b16 %v4190, %v4172
    %v4299 = vpack.c.b16 %v4191, %v4173
    %v4300 = vpack.c.b16 %v4192, %v4174
    %v4301 = vpack.c.b16 %v4193, %v4175
    %v4302 = vpack.c.b16 %v4212, %v4194
    %v4303 = vpack.c.b16 %v4213, %v4195
    %v4304 = vpack.c.b16 %v4214, %v4196
    %v4305 = vpack.c.b16 %v4215, %v4197
    %v4306 = vpack.c.b16 %v4216, %v4198
    %v4307 = vpack.c.b16 %v4217, %v4199
    %v4308 = vpack.c.b16 %v4218, %v4200
    %v4309 = vpack.c.b16 %v4219, %v4201
    %v4310 = vpack.c.b16 %v4220, %v4202
    %v4311 = vpack.c.b16 %v4221, %v4203
    %v4312 = vpack.c.b16 %v4222, %v4204
    %v4313 = vpack.c.b16 %v4223, %v4205
    %v4314 = vpack.c.b16 %v4224, %v4206
    %v4315 = vpack.c.b16 %v4225, %v4207
    %v4316 = vpack.c.b16 %v4226, %v4208
    %v4317 = vpack.c.b16 %v4227, %v4209
    %v4318 = vpack.c.b16 %v4228, %v4210
    %v4319 = vpack.c.b16 %v4229, %v4211
    %v4320 = vpack.c.b16 %v4248, %v4230
    %v4321 = vpack.c.b16 %v4249, %v4231
    %v4322 = vpack.c.b16 %v4250, %v4232
    %v4323 = vpack.c.b16 %v4251, %v4233
    %v4324 = vpack.c.b16 %v4252, %v4234
    %v4325 = vpack.c.b16 %v4253, %v4235
    %v4326 = vpack.c.b16 %v4254, %v4236
    %v4327 = vpack.c.b16 %v4255, %v4237
    %v4328 = vpack.c.b16 %v4256, %v4238
    %v4329 = vpack.c.b16 %v4257, %v4239
    %v4330 = vpack.c.b16 %v4258, %v4240
    %v4331 = vpack.c.b16 %v4259, %v4241
    %v4332 = vpack.c.b16 %v4260, %v4242
    %v4333 = vpack.c.b16 %v4261, %v4243
    %v4334 = vpack.c.b16 %v4262, %v4244
    %v4335 = vpack.c.b16 %v4263, %v4245
    %v4336 = vpack.c.b16 %v4264, %v4246
    %v4337 = vpack.c.b16 %v4265, %v4247
    %v4411 = vsel %vm294, %v4049, 0
    %4413 = vmatprep.subr.bf16.mxu0 %v4267
    %4414 = vmatpush1.bf16.msra.mxu0 %v4266
    %4415 = vmatprep.subr.bf16.mxu0 %v4285
    %4416 = vmatpush1.bf16.msra.mxu0 %v4284
    %4417 = vmatprep.subr.bf16.mxu0 %v4303
    %4418 = vmatpush1.bf16.msra.mxu0 %v4302
    %4419 = vmatprep.subr.bf16.mxu0 %v4321
    %4420 = vmatpush1.bf16.msra.mxu0 %v4320
    %4421 = vmatprep.subr.bf16.mxu0 0
    %4422 = vmatpush1.bf16.msra.mxu0 0
    %4423 = vmatprep.subr.bf16.mxu0 0
    %4424 = vmatpush1.bf16.msra.mxu0 0
    %4425 = vmatprep.subr.bf16.mxu0 0
    %4426 = vmatpush1.bf16.msra.mxu0 0
    %4427 = vmatprep.subr.bf16.mxu0 0
    %4428 = vmatpush1.bf16.msra.mxu0 0
    %4429 = vmatprep.subr.bf16.mxu0 0
    %4430 = vmatpush1.bf16.msra.mxu0 0
    %4431 = vmatprep.subr.bf16.mxu0 0
    %4432 = vmatpush1.bf16.msra.mxu0 0
    %4433 = vmatprep.subr.bf16.mxu0 0
    %4434 = vmatpush1.bf16.msra.mxu0 0
    %4435 = vmatprep.subr.bf16.mxu0 0
    %4436 = vmatpush1.bf16.msra.mxu0 0
    %4437 = vmatprep.subr.bf16.mxu0 0
    %4438 = vmatpush1.bf16.msra.mxu0 0
    %4439 = vmatprep.subr.bf16.mxu0 0
    %4440 = vmatpush1.bf16.msra.mxu0 0
    %4441 = vmatprep.subr.bf16.mxu0 0
    %4442 = vmatpush1.bf16.msra.mxu0 0
    %4443 = vmatprep.subr.bf16.mxu0 0
    %4444 = vmatpush1.bf16.msra.mxu0 0
    %4445 = vmatprep.mubr.bf16.mxu0 0
    %4446 = vmatmul.mubr.bf16.gmra.mrb[0].mxu0 %v4411
    %v4447 = vpop.f32.mrb[0].mxu0
    %v4448 = vadd.f32 0.0, %v4447
    %v4449 = vpop.f32.mrb[0].mxu0
    %v4450 = vadd.f32 0.0, %v4449
    %v4451 = vpop.f32.mrb[0].mxu0
    %v4452 = vadd.f32 0.0, %v4451
    %v4453 = vpop.f32.mrb[0].mxu0
    %v4454 = vadd.f32 0.0, %v4453
    %4455 = vdwg.mxu0
    %4456 = vmatprep.subr.bf16.mxu0 %v4269
    %4457 = vmatpush1.bf16.msra.mxu0 %v4268
    %4458 = vmatprep.subr.bf16.mxu0 %v4287
    %4459 = vmatpush1.bf16.msra.mxu0 %v4286
    %4460 = vmatprep.subr.bf16.mxu0 %v4305
    %4461 = vmatpush1.bf16.msra.mxu0 %v4304
    %4462 = vmatprep.subr.bf16.mxu0 %v4323
    %4463 = vmatpush1.bf16.msra.mxu0 %v4322
    %4464 = vmatprep.subr.bf16.mxu0 0
    %4465 = vmatpush1.bf16.msra.mxu0 0
    %4466 = vmatprep.subr.bf16.mxu0 0
    %4467 = vmatpush1.bf16.msra.mxu0 0
    %4468 = vmatprep.subr.bf16.mxu0 0
    %4469 = vmatpush1.bf16.msra.mxu0 0
    %4470 = vmatprep.subr.bf16.mxu0 0
    %4471 = vmatpush1.bf16.msra.mxu0 0
    %4472 = vmatprep.subr.bf16.mxu0 0
    %4473 = vmatpush1.bf16.msra.mxu0 0
    %4474 = vmatprep.subr.bf16.mxu0 0
    %4475 = vmatpush1.bf16.msra.mxu0 0
    %4476 = vmatprep.subr.bf16.mxu0 0
    %4477 = vmatpush1.bf16.msra.mxu0 0
    %4478 = vmatprep.subr.bf16.mxu0 0
    %4479 = vmatpush1.bf16.msra.mxu0 0
    %4480 = vmatprep.subr.bf16.mxu0 0
    %4481 = vmatpush1.bf16.msra.mxu0 0
    %4482 = vmatprep.subr.bf16.mxu0 0
    %4483 = vmatpush1.bf16.msra.mxu0 0
    %4484 = vmatprep.subr.bf16.mxu0 0
    %4485 = vmatpush1.bf16.msra.mxu0 0
    %4486 = vmatprep.subr.bf16.mxu0 0
    %4487 = vmatpush1.bf16.msra.mxu0 0
    %4488 = vmatprep.mubr.bf16.mxu0 0
    %4489 = vmatmul.mubr.bf16.gmra.mrb[0].mxu0 %v4411
    %v4490 = vpop.f32.mrb[0].mxu0
    %v4491 = vadd.f32 0.0, %v4490
    %v4492 = vpop.f32.mrb[0].mxu0
    %v4493 = vadd.f32 0.0, %v4492
    %v4494 = vpop.f32.mrb[0].mxu0
    %v4495 = vadd.f32 0.0, %v4494
    %v4496 = vpop.f32.mrb[0].mxu0
    %v4497 = vadd.f32 0.0, %v4496
    %4498 = vdwg.mxu0
    %4499 = vmatprep.subr.bf16.mxu0 %v4271
    %4500 = vmatpush1.bf16.msra.mxu0 %v4270
    %4501 = vmatprep.subr.bf16.mxu0 %v4289
    %4502 = vmatpush1.bf16.msra.mxu0 %v4288
    %4503 = vmatprep.subr.bf16.mxu0 %v4307
    %4504 = vmatpush1.bf16.msra.mxu0 %v4306
    %4505 = vmatprep.subr.bf16.mxu0 %v4325
    %4506 = vmatpush1.bf16.msra.mxu0 %v4324
    %4507 = vmatprep.subr.bf16.mxu0 0
    %4508 = vmatpush1.bf16.msra.mxu0 0
    %4509 = vmatprep.subr.bf16.mxu0 0
    %4510 = vmatpush1.bf16.msra.mxu0 0
    %4511 = vmatprep.subr.bf16.mxu0 0
    %4512 = vmatpush1.bf16.msra.mxu0 0
    %4513 = vmatprep.subr.bf16.mxu0 0
    %4514 = vmatpush1.bf16.msra.mxu0 0
    %4515 = vmatprep.subr.bf16.mxu0 0
    %4516 = vmatpush1.bf16.msra.mxu0 0
    %4517 = vmatprep.subr.bf16.mxu0 0
    %4518 = vmatpush1.bf16.msra.mxu0 0
    %4519 = vmatprep.subr.bf16.mxu0 0
    %4520 = vmatpush1.bf16.msra.mxu0 0
    %4521 = vmatprep.subr.bf16.mxu0 0
    %4522 = vmatpush1.bf16.msra.mxu0 0
    %4523 = vmatprep.subr.bf16.mxu0 0
    %4524 = vmatpush1.bf16.msra.mxu0 0
    %4525 = vmatprep.subr.bf16.mxu0 0
    %4526 = vmatpush1.bf16.msra.mxu0 0
    %4527 = vmatprep.subr.bf16.mxu0 0
    %4528 = vmatpush1.bf16.msra.mxu0 0
    %4529 = vmatprep.subr.bf16.mxu0 0
    %4530 = vmatpush1.bf16.msra.mxu0 0
    %4531 = vmatprep.mubr.bf16.mxu0 0
    %4532 = vmatmul.mubr.bf16.gmra.mrb[0].mxu0 %v4411
    %v4533 = vpop.f32.mrb[0].mxu0
    %v4534 = vadd.f32 0.0, %v4533
    %v4535 = vpop.f32.mrb[0].mxu0
    %v4536 = vadd.f32 0.0, %v4535
    %v4537 = vpop.f32.mrb[0].mxu0
    %v4538 = vadd.f32 0.0, %v4537
    %v4539 = vpop.f32.mrb[0].mxu0
    %v4540 = vadd.f32 0.0, %v4539
    %4541 = vdwg.mxu0
    %4542 = vmatprep.subr.bf16.mxu0 %v4273
    %4543 = vmatpush1.bf16.msra.mxu0 %v4272
    %4544 = vmatprep.subr.bf16.mxu0 %v4291
    %4545 = vmatpush1.bf16.msra.mxu0 %v4290
    %4546 = vmatprep.subr.bf16.mxu0 %v4309
    %4547 = vmatpush1.bf16.msra.mxu0 %v4308
    %4548 = vmatprep.subr.bf16.mxu0 %v4327
    %4549 = vmatpush1.bf16.msra.mxu0 %v4326
    %4550 = vmatprep.subr.bf16.mxu0 0
    %4551 = vmatpush1.bf16.msra.mxu0 0
    %4552 = vmatprep.subr.bf16.mxu0 0
    %4553 = vmatpush1.bf16.msra.mxu0 0
    %4554 = vmatprep.subr.bf16.mxu0 0
    %4555 = vmatpush1.bf16.msra.mxu0 0
    %4556 = vmatprep.subr.bf16.mxu0 0
    %4557 = vmatpush1.bf16.msra.mxu0 0
    %4558 = vmatprep.subr.bf16.mxu0 0
    %4559 = vmatpush1.bf16.msra.mxu0 0
    %4560 = vmatprep.subr.bf16.mxu0 0
    %4561 = vmatpush1.bf16.msra.mxu0 0
    %4562 = vmatprep.subr.bf16.mxu0 0
    %4563 = vmatpush1.bf16.msra.mxu0 0
    %4564 = vmatprep.subr.bf16.mxu0 0
    %4565 = vmatpush1.bf16.msra.mxu0 0
    %4566 = vmatprep.subr.bf16.mxu0 0
    %4567 = vmatpush1.bf16.msra.mxu0 0
    %4568 = vmatprep.subr.bf16.mxu0 0
    %4569 = vmatpush1.bf16.msra.mxu0 0
    %4570 = vmatprep.subr.bf16.mxu0 0
    %4571 = vmatpush1.bf16.msra.mxu0 0
    %4572 = vmatprep.subr.bf16.mxu0 0
    %4573 = vmatpush1.bf16.msra.mxu0 0
    %4574 = vmatprep.mubr.bf16.mxu0 0
    %4575 = vmatmul.mubr.bf16.gmra.mrb[0].mxu0 %v4411
    %v4576 = vpop.f32.mrb[0].mxu0
    %v4577 = vadd.f32 0.0, %v4576
    %v4578 = vpop.f32.mrb[0].mxu0
    %v4579 = vadd.f32 0.0, %v4578
    %v4580 = vpop.f32.mrb[0].mxu0
    %v4581 = vadd.f32 0.0, %v4580
    %v4582 = vpop.f32.mrb[0].mxu0
    %v4583 = vadd.f32 0.0, %v4582
    %4584 = vdwg.mxu0
    %4585 = vmatprep.subr.bf16.mxu0 %v4275
    %4586 = vmatpush1.bf16.msra.mxu0 %v4274
    %4587 = vmatprep.subr.bf16.mxu0 %v4293
    %4588 = vmatpush1.bf16.msra.mxu0 %v4292
    %4589 = vmatprep.subr.bf16.mxu0 %v4311
    %4590 = vmatpush1.bf16.msra.mxu0 %v4310
    %4591 = vmatprep.subr.bf16.mxu0 %v4329
    %4592 = vmatpush1.bf16.msra.mxu0 %v4328
    %4593 = vmatprep.subr.bf16.mxu0 0
    %4594 = vmatpush1.bf16.msra.mxu0 0
    %4595 = vmatprep.subr.bf16.mxu0 0
    %4596 = vmatpush1.bf16.msra.mxu0 0
    %4597 = vmatprep.subr.bf16.mxu0 0
    %4598 = vmatpush1.bf16.msra.mxu0 0
    %4599 = vmatprep.subr.bf16.mxu0 0
    %4600 = vmatpush1.bf16.msra.mxu0 0
    %4601 = vmatprep.subr.bf16.mxu0 0
    %4602 = vmatpush1.bf16.msra.mxu0 0
    %4603 = vmatprep.subr.bf16.mxu0 0
    %4604 = vmatpush1.bf16.msra.mxu0 0
    %4605 = vmatprep.subr.bf16.mxu0 0
    %4606 = vmatpush1.bf16.msra.mxu0 0
    %4607 = vmatprep.subr.bf16.mxu0 0
    %4608 = vmatpush1.bf16.msra.mxu0 0
    %4609 = vmatprep.subr.bf16.mxu0 0
    %4610 = vmatpush1.bf16.msra.mxu0 0
    %4611 = vmatprep.subr.bf16.mxu0 0
    %4612 = vmatpush1.bf16.msra.mxu0 0
    %4613 = vmatprep.subr.bf16.mxu0 0
    %4614 = vmatpush1.bf16.msra.mxu0 0
    %4615 = vmatprep.subr.bf16.mxu0 0
    %4616 = vmatpush1.bf16.msra.mxu0 0
    %4617 = vmatprep.mubr.bf16.mxu0 0
    %4618 = vmatmul.mubr.bf16.gmra.mrb[0].mxu0 %v4411
    %v4619 = vpop.f32.mrb[0].mxu0
    %v4620 = vadd.f32 0.0, %v4619
    %v4621 = vpop.f32.mrb[0].mxu0
    %v4622 = vadd.f32 0.0, %v4621
    %v4623 = vpop.f32.mrb[0].mxu0
    %v4624 = vadd.f32 0.0, %v4623
    %v4625 = vpop.f32.mrb[0].mxu0
    %v4626 = vadd.f32 0.0, %v4625
    %4627 = vdwg.mxu0
    %4628 = vmatprep.subr.bf16.mxu0 %v4277
    %4629 = vmatpush1.bf16.msra.mxu0 %v4276
    %4630 = vmatprep.subr.bf16.mxu0 %v4295
    %4631 = vmatpush1.bf16.msra.mxu0 %v4294
    %4632 = vmatprep.subr.bf16.mxu0 %v4313
    %4633 = vmatpush1.bf16.msra.mxu0 %v4312
    %4634 = vmatprep.subr.bf16.mxu0 %v4331
    %4635 = vmatpush1.bf16.msra.mxu0 %v4330
    %4636 = vmatprep.subr.bf16.mxu0 0
    %4637 = vmatpush1.bf16.msra.mxu0 0
    %4638 = vmatprep.subr.bf16.mxu0 0
    %4639 = vmatpush1.bf16.msra.mxu0 0
    %4640 = vmatprep.subr.bf16.mxu0 0
    %4641 = vmatpush1.bf16.msra.mxu0 0
    %4642 = vmatprep.subr.bf16.mxu0 0
    %4643 = vmatpush1.bf16.msra.mxu0 0
    %4644 = vmatprep.subr.bf16.mxu0 0
    %4645 = vmatpush1.bf16.msra.mxu0 0
    %4646 = vmatprep.subr.bf16.mxu0 0
    %4647 = vmatpush1.bf16.msra.mxu0 0
    %4648 = vmatprep.subr.bf16.mxu0 0
    %4649 = vmatpush1.bf16.msra.mxu0 0
    %4650 = vmatprep.subr.bf16.mxu0 0
    %4651 = vmatpush1.bf16.msra.mxu0 0
    %4652 = vmatprep.subr.bf16.mxu0 0
    %4653 = vmatpush1.bf16.msra.mxu0 0
    %4654 = vmatprep.subr.bf16.mxu0 0
    %4655 = vmatpush1.bf16.msra.mxu0 0
    %4656 = vmatprep.subr.bf16.mxu0 0
    %4657 = vmatpush1.bf16.msra.mxu0 0
    %4658 = vmatprep.subr.bf16.mxu0 0
    %4659 = vmatpush1.bf16.msra.mxu0 0
    %4660 = vmatprep.mubr.bf16.mxu0 0
    %4661 = vmatmul.mubr.bf16.gmra.mrb[0].mxu0 %v4411
    %v4662 = vpop.f32.mrb[0].mxu0
    %v4663 = vadd.f32 0.0, %v4662
    %v4664 = vpop.f32.mrb[0].mxu0
    %v4665 = vadd.f32 0.0, %v4664
    %v4666 = vpop.f32.mrb[0].mxu0
    %v4667 = vadd.f32 0.0, %v4666
    %v4668 = vpop.f32.mrb[0].mxu0
    %v4669 = vadd.f32 0.0, %v4668
    %4670 = vdwg.mxu0
    %4671 = vmatprep.subr.bf16.mxu0 %v4279
    %4672 = vmatpush1.bf16.msra.mxu0 %v4278
    %4673 = vmatprep.subr.bf16.mxu0 %v4297
    %4674 = vmatpush1.bf16.msra.mxu0 %v4296
    %4675 = vmatprep.subr.bf16.mxu0 %v4315
    %4676 = vmatpush1.bf16.msra.mxu0 %v4314
    %4677 = vmatprep.subr.bf16.mxu0 %v4333
    %4678 = vmatpush1.bf16.msra.mxu0 %v4332
    %4679 = vmatprep.subr.bf16.mxu0 0
    %4680 = vmatpush1.bf16.msra.mxu0 0
    %4681 = vmatprep.subr.bf16.mxu0 0
    %4682 = vmatpush1.bf16.msra.mxu0 0
    %4683 = vmatprep.subr.bf16.mxu0 0
    %4684 = vmatpush1.bf16.msra.mxu0 0
    %4685 = vmatprep.subr.bf16.mxu0 0
    %4686 = vmatpush1.bf16.msra.mxu0 0
    %4687 = vmatprep.subr.bf16.mxu0 0
    %4688 = vmatpush1.bf16.msra.mxu0 0
    %4689 = vmatprep.subr.bf16.mxu0 0
    %4690 = vmatpush1.bf16.msra.mxu0 0
    %4691 = vmatprep.subr.bf16.mxu0 0
    %4692 = vmatpush1.bf16.msra.mxu0 0
    %4693 = vmatprep.subr.bf16.mxu0 0
    %4694 = vmatpush1.bf16.msra.mxu0 0
    %4695 = vmatprep.subr.bf16.mxu0 0
    %4696 = vmatpush1.bf16.msra.mxu0 0
    %4697 = vmatprep.subr.bf16.mxu0 0
    %4698 = vmatpush1.bf16.msra.mxu0 0
    %4699 = vmatprep.subr.bf16.mxu0 0
    %4700 = vmatpush1.bf16.msra.mxu0 0
    %4701 = vmatprep.subr.bf16.mxu0 0
    %4702 = vmatpush1.bf16.msra.mxu0 0
    %4703 = vmatprep.mubr.bf16.mxu0 0
    %4704 = vmatmul.mubr.bf16.gmra.mrb[0].mxu0 %v4411
    %v4705 = vpop.f32.mrb[0].mxu0
    %v4706 = vadd.f32 0.0, %v4705
    %v4707 = vpop.f32.mrb[0].mxu0
    %v4708 = vadd.f32 0.0, %v4707
    %v4709 = vpop.f32.mrb[0].mxu0
    %v4710 = vadd.f32 0.0, %v4709
    %v4711 = vpop.f32.mrb[0].mxu0
    %v4712 = vadd.f32 0.0, %v4711
    %4713 = vdwg.mxu0
    %4714 = vmatprep.subr.bf16.mxu0 %v4281
    %4715 = vmatpush1.bf16.msra.mxu0 %v4280
    %4716 = vmatprep.subr.bf16.mxu0 %v4299
    %4717 = vmatpush1.bf16.msra.mxu0 %v4298
    %4718 = vmatprep.subr.bf16.mxu0 %v4317
    %4719 = vmatpush1.bf16.msra.mxu0 %v4316
    %4720 = vmatprep.subr.bf16.mxu0 %v4335
    %4721 = vmatpush1.bf16.msra.mxu0 %v4334
    %4722 = vmatprep.subr.bf16.mxu0 0
    %4723 = vmatpush1.bf16.msra.mxu0 0
    %4724 = vmatprep.subr.bf16.mxu0 0
    %4725 = vmatpush1.bf16.msra.mxu0 0
    %4726 = vmatprep.subr.bf16.mxu0 0
    %4727 = vmatpush1.bf16.msra.mxu0 0
    %4728 = vmatprep.subr.bf16.mxu0 0
    %4729 = vmatpush1.bf16.msra.mxu0 0
    %4730 = vmatprep.subr.bf16.mxu0 0
    %4731 = vmatpush1.bf16.msra.mxu0 0
    %4732 = vmatprep.subr.bf16.mxu0 0
    %4733 = vmatpush1.bf16.msra.mxu0 0
    %4734 = vmatprep.subr.bf16.mxu0 0
    %4735 = vmatpush1.bf16.msra.mxu0 0
    %4736 = vmatprep.subr.bf16.mxu0 0
    %4737 = vmatpush1.bf16.msra.mxu0 0
    %4738 = vmatprep.subr.bf16.mxu0 0
    %4739 = vmatpush1.bf16.msra.mxu0 0
    %4740 = vmatprep.subr.bf16.mxu0 0
    %4741 = vmatpush1.bf16.msra.mxu0 0
    %4742 = vmatprep.subr.bf16.mxu0 0
    %4743 = vmatpush1.bf16.msra.mxu0 0
    %4744 = vmatprep.subr.bf16.mxu0 0
    %4745 = vmatpush1.bf16.msra.mxu0 0
    %4746 = vmatprep.mubr.bf16.mxu0 0
    %4747 = vmatmul.mubr.bf16.gmra.mrb[0].mxu0 %v4411
    %v4748 = vpop.f32.mrb[0].mxu0
    %v4749 = vadd.f32 0.0, %v4748
    %v4750 = vpop.f32.mrb[0].mxu0
    %v4751 = vadd.f32 0.0, %v4750
    %v4752 = vpop.f32.mrb[0].mxu0
    %v4753 = vadd.f32 0.0, %v4752
    %v4754 = vpop.f32.mrb[0].mxu0
    %v4755 = vadd.f32 0.0, %v4754
    %4756 = vdwg.mxu0
    %4757 = vmatprep.subr.bf16.mxu0 %v4283
    %4758 = vmatpush1.bf16.msra.mxu0 %v4282
    %4759 = vmatprep.subr.bf16.mxu0 %v4301
    %4760 = vmatpush1.bf16.msra.mxu0 %v4300
    %4761 = vmatprep.subr.bf16.mxu0 %v4319
    %4762 = vmatpush1.bf16.msra.mxu0 %v4318
    %4763 = vmatprep.subr.bf16.mxu0 %v4337
    %4764 = vmatpush1.bf16.msra.mxu0 %v4336
    %4765 = vmatprep.subr.bf16.mxu0 0
    %4766 = vmatpush1.bf16.msra.mxu0 0
    %4767 = vmatprep.subr.bf16.mxu0 0
    %4768 = vmatpush1.bf16.msra.mxu0 0
    %4769 = vmatprep.subr.bf16.mxu0 0
    %4770 = vmatpush1.bf16.msra.mxu0 0
    %4771 = vmatprep.subr.bf16.mxu0 0
    %4772 = vmatpush1.bf16.msra.mxu0 0
    %4773 = vmatprep.subr.bf16.mxu0 0
    %4774 = vmatpush1.bf16.msra.mxu0 0
    %4775 = vmatprep.subr.bf16.mxu0 0
    %4776 = vmatpush1.bf16.msra.mxu0 0
    %4777 = vmatprep.subr.bf16.mxu0 0
    %4778 = vmatpush1.bf16.msra.mxu0 0
    %4779 = vmatprep.subr.bf16.mxu0 0
    %4780 = vmatpush1.bf16.msra.mxu0 0
    %4781 = vmatprep.subr.bf16.mxu0 0
    %4782 = vmatpush1.bf16.msra.mxu0 0
    %4783 = vmatprep.subr.bf16.mxu0 0
    %4784 = vmatpush1.bf16.msra.mxu0 0
    %4785 = vmatprep.subr.bf16.mxu0 0
    %4786 = vmatpush1.bf16.msra.mxu0 0
    %4787 = vmatprep.subr.bf16.mxu0 0
    %4788 = vmatpush1.bf16.msra.mxu0 0
    %4789 = vmatprep.mubr.bf16.mxu0 0
    %4790 = vmatmul.mubr.bf16.gmra.mrb[0].mxu0 %v4411
    %v4791 = vpop.f32.mrb[0].mxu0
    %v4792 = vadd.f32 0.0, %v4791
    %v4793 = vpop.f32.mrb[0].mxu0
    %v4794 = vadd.f32 0.0, %v4793
    %v4795 = vpop.f32.mrb[0].mxu0
    %v4796 = vadd.f32 0.0, %v4795
    %v4797 = vpop.f32.mrb[0].mxu0
    %v4798 = vadd.f32 0.0, %v4797
    %4799 = vdwg.mxu0
    %v4800 = vld [vmem:[%s14] sm:$0xf]
    %v4801 = vld [vmem:[%s14 + $0x4] sm:$0xf]
    %v4802 = vpack.c.bf16 %v4452, %v4448
    %v4803 = vpack.c.bf16 %v4454, %v4450
    %s4804 = scalar_lea.vmem %s14, 8
    %v4805 = vld [vmem:[%s4804] sm:$0xf]
    %v4806 = vld [vmem:[%s4804 + $0x4] sm:$0xf]
    %v4807 = vpack.c.bf16 %v4495, %v4491
    %v4808 = vpack.c.bf16 %v4497, %v4493
    %v4811 = vunpack.c.l.b16 %v4805
    %v4812 = vunpack.c.l.b16 %v4806
    %v4813 = vpack.c.b16 %v4812, %v4811
    %v4815 = vsel %vm560, %v4813, 0
    %4817 = vmatprep.subr.bf16.mxu0 %v4808
    %4818 = vmatpush1.bf16.msra.mxu0 %v4807
    %4819 = vmatprep.subr.bf16.mxu0 0
    %4820 = vmatpush1.bf16.msra.mxu0 0
    %4821 = vmatprep.subr.bf16.mxu0 0
    %4822 = vmatpush1.bf16.msra.mxu0 0
    %4823 = vmatprep.subr.bf16.mxu0 0
    %4824 = vmatpush1.bf16.msra.mxu0 0
    %4825 = vmatprep.subr.bf16.mxu0 0
    %4826 = vmatpush1.bf16.msra.mxu0 0
    %4827 = vmatprep.subr.bf16.mxu0 0
    %4828 = vmatpush1.bf16.msra.mxu0 0
    %4829 = vmatprep.subr.bf16.mxu0 0
    %4830 = vmatpush1.bf16.msra.mxu0 0
    %4831 = vmatprep.subr.bf16.mxu0 0
    %4832 = vmatpush1.bf16.msra.mxu0 0
    %4833 = vmatprep.subr.bf16.mxu0 0
    %4834 = vmatpush1.bf16.msra.mxu0 0
    %4835 = vmatprep.subr.bf16.mxu0 0
    %4836 = vmatpush1.bf16.msra.mxu0 0
    %4837 = vmatprep.subr.bf16.mxu0 0
    %4838 = vmatpush1.bf16.msra.mxu0 0
    %4839 = vmatprep.subr.bf16.mxu0 0
    %4840 = vmatpush1.bf16.msra.mxu0 0
    %4841 = vmatprep.subr.bf16.mxu0 0
    %4842 = vmatpush1.bf16.msra.mxu0 0
    %4843 = vmatprep.subr.bf16.mxu0 0
    %4844 = vmatpush1.bf16.msra.mxu0 0
    %4845 = vmatprep.subr.bf16.mxu0 0
    %4846 = vmatpush1.bf16.msra.mxu0 0
    %4847 = vmatprep.subr.bf16.mxu0 0
    %4848 = vmatpush1.bf16.msra.mxu0 0
    %4849 = vmatprep.mubr.bf16.mxu0 0
    %4850 = vmatmul.mubr.bf16.gmra.mrb[0].mxu0 %v4815
    %v4851 = vpop.f32.mrb[0].mxu0
    %v4852 = vadd.f32 0.0, %v4851
    %v4853 = vpop.f32.mrb[0].mxu0
    %v4854 = vadd.f32 0.0, %v4853
    %v4855 = vpop.f32.mrb[0].mxu0
    %v4856 = vadd.f32 0.0, %v4855
    %v4857 = vpop.f32.mrb[0].mxu0
    %v4858 = vadd.f32 0.0, %v4857
    %4859 = vdwg.mxu0
    %v4862 = vunpack.c.l.b16 %v4800
    %v4863 = vunpack.c.l.b16 %v4801
    %v4864 = vpack.c.b16 %v4863, %v4862
    %v4866 = vsel %vm560, %v4864, 0
    %4868 = vmatprep.subr.bf16.mxu0 %v4803
    %4869 = vmatpush1.bf16.msra.mxu0 %v4802
    %4870 = vmatprep.subr.bf16.mxu0 0
    %4871 = vmatpush1.bf16.msra.mxu0 0
    %4872 = vmatprep.subr.bf16.mxu0 0
    %4873 = vmatpush1.bf16.msra.mxu0 0
    %4874 = vmatprep.subr.bf16.mxu0 0
    %4875 = vmatpush1.bf16.msra.mxu0 0
    %4876 = vmatprep.subr.bf16.mxu0 0
    %4877 = vmatpush1.bf16.msra.mxu0 0
    %4878 = vmatprep.subr.bf16.mxu0 0
    %4879 = vmatpush1.bf16.msra.mxu0 0
    %4880 = vmatprep.subr.bf16.mxu0 0
    %4881 = vmatpush1.bf16.msra.mxu0 0
    %4882 = vmatprep.subr.bf16.mxu0 0
    %4883 = vmatpush1.bf16.msra.mxu0 0
    %4884 = vmatprep.subr.bf16.mxu0 0
    %4885 = vmatpush1.bf16.msra.mxu0 0
    %4886 = vmatprep.subr.bf16.mxu0 0
    %4887 = vmatpush1.bf16.msra.mxu0 0
    %4888 = vmatprep.subr.bf16.mxu0 0
    %4889 = vmatpush1.bf16.msra.mxu0 0
    %4890 = vmatprep.subr.bf16.mxu0 0
    %4891 = vmatpush1.bf16.msra.mxu0 0
    %4892 = vmatprep.subr.bf16.mxu0 0
    %4893 = vmatpush1.bf16.msra.mxu0 0
    %4894 = vmatprep.subr.bf16.mxu0 0
    %4895 = vmatpush1.bf16.msra.mxu0 0
    %4896 = vmatprep.subr.bf16.mxu0 0
    %4897 = vmatpush1.bf16.msra.mxu0 0
    %4898 = vmatprep.subr.bf16.mxu0 0
    %4899 = vmatpush1.bf16.msra.mxu0 0
    %4900 = vmatprep.mubr.bf16.mxu0 0
    %4901 = vmatmul.mubr.bf16.gmra.mrb[0].mxu0 %v4866
    %v4902 = vpop.f32.mrb[0].mxu0
    %v4903 = vadd.f32 %v4852, %v4902
    %v4904 = vpop.f32.mrb[0].mxu0
    %v4905 = vadd.f32 %v4854, %v4904
    %v4906 = vpop.f32.mrb[0].mxu0
    %v4907 = vadd.f32 %v4856, %v4906
    %v4908 = vpop.f32.mrb[0].mxu0
    %v4909 = vadd.f32 %v4858, %v4908
    %4910 = vdwg.mxu0
    %s4911 = scalar_lea.vmem %s14, 16
    %v4912 = vld [vmem:[%s4911] sm:$0xf]
    %v4913 = vld [vmem:[%s4911 + $0x4] sm:$0xf]
    %v4914 = vpack.c.bf16 %v4538, %v4534
    %v4915 = vpack.c.bf16 %v4540, %v4536
    %v4918 = vunpack.c.l.b16 %v4912
    %v4919 = vunpack.c.l.b16 %v4913
    %v4920 = vpack.c.b16 %v4919, %v4918
    %v4922 = vsel %vm560, %v4920, 0
    %4924 = vmatprep.subr.bf16.mxu0 %v4915
    %4925 = vmatpush1.bf16.msra.mxu0 %v4914
    %4926 = vmatprep.subr.bf16.mxu0 0
    %4927 = vmatpush1.bf16.msra.mxu0 0
    %4928 = vmatprep.subr.bf16.mxu0 0
    %4929 = vmatpush1.bf16.msra.mxu0 0
    %4930 = vmatprep.subr.bf16.mxu0 0
    %4931 = vmatpush1.bf16.msra.mxu0 0
    %4932 = vmatprep.subr.bf16.mxu0 0
    %4933 = vmatpush1.bf16.msra.mxu0 0
    %4934 = vmatprep.subr.bf16.mxu0 0
    %4935 = vmatpush1.bf16.msra.mxu0 0
    %4936 = vmatprep.subr.bf16.mxu0 0
    %4937 = vmatpush1.bf16.msra.mxu0 0
    %4938 = vmatprep.subr.bf16.mxu0 0
    %4939 = vmatpush1.bf16.msra.mxu0 0
    %4940 = vmatprep.subr.bf16.mxu0 0
    %4941 = vmatpush1.bf16.msra.mxu0 0
    %4942 = vmatprep.subr.bf16.mxu0 0
    %4943 = vmatpush1.bf16.msra.mxu0 0
    %4944 = vmatprep.subr.bf16.mxu0 0
    %4945 = vmatpush1.bf16.msra.mxu0 0
    %4946 = vmatprep.subr.bf16.mxu0 0
    %4947 = vmatpush1.bf16.msra.mxu0 0
    %4948 = vmatprep.subr.bf16.mxu0 0
    %4949 = vmatpush1.bf16.msra.mxu0 0
    %4950 = vmatprep.subr.bf16.mxu0 0
    %4951 = vmatpush1.bf16.msra.mxu0 0
    %4952 = vmatprep.subr.bf16.mxu0 0
    %4953 = vmatpush1.bf16.msra.mxu0 0
    %4954 = vmatprep.subr.bf16.mxu0 0
    %4955 = vmatpush1.bf16.msra.mxu0 0
    %4956 = vmatprep.mubr.bf16.mxu0 0
    %4957 = vmatmul.mubr.bf16.gmra.mrb[0].mxu0 %v4922
    %v4958 = vpop.f32.mrb[0].mxu0
    %v4959 = vadd.f32 0.0, %v4958
    %v4960 = vpop.f32.mrb[0].mxu0
    %v4961 = vadd.f32 0.0, %v4960
    %v4962 = vpop.f32.mrb[0].mxu0
    %v4963 = vadd.f32 0.0, %v4962
    %v4964 = vpop.f32.mrb[0].mxu0
    %v4965 = vadd.f32 0.0, %v4964
    %4966 = vdwg.mxu0
    %v4967 = vadd.f32 %v4903, %v4959
    %v4968 = vadd.f32 %v4905, %v4961
    %v4969 = vadd.f32 %v4907, %v4963
    %v4970 = vadd.f32 %v4909, %v4965
    %s4971 = scalar_lea.vmem %s14, 24
    %v4972 = vld [vmem:[%s4971] sm:$0xf]
    %v4973 = vld [vmem:[%s4971 + $0x4] sm:$0xf]
    %v4974 = vpack.c.bf16 %v4581, %v4577
    %v4975 = vpack.c.bf16 %v4583, %v4579
    %v4978 = vunpack.c.l.b16 %v4972
    %v4979 = vunpack.c.l.b16 %v4973
    %v4980 = vpack.c.b16 %v4979, %v4978
    %v4982 = vsel %vm560, %v4980, 0
    %4984 = vmatprep.subr.bf16.mxu0 %v4975
    %4985 = vmatpush1.bf16.msra.mxu0 %v4974
    %4986 = vmatprep.subr.bf16.mxu0 0
    %4987 = vmatpush1.bf16.msra.mxu0 0
    %4988 = vmatprep.subr.bf16.mxu0 0
    %4989 = vmatpush1.bf16.msra.mxu0 0
    %4990 = vmatprep.subr.bf16.mxu0 0
    %4991 = vmatpush1.bf16.msra.mxu0 0
    %4992 = vmatprep.subr.bf16.mxu0 0
    %4993 = vmatpush1.bf16.msra.mxu0 0
    %4994 = vmatprep.subr.bf16.mxu0 0
    %4995 = vmatpush1.bf16.msra.mxu0 0
    %4996 = vmatprep.subr.bf16.mxu0 0
    %4997 = vmatpush1.bf16.msra.mxu0 0
    %4998 = vmatprep.subr.bf16.mxu0 0
    %4999 = vmatpush1.bf16.msra.mxu0 0
    %5000 = vmatprep.subr.bf16.mxu0 0
    %5001 = vmatpush1.bf16.msra.mxu0 0
    %5002 = vmatprep.subr.bf16.mxu0 0
    %5003 = vmatpush1.bf16.msra.mxu0 0
    %5004 = vmatprep.subr.bf16.mxu0 0
    %5005 = vmatpush1.bf16.msra.mxu0 0
    %5006 = vmatprep.subr.bf16.mxu0 0
    %5007 = vmatpush1.bf16.msra.mxu0 0
    %5008 = vmatprep.subr.bf16.mxu0 0
    %5009 = vmatpush1.bf16.msra.mxu0 0
    %5010 = vmatprep.subr.bf16.mxu0 0
    %5011 = vmatpush1.bf16.msra.mxu0 0
    %5012 = vmatprep.subr.bf16.mxu0 0
    %5013 = vmatpush1.bf16.msra.mxu0 0
    %5014 = vmatprep.subr.bf16.mxu0 0
    %5015 = vmatpush1.bf16.msra.mxu0 0
    %5016 = vmatprep.mubr.bf16.mxu0 0
    %5017 = vmatmul.mubr.bf16.gmra.mrb[0].mxu0 %v4982
    %v5018 = vpop.f32.mrb[0].mxu0
    %v5019 = vadd.f32 0.0, %v5018
    %v5020 = vpop.f32.mrb[0].mxu0
    %v5021 = vadd.f32 0.0, %v5020
    %v5022 = vpop.f32.mrb[0].mxu0
    %v5023 = vadd.f32 0.0, %v5022
    %v5024 = vpop.f32.mrb[0].mxu0
    %v5025 = vadd.f32 0.0, %v5024
    %5026 = vdwg.mxu0
    %v5027 = vadd.f32 %v4967, %v5019
    %v5028 = vadd.f32 %v4968, %v5021
    %v5029 = vadd.f32 %v4969, %v5023
    %v5030 = vadd.f32 %v4970, %v5025
    %s5031 = scalar_lea.vmem %s14, 32
    %v5032 = vld [vmem:[%s5031] sm:$0xf]
    %v5033 = vld [vmem:[%s5031 + $0x4] sm:$0xf]
    %v5034 = vpack.c.bf16 %v4624, %v4620
    %v5035 = vpack.c.bf16 %v4626, %v4622
    %v5038 = vunpack.c.l.b16 %v5032
    %v5039 = vunpack.c.l.b16 %v5033
    %v5040 = vpack.c.b16 %v5039, %v5038
    %v5042 = vsel %vm560, %v5040, 0
    %5044 = vmatprep.subr.bf16.mxu0 %v5035
    %5045 = vmatpush1.bf16.msra.mxu0 %v5034
    %5046 = vmatprep.subr.bf16.mxu0 0
    %5047 = vmatpush1.bf16.msra.mxu0 0
    %5048 = vmatprep.subr.bf16.mxu0 0
    %5049 = vmatpush1.bf16.msra.mxu0 0
    %5050 = vmatprep.subr.bf16.mxu0 0
    %5051 = vmatpush1.bf16.msra.mxu0 0
    %5052 = vmatprep.subr.bf16.mxu0 0
    %5053 = vmatpush1.bf16.msra.mxu0 0
    %5054 = vmatprep.subr.bf16.mxu0 0
    %5055 = vmatpush1.bf16.msra.mxu0 0
    %5056 = vmatprep.subr.bf16.mxu0 0
    %5057 = vmatpush1.bf16.msra.mxu0 0
    %5058 = vmatprep.subr.bf16.mxu0 0
    %5059 = vmatpush1.bf16.msra.mxu0 0
    %5060 = vmatprep.subr.bf16.mxu0 0
    %5061 = vmatpush1.bf16.msra.mxu0 0
    %5062 = vmatprep.subr.bf16.mxu0 0
    %5063 = vmatpush1.bf16.msra.mxu0 0
    %5064 = vmatprep.subr.bf16.mxu0 0
    %5065 = vmatpush1.bf16.msra.mxu0 0
    %5066 = vmatprep.subr.bf16.mxu0 0
    %5067 = vmatpush1.bf16.msra.mxu0 0
    %5068 = vmatprep.subr.bf16.mxu0 0
    %5069 = vmatpush1.bf16.msra.mxu0 0
    %5070 = vmatprep.subr.bf16.mxu0 0
    %5071 = vmatpush1.bf16.msra.mxu0 0
    %5072 = vmatprep.subr.bf16.mxu0 0
    %5073 = vmatpush1.bf16.msra.mxu0 0
    %5074 = vmatprep.subr.bf16.mxu0 0
    %5075 = vmatpush1.bf16.msra.mxu0 0
    %5076 = vmatprep.mubr.bf16.mxu0 0
    %5077 = vmatmul.mubr.bf16.gmra.mrb[0].mxu0 %v5042
    %v5078 = vpop.f32.mrb[0].mxu0
    %v5079 = vadd.f32 0.0, %v5078
    %v5080 = vpop.f32.mrb[0].mxu0
    %v5081 = vadd.f32 0.0, %v5080
    %v5082 = vpop.f32.mrb[0].mxu0
    %v5083 = vadd.f32 0.0, %v5082
    %v5084 = vpop.f32.mrb[0].mxu0
    %v5085 = vadd.f32 0.0, %v5084
    %5086 = vdwg.mxu0
    %v5087 = vadd.f32 %v5027, %v5079
    %v5088 = vadd.f32 %v5028, %v5081
    %v5089 = vadd.f32 %v5029, %v5083
    %v5090 = vadd.f32 %v5030, %v5085
    %s5091 = scalar_lea.vmem %s14, 40
    %v5092 = vld [vmem:[%s5091] sm:$0xf]
    %v5093 = vld [vmem:[%s5091 + $0x4] sm:$0xf]
    %v5094 = vpack.c.bf16 %v4667, %v4663
    %v5095 = vpack.c.bf16 %v4669, %v4665
    %v5098 = vunpack.c.l.b16 %v5092
    %v5099 = vunpack.c.l.b16 %v5093
    %v5100 = vpack.c.b16 %v5099, %v5098
    %v5102 = vsel %vm560, %v5100, 0
    %5104 = vmatprep.subr.bf16.mxu0 %v5095
    %5105 = vmatpush1.bf16.msra.mxu0 %v5094
    %5106 = vmatprep.subr.bf16.mxu0 0
    %5107 = vmatpush1.bf16.msra.mxu0 0
    %5108 = vmatprep.subr.bf16.mxu0 0
    %5109 = vmatpush1.bf16.msra.mxu0 0
    %5110 = vmatprep.subr.bf16.mxu0 0
    %5111 = vmatpush1.bf16.msra.mxu0 0
    %5112 = vmatprep.subr.bf16.mxu0 0
    %5113 = vmatpush1.bf16.msra.mxu0 0
    %5114 = vmatprep.subr.bf16.mxu0 0
    %5115 = vmatpush1.bf16.msra.mxu0 0
    %5116 = vmatprep.subr.bf16.mxu0 0
    %5117 = vmatpush1.bf16.msra.mxu0 0
    %5118 = vmatprep.subr.bf16.mxu0 0
    %5119 = vmatpush1.bf16.msra.mxu0 0
    %5120 = vmatprep.subr.bf16.mxu0 0
    %5121 = vmatpush1.bf16.msra.mxu0 0
    %5122 = vmatprep.subr.bf16.mxu0 0
    %5123 = vmatpush1.bf16.msra.mxu0 0
    %5124 = vmatprep.subr.bf16.mxu0 0
    %5125 = vmatpush1.bf16.msra.mxu0 0
    %5126 = vmatprep.subr.bf16.mxu0 0
    %5127 = vmatpush1.bf16.msra.mxu0 0
    %5128 = vmatprep.subr.bf16.mxu0 0
    %5129 = vmatpush1.bf16.msra.mxu0 0
    %5130 = vmatprep.subr.bf16.mxu0 0
    %5131 = vmatpush1.bf16.msra.mxu0 0
    %5132 = vmatprep.subr.bf16.mxu0 0
    %5133 = vmatpush1.bf16.msra.mxu0 0
    %5134 = vmatprep.subr.bf16.mxu0 0
    %5135 = vmatpush1.bf16.msra.mxu0 0
    %5136 = vmatprep.mubr.bf16.mxu0 0
    %5137 = vmatmul.mubr.bf16.gmra.mrb[0].mxu0 %v5102
    %v5138 = vpop.f32.mrb[0].mxu0
    %v5139 = vadd.f32 0.0, %v5138
    %v5140 = vpop.f32.mrb[0].mxu0
    %v5141 = vadd.f32 0.0, %v5140
    %v5142 = vpop.f32.mrb[0].mxu0
    %v5143 = vadd.f32 0.0, %v5142
    %v5144 = vpop.f32.mrb[0].mxu0
    %v5145 = vadd.f32 0.0, %v5144
    %5146 = vdwg.mxu0
    %v5147 = vadd.f32 %v5087, %v5139
    %v5148 = vadd.f32 %v5088, %v5141
    %v5149 = vadd.f32 %v5089, %v5143
    %v5150 = vadd.f32 %v5090, %v5145
    %s5151 = scalar_lea.vmem %s14, 48
    %v5152 = vld [vmem:[%s5151] sm:$0xf]
    %v5153 = vld [vmem:[%s5151 + $0x4] sm:$0xf]
    %v5154 = vpack.c.bf16 %v4710, %v4706
    %v5155 = vpack.c.bf16 %v4712, %v4708
    %v5158 = vunpack.c.l.b16 %v5152
    %v5159 = vunpack.c.l.b16 %v5153
    %v5160 = vpack.c.b16 %v5159, %v5158
    %v5162 = vsel %vm560, %v5160, 0
    %5164 = vmatprep.subr.bf16.mxu0 %v5155
    %5165 = vmatpush1.bf16.msra.mxu0 %v5154
    %5166 = vmatprep.subr.bf16.mxu0 0
    %5167 = vmatpush1.bf16.msra.mxu0 0
    %5168 = vmatprep.subr.bf16.mxu0 0
    %5169 = vmatpush1.bf16.msra.mxu0 0
    %5170 = vmatprep.subr.bf16.mxu0 0
    %5171 = vmatpush1.bf16.msra.mxu0 0
    %5172 = vmatprep.subr.bf16.mxu0 0
    %5173 = vmatpush1.bf16.msra.mxu0 0
    %5174 = vmatprep.subr.bf16.mxu0 0
    %5175 = vmatpush1.bf16.msra.mxu0 0
    %5176 = vmatprep.subr.bf16.mxu0 0
    %5177 = vmatpush1.bf16.msra.mxu0 0
    %5178 = vmatprep.subr.bf16.mxu0 0
    %5179 = vmatpush1.bf16.msra.mxu0 0
    %5180 = vmatprep.subr.bf16.mxu0 0
    %5181 = vmatpush1.bf16.msra.mxu0 0
    %5182 = vmatprep.subr.bf16.mxu0 0
    %5183 = vmatpush1.bf16.msra.mxu0 0
    %5184 = vmatprep.subr.bf16.mxu0 0
    %5185 = vmatpush1.bf16.msra.mxu0 0
    %5186 = vmatprep.subr.bf16.mxu0 0
    %5187 = vmatpush1.bf16.msra.mxu0 0
    %5188 = vmatprep.subr.bf16.mxu0 0
    %5189 = vmatpush1.bf16.msra.mxu0 0
    %5190 = vmatprep.subr.bf16.mxu0 0
    %5191 = vmatpush1.bf16.msra.mxu0 0
    %5192 = vmatprep.subr.bf16.mxu0 0
    %5193 = vmatpush1.bf16.msra.mxu0 0
    %5194 = vmatprep.subr.bf16.mxu0 0
    %5195 = vmatpush1.bf16.msra.mxu0 0
    %5196 = vmatprep.mubr.bf16.mxu0 0
    %5197 = vmatmul.mubr.bf16.gmra.mrb[0].mxu0 %v5162
    %v5198 = vpop.f32.mrb[0].mxu0
    %v5199 = vadd.f32 0.0, %v5198
    %v5200 = vpop.f32.mrb[0].mxu0
    %v5201 = vadd.f32 0.0, %v5200
    %v5202 = vpop.f32.mrb[0].mxu0
    %v5203 = vadd.f32 0.0, %v5202
    %v5204 = vpop.f32.mrb[0].mxu0
    %v5205 = vadd.f32 0.0, %v5204
    %5206 = vdwg.mxu0
    %v5207 = vadd.f32 %v5147, %v5199
    %v5208 = vadd.f32 %v5148, %v5201
    %v5209 = vadd.f32 %v5149, %v5203
    %v5210 = vadd.f32 %v5150, %v5205
    %s5211 = scalar_lea.vmem %s14, 56
    %v5212 = vld [vmem:[%s5211] sm:$0xf]
    %v5213 = vld [vmem:[%s5211 + $0x4] sm:$0xf]
    %v5214 = vpack.c.bf16 %v4753, %v4749
    %v5215 = vpack.c.bf16 %v4755, %v4751
    %v5218 = vunpack.c.l.b16 %v5212
    %v5219 = vunpack.c.l.b16 %v5213
    %v5220 = vpack.c.b16 %v5219, %v5218
    %v5222 = vsel %vm560, %v5220, 0
    %5224 = vmatprep.subr.bf16.mxu0 %v5215
    %5225 = vmatpush1.bf16.msra.mxu0 %v5214
    %5226 = vmatprep.subr.bf16.mxu0 0
    %5227 = vmatpush1.bf16.msra.mxu0 0
    %5228 = vmatprep.subr.bf16.mxu0 0
    %5229 = vmatpush1.bf16.msra.mxu0 0
    %5230 = vmatprep.subr.bf16.mxu0 0
    %5231 = vmatpush1.bf16.msra.mxu0 0
    %5232 = vmatprep.subr.bf16.mxu0 0
    %5233 = vmatpush1.bf16.msra.mxu0 0
    %5234 = vmatprep.subr.bf16.mxu0 0
    %5235 = vmatpush1.bf16.msra.mxu0 0
    %5236 = vmatprep.subr.bf16.mxu0 0
    %5237 = vmatpush1.bf16.msra.mxu0 0
    %5238 = vmatprep.subr.bf16.mxu0 0
    %5239 = vmatpush1.bf16.msra.mxu0 0
    %5240 = vmatprep.subr.bf16.mxu0 0
    %5241 = vmatpush1.bf16.msra.mxu0 0
    %5242 = vmatprep.subr.bf16.mxu0 0
    %5243 = vmatpush1.bf16.msra.mxu0 0
    %5244 = vmatprep.subr.bf16.mxu0 0
    %5245 = vmatpush1.bf16.msra.mxu0 0
    %5246 = vmatprep.subr.bf16.mxu0 0
    %5247 = vmatpush1.bf16.msra.mxu0 0
    %5248 = vmatprep.subr.bf16.mxu0 0
    %5249 = vmatpush1.bf16.msra.mxu0 0
    %5250 = vmatprep.subr.bf16.mxu0 0
    %5251 = vmatpush1.bf16.msra.mxu0 0
    %5252 = vmatprep.subr.bf16.mxu0 0
    %5253 = vmatpush1.bf16.msra.mxu0 0
    %5254 = vmatprep.subr.bf16.mxu0 0
    %5255 = vmatpush1.bf16.msra.mxu0 0
    %5256 = vmatprep.mubr.bf16.mxu0 0
    %5257 = vmatmul.mubr.bf16.gmra.mrb[0].mxu0 %v5222
    %v5258 = vpop.f32.mrb[0].mxu0
    %v5259 = vadd.f32 0.0, %v5258
    %v5260 = vpop.f32.mrb[0].mxu0
    %v5261 = vadd.f32 0.0, %v5260
    %v5262 = vpop.f32.mrb[0].mxu0
    %v5263 = vadd.f32 0.0, %v5262
    %v5264 = vpop.f32.mrb[0].mxu0
    %v5265 = vadd.f32 0.0, %v5264
    %5266 = vdwg.mxu0
    %v5267 = vadd.f32 %v5207, %v5259
    %v5268 = vadd.f32 %v5208, %v5261
    %v5269 = vadd.f32 %v5209, %v5263
    %v5270 = vadd.f32 %v5210, %v5265
    %s5271 = scalar_lea.vmem %s14, 64
    %v5272 = vld [vmem:[%s5271] sm:$0xf]
    %v5273 = vld [vmem:[%s5271 + $0x4] sm:$0xf]
    %v5274 = vpack.c.bf16 %v4796, %v4792
    %v5275 = vpack.c.bf16 %v4798, %v4794
    %v5278 = vunpack.c.l.b16 %v5272
    %v5279 = vunpack.c.l.b16 %v5273
    %v5280 = vpack.c.b16 %v5279, %v5278
    %v5282 = vsel %vm560, %v5280, 0
    %5284 = vmatprep.subr.bf16.mxu0 %v5275
    %5285 = vmatpush1.bf16.msra.mxu0 %v5274
    %5286 = vmatprep.subr.bf16.mxu0 0
    %5287 = vmatpush1.bf16.msra.mxu0 0
    %5288 = vmatprep.subr.bf16.mxu0 0
    %5289 = vmatpush1.bf16.msra.mxu0 0
    %5290 = vmatprep.subr.bf16.mxu0 0
    %5291 = vmatpush1.bf16.msra.mxu0 0
    %5292 = vmatprep.subr.bf16.mxu0 0
    %5293 = vmatpush1.bf16.msra.mxu0 0
    %5294 = vmatprep.subr.bf16.mxu0 0
    %5295 = vmatpush1.bf16.msra.mxu0 0
    %5296 = vmatprep.subr.bf16.mxu0 0
    %5297 = vmatpush1.bf16.msra.mxu0 0
    %5298 = vmatprep.subr.bf16.mxu0 0
    %5299 = vmatpush1.bf16.msra.mxu0 0
    %5300 = vmatprep.subr.bf16.mxu0 0
    %5301 = vmatpush1.bf16.msra.mxu0 0
    %5302 = vmatprep.subr.bf16.mxu0 0
    %5303 = vmatpush1.bf16.msra.mxu0 0
    %5304 = vmatprep.subr.bf16.mxu0 0
    %5305 = vmatpush1.bf16.msra.mxu0 0
    %5306 = vmatprep.subr.bf16.mxu0 0
    %5307 = vmatpush1.bf16.msra.mxu0 0
    %5308 = vmatprep.subr.bf16.mxu0 0
    %5309 = vmatpush1.bf16.msra.mxu0 0
    %5310 = vmatprep.subr.bf16.mxu0 0
    %5311 = vmatpush1.bf16.msra.mxu0 0
    %5312 = vmatprep.subr.bf16.mxu0 0
    %5313 = vmatpush1.bf16.msra.mxu0 0
    %5314 = vmatprep.subr.bf16.mxu0 0
    %5315 = vmatpush1.bf16.msra.mxu0 0
    %5316 = vmatprep.mubr.bf16.mxu0 0
    %5317 = vmatmul.mubr.bf16.gmra.mrb[0].mxu0 %v5282
    %v5318 = vpop.f32.mrb[0].mxu0
    %v5319 = vadd.f32 0.0, %v5318
    %v5320 = vpop.f32.mrb[0].mxu0
    %v5321 = vadd.f32 0.0, %v5320
    %v5322 = vpop.f32.mrb[0].mxu0
    %v5323 = vadd.f32 0.0, %v5322
    %v5324 = vpop.f32.mrb[0].mxu0
    %v5325 = vadd.f32 0.0, %v5324
    %5326 = vdwg.mxu0
    %v5327 = vadd.f32 %v5267, %v5319
    %v5328 = vadd.f32 %v5268, %v5321
    %v5329 = vadd.f32 %v5269, %v5323
    %v5330 = vadd.f32 %v5270, %v5325
    %v5331 = vld [vmem:[%s16] sm:$0x3]
    %v5333 = vlaneseq
    %v5334 = vshrl.u32 %v5333, 7
    %v5335 = vsub.s32 0, %v5334
    %v5336 = vrot.slane %v5331, %v5335
    %v5337 = vlaneseq
    %v5338 = vshrl.u32 %v5337, 7
    %v5339 = vsub.s32 1, %v5338
    %v5340 = vrot.slane %v5331, %v5339
    %v5343 = vadd.f32 %v5327, %v5336
    %v5344 = vadd.f32 %v5328, %v5340
    %v5345 = vadd.f32 %v5329, %v5336
    %v5346 = vadd.f32 %v5330, %v5340
    %v5347 = vmax.f32 %v5343, 0.0
    %v5348 = vmax.f32 %v5344, 0.0
    %v5349 = vmax.f32 %v5345, 0.0
    %v5350 = vmax.f32 %v5346, 0.0
    %v5351 = vld [vmem:[%s17] sm:$0x77]
    %v5352 = vpack.c.bf16 %v5349, %v5347
    %v5353 = vpack.c.bf16 %v5350, %v5348
    %v5355 = vunpack.c.l.b16 %v5351
    %v5356 = vunpack.c.h.b16 %v5351
    %v5357 = vpack.c.b16 %v5355, %v5355
    %v5358 = vpack.c.b16 %v5356, %v5356
    %5361 = vmatprep.subr.bf16.mxu0 %v5353
    %5362 = vmatpush1.bf16.xpose.msra.mxu0 %v5352
    %5363 = vmatprep.subr.bf16.mxu0 0
    %5364 = vmatpush1.bf16.xpose.msra.mxu0 0
    %5365 = vmatprep.subr.bf16.mxu0 0
    %5366 = vmatpush1.bf16.xpose.msra.mxu0 0
    %5367 = vmatprep.subr.bf16.mxu0 0
    %5368 = vmatpush1.bf16.xpose.msra.mxu0 0
    %5369 = vmatprep.subr.bf16.mxu0 0
    %5370 = vmatpush1.bf16.xpose.msra.mxu0 0
    %5371 = vmatprep.subr.bf16.mxu0 0
    %5372 = vmatpush1.bf16.xpose.msra.mxu0 0
    %5373 = vmatprep.subr.bf16.mxu0 0
    %5374 = vmatpush1.bf16.xpose.msra.mxu0 0
    %5375 = vmatprep.subr.bf16.mxu0 0
    %5376 = vmatpush1.bf16.xpose.msra.mxu0 0
    %5377 = vmatprep.subr.bf16.mxu0 0
    %5378 = vmatpush1.bf16.xpose.msra.mxu0 0
    %5379 = vmatprep.subr.bf16.mxu0 0
    %5380 = vmatpush1.bf16.xpose.msra.mxu0 0
    %5381 = vmatprep.subr.bf16.mxu0 0
    %5382 = vmatpush1.bf16.xpose.msra.mxu0 0
    %5383 = vmatprep.subr.bf16.mxu0 0
    %5384 = vmatpush1.bf16.xpose.msra.mxu0 0
    %5385 = vmatprep.subr.bf16.mxu0 0
    %5386 = vmatpush1.bf16.xpose.msra.mxu0 0
    %5387 = vmatprep.subr.bf16.mxu0 0
    %5388 = vmatpush1.bf16.xpose.msra.mxu0 0
    %5389 = vmatprep.subr.bf16.mxu0 0
    %5390 = vmatpush1.bf16.xpose.msra.mxu0 0
    %5391 = vmatprep.subr.bf16.mxu0 0
    %5392 = vmatpush1.bf16.xpose.msra.mxu0 0
    %5393 = vmatprep.mubr.bf16.mxu0 %v5358
    %5394 = vmatmul.mubr.bf16.gmra.mrb[0].mxu0 %v5357
    %v5395 = vpop.f32.mrb[0].mxu0
    %v5396 = vadd.f32 0.0, %v5395
    %v5397 = vpop.f32.mrb[0].mxu0
    %v5398 = vpop.f32.mrb[0].mxu0
    %v5399 = vpop.f32.mrb[0].mxu0
    %5400 = vdwg.mxu0
    %v5401 = vld [vmem:[%s19] sm:$0xff]
    %v5402 = vld [vmem:[%s19 + $0x8] sm:$0xff]
    %v5403 = vld [vmem:[%s19 + $0x10] sm:$0xff]
    %v5404 = vld [vmem:[%s19 + $0x18] sm:$0xff]
    %v5405 = vld [vmem:[%s19 + $0x20] sm:$0xff]
    %v5406 = vld [vmem:[%s19 + $0x28] sm:$0xff]
    %v5407 = vld [vmem:[%s19 + $0x30] sm:$0xff]
    %v5408 = vld [vmem:[%s19 + $0x38] sm:$0xff]
    %v5409 = vpack.c.bf16 %v5396, %v5396
    %v5410 = vld [vmem:[%s18] sm:$0x1f]
    %5412 = vset.pattern.permute.xlu0 0
    %5413 = vperm.xlu0 %5412, %v5410
    %v5414 = vpop.permute.xlu0 %5413
    %v5424 = vunpack.c.l.b16 %v5401
    %v5425 = vunpack.c.h.b16 %v5401
    %v5426 = vunpack.c.l.b16 %v5402
    %v5427 = vunpack.c.h.b16 %v5402
    %v5428 = vunpack.c.l.b16 %v5403
    %v5429 = vunpack.c.h.b16 %v5403
    %v5430 = vunpack.c.l.b16 %v5404
    %v5431 = vunpack.c.h.b16 %v5404
    %v5432 = vunpack.c.l.b16 %v5405
    %v5433 = vunpack.c.h.b16 %v5405
    %v5434 = vunpack.c.l.b16 %v5406
    %v5435 = vunpack.c.h.b16 %v5406
    %v5436 = vunpack.c.l.b16 %v5407
    %v5437 = vunpack.c.h.b16 %v5407
    %v5438 = vunpack.c.l.b16 %v5408
    %v5439 = vunpack.c.h.b16 %v5408
    %v5440 = vpack.c.b16 %v5432, %v5424
    %v5441 = vpack.c.b16 %v5433, %v5425
    %v5442 = vpack.c.b16 %v5434, %v5426
    %v5443 = vpack.c.b16 %v5435, %v5427
    %v5444 = vpack.c.b16 %v5436, %v5428
    %v5445 = vpack.c.b16 %v5437, %v5429
    %v5446 = vpack.c.b16 %v5438, %v5430
    %v5447 = vpack.c.b16 %v5439, %v5431
    %v5457 = vsel %vm560, %v5409, 0
    %5459 = vmatprep.subr.bf16.mxu0 %v5441
    %5460 = vmatpush1.bf16.msra.mxu0 %v5440
    %5461 = vmatprep.subr.bf16.mxu0 0
    %5462 = vmatpush1.bf16.msra.mxu0 0
    %5463 = vmatprep.subr.bf16.mxu0 0
    %5464 = vmatpush1.bf16.msra.mxu0 0
    %5465 = vmatprep.subr.bf16.mxu0 0
    %5466 = vmatpush1.bf16.msra.mxu0 0
    %5467 = vmatprep.subr.bf16.mxu0 0
    %5468 = vmatpush1.bf16.msra.mxu0 0
    %5469 = vmatprep.subr.bf16.mxu0 0
    %5470 = vmatpush1.bf16.msra.mxu0 0
    %5471 = vmatprep.subr.bf16.mxu0 0
    %5472 = vmatpush1.bf16.msra.mxu0 0
    %5473 = vmatprep.subr.bf16.mxu0 0
    %5474 = vmatpush1.bf16.msra.mxu0 0
    %5475 = vmatprep.subr.bf16.mxu0 0
    %5476 = vmatpush1.bf16.msra.mxu0 0
    %5477 = vmatprep.subr.bf16.mxu0 0
    %5478 = vmatpush1.bf16.msra.mxu0 0
    %5479 = vmatprep.subr.bf16.mxu0 0
    %5480 = vmatpush1.bf16.msra.mxu0 0
    %5481 = vmatprep.subr.bf16.mxu0 0
    %5482 = vmatpush1.bf16.msra.mxu0 0
    %5483 = vmatprep.subr.bf16.mxu0 0
    %5484 = vmatpush1.bf16.msra.mxu0 0
    %5485 = vmatprep.subr.bf16.mxu0 0
    %5486 = vmatpush1.bf16.msra.mxu0 0
    %5487 = vmatprep.subr.bf16.mxu0 0
    %5488 = vmatpush1.bf16.msra.mxu0 0
    %5489 = vmatprep.subr.bf16.mxu0 0
    %5490 = vmatpush1.bf16.msra.mxu0 0
    %5491 = vmatprep.mubr.bf16.mxu0 0
    %5492 = vmatmul.mubr.bf16.gmra.mrb[0].mxu0 %v5457
    %v5493 = vpop.f32.mrb[0].mxu0
    %v5494 = vadd.f32 %v5414, %v5493
    %v5495 = vpop.f32.mrb[0].mxu0
    %v5496 = vadd.f32 %v5414, %v5495
    %v5497 = vpop.f32.mrb[0].mxu0
    %v5498 = vpop.f32.mrb[0].mxu0
    %5499 = vdwg.mxu0
    %5500 = vmatprep.subr.bf16.mxu0 %v5443
    %5501 = vmatpush1.bf16.msra.mxu0 %v5442
    %5502 = vmatprep.subr.bf16.mxu0 0
    %5503 = vmatpush1.bf16.msra.mxu0 0
    %5504 = vmatprep.subr.bf16.mxu0 0
    %5505 = vmatpush1.bf16.msra.mxu0 0
    %5506 = vmatprep.subr.bf16.mxu0 0
    %5507 = vmatpush1.bf16.msra.mxu0 0
    %5508 = vmatprep.subr.bf16.mxu0 0
    %5509 = vmatpush1.bf16.msra.mxu0 0
    %5510 = vmatprep.subr.bf16.mxu0 0
    %5511 = vmatpush1.bf16.msra.mxu0 0
    %5512 = vmatprep.subr.bf16.mxu0 0
    %5513 = vmatpush1.bf16.msra.mxu0 0
    %5514 = vmatprep.subr.bf16.mxu0 0
    %5515 = vmatpush1.bf16.msra.mxu0 0
    %5516 = vmatprep.subr.bf16.mxu0 0
    %5517 = vmatpush1.bf16.msra.mxu0 0
    %5518 = vmatprep.subr.bf16.mxu0 0
    %5519 = vmatpush1.bf16.msra.mxu0 0
    %5520 = vmatprep.subr.bf16.mxu0 0
    %5521 = vmatpush1.bf16.msra.mxu0 0
    %5522 = vmatprep.subr.bf16.mxu0 0
    %5523 = vmatpush1.bf16.msra.mxu0 0
    %5524 = vmatprep.subr.bf16.mxu0 0
    %5525 = vmatpush1.bf16.msra.mxu0 0
    %5526 = vmatprep.subr.bf16.mxu0 0
    %5527 = vmatpush1.bf16.msra.mxu0 0
    %5528 = vmatprep.subr.bf16.mxu0 0
    %5529 = vmatpush1.bf16.msra.mxu0 0
    %5530 = vmatprep.subr.bf16.mxu0 0
    %5531 = vmatpush1.bf16.msra.mxu0 0
    %5532 = vmatprep.mubr.bf16.mxu0 0
    %5533 = vmatmul.mubr.bf16.gmra.mrb[0].mxu0 %v5457
    %v5534 = vpop.f32.mrb[0].mxu0
    %v5535 = vadd.f32 %v5414, %v5534
    %v5536 = vpop.f32.mrb[0].mxu0
    %v5537 = vadd.f32 %v5414, %v5536
    %v5538 = vpop.f32.mrb[0].mxu0
    %v5539 = vpop.f32.mrb[0].mxu0
    %5540 = vdwg.mxu0
    %5541 = vmatprep.subr.bf16.mxu0 %v5445
    %5542 = vmatpush1.bf16.msra.mxu0 %v5444
    %5543 = vmatprep.subr.bf16.mxu0 0
    %5544 = vmatpush1.bf16.msra.mxu0 0
    %5545 = vmatprep.subr.bf16.mxu0 0
    %5546 = vmatpush1.bf16.msra.mxu0 0
    %5547 = vmatprep.subr.bf16.mxu0 0
    %5548 = vmatpush1.bf16.msra.mxu0 0
    %5549 = vmatprep.subr.bf16.mxu0 0
    %5550 = vmatpush1.bf16.msra.mxu0 0
    %5551 = vmatprep.subr.bf16.mxu0 0
    %5552 = vmatpush1.bf16.msra.mxu0 0
    %5553 = vmatprep.subr.bf16.mxu0 0
    %5554 = vmatpush1.bf16.msra.mxu0 0
    %5555 = vmatprep.subr.bf16.mxu0 0
    %5556 = vmatpush1.bf16.msra.mxu0 0
    %5557 = vmatprep.subr.bf16.mxu0 0
    %5558 = vmatpush1.bf16.msra.mxu0 0
    %5559 = vmatprep.subr.bf16.mxu0 0
    %5560 = vmatpush1.bf16.msra.mxu0 0
    %5561 = vmatprep.subr.bf16.mxu0 0
    %5562 = vmatpush1.bf16.msra.mxu0 0
    %5563 = vmatprep.subr.bf16.mxu0 0
    %5564 = vmatpush1.bf16.msra.mxu0 0
    %5565 = vmatprep.subr.bf16.mxu0 0
    %5566 = vmatpush1.bf16.msra.mxu0 0
    %5567 = vmatprep.subr.bf16.mxu0 0
    %5568 = vmatpush1.bf16.msra.mxu0 0
    %5569 = vmatprep.subr.bf16.mxu0 0
    %5570 = vmatpush1.bf16.msra.mxu0 0
    %5571 = vmatprep.subr.bf16.mxu0 0
    %5572 = vmatpush1.bf16.msra.mxu0 0
    %5573 = vmatprep.mubr.bf16.mxu0 0
    %5574 = vmatmul.mubr.bf16.gmra.mrb[0].mxu0 %v5457
    %v5575 = vpop.f32.mrb[0].mxu0
    %v5576 = vadd.f32 %v5414, %v5575
    %v5577 = vpop.f32.mrb[0].mxu0
    %v5578 = vadd.f32 %v5414, %v5577
    %v5579 = vpop.f32.mrb[0].mxu0
    %v5580 = vpop.f32.mrb[0].mxu0
    %5581 = vdwg.mxu0
    %5582 = vmatprep.subr.bf16.mxu0 %v5447
    %5583 = vmatpush1.bf16.msra.mxu0 %v5446
    %5584 = vmatprep.subr.bf16.mxu0 0
    %5585 = vmatpush1.bf16.msra.mxu0 0
    %5586 = vmatprep.subr.bf16.mxu0 0
    %5587 = vmatpush1.bf16.msra.mxu0 0
    %5588 = vmatprep.subr.bf16.mxu0 0
    %5589 = vmatpush1.bf16.msra.mxu0 0
    %5590 = vmatprep.subr.bf16.mxu0 0
    %5591 = vmatpush1.bf16.msra.mxu0 0
    %5592 = vmatprep.subr.bf16.mxu0 0
    %5593 = vmatpush1.bf16.msra.mxu0 0
    %5594 = vmatprep.subr.bf16.mxu0 0
    %5595 = vmatpush1.bf16.msra.mxu0 0
    %5596 = vmatprep.subr.bf16.mxu0 0
    %5597 = vmatpush1.bf16.msra.mxu0 0
    %5598 = vmatprep.subr.bf16.mxu0 0
    %5599 = vmatpush1.bf16.msra.mxu0 0
    %5600 = vmatprep.subr.bf16.mxu0 0
    %5601 = vmatpush1.bf16.msra.mxu0 0
    %5602 = vmatprep.subr.bf16.mxu0 0
    %5603 = vmatpush1.bf16.msra.mxu0 0
    %5604 = vmatprep.subr.bf16.mxu0 0
    %5605 = vmatpush1.bf16.msra.mxu0 0
    %5606 = vmatprep.subr.bf16.mxu0 0
    %5607 = vmatpush1.bf16.msra.mxu0 0
    %5608 = vmatprep.subr.bf16.mxu0 0
    %5609 = vmatpush1.bf16.msra.mxu0 0
    %5610 = vmatprep.subr.bf16.mxu0 0
    %5611 = vmatpush1.bf16.msra.mxu0 0
    %5612 = vmatprep.subr.bf16.mxu0 0
    %5613 = vmatpush1.bf16.msra.mxu0 0
    %5614 = vmatprep.mubr.bf16.mxu0 0
    %5615 = vmatmul.mubr.bf16.gmra.mrb[0].mxu0 %v5457
    %v5616 = vpop.f32.mrb[0].mxu0
    %v5617 = vadd.f32 %v5414, %v5616
    %v5618 = vpop.f32.mrb[0].mxu0
    %v5619 = vadd.f32 %v5414, %v5618
    %v5620 = vpop.f32.mrb[0].mxu0
    %v5621 = vpop.f32.mrb[0].mxu0
    %5622 = vdwg.mxu0
    %5623 = vst [vmem:[%s20] sm:$0x1f] %v5494
    %5624 = vst [vmem:[%s20 + $0x8] sm:$0x1f] %v5496
    %5625 = vst [vmem:[%s20 + $0x10] sm:$0x1f] %v5535
    %5626 = vst [vmem:[%s20 + $0x18] sm:$0x1f] %v5537
    %5627 = vst [vmem:[%s20 + $0x20] sm:$0x1f] %v5576
    %5628 = vst [vmem:[%s20 + $0x28] sm:$0x1f] %v5578
    %5629 = vst [vmem:[%s20 + $0x30] sm:$0x1f] %v5617
    %5630 = vst [vmem:[%s20 + $0x38] sm:$0x1f] %v5619
    %v5631 = vld [vmem:[#allocation15] sm:$0xff]
    %v5632 = vld [vmem:[#allocation15 + $0x8] sm:$0xff]
    %v5633 = vld [vmem:[#allocation15 + $0x10] sm:$0xff]
    %v5634 = vld [vmem:[#allocation15 + $0x18] sm:$0xff]
    %v5635 = vld [vmem:[#allocation15 + $0x20] sm:$0xff]
    %v5636 = vld [vmem:[#allocation15 + $0x28] sm:$0xff]
    %v5637 = vld [vmem:[#allocation15 + $0x30] sm:$0xff]
    %v5638 = vld [vmem:[#allocation15 + $0x38] sm:$0xff]
    %v5639 = vld [vmem:[#allocation15 + $0x40] sm:$0xff]
    %v5640 = vld [vmem:[#allocation15 + $0x48] sm:$0xff]
    %v5641 = vld [vmem:[#allocation15 + $0x50] sm:$0xff]
    %v5642 = vld [vmem:[#allocation15 + $0x58] sm:$0xff]
    %v5643 = vld [vmem:[#allocation15 + $0x60] sm:$0xff]
    %v5644 = vld [vmem:[#allocation15 + $0x68] sm:$0xff]
    %v5645 = vld [vmem:[#allocation15 + $0x70] sm:$0xff]
    %v5646 = vld [vmem:[#allocation15 + $0x78] sm:$0xff]
    %v5647 = vld [vmem:[#allocation15 + $0x80] sm:$0xff]
    %v5648 = vld [vmem:[#allocation15 + $0x88] sm:$0xff]
    %v5649 = vld [vmem:[#allocation15 + $0x90] sm:$0xff]
    %v5650 = vld [vmem:[#allocation15 + $0x98] sm:$0xff]
    %v5651 = vld [vmem:[#allocation15 + $0xa0] sm:$0xff]
    %v5652 = vld [vmem:[#allocation15 + $0xa8] sm:$0xff]
    %v5653 = vld [vmem:[#allocation15 + $0xb0] sm:$0xff]
    %v5654 = vld [vmem:[#allocation15 + $0xb8] sm:$0xff]
    %v5655 = vld [vmem:[#allocation15 + $0xc0] sm:$0xff]
    %v5656 = vld [vmem:[#allocation15 + $0xc8] sm:$0xff]
    %v5657 = vld [vmem:[#allocation15 + $0xd0] sm:$0xff]
    %v5658 = vld [vmem:[#allocation15 + $0xd8] sm:$0xff]
    %v5659 = vld [vmem:[#allocation15 + $0xe0] sm:$0xff]
    %v5660 = vld [vmem:[#allocation15 + $0xe8] sm:$0xff]
    %v5661 = vld [vmem:[#allocation15 + $0xf0] sm:$0xff]
    %v5662 = vld [vmem:[#allocation15 + $0xf8] sm:$0xff]
    %v5663 = vld [vmem:[#allocation15 + $0x100] sm:$0xff]
    %v5664 = vld [vmem:[#allocation15 + $0x108] sm:$0xff]
    %v5665 = vld [vmem:[#allocation15 + $0x110] sm:$0xff]
    %v5666 = vld [vmem:[#allocation15 + $0x118] sm:$0xff]
    %v5667 = vld [vmem:[#allocation15 + $0x120] sm:$0xff]
    %v5668 = vld [vmem:[#allocation15 + $0x128] sm:$0xff]
    %v5669 = vld [vmem:[#allocation15 + $0x130] sm:$0xff]
    %v5670 = vld [vmem:[#allocation15 + $0x138] sm:$0xff]
    %v5671 = vld [vmem:[#allocation15 + $0x140] sm:$0xff]
    %v5672 = vld [vmem:[#allocation15 + $0x148] sm:$0xff]
    %v5673 = vld [vmem:[#allocation15 + $0x150] sm:$0xff]
    %v5674 = vld [vmem:[#allocation15 + $0x158] sm:$0xff]
    %v5675 = vld [vmem:[#allocation15 + $0x160] sm:$0xff]
    %v5676 = vld [vmem:[#allocation15 + $0x168] sm:$0xff]
    %v5677 = vld [vmem:[#allocation15 + $0x170] sm:$0xff]
    %v5678 = vld [vmem:[#allocation15 + $0x178] sm:$0xff]
    %v5679 = vld [vmem:[#allocation15 + $0x180] sm:$0xff]
    %v5680 = vld [vmem:[#allocation15 + $0x188] sm:$0xff]
    %v5681 = vld [vmem:[#allocation15 + $0x190] sm:$0xff]
    %v5682 = vld [vmem:[#allocation15 + $0x198] sm:$0xff]
    %v5683 = vld [vmem:[#allocation15 + $0x1a0] sm:$0xff]
    %v5684 = vld [vmem:[#allocation15 + $0x1a8] sm:$0xff]
    %v5685 = vld [vmem:[#allocation15 + $0x1b0] sm:$0xff]
    %v5686 = vld [vmem:[#allocation15 + $0x1b8] sm:$0xff]
    %v5687 = vld [vmem:[#allocation15 + $0x1c0] sm:$0xff]
    %v5688 = vld [vmem:[#allocation15 + $0x1c8] sm:$0xff]
    %v5689 = vld [vmem:[#allocation15 + $0x1d0] sm:$0xff]
    %v5690 = vld [vmem:[#allocation15 + $0x1d8] sm:$0xff]
    %v5691 = vld [vmem:[#allocation15 + $0x1e0] sm:$0xff]
    %v5692 = vld [vmem:[#allocation15 + $0x1e8] sm:$0xff]
    %v5693 = vld [vmem:[#allocation15 + $0x1f0] sm:$0xff]
    %v5694 = vld [vmem:[#allocation15 + $0x1f8] sm:$0xff]
    %v5695 = vld [vmem:[#allocation15 + $0x200] sm:$0xff]
    %v5696 = vld [vmem:[#allocation15 + $0x208] sm:$0xff]
    %v5697 = vld [vmem:[#allocation15 + $0x210] sm:$0xff]
    %v5698 = vld [vmem:[#allocation15 + $0x218] sm:$0xff]
    %v5699 = vld [vmem:[#allocation15 + $0x220] sm:$0xff]
    %v5700 = vld [vmem:[#allocation15 + $0x228] sm:$0xff]
    %v5701 = vld [vmem:[#allocation15 + $0x230] sm:$0xff]
    %v5702 = vld [vmem:[#allocation15 + $0x238] sm:$0xff]
    %v5703 = vpack.c.bf16 %v3976, %v3975
    %v5776 = vunpack.c.l.b16 %v5631
    %v5777 = vunpack.c.h.b16 %v5631
    %v5778 = vunpack.c.l.b16 %v5632
    %v5779 = vunpack.c.h.b16 %v5632
    %v5780 = vunpack.c.l.b16 %v5633
    %v5781 = vunpack.c.h.b16 %v5633
    %v5782 = vunpack.c.l.b16 %v5634
    %v5783 = vunpack.c.h.b16 %v5634
    %v5784 = vunpack.c.l.b16 %v5635
    %v5785 = vunpack.c.h.b16 %v5635
    %v5786 = vunpack.c.l.b16 %v5636
    %v5787 = vunpack.c.h.b16 %v5636
    %v5788 = vunpack.c.l.b16 %v5637
    %v5789 = vunpack.c.h.b16 %v5637
    %v5790 = vunpack.c.l.b16 %v5638
    %v5791 = vunpack.c.h.b16 %v5638
    %v5792 = vunpack.c.l.b16 %v5639
    %v5793 = vunpack.c.h.b16 %v5639
    %v5794 = vunpack.c.l.b16 %v5640
    %v5795 = vunpack.c.h.b16 %v5640
    %v5796 = vunpack.c.l.b16 %v5641
    %v5797 = vunpack.c.h.b16 %v5641
    %v5798 = vunpack.c.l.b16 %v5642
    %v5799 = vunpack.c.h.b16 %v5642
    %v5800 = vunpack.c.l.b16 %v5643
    %v5801 = vunpack.c.h.b16 %v5643
    %v5802 = vunpack.c.l.b16 %v5644
    %v5803 = vunpack.c.h.b16 %v5644
    %v5804 = vunpack.c.l.b16 %v5645
    %v5805 = vunpack.c.h.b16 %v5645
    %v5806 = vunpack.c.l.b16 %v5646
    %v5807 = vunpack.c.h.b16 %v5646
    %v5808 = vunpack.c.l.b16 %v5647
    %v5809 = vunpack.c.h.b16 %v5647
    %v5810 = vunpack.c.l.b16 %v5648
    %v5811 = vunpack.c.h.b16 %v5648
    %v5812 = vunpack.c.l.b16 %v5649
    %v5813 = vunpack.c.h.b16 %v5649
    %v5814 = vunpack.c.l.b16 %v5650
    %v5815 = vunpack.c.h.b16 %v5650
    %v5816 = vunpack.c.l.b16 %v5651
    %v5817 = vunpack.c.h.b16 %v5651
    %v5818 = vunpack.c.l.b16 %v5652
    %v5819 = vunpack.c.h.b16 %v5652
    %v5820 = vunpack.c.l.b16 %v5653
    %v5821 = vunpack.c.h.b16 %v5653
    %v5822 = vunpack.c.l.b16 %v5654
    %v5823 = vunpack.c.h.b16 %v5654
    %v5824 = vunpack.c.l.b16 %v5655
    %v5825 = vunpack.c.h.b16 %v5655
    %v5826 = vunpack.c.l.b16 %v5656
    %v5827 = vunpack.c.h.b16 %v5656
    %v5828 = vunpack.c.l.b16 %v5657
    %v5829 = vunpack.c.h.b16 %v5657
    %v5830 = vunpack.c.l.b16 %v5658
    %v5831 = vunpack.c.h.b16 %v5658
    %v5832 = vunpack.c.l.b16 %v5659
    %v5833 = vunpack.c.h.b16 %v5659
    %v5834 = vunpack.c.l.b16 %v5660
    %v5835 = vunpack.c.h.b16 %v5660
    %v5836 = vunpack.c.l.b16 %v5661
    %v5837 = vunpack.c.h.b16 %v5661
    %v5838 = vunpack.c.l.b16 %v5662
    %v5839 = vunpack.c.h.b16 %v5662
    %v5840 = vunpack.c.l.b16 %v5663
    %v5841 = vunpack.c.h.b16 %v5663
    %v5842 = vunpack.c.l.b16 %v5664
    %v5843 = vunpack.c.h.b16 %v5664
    %v5844 = vunpack.c.l.b16 %v5665
    %v5845 = vunpack.c.h.b16 %v5665
    %v5846 = vunpack.c.l.b16 %v5666
    %v5847 = vunpack.c.h.b16 %v5666
    %v5848 = vunpack.c.l.b16 %v5667
    %v5849 = vunpack.c.h.b16 %v5667
    %v5850 = vunpack.c.l.b16 %v5668
    %v5851 = vunpack.c.h.b16 %v5668
    %v5852 = vunpack.c.l.b16 %v5669
    %v5853 = vunpack.c.h.b16 %v5669
    %v5854 = vunpack.c.l.b16 %v5670
    %v5855 = vunpack.c.h.b16 %v5670
    %v5856 = vunpack.c.l.b16 %v5671
    %v5857 = vunpack.c.h.b16 %v5671
    %v5858 = vunpack.c.l.b16 %v5672
    %v5859 = vunpack.c.h.b16 %v5672
    %v5860 = vunpack.c.l.b16 %v5673
    %v5861 = vunpack.c.h.b16 %v5673
    %v5862 = vunpack.c.l.b16 %v5674
    %v5863 = vunpack.c.h.b16 %v5674
    %v5864 = vunpack.c.l.b16 %v5675
    %v5865 = vunpack.c.h.b16 %v5675
    %v5866 = vunpack.c.l.b16 %v5676
    %v5867 = vunpack.c.h.b16 %v5676
    %v5868 = vunpack.c.l.b16 %v5677
    %v5869 = vunpack.c.h.b16 %v5677
    %v5870 = vunpack.c.l.b16 %v5678
    %v5871 = vunpack.c.h.b16 %v5678
    %v5872 = vunpack.c.l.b16 %v5679
    %v5873 = vunpack.c.h.b16 %v5679
    %v5874 = vunpack.c.l.b16 %v5680
    %v5875 = vunpack.c.h.b16 %v5680
    %v5876 = vunpack.c.l.b16 %v5681
    %v5877 = vunpack.c.h.b16 %v5681
    %v5878 = vunpack.c.l.b16 %v5682
    %v5879 = vunpack.c.h.b16 %v5682
    %v5880 = vunpack.c.l.b16 %v5683
    %v5881 = vunpack.c.h.b16 %v5683
    %v5882 = vunpack.c.l.b16 %v5684
    %v5883 = vunpack.c.h.b16 %v5684
    %v5884 = vunpack.c.l.b16 %v5685
    %v5885 = vunpack.c.h.b16 %v5685
    %v5886 = vunpack.c.l.b16 %v5686
    %v5887 = vunpack.c.h.b16 %v5686
    %v5888 = vunpack.c.l.b16 %v5687
    %v5889 = vunpack.c.h.b16 %v5687
    %v5890 = vunpack.c.l.b16 %v5688
    %v5891 = vunpack.c.h.b16 %v5688
    %v5892 = vunpack.c.l.b16 %v5689
    %v5893 = vunpack.c.h.b16 %v5689
    %v5894 = vunpack.c.l.b16 %v5690
    %v5895 = vunpack.c.h.b16 %v5690
    %v5896 = vunpack.c.l.b16 %v5691
    %v5897 = vunpack.c.h.b16 %v5691
    %v5898 = vunpack.c.l.b16 %v5692
    %v5899 = vunpack.c.h.b16 %v5692
    %v5900 = vunpack.c.l.b16 %v5693
    %v5901 = vunpack.c.h.b16 %v5693
    %v5902 = vunpack.c.l.b16 %v5694
    %v5903 = vunpack.c.h.b16 %v5694
    %v5904 = vunpack.c.l.b16 %v5695
    %v5905 = vunpack.c.h.b16 %v5695
    %v5906 = vunpack.c.l.b16 %v5696
    %v5907 = vunpack.c.h.b16 %v5696
    %v5908 = vunpack.c.l.b16 %v5697
    %v5909 = vunpack.c.h.b16 %v5697
    %v5910 = vunpack.c.l.b16 %v5698
    %v5911 = vunpack.c.h.b16 %v5698
    %v5912 = vunpack.c.l.b16 %v5699
    %v5913 = vunpack.c.h.b16 %v5699
    %v5914 = vunpack.c.l.b16 %v5700
    %v5915 = vunpack.c.h.b16 %v5700
    %v5916 = vunpack.c.l.b16 %v5701
    %v5917 = vunpack.c.h.b16 %v5701
    %v5918 = vunpack.c.l.b16 %v5702
    %v5919 = vunpack.c.h.b16 %v5702
    %v5920 = vpack.c.b16 %v5794, %v5776
    %v5921 = vpack.c.b16 %v5795, %v5777
    %v5922 = vpack.c.b16 %v5796, %v5778
    %v5923 = vpack.c.b16 %v5797, %v5779
    %v5924 = vpack.c.b16 %v5798, %v5780
    %v5925 = vpack.c.b16 %v5799, %v5781
    %v5926 = vpack.c.b16 %v5800, %v5782
    %v5927 = vpack.c.b16 %v5801, %v5783
    %v5928 = vpack.c.b16 %v5802, %v5784
    %v5929 = vpack.c.b16 %v5803, %v5785
    %v5930 = vpack.c.b16 %v5804, %v5786
    %v5931 = vpack.c.b16 %v5805, %v5787
    %v5932 = vpack.c.b16 %v5806, %v5788
    %v5933 = vpack.c.b16 %v5807, %v5789
    %v5934 = vpack.c.b16 %v5808, %v5790
    %v5935 = vpack.c.b16 %v5809, %v5791
    %v5936 = vpack.c.b16 %v5810, %v5792
    %v5937 = vpack.c.b16 %v5811, %v5793
    %v5938 = vpack.c.b16 %v5830, %v5812
    %v5939 = vpack.c.b16 %v5831, %v5813
    %v5940 = vpack.c.b16 %v5832, %v5814
    %v5941 = vpack.c.b16 %v5833, %v5815
    %v5942 = vpack.c.b16 %v5834, %v5816
    %v5943 = vpack.c.b16 %v5835, %v5817
    %v5944 = vpack.c.b16 %v5836, %v5818
    %v5945 = vpack.c.b16 %v5837, %v5819
    %v5946 = vpack.c.b16 %v5838, %v5820
    %v5947 = vpack.c.b16 %v5839, %v5821
    %v5948 = vpack.c.b16 %v5840, %v5822
    %v5949 = vpack.c.b16 %v5841, %v5823
    %v5950 = vpack.c.b16 %v5842, %v5824
    %v5951 = vpack.c.b16 %v5843, %v5825
    %v5952 = vpack.c.b16 %v5844, %v5826
    %v5953 = vpack.c.b16 %v5845, %v5827
    %v5954 = vpack.c.b16 %v5846, %v5828
    %v5955 = vpack.c.b16 %v5847, %v5829
    %v5956 = vpack.c.b16 %v5866, %v5848
    %v5957 = vpack.c.b16 %v5867, %v5849
    %v5958 = vpack.c.b16 %v5868, %v5850
    %v5959 = vpack.c.b16 %v5869, %v5851
    %v5960 = vpack.c.b16 %v5870, %v5852
    %v5961 = vpack.c.b16 %v5871, %v5853
    %v5962 = vpack.c.b16 %v5872, %v5854
    %v5963 = vpack.c.b16 %v5873, %v5855
    %v5964 = vpack.c.b16 %v5874, %v5856
    %v5965 = vpack.c.b16 %v5875, %v5857
    %v5966 = vpack.c.b16 %v5876, %v5858
    %v5967 = vpack.c.b16 %v5877, %v5859
    %v5968 = vpack.c.b16 %v5878, %v5860
    %v5969 = vpack.c.b16 %v5879, %v5861
    %v5970 = vpack.c.b16 %v5880, %v5862
    %v5971 = vpack.c.b16 %v5881, %v5863
    %v5972 = vpack.c.b16 %v5882, %v5864
    %v5973 = vpack.c.b16 %v5883, %v5865
    %v5974 = vpack.c.b16 %v5902, %v5884
    %v5975 = vpack.c.b16 %v5903, %v5885
    %v5976 = vpack.c.b16 %v5904, %v5886
    %v5977 = vpack.c.b16 %v5905, %v5887
    %v5978 = vpack.c.b16 %v5906, %v5888
    %v5979 = vpack.c.b16 %v5907, %v5889
    %v5980 = vpack.c.b16 %v5908, %v5890
    %v5981 = vpack.c.b16 %v5909, %v5891
    %v5982 = vpack.c.b16 %v5910, %v5892
    %v5983 = vpack.c.b16 %v5911, %v5893
    %v5984 = vpack.c.b16 %v5912, %v5894
    %v5985 = vpack.c.b16 %v5913, %v5895
    %v5986 = vpack.c.b16 %v5914, %v5896
    %v5987 = vpack.c.b16 %v5915, %v5897
    %v5988 = vpack.c.b16 %v5916, %v5898
    %v5989 = vpack.c.b16 %v5917, %v5899
    %v5990 = vpack.c.b16 %v5918, %v5900
    %v5991 = vpack.c.b16 %v5919, %v5901
    %v6065 = vsel %vm294, %v5703, 0
    %6067 = vmatprep.subr.bf16.mxu0 %v5921
    %6068 = vmatpush1.bf16.msra.mxu0 %v5920
    %6069 = vmatprep.subr.bf16.mxu0 %v5939
    %6070 = vmatpush1.bf16.msra.mxu0 %v5938
    %6071 = vmatprep.subr.bf16.mxu0 %v5957
    %6072 = vmatpush1.bf16.msra.mxu0 %v5956
    %6073 = vmatprep.subr.bf16.mxu0 %v5975
    %6074 = vmatpush1.bf16.msra.mxu0 %v5974
    %6075 = vmatprep.subr.bf16.mxu0 0
    %6076 = vmatpush1.bf16.msra.mxu0 0
    %6077 = vmatprep.subr.bf16.mxu0 0
    %6078 = vmatpush1.bf16.msra.mxu0 0
    %6079 = vmatprep.subr.bf16.mxu0 0
    %6080 = vmatpush1.bf16.msra.mxu0 0
    %6081 = vmatprep.subr.bf16.mxu0 0
    %6082 = vmatpush1.bf16.msra.mxu0 0
    %6083 = vmatprep.subr.bf16.mxu0 0
    %6084 = vmatpush1.bf16.msra.mxu0 0
    %6085 = vmatprep.subr.bf16.mxu0 0
    %6086 = vmatpush1.bf16.msra.mxu0 0
    %6087 = vmatprep.subr.bf16.mxu0 0
    %6088 = vmatpush1.bf16.msra.mxu0 0
    %6089 = vmatprep.subr.bf16.mxu0 0
    %6090 = vmatpush1.bf16.msra.mxu0 0
    %6091 = vmatprep.subr.bf16.mxu0 0
    %6092 = vmatpush1.bf16.msra.mxu0 0
    %6093 = vmatprep.subr.bf16.mxu0 0
    %6094 = vmatpush1.bf16.msra.mxu0 0
    %6095 = vmatprep.subr.bf16.mxu0 0
    %6096 = vmatpush1.bf16.msra.mxu0 0
    %6097 = vmatprep.subr.bf16.mxu0 0
    %6098 = vmatpush1.bf16.msra.mxu0 0
    %6099 = vmatprep.mubr.bf16.mxu0 0
    %6100 = vmatmul.mubr.bf16.gmra.mrb[0].mxu0 %v6065
    %v6101 = vpop.f32.mrb[0].mxu0
    %v6102 = vadd.f32 0.0, %v6101
    %v6103 = vpop.f32.mrb[0].mxu0
    %v6104 = vadd.f32 0.0, %v6103
    %v6105 = vpop.f32.mrb[0].mxu0
    %v6106 = vadd.f32 0.0, %v6105
    %v6107 = vpop.f32.mrb[0].mxu0
    %v6108 = vadd.f32 0.0, %v6107
    %6109 = vdwg.mxu0
    %6110 = vmatprep.subr.bf16.mxu0 %v5923
    %6111 = vmatpush1.bf16.msra.mxu0 %v5922
    %6112 = vmatprep.subr.bf16.mxu0 %v5941
    %6113 = vmatpush1.bf16.msra.mxu0 %v5940
    %6114 = vmatprep.subr.bf16.mxu0 %v5959
    %6115 = vmatpush1.bf16.msra.mxu0 %v5958
    %6116 = vmatprep.subr.bf16.mxu0 %v5977
    %6117 = vmatpush1.bf16.msra.mxu0 %v5976
    %6118 = vmatprep.subr.bf16.mxu0 0
    %6119 = vmatpush1.bf16.msra.mxu0 0
    %6120 = vmatprep.subr.bf16.mxu0 0
    %6121 = vmatpush1.bf16.msra.mxu0 0
    %6122 = vmatprep.subr.bf16.mxu0 0
    %6123 = vmatpush1.bf16.msra.mxu0 0
    %6124 = vmatprep.subr.bf16.mxu0 0
    %6125 = vmatpush1.bf16.msra.mxu0 0
    %6126 = vmatprep.subr.bf16.mxu0 0
    %6127 = vmatpush1.bf16.msra.mxu0 0
    %6128 = vmatprep.subr.bf16.mxu0 0
    %6129 = vmatpush1.bf16.msra.mxu0 0
    %6130 = vmatprep.subr.bf16.mxu0 0
    %6131 = vmatpush1.bf16.msra.mxu0 0
    %6132 = vmatprep.subr.bf16.mxu0 0
    %6133 = vmatpush1.bf16.msra.mxu0 0
    %6134 = vmatprep.subr.bf16.mxu0 0
    %6135 = vmatpush1.bf16.msra.mxu0 0
    %6136 = vmatprep.subr.bf16.mxu0 0
    %6137 = vmatpush1.bf16.msra.mxu0 0
    %6138 = vmatprep.subr.bf16.mxu0 0
    %6139 = vmatpush1.bf16.msra.mxu0 0
    %6140 = vmatprep.subr.bf16.mxu0 0
    %6141 = vmatpush1.bf16.msra.mxu0 0
    %6142 = vmatprep.mubr.bf16.mxu0 0
    %6143 = vmatmul.mubr.bf16.gmra.mrb[0].mxu0 %v6065
    %v6144 = vpop.f32.mrb[0].mxu0
    %v6145 = vadd.f32 0.0, %v6144
    %v6146 = vpop.f32.mrb[0].mxu0
    %v6147 = vadd.f32 0.0, %v6146
    %v6148 = vpop.f32.mrb[0].mxu0
    %v6149 = vadd.f32 0.0, %v6148
    %v6150 = vpop.f32.mrb[0].mxu0
    %v6151 = vadd.f32 0.0, %v6150
    %6152 = vdwg.mxu0
    %6153 = vmatprep.subr.bf16.mxu0 %v5925
    %6154 = vmatpush1.bf16.msra.mxu0 %v5924
    %6155 = vmatprep.subr.bf16.mxu0 %v5943
    %6156 = vmatpush1.bf16.msra.mxu0 %v5942
    %6157 = vmatprep.subr.bf16.mxu0 %v5961
    %6158 = vmatpush1.bf16.msra.mxu0 %v5960
    %6159 = vmatprep.subr.bf16.mxu0 %v5979
    %6160 = vmatpush1.bf16.msra.mxu0 %v5978
    %6161 = vmatprep.subr.bf16.mxu0 0
    %6162 = vmatpush1.bf16.msra.mxu0 0
    %6163 = vmatprep.subr.bf16.mxu0 0
    %6164 = vmatpush1.bf16.msra.mxu0 0
    %6165 = vmatprep.subr.bf16.mxu0 0
    %6166 = vmatpush1.bf16.msra.mxu0 0
    %6167 = vmatprep.subr.bf16.mxu0 0
    %6168 = vmatpush1.bf16.msra.mxu0 0
    %6169 = vmatprep.subr.bf16.mxu0 0
    %6170 = vmatpush1.bf16.msra.mxu0 0
    %6171 = vmatprep.subr.bf16.mxu0 0
    %6172 = vmatpush1.bf16.msra.mxu0 0
    %6173 = vmatprep.subr.bf16.mxu0 0
    %6174 = vmatpush1.bf16.msra.mxu0 0
    %6175 = vmatprep.subr.bf16.mxu0 0
    %6176 = vmatpush1.bf16.msra.mxu0 0
    %6177 = vmatprep.subr.bf16.mxu0 0
    %6178 = vmatpush1.bf16.msra.mxu0 0
    %6179 = vmatprep.subr.bf16.mxu0 0
    %6180 = vmatpush1.bf16.msra.mxu0 0
    %6181 = vmatprep.subr.bf16.mxu0 0
    %6182 = vmatpush1.bf16.msra.mxu0 0
    %6183 = vmatprep.subr.bf16.mxu0 0
    %6184 = vmatpush1.bf16.msra.mxu0 0
    %6185 = vmatprep.mubr.bf16.mxu0 0
    %6186 = vmatmul.mubr.bf16.gmra.mrb[0].mxu0 %v6065
    %v6187 = vpop.f32.mrb[0].mxu0
    %v6188 = vadd.f32 0.0, %v6187
    %v6189 = vpop.f32.mrb[0].mxu0
    %v6190 = vadd.f32 0.0, %v6189
    %v6191 = vpop.f32.mrb[0].mxu0
    %v6192 = vadd.f32 0.0, %v6191
    %v6193 = vpop.f32.mrb[0].mxu0
    %v6194 = vadd.f32 0.0, %v6193
    %6195 = vdwg.mxu0
    %6196 = vmatprep.subr.bf16.mxu0 %v5927
    %6197 = vmatpush1.bf16.msra.mxu0 %v5926
    %6198 = vmatprep.subr.bf16.mxu0 %v5945
    %6199 = vmatpush1.bf16.msra.mxu0 %v5944
    %6200 = vmatprep.subr.bf16.mxu0 %v5963
    %6201 = vmatpush1.bf16.msra.mxu0 %v5962
    %6202 = vmatprep.subr.bf16.mxu0 %v5981
    %6203 = vmatpush1.bf16.msra.mxu0 %v5980
    %6204 = vmatprep.subr.bf16.mxu0 0
    %6205 = vmatpush1.bf16.msra.mxu0 0
    %6206 = vmatprep.subr.bf16.mxu0 0
    %6207 = vmatpush1.bf16.msra.mxu0 0
    %6208 = vmatprep.subr.bf16.mxu0 0
    %6209 = vmatpush1.bf16.msra.mxu0 0
    %6210 = vmatprep.subr.bf16.mxu0 0
    %6211 = vmatpush1.bf16.msra.mxu0 0
    %6212 = vmatprep.subr.bf16.mxu0 0
    %6213 = vmatpush1.bf16.msra.mxu0 0
    %6214 = vmatprep.subr.bf16.mxu0 0
    %6215 = vmatpush1.bf16.msra.mxu0 0
    %6216 = vmatprep.subr.bf16.mxu0 0
    %6217 = vmatpush1.bf16.msra.mxu0 0
    %6218 = vmatprep.subr.bf16.mxu0 0
    %6219 = vmatpush1.bf16.msra.mxu0 0
    %6220 = vmatprep.subr.bf16.mxu0 0
    %6221 = vmatpush1.bf16.msra.mxu0 0
    %6222 = vmatprep.subr.bf16.mxu0 0
    %6223 = vmatpush1.bf16.msra.mxu0 0
    %6224 = vmatprep.subr.bf16.mxu0 0
    %6225 = vmatpush1.bf16.msra.mxu0 0
    %6226 = vmatprep.subr.bf16.mxu0 0
    %6227 = vmatpush1.bf16.msra.mxu0 0
    %6228 = vmatprep.mubr.bf16.mxu0 0
    %6229 = vmatmul.mubr.bf16.gmra.mrb[0].mxu0 %v6065
    %v6230 = vpop.f32.mrb[0].mxu0
    %v6231 = vadd.f32 0.0, %v6230
    %v6232 = vpop.f32.mrb[0].mxu0
    %v6233 = vadd.f32 0.0, %v6232
    %v6234 = vpop.f32.mrb[0].mxu0
    %v6235 = vadd.f32 0.0, %v6234
    %v6236 = vpop.f32.mrb[0].mxu0
    %v6237 = vadd.f32 0.0, %v6236
    %6238 = vdwg.mxu0
    %6239 = vmatprep.subr.bf16.mxu0 %v5929
    %6240 = vmatpush1.bf16.msra.mxu0 %v5928
    %6241 = vmatprep.subr.bf16.mxu0 %v5947
    %6242 = vmatpush1.bf16.msra.mxu0 %v5946
    %6243 = vmatprep.subr.bf16.mxu0 %v5965
    %6244 = vmatpush1.bf16.msra.mxu0 %v5964
    %6245 = vmatprep.subr.bf16.mxu0 %v5983
    %6246 = vmatpush1.bf16.msra.mxu0 %v5982
    %6247 = vmatprep.subr.bf16.mxu0 0
    %6248 = vmatpush1.bf16.msra.mxu0 0
    %6249 = vmatprep.subr.bf16.mxu0 0
    %6250 = vmatpush1.bf16.msra.mxu0 0
    %6251 = vmatprep.subr.bf16.mxu0 0
    %6252 = vmatpush1.bf16.msra.mxu0 0
    %6253 = vmatprep.subr.bf16.mxu0 0
    %6254 = vmatpush1.bf16.msra.mxu0 0
    %6255 = vmatprep.subr.bf16.mxu0 0
    %6256 = vmatpush1.bf16.msra.mxu0 0
    %6257 = vmatprep.subr.bf16.mxu0 0
    %6258 = vmatpush1.bf16.msra.mxu0 0
    %6259 = vmatprep.subr.bf16.mxu0 0
    %6260 = vmatpush1.bf16.msra.mxu0 0
    %6261 = vmatprep.subr.bf16.mxu0 0
    %6262 = vmatpush1.bf16.msra.mxu0 0
    %6263 = vmatprep.subr.bf16.mxu0 0
    %6264 = vmatpush1.bf16.msra.mxu0 0
    %6265 = vmatprep.subr.bf16.mxu0 0
    %6266 = vmatpush1.bf16.msra.mxu0 0
    %6267 = vmatprep.subr.bf16.mxu0 0
    %6268 = vmatpush1.bf16.msra.mxu0 0
    %6269 = vmatprep.subr.bf16.mxu0 0
    %6270 = vmatpush1.bf16.msra.mxu0 0
    %6271 = vmatprep.mubr.bf16.mxu0 0
    %6272 = vmatmul.mubr.bf16.gmra.mrb[0].mxu0 %v6065
    %v6273 = vpop.f32.mrb[0].mxu0
    %v6274 = vadd.f32 0.0, %v6273
    %v6275 = vpop.f32.mrb[0].mxu0
    %v6276 = vadd.f32 0.0, %v6275
    %v6277 = vpop.f32.mrb[0].mxu0
    %v6278 = vadd.f32 0.0, %v6277
    %v6279 = vpop.f32.mrb[0].mxu0
    %v6280 = vadd.f32 0.0, %v6279
    %6281 = vdwg.mxu0
    %6282 = vmatprep.subr.bf16.mxu0 %v5931
    %6283 = vmatpush1.bf16.msra.mxu0 %v5930
    %6284 = vmatprep.subr.bf16.mxu0 %v5949
    %6285 = vmatpush1.bf16.msra.mxu0 %v5948
    %6286 = vmatprep.subr.bf16.mxu0 %v5967
    %6287 = vmatpush1.bf16.msra.mxu0 %v5966
    %6288 = vmatprep.subr.bf16.mxu0 %v5985
    %6289 = vmatpush1.bf16.msra.mxu0 %v5984
    %6290 = vmatprep.subr.bf16.mxu0 0
    %6291 = vmatpush1.bf16.msra.mxu0 0
    %6292 = vmatprep.subr.bf16.mxu0 0
    %6293 = vmatpush1.bf16.msra.mxu0 0
    %6294 = vmatprep.subr.bf16.mxu0 0
    %6295 = vmatpush1.bf16.msra.mxu0 0
    %6296 = vmatprep.subr.bf16.mxu0 0
    %6297 = vmatpush1.bf16.msra.mxu0 0
    %6298 = vmatprep.subr.bf16.mxu0 0
    %6299 = vmatpush1.bf16.msra.mxu0 0
    %6300 = vmatprep.subr.bf16.mxu0 0
    %6301 = vmatpush1.bf16.msra.mxu0 0
    %6302 = vmatprep.subr.bf16.mxu0 0
    %6303 = vmatpush1.bf16.msra.mxu0 0
    %6304 = vmatprep.subr.bf16.mxu0 0
    %6305 = vmatpush1.bf16.msra.mxu0 0
    %6306 = vmatprep.subr.bf16.mxu0 0
    %6307 = vmatpush1.bf16.msra.mxu0 0
    %6308 = vmatprep.subr.bf16.mxu0 0
    %6309 = vmatpush1.bf16.msra.mxu0 0
    %6310 = vmatprep.subr.bf16.mxu0 0
    %6311 = vmatpush1.bf16.msra.mxu0 0
    %6312 = vmatprep.subr.bf16.mxu0 0
    %6313 = vmatpush1.bf16.msra.mxu0 0
    %6314 = vmatprep.mubr.bf16.mxu0 0
    %6315 = vmatmul.mubr.bf16.gmra.mrb[0].mxu0 %v6065
    %v6316 = vpop.f32.mrb[0].mxu0
    %v6317 = vadd.f32 0.0, %v6316
    %v6318 = vpop.f32.mrb[0].mxu0
    %v6319 = vadd.f32 0.0, %v6318
    %v6320 = vpop.f32.mrb[0].mxu0
    %v6321 = vadd.f32 0.0, %v6320
    %v6322 = vpop.f32.mrb[0].mxu0
    %v6323 = vadd.f32 0.0, %v6322
    %6324 = vdwg.mxu0
    %6325 = vmatprep.subr.bf16.mxu0 %v5933
    %6326 = vmatpush1.bf16.msra.mxu0 %v5932
    %6327 = vmatprep.subr.bf16.mxu0 %v5951
    %6328 = vmatpush1.bf16.msra.mxu0 %v5950
    %6329 = vmatprep.subr.bf16.mxu0 %v5969
    %6330 = vmatpush1.bf16.msra.mxu0 %v5968
    %6331 = vmatprep.subr.bf16.mxu0 %v5987
    %6332 = vmatpush1.bf16.msra.mxu0 %v5986
    %6333 = vmatprep.subr.bf16.mxu0 0
    %6334 = vmatpush1.bf16.msra.mxu0 0
    %6335 = vmatprep.subr.bf16.mxu0 0
    %6336 = vmatpush1.bf16.msra.mxu0 0
    %6337 = vmatprep.subr.bf16.mxu0 0
    %6338 = vmatpush1.bf16.msra.mxu0 0
    %6339 = vmatprep.subr.bf16.mxu0 0
    %6340 = vmatpush1.bf16.msra.mxu0 0
    %6341 = vmatprep.subr.bf16.mxu0 0
    %6342 = vmatpush1.bf16.msra.mxu0 0
    %6343 = vmatprep.subr.bf16.mxu0 0
    %6344 = vmatpush1.bf16.msra.mxu0 0
    %6345 = vmatprep.subr.bf16.mxu0 0
    %6346 = vmatpush1.bf16.msra.mxu0 0
    %6347 = vmatprep.subr.bf16.mxu0 0
    %6348 = vmatpush1.bf16.msra.mxu0 0
    %6349 = vmatprep.subr.bf16.mxu0 0
    %6350 = vmatpush1.bf16.msra.mxu0 0
    %6351 = vmatprep.subr.bf16.mxu0 0
    %6352 = vmatpush1.bf16.msra.mxu0 0
    %6353 = vmatprep.subr.bf16.mxu0 0
    %6354 = vmatpush1.bf16.msra.mxu0 0
    %6355 = vmatprep.subr.bf16.mxu0 0
    %6356 = vmatpush1.bf16.msra.mxu0 0
    %6357 = vmatprep.mubr.bf16.mxu0 0
    %6358 = vmatmul.mubr.bf16.gmra.mrb[0].mxu0 %v6065
    %v6359 = vpop.f32.mrb[0].mxu0
    %v6360 = vadd.f32 0.0, %v6359
    %v6361 = vpop.f32.mrb[0].mxu0
    %v6362 = vadd.f32 0.0, %v6361
    %v6363 = vpop.f32.mrb[0].mxu0
    %v6364 = vadd.f32 0.0, %v6363
    %v6365 = vpop.f32.mrb[0].mxu0
    %v6366 = vadd.f32 0.0, %v6365
    %6367 = vdwg.mxu0
    %6368 = vmatprep.subr.bf16.mxu0 %v5935
    %6369 = vmatpush1.bf16.msra.mxu0 %v5934
    %6370 = vmatprep.subr.bf16.mxu0 %v5953
    %6371 = vmatpush1.bf16.msra.mxu0 %v5952
    %6372 = vmatprep.subr.bf16.mxu0 %v5971
    %6373 = vmatpush1.bf16.msra.mxu0 %v5970
    %6374 = vmatprep.subr.bf16.mxu0 %v5989
    %6375 = vmatpush1.bf16.msra.mxu0 %v5988
    %6376 = vmatprep.subr.bf16.mxu0 0
    %6377 = vmatpush1.bf16.msra.mxu0 0
    %6378 = vmatprep.subr.bf16.mxu0 0
    %6379 = vmatpush1.bf16.msra.mxu0 0
    %6380 = vmatprep.subr.bf16.mxu0 0
    %6381 = vmatpush1.bf16.msra.mxu0 0
    %6382 = vmatprep.subr.bf16.mxu0 0
    %6383 = vmatpush1.bf16.msra.mxu0 0
    %6384 = vmatprep.subr.bf16.mxu0 0
    %6385 = vmatpush1.bf16.msra.mxu0 0
    %6386 = vmatprep.subr.bf16.mxu0 0
    %6387 = vmatpush1.bf16.msra.mxu0 0
    %6388 = vmatprep.subr.bf16.mxu0 0
    %6389 = vmatpush1.bf16.msra.mxu0 0
    %6390 = vmatprep.subr.bf16.mxu0 0
    %6391 = vmatpush1.bf16.msra.mxu0 0
    %6392 = vmatprep.subr.bf16.mxu0 0
    %6393 = vmatpush1.bf16.msra.mxu0 0
    %6394 = vmatprep.subr.bf16.mxu0 0
    %6395 = vmatpush1.bf16.msra.mxu0 0
    %6396 = vmatprep.subr.bf16.mxu0 0
    %6397 = vmatpush1.bf16.msra.mxu0 0
    %6398 = vmatprep.subr.bf16.mxu0 0
    %6399 = vmatpush1.bf16.msra.mxu0 0
    %6400 = vmatprep.mubr.bf16.mxu0 0
    %6401 = vmatmul.mubr.bf16.gmra.mrb[0].mxu0 %v6065
    %v6402 = vpop.f32.mrb[0].mxu0
    %v6403 = vadd.f32 0.0, %v6402
    %v6404 = vpop.f32.mrb[0].mxu0
    %v6405 = vadd.f32 0.0, %v6404
    %v6406 = vpop.f32.mrb[0].mxu0
    %v6407 = vadd.f32 0.0, %v6406
    %v6408 = vpop.f32.mrb[0].mxu0
    %v6409 = vadd.f32 0.0, %v6408
    %6410 = vdwg.mxu0
    %6411 = vmatprep.subr.bf16.mxu0 %v5937
    %6412 = vmatpush1.bf16.msra.mxu0 %v5936
    %6413 = vmatprep.subr.bf16.mxu0 %v5955
    %6414 = vmatpush1.bf16.msra.mxu0 %v5954
    %6415 = vmatprep.subr.bf16.mxu0 %v5973
    %6416 = vmatpush1.bf16.msra.mxu0 %v5972
    %6417 = vmatprep.subr.bf16.mxu0 %v5991
    %6418 = vmatpush1.bf16.msra.mxu0 %v5990
    %6419 = vmatprep.subr.bf16.mxu0 0
    %6420 = vmatpush1.bf16.msra.mxu0 0
    %6421 = vmatprep.subr.bf16.mxu0 0
    %6422 = vmatpush1.bf16.msra.mxu0 0
    %6423 = vmatprep.subr.bf16.mxu0 0
    %6424 = vmatpush1.bf16.msra.mxu0 0
    %6425 = vmatprep.subr.bf16.mxu0 0
    %6426 = vmatpush1.bf16.msra.mxu0 0
    %6427 = vmatprep.subr.bf16.mxu0 0
    %6428 = vmatpush1.bf16.msra.mxu0 0
    %6429 = vmatprep.subr.bf16.mxu0 0
    %6430 = vmatpush1.bf16.msra.mxu0 0
    %6431 = vmatprep.subr.bf16.mxu0 0
    %6432 = vmatpush1.bf16.msra.mxu0 0
    %6433 = vmatprep.subr.bf16.mxu0 0
    %6434 = vmatpush1.bf16.msra.mxu0 0
    %6435 = vmatprep.subr.bf16.mxu0 0
    %6436 = vmatpush1.bf16.msra.mxu0 0
    %6437 = vmatprep.subr.bf16.mxu0 0
    %6438 = vmatpush1.bf16.msra.mxu0 0
    %6439 = vmatprep.subr.bf16.mxu0 0
    %6440 = vmatpush1.bf16.msra.mxu0 0
    %6441 = vmatprep.subr.bf16.mxu0 0
    %6442 = vmatpush1.bf16.msra.mxu0 0
    %6443 = vmatprep.mubr.bf16.mxu0 0
    %6444 = vmatmul.mubr.bf16.gmra.mrb[0].mxu0 %v6065
    %v6445 = vpop.f32.mrb[0].mxu0
    %v6446 = vadd.f32 0.0, %v6445
    %v6447 = vpop.f32.mrb[0].mxu0
    %v6448 = vadd.f32 0.0, %v6447
    %v6449 = vpop.f32.mrb[0].mxu0
    %v6450 = vadd.f32 0.0, %v6449
    %v6451 = vpop.f32.mrb[0].mxu0
    %v6452 = vadd.f32 0.0, %v6451
    %6453 = vdwg.mxu0
    %v6454 = vld [vmem:[%s14] sm:$0xf]
    %v6455 = vld [vmem:[%s14 + $0x4] sm:$0xf]
    %v6456 = vpack.c.bf16 %v6106, %v6102
    %v6457 = vpack.c.bf16 %v6108, %v6104
    %v6458 = vld [vmem:[%s4804] sm:$0xf]
    %v6459 = vld [vmem:[%s4804 + $0x4] sm:$0xf]
    %v6460 = vpack.c.bf16 %v6149, %v6145
    %v6461 = vpack.c.bf16 %v6151, %v6147
    %v6464 = vunpack.c.l.b16 %v6458
    %v6465 = vunpack.c.l.b16 %v6459
    %v6466 = vpack.c.b16 %v6465, %v6464
    %v6468 = vsel %vm560, %v6466, 0
    %6470 = vmatprep.subr.bf16.mxu0 %v6461
    %6471 = vmatpush1.bf16.msra.mxu0 %v6460
    %6472 = vmatprep.subr.bf16.mxu0 0
    %6473 = vmatpush1.bf16.msra.mxu0 0
    %6474 = vmatprep.subr.bf16.mxu0 0
    %6475 = vmatpush1.bf16.msra.mxu0 0
    %6476 = vmatprep.subr.bf16.mxu0 0
    %6477 = vmatpush1.bf16.msra.mxu0 0
    %6478 = vmatprep.subr.bf16.mxu0 0
    %6479 = vmatpush1.bf16.msra.mxu0 0
    %6480 = vmatprep.subr.bf16.mxu0 0
    %6481 = vmatpush1.bf16.msra.mxu0 0
    %6482 = vmatprep.subr.bf16.mxu0 0
    %6483 = vmatpush1.bf16.msra.mxu0 0
    %6484 = vmatprep.subr.bf16.mxu0 0
    %6485 = vmatpush1.bf16.msra.mxu0 0
    %6486 = vmatprep.subr.bf16.mxu0 0
    %6487 = vmatpush1.bf16.msra.mxu0 0
    %6488 = vmatprep.subr.bf16.mxu0 0
    %6489 = vmatpush1.bf16.msra.mxu0 0
    %6490 = vmatprep.subr.bf16.mxu0 0
    %6491 = vmatpush1.bf16.msra.mxu0 0
    %6492 = vmatprep.subr.bf16.mxu0 0
    %6493 = vmatpush1.bf16.msra.mxu0 0
    %6494 = vmatprep.subr.bf16.mxu0 0
    %6495 = vmatpush1.bf16.msra.mxu0 0
    %6496 = vmatprep.subr.bf16.mxu0 0
    %6497 = vmatpush1.bf16.msra.mxu0 0
    %6498 = vmatprep.subr.bf16.mxu0 0
    %6499 = vmatpush1.bf16.msra.mxu0 0
    %6500 = vmatprep.subr.bf16.mxu0 0
    %6501 = vmatpush1.bf16.msra.mxu0 0
    %6502 = vmatprep.mubr.bf16.mxu0 0
    %6503 = vmatmul.mubr.bf16.gmra.mrb[0].mxu0 %v6468
    %v6504 = vpop.f32.mrb[0].mxu0
    %v6505 = vadd.f32 0.0, %v6504
    %v6506 = vpop.f32.mrb[0].mxu0
    %v6507 = vadd.f32 0.0, %v6506
    %v6508 = vpop.f32.mrb[0].mxu0
    %v6509 = vadd.f32 0.0, %v6508
    %v6510 = vpop.f32.mrb[0].mxu0
    %v6511 = vadd.f32 0.0, %v6510
    %6512 = vdwg.mxu0
    %v6515 = vunpack.c.l.b16 %v6454
    %v6516 = vunpack.c.l.b16 %v6455
    %v6517 = vpack.c.b16 %v6516, %v6515
    %v6519 = vsel %vm560, %v6517, 0
    %6521 = vmatprep.subr.bf16.mxu0 %v6457
    %6522 = vmatpush1.bf16.msra.mxu0 %v6456
    %6523 = vmatprep.subr.bf16.mxu0 0
    %6524 = vmatpush1.bf16.msra.mxu0 0
    %6525 = vmatprep.subr.bf16.mxu0 0
    %6526 = vmatpush1.bf16.msra.mxu0 0
    %6527 = vmatprep.subr.bf16.mxu0 0
    %6528 = vmatpush1.bf16.msra.mxu0 0
    %6529 = vmatprep.subr.bf16.mxu0 0
    %6530 = vmatpush1.bf16.msra.mxu0 0
    %6531 = vmatprep.subr.bf16.mxu0 0
    %6532 = vmatpush1.bf16.msra.mxu0 0
    %6533 = vmatprep.subr.bf16.mxu0 0
    %6534 = vmatpush1.bf16.msra.mxu0 0
    %6535 = vmatprep.subr.bf16.mxu0 0
    %6536 = vmatpush1.bf16.msra.mxu0 0
    %6537 = vmatprep.subr.bf16.mxu0 0
    %6538 = vmatpush1.bf16.msra.mxu0 0
    %6539 = vmatprep.subr.bf16.mxu0 0
    %6540 = vmatpush1.bf16.msra.mxu0 0
    %6541 = vmatprep.subr.bf16.mxu0 0
    %6542 = vmatpush1.bf16.msra.mxu0 0
    %6543 = vmatprep.subr.bf16.mxu0 0
    %6544 = vmatpush1.bf16.msra.mxu0 0
    %6545 = vmatprep.subr.bf16.mxu0 0
    %6546 = vmatpush1.bf16.msra.mxu0 0
    %6547 = vmatprep.subr.bf16.mxu0 0
    %6548 = vmatpush1.bf16.msra.mxu0 0
    %6549 = vmatprep.subr.bf16.mxu0 0
    %6550 = vmatpush1.bf16.msra.mxu0 0
    %6551 = vmatprep.subr.bf16.mxu0 0
    %6552 = vmatpush1.bf16.msra.mxu0 0
    %6553 = vmatprep.mubr.bf16.mxu0 0
    %6554 = vmatmul.mubr.bf16.gmra.mrb[0].mxu0 %v6519
    %v6555 = vpop.f32.mrb[0].mxu0
    %v6556 = vadd.f32 %v6505, %v6555
    %v6557 = vpop.f32.mrb[0].mxu0
    %v6558 = vadd.f32 %v6507, %v6557
    %v6559 = vpop.f32.mrb[0].mxu0
    %v6560 = vadd.f32 %v6509, %v6559
    %v6561 = vpop.f32.mrb[0].mxu0
    %v6562 = vadd.f32 %v6511, %v6561
    %6563 = vdwg.mxu0
    %v6564 = vld [vmem:[%s4911] sm:$0xf]
    %v6565 = vld [vmem:[%s4911 + $0x4] sm:$0xf]
    %v6566 = vpack.c.bf16 %v6192, %v6188
    %v6567 = vpack.c.bf16 %v6194, %v6190
    %v6570 = vunpack.c.l.b16 %v6564
    %v6571 = vunpack.c.l.b16 %v6565
    %v6572 = vpack.c.b16 %v6571, %v6570
    %v6574 = vsel %vm560, %v6572, 0
    %6576 = vmatprep.subr.bf16.mxu0 %v6567
    %6577 = vmatpush1.bf16.msra.mxu0 %v6566
    %6578 = vmatprep.subr.bf16.mxu0 0
    %6579 = vmatpush1.bf16.msra.mxu0 0
    %6580 = vmatprep.subr.bf16.mxu0 0
    %6581 = vmatpush1.bf16.msra.mxu0 0
    %6582 = vmatprep.subr.bf16.mxu0 0
    %6583 = vmatpush1.bf16.msra.mxu0 0
    %6584 = vmatprep.subr.bf16.mxu0 0
    %6585 = vmatpush1.bf16.msra.mxu0 0
    %6586 = vmatprep.subr.bf16.mxu0 0
    %6587 = vmatpush1.bf16.msra.mxu0 0
    %6588 = vmatprep.subr.bf16.mxu0 0
    %6589 = vmatpush1.bf16.msra.mxu0 0
    %6590 = vmatprep.subr.bf16.mxu0 0
    %6591 = vmatpush1.bf16.msra.mxu0 0
    %6592 = vmatprep.subr.bf16.mxu0 0
    %6593 = vmatpush1.bf16.msra.mxu0 0
    %6594 = vmatprep.subr.bf16.mxu0 0
    %6595 = vmatpush1.bf16.msra.mxu0 0
    %6596 = vmatprep.subr.bf16.mxu0 0
    %6597 = vmatpush1.bf16.msra.mxu0 0
    %6598 = vmatprep.subr.bf16.mxu0 0
    %6599 = vmatpush1.bf16.msra.mxu0 0
    %6600 = vmatprep.subr.bf16.mxu0 0
    %6601 = vmatpush1.bf16.msra.mxu0 0
    %6602 = vmatprep.subr.bf16.mxu0 0
    %6603 = vmatpush1.bf16.msra.mxu0 0
    %6604 = vmatprep.subr.bf16.mxu0 0
    %6605 = vmatpush1.bf16.msra.mxu0 0
    %6606 = vmatprep.subr.bf16.mxu0 0
    %6607 = vmatpush1.bf16.msra.mxu0 0
    %6608 = vmatprep.mubr.bf16.mxu0 0
    %6609 = vmatmul.mubr.bf16.gmra.mrb[0].mxu0 %v6574
    %v6610 = vpop.f32.mrb[0].mxu0
    %v6611 = vadd.f32 0.0, %v6610
    %v6612 = vpop.f32.mrb[0].mxu0
    %v6613 = vadd.f32 0.0, %v6612
    %v6614 = vpop.f32.mrb[0].mxu0
    %v6615 = vadd.f32 0.0, %v6614
    %v6616 = vpop.f32.mrb[0].mxu0
    %v6617 = vadd.f32 0.0, %v6616
    %6618 = vdwg.mxu0
    %v6619 = vadd.f32 %v6556, %v6611
    %v6620 = vadd.f32 %v6558, %v6613
    %v6621 = vadd.f32 %v6560, %v6615
    %v6622 = vadd.f32 %v6562, %v6617
    %v6623 = vld [vmem:[%s4971] sm:$0xf]
    %v6624 = vld [vmem:[%s4971 + $0x4] sm:$0xf]
    %v6625 = vpack.c.bf16 %v6235, %v6231
    %v6626 = vpack.c.bf16 %v6237, %v6233
    %v6629 = vunpack.c.l.b16 %v6623
    %v6630 = vunpack.c.l.b16 %v6624
    %v6631 = vpack.c.b16 %v6630, %v6629
    %v6633 = vsel %vm560, %v6631, 0
    %6635 = vmatprep.subr.bf16.mxu0 %v6626
    %6636 = vmatpush1.bf16.msra.mxu0 %v6625
    %6637 = vmatprep.subr.bf16.mxu0 0
    %6638 = vmatpush1.bf16.msra.mxu0 0
    %6639 = vmatprep.subr.bf16.mxu0 0
    %6640 = vmatpush1.bf16.msra.mxu0 0
    %6641 = vmatprep.subr.bf16.mxu0 0
    %6642 = vmatpush1.bf16.msra.mxu0 0
    %6643 = vmatprep.subr.bf16.mxu0 0
    %6644 = vmatpush1.bf16.msra.mxu0 0
    %6645 = vmatprep.subr.bf16.mxu0 0
    %6646 = vmatpush1.bf16.msra.mxu0 0
    %6647 = vmatprep.subr.bf16.mxu0 0
    %6648 = vmatpush1.bf16.msra.mxu0 0
    %6649 = vmatprep.subr.bf16.mxu0 0
    %6650 = vmatpush1.bf16.msra.mxu0 0
    %6651 = vmatprep.subr.bf16.mxu0 0
    %6652 = vmatpush1.bf16.msra.mxu0 0
    %6653 = vmatprep.subr.bf16.mxu0 0
    %6654 = vmatpush1.bf16.msra.mxu0 0
    %6655 = vmatprep.subr.bf16.mxu0 0
    %6656 = vmatpush1.bf16.msra.mxu0 0
    %6657 = vmatprep.subr.bf16.mxu0 0
    %6658 = vmatpush1.bf16.msra.mxu0 0
    %6659 = vmatprep.subr.bf16.mxu0 0
    %6660 = vmatpush1.bf16.msra.mxu0 0
    %6661 = vmatprep.subr.bf16.mxu0 0
    %6662 = vmatpush1.bf16.msra.mxu0 0
    %6663 = vmatprep.subr.bf16.mxu0 0
    %6664 = vmatpush1.bf16.msra.mxu0 0
    %6665 = vmatprep.subr.bf16.mxu0 0
    %6666 = vmatpush1.bf16.msra.mxu0 0
    %6667 = vmatprep.mubr.bf16.mxu0 0
    %6668 = vmatmul.mubr.bf16.gmra.mrb[0].mxu0 %v6633
    %v6669 = vpop.f32.mrb[0].mxu0
    %v6670 = vadd.f32 0.0, %v6669
    %v6671 = vpop.f32.mrb[0].mxu0
    %v6672 = vadd.f32 0.0, %v6671
    %v6673 = vpop.f32.mrb[0].mxu0
    %v6674 = vadd.f32 0.0, %v6673
    %v6675 = vpop.f32.mrb[0].mxu0
    %v6676 = vadd.f32 0.0, %v6675
    %6677 = vdwg.mxu0
    %v6678 = vadd.f32 %v6619, %v6670
    %v6679 = vadd.f32 %v6620, %v6672
    %v6680 = vadd.f32 %v6621, %v6674
    %v6681 = vadd.f32 %v6622, %v6676
    %v6682 = vld [vmem:[%s5031] sm:$0xf]
    %v6683 = vld [vmem:[%s5031 + $0x4] sm:$0xf]
    %v6684 = vpack.c.bf16 %v6278, %v6274
    %v6685 = vpack.c.bf16 %v6280, %v6276
    %v6688 = vunpack.c.l.b16 %v6682
    %v6689 = vunpack.c.l.b16 %v6683
    %v6690 = vpack.c.b16 %v6689, %v6688
    %v6692 = vsel %vm560, %v6690, 0
    %6694 = vmatprep.subr.bf16.mxu0 %v6685
    %6695 = vmatpush1.bf16.msra.mxu0 %v6684
    %6696 = vmatprep.subr.bf16.mxu0 0
    %6697 = vmatpush1.bf16.msra.mxu0 0
    %6698 = vmatprep.subr.bf16.mxu0 0
    %6699 = vmatpush1.bf16.msra.mxu0 0
    %6700 = vmatprep.subr.bf16.mxu0 0
    %6701 = vmatpush1.bf16.msra.mxu0 0
    %6702 = vmatprep.subr.bf16.mxu0 0
    %6703 = vmatpush1.bf16.msra.mxu0 0
    %6704 = vmatprep.subr.bf16.mxu0 0
    %6705 = vmatpush1.bf16.msra.mxu0 0
    %6706 = vmatprep.subr.bf16.mxu0 0
    %6707 = vmatpush1.bf16.msra.mxu0 0
    %6708 = vmatprep.subr.bf16.mxu0 0
    %6709 = vmatpush1.bf16.msra.mxu0 0
    %6710 = vmatprep.subr.bf16.mxu0 0
    %6711 = vmatpush1.bf16.msra.mxu0 0
    %6712 = vmatprep.subr.bf16.mxu0 0
    %6713 = vmatpush1.bf16.msra.mxu0 0
    %6714 = vmatprep.subr.bf16.mxu0 0
    %6715 = vmatpush1.bf16.msra.mxu0 0
    %6716 = vmatprep.subr.bf16.mxu0 0
    %6717 = vmatpush1.bf16.msra.mxu0 0
    %6718 = vmatprep.subr.bf16.mxu0 0
    %6719 = vmatpush1.bf16.msra.mxu0 0
    %6720 = vmatprep.subr.bf16.mxu0 0
    %6721 = vmatpush1.bf16.msra.mxu0 0
    %6722 = vmatprep.subr.bf16.mxu0 0
    %6723 = vmatpush1.bf16.msra.mxu0 0
    %6724 = vmatprep.subr.bf16.mxu0 0
    %6725 = vmatpush1.bf16.msra.mxu0 0
    %6726 = vmatprep.mubr.bf16.mxu0 0
    %6727 = vmatmul.mubr.bf16.gmra.mrb[0].mxu0 %v6692
    %v6728 = vpop.f32.mrb[0].mxu0
    %v6729 = vadd.f32 0.0, %v6728
    %v6730 = vpop.f32.mrb[0].mxu0
    %v6731 = vadd.f32 0.0, %v6730
    %v6732 = vpop.f32.mrb[0].mxu0
    %v6733 = vadd.f32 0.0, %v6732
    %v6734 = vpop.f32.mrb[0].mxu0
    %v6735 = vadd.f32 0.0, %v6734
    %6736 = vdwg.mxu0
    %v6737 = vadd.f32 %v6678, %v6729
    %v6738 = vadd.f32 %v6679, %v6731
    %v6739 = vadd.f32 %v6680, %v6733
    %v6740 = vadd.f32 %v6681, %v6735
    %v6741 = vld [vmem:[%s5091] sm:$0xf]
    %v6742 = vld [vmem:[%s5091 + $0x4] sm:$0xf]
    %v6743 = vpack.c.bf16 %v6321, %v6317
    %v6744 = vpack.c.bf16 %v6323, %v6319
    %v6747 = vunpack.c.l.b16 %v6741
    %v6748 = vunpack.c.l.b16 %v6742
    %v6749 = vpack.c.b16 %v6748, %v6747
    %v6751 = vsel %vm560, %v6749, 0
    %6753 = vmatprep.subr.bf16.mxu0 %v6744
    %6754 = vmatpush1.bf16.msra.mxu0 %v6743
    %6755 = vmatprep.subr.bf16.mxu0 0
    %6756 = vmatpush1.bf16.msra.mxu0 0
    %6757 = vmatprep.subr.bf16.mxu0 0
    %6758 = vmatpush1.bf16.msra.mxu0 0
    %6759 = vmatprep.subr.bf16.mxu0 0
    %6760 = vmatpush1.bf16.msra.mxu0 0
    %6761 = vmatprep.subr.bf16.mxu0 0
    %6762 = vmatpush1.bf16.msra.mxu0 0
    %6763 = vmatprep.subr.bf16.mxu0 0
    %6764 = vmatpush1.bf16.msra.mxu0 0
    %6765 = vmatprep.subr.bf16.mxu0 0
    %6766 = vmatpush1.bf16.msra.mxu0 0
    %6767 = vmatprep.subr.bf16.mxu0 0
    %6768 = vmatpush1.bf16.msra.mxu0 0
    %6769 = vmatprep.subr.bf16.mxu0 0
    %6770 = vmatpush1.bf16.msra.mxu0 0
    %6771 = vmatprep.subr.bf16.mxu0 0
    %6772 = vmatpush1.bf16.msra.mxu0 0
    %6773 = vmatprep.subr.bf16.mxu0 0
    %6774 = vmatpush1.bf16.msra.mxu0 0
    %6775 = vmatprep.subr.bf16.mxu0 0
    %6776 = vmatpush1.bf16.msra.mxu0 0
    %6777 = vmatprep.subr.bf16.mxu0 0
    %6778 = vmatpush1.bf16.msra.mxu0 0
    %6779 = vmatprep.subr.bf16.mxu0 0
    %6780 = vmatpush1.bf16.msra.mxu0 0
    %6781 = vmatprep.subr.bf16.mxu0 0
    %6782 = vmatpush1.bf16.msra.mxu0 0
    %6783 = vmatprep.subr.bf16.mxu0 0
    %6784 = vmatpush1.bf16.msra.mxu0 0
    %6785 = vmatprep.mubr.bf16.mxu0 0
    %6786 = vmatmul.mubr.bf16.gmra.mrb[0].mxu0 %v6751
    %v6787 = vpop.f32.mrb[0].mxu0
    %v6788 = vadd.f32 0.0, %v6787
    %v6789 = vpop.f32.mrb[0].mxu0
    %v6790 = vadd.f32 0.0, %v6789
    %v6791 = vpop.f32.mrb[0].mxu0
    %v6792 = vadd.f32 0.0, %v6791
    %v6793 = vpop.f32.mrb[0].mxu0
    %v6794 = vadd.f32 0.0, %v6793
    %6795 = vdwg.mxu0
    %v6796 = vadd.f32 %v6737, %v6788
    %v6797 = vadd.f32 %v6738, %v6790
    %v6798 = vadd.f32 %v6739, %v6792
    %v6799 = vadd.f32 %v6740, %v6794
    %v6800 = vld [vmem:[%s5151] sm:$0xf]
    %v6801 = vld [vmem:[%s5151 + $0x4] sm:$0xf]
    %v6802 = vpack.c.bf16 %v6364, %v6360
    %v6803 = vpack.c.bf16 %v6366, %v6362
    %v6806 = vunpack.c.l.b16 %v6800
    %v6807 = vunpack.c.l.b16 %v6801
    %v6808 = vpack.c.b16 %v6807, %v6806
    %v6810 = vsel %vm560, %v6808, 0
    %6812 = vmatprep.subr.bf16.mxu0 %v6803
    %6813 = vmatpush1.bf16.msra.mxu0 %v6802
    %6814 = vmatprep.subr.bf16.mxu0 0
    %6815 = vmatpush1.bf16.msra.mxu0 0
    %6816 = vmatprep.subr.bf16.mxu0 0
    %6817 = vmatpush1.bf16.msra.mxu0 0
    %6818 = vmatprep.subr.bf16.mxu0 0
    %6819 = vmatpush1.bf16.msra.mxu0 0
    %6820 = vmatprep.subr.bf16.mxu0 0
    %6821 = vmatpush1.bf16.msra.mxu0 0
    %6822 = vmatprep.subr.bf16.mxu0 0
    %6823 = vmatpush1.bf16.msra.mxu0 0
    %6824 = vmatprep.subr.bf16.mxu0 0
    %6825 = vmatpush1.bf16.msra.mxu0 0
    %6826 = vmatprep.subr.bf16.mxu0 0
    %6827 = vmatpush1.bf16.msra.mxu0 0
    %6828 = vmatprep.subr.bf16.mxu0 0
    %6829 = vmatpush1.bf16.msra.mxu0 0
    %6830 = vmatprep.subr.bf16.mxu0 0
    %6831 = vmatpush1.bf16.msra.mxu0 0
    %6832 = vmatprep.subr.bf16.mxu0 0
    %6833 = vmatpush1.bf16.msra.mxu0 0
    %6834 = vmatprep.subr.bf16.mxu0 0
    %6835 = vmatpush1.bf16.msra.mxu0 0
    %6836 = vmatprep.subr.bf16.mxu0 0
    %6837 = vmatpush1.bf16.msra.mxu0 0
    %6838 = vmatprep.subr.bf16.mxu0 0
    %6839 = vmatpush1.bf16.msra.mxu0 0
    %6840 = vmatprep.subr.bf16.mxu0 0
    %6841 = vmatpush1.bf16.msra.mxu0 0
    %6842 = vmatprep.subr.bf16.mxu0 0
    %6843 = vmatpush1.bf16.msra.mxu0 0
    %6844 = vmatprep.mubr.bf16.mxu0 0
    %6845 = vmatmul.mubr.bf16.gmra.mrb[0].mxu0 %v6810
    %v6846 = vpop.f32.mrb[0].mxu0
    %v6847 = vadd.f32 0.0, %v6846
    %v6848 = vpop.f32.mrb[0].mxu0
    %v6849 = vadd.f32 0.0, %v6848
    %v6850 = vpop.f32.mrb[0].mxu0
    %v6851 = vadd.f32 0.0, %v6850
    %v6852 = vpop.f32.mrb[0].mxu0
    %v6853 = vadd.f32 0.0, %v6852
    %6854 = vdwg.mxu0
    %v6855 = vadd.f32 %v6796, %v6847
    %v6856 = vadd.f32 %v6797, %v6849
    %v6857 = vadd.f32 %v6798, %v6851
    %v6858 = vadd.f32 %v6799, %v6853
    %v6859 = vld [vmem:[%s5211] sm:$0xf]
    %v6860 = vld [vmem:[%s5211 + $0x4] sm:$0xf]
    %v6861 = vpack.c.bf16 %v6407, %v6403
    %v6862 = vpack.c.bf16 %v6409, %v6405
    %v6865 = vunpack.c.l.b16 %v6859
    %v6866 = vunpack.c.l.b16 %v6860
    %v6867 = vpack.c.b16 %v6866, %v6865
    %v6869 = vsel %vm560, %v6867, 0
    %6871 = vmatprep.subr.bf16.mxu0 %v6862
    %6872 = vmatpush1.bf16.msra.mxu0 %v6861
    %6873 = vmatprep.subr.bf16.mxu0 0
    %6874 = vmatpush1.bf16.msra.mxu0 0
    %6875 = vmatprep.subr.bf16.mxu0 0
    %6876 = vmatpush1.bf16.msra.mxu0 0
    %6877 = vmatprep.subr.bf16.mxu0 0
    %6878 = vmatpush1.bf16.msra.mxu0 0
    %6879 = vmatprep.subr.bf16.mxu0 0
    %6880 = vmatpush1.bf16.msra.mxu0 0
    %6881 = vmatprep.subr.bf16.mxu0 0
    %6882 = vmatpush1.bf16.msra.mxu0 0
    %6883 = vmatprep.subr.bf16.mxu0 0
    %6884 = vmatpush1.bf16.msra.mxu0 0
    %6885 = vmatprep.subr.bf16.mxu0 0
    %6886 = vmatpush1.bf16.msra.mxu0 0
    %6887 = vmatprep.subr.bf16.mxu0 0
    %6888 = vmatpush1.bf16.msra.mxu0 0
    %6889 = vmatprep.subr.bf16.mxu0 0
    %6890 = vmatpush1.bf16.msra.mxu0 0
    %6891 = vmatprep.subr.bf16.mxu0 0
    %6892 = vmatpush1.bf16.msra.mxu0 0
    %6893 = vmatprep.subr.bf16.mxu0 0
    %6894 = vmatpush1.bf16.msra.mxu0 0
    %6895 = vmatprep.subr.bf16.mxu0 0
    %6896 = vmatpush1.bf16.msra.mxu0 0
    %6897 = vmatprep.subr.bf16.mxu0 0
    %6898 = vmatpush1.bf16.msra.mxu0 0
    %6899 = vmatprep.subr.bf16.mxu0 0
    %6900 = vmatpush1.bf16.msra.mxu0 0
    %6901 = vmatprep.subr.bf16.mxu0 0
    %6902 = vmatpush1.bf16.msra.mxu0 0
    %6903 = vmatprep.mubr.bf16.mxu0 0
    %6904 = vmatmul.mubr.bf16.gmra.mrb[0].mxu0 %v6869
    %v6905 = vpop.f32.mrb[0].mxu0
    %v6906 = vadd.f32 0.0, %v6905
    %v6907 = vpop.f32.mrb[0].mxu0
    %v6908 = vadd.f32 0.0, %v6907
    %v6909 = vpop.f32.mrb[0].mxu0
    %v6910 = vadd.f32 0.0, %v6909
    %v6911 = vpop.f32.mrb[0].mxu0
    %v6912 = vadd.f32 0.0, %v6911
    %6913 = vdwg.mxu0
    %v6914 = vadd.f32 %v6855, %v6906
    %v6915 = vadd.f32 %v6856, %v6908
    %v6916 = vadd.f32 %v6857, %v6910
    %v6917 = vadd.f32 %v6858, %v6912
    %v6918 = vld [vmem:[%s5271] sm:$0xf]
    %v6919 = vld [vmem:[%s5271 + $0x4] sm:$0xf]
    %v6920 = vpack.c.bf16 %v6450, %v6446
    %v6921 = vpack.c.bf16 %v6452, %v6448
    %v6924 = vunpack.c.l.b16 %v6918
    %v6925 = vunpack.c.l.b16 %v6919
    %v6926 = vpack.c.b16 %v6925, %v6924
    %v6928 = vsel %vm560, %v6926, 0
    %6930 = vmatprep.subr.bf16.mxu0 %v6921
    %6931 = vmatpush1.bf16.msra.mxu0 %v6920
    %6932 = vmatprep.subr.bf16.mxu0 0
    %6933 = vmatpush1.bf16.msra.mxu0 0
    %6934 = vmatprep.subr.bf16.mxu0 0
    %6935 = vmatpush1.bf16.msra.mxu0 0
    %6936 = vmatprep.subr.bf16.mxu0 0
    %6937 = vmatpush1.bf16.msra.mxu0 0
    %6938 = vmatprep.subr.bf16.mxu0 0
    %6939 = vmatpush1.bf16.msra.mxu0 0
    %6940 = vmatprep.subr.bf16.mxu0 0
    %6941 = vmatpush1.bf16.msra.mxu0 0
    %6942 = vmatprep.subr.bf16.mxu0 0
    %6943 = vmatpush1.bf16.msra.mxu0 0
    %6944 = vmatprep.subr.bf16.mxu0 0
    %6945 = vmatpush1.bf16.msra.mxu0 0
    %6946 = vmatprep.subr.bf16.mxu0 0
    %6947 = vmatpush1.bf16.msra.mxu0 0
    %6948 = vmatprep.subr.bf16.mxu0 0
    %6949 = vmatpush1.bf16.msra.mxu0 0
    %6950 = vmatprep.subr.bf16.mxu0 0
    %6951 = vmatpush1.bf16.msra.mxu0 0
    %6952 = vmatprep.subr.bf16.mxu0 0
    %6953 = vmatpush1.bf16.msra.mxu0 0
    %6954 = vmatprep.subr.bf16.mxu0 0
    %6955 = vmatpush1.bf16.msra.mxu0 0
    %6956 = vmatprep.subr.bf16.mxu0 0
    %6957 = vmatpush1.bf16.msra.mxu0 0
    %6958 = vmatprep.subr.bf16.mxu0 0
    %6959 = vmatpush1.bf16.msra.mxu0 0
    %6960 = vmatprep.subr.bf16.mxu0 0
    %6961 = vmatpush1.bf16.msra.mxu0 0
    %6962 = vmatprep.mubr.bf16.mxu0 0
    %6963 = vmatmul.mubr.bf16.gmra.mrb[0].mxu0 %v6928
    %v6964 = vpop.f32.mrb[0].mxu0
    %v6965 = vadd.f32 0.0, %v6964
    %v6966 = vpop.f32.mrb[0].mxu0
    %v6967 = vadd.f32 0.0, %v6966
    %v6968 = vpop.f32.mrb[0].mxu0
    %v6969 = vadd.f32 0.0, %v6968
    %v6970 = vpop.f32.mrb[0].mxu0
    %v6971 = vadd.f32 0.0, %v6970
    %6972 = vdwg.mxu0
    %v6973 = vadd.f32 %v6914, %v6965
    %v6974 = vadd.f32 %v6915, %v6967
    %v6975 = vadd.f32 %v6916, %v6969
    %v6976 = vadd.f32 %v6917, %v6971
    %v6977 = vld [vmem:[%s16] sm:$0x3]
    %v6979 = vlaneseq
    %v6980 = vshrl.u32 %v6979, 7
    %v6981 = vsub.s32 0, %v6980
    %v6982 = vrot.slane %v6977, %v6981
    %v6983 = vlaneseq
    %v6984 = vshrl.u32 %v6983, 7
    %v6985 = vsub.s32 1, %v6984
    %v6986 = vrot.slane %v6977, %v6985
    %v6989 = vadd.f32 %v6973, %v6982
    %v6990 = vadd.f32 %v6974, %v6986
    %v6991 = vadd.f32 %v6975, %v6982
    %v6992 = vadd.f32 %v6976, %v6986
    %v6993 = vmax.f32 %v6989, 0.0
    %v6994 = vmax.f32 %v6990, 0.0
    %v6995 = vmax.f32 %v6991, 0.0
    %v6996 = vmax.f32 %v6992, 0.0
    %v6997 = vld [vmem:[%s17] sm:$0x77]
    %v6998 = vpack.c.bf16 %v6995, %v6993
    %v6999 = vpack.c.bf16 %v6996, %v6994
    %v7001 = vunpack.c.l.b16 %v6997
    %v7002 = vunpack.c.h.b16 %v6997
    %v7003 = vpack.c.b16 %v7001, %v7001
    %v7004 = vpack.c.b16 %v7002, %v7002
    %7007 = vmatprep.subr.bf16.mxu0 %v6999
    %7008 = vmatpush1.bf16.xpose.msra.mxu0 %v6998
    %7009 = vmatprep.subr.bf16.mxu0 0
    %7010 = vmatpush1.bf16.xpose.msra.mxu0 0
    %7011 = vmatprep.subr.bf16.mxu0 0
    %7012 = vmatpush1.bf16.xpose.msra.mxu0 0
    %7013 = vmatprep.subr.bf16.mxu0 0
    %7014 = vmatpush1.bf16.xpose.msra.mxu0 0
    %7015 = vmatprep.subr.bf16.mxu0 0
    %7016 = vmatpush1.bf16.xpose.msra.mxu0 0
    %7017 = vmatprep.subr.bf16.mxu0 0
    %7018 = vmatpush1.bf16.xpose.msra.mxu0 0
    %7019 = vmatprep.subr.bf16.mxu0 0
    %7020 = vmatpush1.bf16.xpose.msra.mxu0 0
    %7021 = vmatprep.subr.bf16.mxu0 0
    %7022 = vmatpush1.bf16.xpose.msra.mxu0 0
    %7023 = vmatprep.subr.bf16.mxu0 0
    %7024 = vmatpush1.bf16.xpose.msra.mxu0 0
    %7025 = vmatprep.subr.bf16.mxu0 0
    %7026 = vmatpush1.bf16.xpose.msra.mxu0 0
    %7027 = vmatprep.subr.bf16.mxu0 0
    %7028 = vmatpush1.bf16.xpose.msra.mxu0 0
    %7029 = vmatprep.subr.bf16.mxu0 0
    %7030 = vmatpush1.bf16.xpose.msra.mxu0 0
    %7031 = vmatprep.subr.bf16.mxu0 0
    %7032 = vmatpush1.bf16.xpose.msra.mxu0 0
    %7033 = vmatprep.subr.bf16.mxu0 0
    %7034 = vmatpush1.bf16.xpose.msra.mxu0 0
    %7035 = vmatprep.subr.bf16.mxu0 0
    %7036 = vmatpush1.bf16.xpose.msra.mxu0 0
    %7037 = vmatprep.subr.bf16.mxu0 0
    %7038 = vmatpush1.bf16.xpose.msra.mxu0 0
    %7039 = vmatprep.mubr.bf16.mxu0 %v7004
    %7040 = vmatmul.mubr.bf16.gmra.mrb[0].mxu0 %v7003
    %v7041 = vpop.f32.mrb[0].mxu0
    %v7042 = vadd.f32 0.0, %v7041
    %v7043 = vpop.f32.mrb[0].mxu0
    %v7044 = vpop.f32.mrb[0].mxu0
    %v7045 = vpop.f32.mrb[0].mxu0
    %7046 = vdwg.mxu0
    %v7047 = vld [vmem:[%s19] sm:$0xff]
    %v7048 = vld [vmem:[%s19 + $0x8] sm:$0xff]
    %v7049 = vld [vmem:[%s19 + $0x10] sm:$0xff]
    %v7050 = vld [vmem:[%s19 + $0x18] sm:$0xff]
    %v7051 = vld [vmem:[%s19 + $0x20] sm:$0xff]
    %v7052 = vld [vmem:[%s19 + $0x28] sm:$0xff]
    %v7053 = vld [vmem:[%s19 + $0x30] sm:$0xff]
    %v7054 = vld [vmem:[%s19 + $0x38] sm:$0xff]
    %v7055 = vpack.c.bf16 %v7042, %v7042
    %v7056 = vld [vmem:[%s18] sm:$0x1f]
    %7058 = vset.pattern.permute.xlu0 0
    %7059 = vperm.xlu0 %7058, %v7056
    %v7060 = vpop.permute.xlu0 %7059
    %v7070 = vunpack.c.l.b16 %v7047
    %v7071 = vunpack.c.h.b16 %v7047
    %v7072 = vunpack.c.l.b16 %v7048
    %v7073 = vunpack.c.h.b16 %v7048
    %v7074 = vunpack.c.l.b16 %v7049
    %v7075 = vunpack.c.h.b16 %v7049
    %v7076 = vunpack.c.l.b16 %v7050
    %v7077 = vunpack.c.h.b16 %v7050
    %v7078 = vunpack.c.l.b16 %v7051
    %v7079 = vunpack.c.h.b16 %v7051
    %v7080 = vunpack.c.l.b16 %v7052
    %v7081 = vunpack.c.h.b16 %v7052
    %v7082 = vunpack.c.l.b16 %v7053
    %v7083 = vunpack.c.h.b16 %v7053
    %v7084 = vunpack.c.l.b16 %v7054
    %v7085 = vunpack.c.h.b16 %v7054
    %v7086 = vpack.c.b16 %v7078, %v7070
    %v7087 = vpack.c.b16 %v7079, %v7071
    %v7088 = vpack.c.b16 %v7080, %v7072
    %v7089 = vpack.c.b16 %v7081, %v7073
    %v7090 = vpack.c.b16 %v7082, %v7074
    %v7091 = vpack.c.b16 %v7083, %v7075
    %v7092 = vpack.c.b16 %v7084, %v7076
    %v7093 = vpack.c.b16 %v7085, %v7077
    %v7103 = vsel %vm560, %v7055, 0
    %7105 = vmatprep.subr.bf16.mxu0 %v7087
    %7106 = vmatpush1.bf16.msra.mxu0 %v7086
    %7107 = vmatprep.subr.bf16.mxu0 0
    %7108 = vmatpush1.bf16.msra.mxu0 0
    %7109 = vmatprep.subr.bf16.mxu0 0
    %7110 = vmatpush1.bf16.msra.mxu0 0
    %7111 = vmatprep.subr.bf16.mxu0 0
    %7112 = vmatpush1.bf16.msra.mxu0 0
    %7113 = vmatprep.subr.bf16.mxu0 0
    %7114 = vmatpush1.bf16.msra.mxu0 0
    %7115 = vmatprep.subr.bf16.mxu0 0
    %7116 = vmatpush1.bf16.msra.mxu0 0
    %7117 = vmatprep.subr.bf16.mxu0 0
    %7118 = vmatpush1.bf16.msra.mxu0 0
    %7119 = vmatprep.subr.bf16.mxu0 0
    %7120 = vmatpush1.bf16.msra.mxu0 0
    %7121 = vmatprep.subr.bf16.mxu0 0
    %7122 = vmatpush1.bf16.msra.mxu0 0
    %7123 = vmatprep.subr.bf16.mxu0 0
    %7124 = vmatpush1.bf16.msra.mxu0 0
    %7125 = vmatprep.subr.bf16.mxu0 0
    %7126 = vmatpush1.bf16.msra.mxu0 0
    %7127 = vmatprep.subr.bf16.mxu0 0
    %7128 = vmatpush1.bf16.msra.mxu0 0
    %7129 = vmatprep.subr.bf16.mxu0 0
    %7130 = vmatpush1.bf16.msra.mxu0 0
    %7131 = vmatprep.subr.bf16.mxu0 0
    %7132 = vmatpush1.bf16.msra.mxu0 0
    %7133 = vmatprep.subr.bf16.mxu0 0
    %7134 = vmatpush1.bf16.msra.mxu0 0
    %7135 = vmatprep.subr.bf16.mxu0 0
    %7136 = vmatpush1.bf16.msra.mxu0 0
    %7137 = vmatprep.mubr.bf16.mxu0 0
    %7138 = vmatmul.mubr.bf16.gmra.mrb[0].mxu0 %v7103
    %v7139 = vpop.f32.mrb[0].mxu0
    %v7140 = vadd.f32 %v7060, %v7139
    %v7141 = vpop.f32.mrb[0].mxu0
    %v7142 = vadd.f32 %v7060, %v7141
    %v7143 = vpop.f32.mrb[0].mxu0
    %v7144 = vpop.f32.mrb[0].mxu0
    %7145 = vdwg.mxu0
    %7146 = vmatprep.subr.bf16.mxu0 %v7089
    %7147 = vmatpush1.bf16.msra.mxu0 %v7088
    %7148 = vmatprep.subr.bf16.mxu0 0
    %7149 = vmatpush1.bf16.msra.mxu0 0
    %7150 = vmatprep.subr.bf16.mxu0 0
    %7151 = vmatpush1.bf16.msra.mxu0 0
    %7152 = vmatprep.subr.bf16.mxu0 0
    %7153 = vmatpush1.bf16.msra.mxu0 0
    %7154 = vmatprep.subr.bf16.mxu0 0
    %7155 = vmatpush1.bf16.msra.mxu0 0
    %7156 = vmatprep.subr.bf16.mxu0 0
    %7157 = vmatpush1.bf16.msra.mxu0 0
    %7158 = vmatprep.subr.bf16.mxu0 0
    %7159 = vmatpush1.bf16.msra.mxu0 0
    %7160 = vmatprep.subr.bf16.mxu0 0
    %7161 = vmatpush1.bf16.msra.mxu0 0
    %7162 = vmatprep.subr.bf16.mxu0 0
    %7163 = vmatpush1.bf16.msra.mxu0 0
    %7164 = vmatprep.subr.bf16.mxu0 0
    %7165 = vmatpush1.bf16.msra.mxu0 0
    %7166 = vmatprep.subr.bf16.mxu0 0
    %7167 = vmatpush1.bf16.msra.mxu0 0
    %7168 = vmatprep.subr.bf16.mxu0 0
    %7169 = vmatpush1.bf16.msra.mxu0 0
    %7170 = vmatprep.subr.bf16.mxu0 0
    %7171 = vmatpush1.bf16.msra.mxu0 0
    %7172 = vmatprep.subr.bf16.mxu0 0
    %7173 = vmatpush1.bf16.msra.mxu0 0
    %7174 = vmatprep.subr.bf16.mxu0 0
    %7175 = vmatpush1.bf16.msra.mxu0 0
    %7176 = vmatprep.subr.bf16.mxu0 0
    %7177 = vmatpush1.bf16.msra.mxu0 0
    %7178 = vmatprep.mubr.bf16.mxu0 0
    %7179 = vmatmul.mubr.bf16.gmra.mrb[0].mxu0 %v7103
    %v7180 = vpop.f32.mrb[0].mxu0
    %v7181 = vadd.f32 %v7060, %v7180
    %v7182 = vpop.f32.mrb[0].mxu0
    %v7183 = vadd.f32 %v7060, %v7182
    %v7184 = vpop.f32.mrb[0].mxu0
    %v7185 = vpop.f32.mrb[0].mxu0
    %7186 = vdwg.mxu0
    %7187 = vmatprep.subr.bf16.mxu0 %v7091
    %7188 = vmatpush1.bf16.msra.mxu0 %v7090
    %7189 = vmatprep.subr.bf16.mxu0 0
    %7190 = vmatpush1.bf16.msra.mxu0 0
    %7191 = vmatprep.subr.bf16.mxu0 0
    %7192 = vmatpush1.bf16.msra.mxu0 0
    %7193 = vmatprep.subr.bf16.mxu0 0
    %7194 = vmatpush1.bf16.msra.mxu0 0
    %7195 = vmatprep.subr.bf16.mxu0 0
    %7196 = vmatpush1.bf16.msra.mxu0 0
    %7197 = vmatprep.subr.bf16.mxu0 0
    %7198 = vmatpush1.bf16.msra.mxu0 0
    %7199 = vmatprep.subr.bf16.mxu0 0
    %7200 = vmatpush1.bf16.msra.mxu0 0
    %7201 = vmatprep.subr.bf16.mxu0 0
    %7202 = vmatpush1.bf16.msra.mxu0 0
    %7203 = vmatprep.subr.bf16.mxu0 0
    %7204 = vmatpush1.bf16.msra.mxu0 0
    %7205 = vmatprep.subr.bf16.mxu0 0
    %7206 = vmatpush1.bf16.msra.mxu0 0
    %7207 = vmatprep.subr.bf16.mxu0 0
    %7208 = vmatpush1.bf16.msra.mxu0 0
    %7209 = vmatprep.subr.bf16.mxu0 0
    %7210 = vmatpush1.bf16.msra.mxu0 0
    %7211 = vmatprep.subr.bf16.mxu0 0
    %7212 = vmatpush1.bf16.msra.mxu0 0
    %7213 = vmatprep.subr.bf16.mxu0 0
    %7214 = vmatpush1.bf16.msra.mxu0 0
    %7215 = vmatprep.subr.bf16.mxu0 0
    %7216 = vmatpush1.bf16.msra.mxu0 0
    %7217 = vmatprep.subr.bf16.mxu0 0
    %7218 = vmatpush1.bf16.msra.mxu0 0
    %7219 = vmatprep.mubr.bf16.mxu0 0
    %7220 = vmatmul.mubr.bf16.gmra.mrb[0].mxu0 %v7103
    %v7221 = vpop.f32.mrb[0].mxu0
    %v7222 = vadd.f32 %v7060, %v7221
    %v7223 = vpop.f32.mrb[0].mxu0
    %v7224 = vadd.f32 %v7060, %v7223
    %v7225 = vpop.f32.mrb[0].mxu0
    %v7226 = vpop.f32.mrb[0].mxu0
    %7227 = vdwg.mxu0
    %7228 = vmatprep.subr.bf16.mxu0 %v7093
    %7229 = vmatpush1.bf16.msra.mxu0 %v7092
    %7230 = vmatprep.subr.bf16.mxu0 0
    %7231 = vmatpush1.bf16.msra.mxu0 0
    %7232 = vmatprep.subr.bf16.mxu0 0
    %7233 = vmatpush1.bf16.msra.mxu0 0
    %7234 = vmatprep.subr.bf16.mxu0 0
    %7235 = vmatpush1.bf16.msra.mxu0 0
    %7236 = vmatprep.subr.bf16.mxu0 0
    %7237 = vmatpush1.bf16.msra.mxu0 0
    %7238 = vmatprep.subr.bf16.mxu0 0
    %7239 = vmatpush1.bf16.msra.mxu0 0
    %7240 = vmatprep.subr.bf16.mxu0 0
    %7241 = vmatpush1.bf16.msra.mxu0 0
    %7242 = vmatprep.subr.bf16.mxu0 0
    %7243 = vmatpush1.bf16.msra.mxu0 0
    %7244 = vmatprep.subr.bf16.mxu0 0
    %7245 = vmatpush1.bf16.msra.mxu0 0
    %7246 = vmatprep.subr.bf16.mxu0 0
    %7247 = vmatpush1.bf16.msra.mxu0 0
    %7248 = vmatprep.subr.bf16.mxu0 0
    %7249 = vmatpush1.bf16.msra.mxu0 0
    %7250 = vmatprep.subr.bf16.mxu0 0
    %7251 = vmatpush1.bf16.msra.mxu0 0
    %7252 = vmatprep.subr.bf16.mxu0 0
    %7253 = vmatpush1.bf16.msra.mxu0 0
    %7254 = vmatprep.subr.bf16.mxu0 0
    %7255 = vmatpush1.bf16.msra.mxu0 0
    %7256 = vmatprep.subr.bf16.mxu0 0
    %7257 = vmatpush1.bf16.msra.mxu0 0
    %7258 = vmatprep.subr.bf16.mxu0 0
    %7259 = vmatpush1.bf16.msra.mxu0 0
    %7260 = vmatprep.mubr.bf16.mxu0 0
    %7261 = vmatmul.mubr.bf16.gmra.mrb[0].mxu0 %v7103
    %v7262 = vpop.f32.mrb[0].mxu0
    %v7263 = vadd.f32 %v7060, %v7262
    %v7264 = vpop.f32.mrb[0].mxu0
    %v7265 = vadd.f32 %v7060, %v7264
    %v7266 = vpop.f32.mrb[0].mxu0
    %v7267 = vpop.f32.mrb[0].mxu0
    %7268 = vdwg.mxu0
    %s7269 = scalar_lea.vmem %s20, 64
    %7270 = vst [vmem:[%s7269] sm:$0x1f] %v7140
    %7271 = vst [vmem:[%s7269 + $0x8] sm:$0x1f] %v7142
    %7272 = vst [vmem:[%s7269 + $0x10] sm:$0x1f] %v7181
    %7273 = vst [vmem:[%s7269 + $0x18] sm:$0x1f] %v7183
    %7274 = vst [vmem:[%s7269 + $0x20] sm:$0x1f] %v7222
    %7275 = vst [vmem:[%s7269 + $0x28] sm:$0x1f] %v7224
    %7276 = vst [vmem:[%s7269 + $0x30] sm:$0x1f] %v7263
    %7277 = vst [vmem:[%s7269 + $0x38] sm:$0x1f] %v7265
    // Predicated region
    $region118: #{tpu_custom_call.1} parent=1 // pred_check
      _
    $region119: #{tpu_custom_call.1} parent=1 // pred_check_branch
      %7279 = sbr.rel (0) target = $region121
    $region120: #{tpu_custom_call.1} parent=1 // pred_region
      _
    $region121: #{tpu_custom_call.1} parent=1 // pred_fallthru
      _
    // Predicated region
    $region122: #{tpu_custom_call.1} parent=1 // pred_check
      _
    $region123: #{tpu_custom_call.1} parent=1 // pred_check_branch
      %7281 = sbr.rel (0) target = $region125
    $region124: #{tpu_custom_call.1} parent=1 // pred_region
      _
    $region125: #{tpu_custom_call.1} parent=1 // pred_fallthru
      _
    %7282 = vsyncpa [#allocation3], 1
    %7283 = vsyncpa [#allocation5], 1
    %7284 = vsyncpa [#allocation8], 1
    %7285 = vsyncpa [#allocation11], 1
    %7286 = vsyncpa [#allocation14], 1

</llo_original>
